<compile_context>
chip_gen: v6e
topology: v6e:2x2x1
jax: 0.10.0
libtpu: 0.0.40
codegen_flags: <defaults>
</compile_context>

<pallas_src>
import jax
import jax.numpy as jnp
from jax.experimental import pallas as pl
from jax.experimental.pallas import tpu as pltpu

_LEAKY_SLOPE = 0.2


def _lrelu(v):
    return jnp.where(v > 0, v, _LEAKY_SLOPE * v)


def _discriminator_kernel(x_ref, meta_ref,
                          w1_ref, b1_ref, w2_ref, b2_ref, w3_ref, b3_ref,
                          w4_ref, b4_ref, w5_ref, b5_ref, fcw_ref, fcb_ref,
                          out_ref,
                          a1, a2, a3, a4, cols1, cols2, cols3, cols4):
    """One image per grid step.  All activations / cols slabs live in VMEM.

    Layouts (per image, channels last):
      x_ref : (66, 16, c0)        H-padded conv1 input
      a1    : (34, 16, ds)        conv1 out, H-padded for conv2
      a2    : (18, 2, 9, 2ds)     conv2 out, padded; W split by parity:
                                  cell (h, w) -> a2[h, w % 2, w // 2]
      a3    : (10, 2, 5, 4ds)     conv3 out, padded, W parity split
      a4    : (1, 16*8ds)         conv4 out, laid out as conv5's im2col row
      colsL : (hoL, woL, khL*kwL*c_inL)  im2col slab of layer L
    """
    f32 = jnp.float32
    c0 = x_ref.shape[-1]          # classes_size
    ds = w1_ref.shape[-1]         # data_size
    c2o, c3o, c4o = 2 * ds, 4 * ds, 8 * ds

    # ------------- conv1: (66,16,c0) -> (32,16,ds), k=(4,1) s=(2,1) p=(1,0)
    x = x_ref[...].reshape(33, 2, 16, c0)                 # h -> (h//2, h%2)
    for i in range(4):                                    # kernel row taps
        cols1[:, :, i * c0:(i + 1) * c0] = x[i // 2:i // 2 + 32, i % 2]
    y = _lrelu(jnp.dot(cols1[...].reshape(32 * 16, 4 * c0), w1_ref[...],
                       preferred_element_type=f32) + b1_ref[...])
    a1[0:1] = jnp.zeros((1, 16, ds), f32)                 # conv2 H padding
    a1[33:34] = jnp.zeros((1, 16, ds), f32)
    a1[1:33] = y.reshape(32, 16, ds)

    # ------------- conv2: (34,16,ds) -> (16,16,2ds), k=(4,1) s=(2,1) p=(1,0)
    x = a1[...].reshape(17, 2, 16, ds)
    for i in range(4):
        cols2[:, :, i * ds:(i + 1) * ds] = x[i // 2:i // 2 + 16, i % 2]
    y = _lrelu(jnp.dot(cols2[...].reshape(16 * 16, 4 * ds), w2_ref[...],
                       preferred_element_type=f32) + b2_ref[...])
    y = y.reshape(16, 16, c2o)
    # zero only conv3's padding border of a2
    a2[0:1] = jnp.zeros((1, 2, 9, c2o), f32)              # h = 0
    a2[17:18] = jnp.zeros((1, 2, 9, c2o), f32)            # h = 17
    a2[:, 0:1, 0:1] = jnp.zeros((18, 1, 1, c2o), f32)     # w = 0
    a2[:, 1:2, 8:9] = jnp.zeros((18, 1, 1, c2o), f32)     # w = 17
    for c in range(16):                                   # interior, W parity split
        wp = 1 + c
        a2[1:17, wp % 2:wp % 2 + 1, wp // 2:wp // 2 + 1] = (
            y[:, c:c + 1, :].reshape(16, 1, 1, c2o))

    # ------------- conv3: (18,18,2ds) -> (8,8,4ds), k=4 s=2 p=1
    x = a2[...].reshape(9, 2, 2, 9, c2o)                  # h -> (h//2, h%2)
    for i in range(4):
        for j in range(4):
            t = i * 4 + j
            cols3[:, :, t * c2o:(t + 1) * c2o] = (
                x[i // 2:i // 2 + 8, i % 2, j % 2, j // 2:j // 2 + 8, :])
    y = _lrelu(jnp.dot(cols3[...].reshape(8 * 8, 16 * c2o), w3_ref[...],
                       preferred_element_type=f32) + b3_ref[...])
    y = y.reshape(8, 8, c3o)
    a3[0:1] = jnp.zeros((1, 2, 5, c3o), f32)              # h = 0
    a3[9:10] = jnp.zeros((1, 2, 5, c3o), f32)             # h = 9
    a3[:, 0:1, 0:1] = jnp.zeros((10, 1, 1, c3o), f32)     # w = 0
    a3[:, 1:2, 4:5] = jnp.zeros((10, 1, 1, c3o), f32)     # w = 9
    for c in range(8):
        wp = 1 + c
        a3[1:9, wp % 2:wp % 2 + 1, wp // 2:wp // 2 + 1] = (
            y[:, c:c + 1, :].reshape(8, 1, 1, c3o))

    # ------------- conv4: (10,10,4ds) -> (4,4,8ds), k=4 s=2 p=1
    x = a3[...].reshape(5, 2, 2, 5, c3o)
    for i in range(4):
        for j in range(4):
            t = i * 4 + j
            cols4[:, :, t * c3o:(t + 1) * c3o] = (
                x[i // 2:i // 2 + 4, i % 2, j % 2, j // 2:j // 2 + 4, :])
    c4v = cols4[...]                                      # (4, 4, 16*c3o)
    w4 = w4_ref[...]
    b4 = b4_ref[...]
    for r in range(4):                                    # 16 output positions ->
        for c in range(4):                                # written as conv5's cols
            yp = _lrelu(jnp.dot(c4v[r:r + 1, c], w4,
                                preferred_element_type=f32) + b4)     # (1, 8ds)
            pos = r * 4 + c
            a4[:, pos * c4o:(pos + 1) * c4o] = yp

    # ------------- conv5 (1x1 output == FC over a4) + meta concat + fc
    feats = _lrelu(jnp.dot(a4[...], w5_ref[...],
                           preferred_element_type=f32) + b5_ref[...])  # (1, 16ds)
    fc_in = jnp.concatenate([feats, meta_ref[...]], axis=1)            # (1, 16ds+m)
    out_ref[...] = jnp.dot(fc_in, fcw_ref[...],
                           preferred_element_type=f32) + fcb_ref[...]


# ---------------------------------------------------------------------------
# Host-side wrappers
# ---------------------------------------------------------------------------
def make_discriminator_params(key, instances_size, classes_size,
                              meta_length, lambda_length):
    """PyTorch-layout parameters (OIHW conv weights, (out,in) fc weight)."""
    ds = instances_size
    shapes = {
        "conv1_w": (ds, classes_size, 4, 1), "conv1_b": (ds,),
        "conv2_w": (ds * 2, ds, 4, 1),       "conv2_b": (ds * 2,),
        "conv3_w": (ds * 4, ds * 2, 4, 4),   "conv3_b": (ds * 4,),
        "conv4_w": (ds * 8, ds * 4, 4, 4),   "conv4_b": (ds * 8,),
        "conv5_w": (ds * 16, ds * 8, 4, 4),  "conv5_b": (ds * 16,),
        "fc_w": (lambda_length + 1, ds * 16 + meta_length),
        "fc_b": (lambda_length + 1,),
    }
    params = {}
    keys = jax.random.split(key, len(shapes))
    for k_, (name, shp) in zip(keys, sorted(shapes.items())):
        params[name] = 0.05 * jax.random.normal(k_, shp, jnp.float32)
    return params


def prepare_kernel_params(params):
    """One-time host-side re-layout so the hot path has no per-call transposes.

    Conv weights -> (kh*kw*c_in, c_out) with row order (i, j, ci), which is
    exactly the lane order the in-kernel cols slabs are assembled in.  Biases
    -> (1, c_out).  fc weight -> (in, out)."""
    prep = {}
    for l in range(1, 6):
        w = params[f"conv{l}_w"]                       # (c_out, c_in, kh, kw)
        c_out, c_in, kh, kw = w.shape
        prep[f"w{l}"] = jnp.transpose(w, (2, 3, 1, 0)).reshape(kh * kw * c_in, c_out)
        prep[f"b{l}"] = params[f"conv{l}_b"].reshape(1, c_out)
    prep["fcw"] = jnp.transpose(params["fc_w"], (1, 0))   # (in, out)
    prep["fcb"] = params["fc_b"].reshape(1, -1)
    return prep


def discriminator_forward(prep, data, meta):
    """data: (N, classes_size, 64, 16) NCHW;  meta: (N, meta_length, 1, 1)."""
    n, c0, h_in, w_in = data.shape
    assert (h_in, w_in) == (64, 16), (
        "conv_5 must produce a 1x1 spatial output -> input spatial must be (64, 16)")
    ds = prep["w1"].shape[1]
    m = meta.shape[1]
    n_out = prep["fcw"].shape[1]

    # One-time re-layout: NCHW -> NHWC + H padding for conv1; meta -> (N,1,m).
    x = jnp.transpose(data, (0, 2, 3, 1))
    x = jnp.pad(x, ((0, 0), (1, 1), (0, 0), (0, 0)))          # (N, 66, 16, c0)
    meta3 = meta.reshape(n, 1, m)

    inputs = [x, meta3,
              prep["w1"], prep["b1"], prep["w2"], prep["b2"],
              prep["w3"], prep["b3"], prep["w4"], prep["b4"],
              prep["w5"], prep["b5"], prep["fcw"], prep["fcb"]]

    def _const_spec(arr):
        nd = arr.ndim
        return pl.BlockSpec(arr.shape, lambda b, _nd=nd: (0,) * _nd)

    in_specs = [
        pl.BlockSpec((None, 66, 16, c0), lambda b: (b, 0, 0, 0)),   # per-image x
        pl.BlockSpec((None, 1, m), lambda b: (b, 0, 0)),            # per-image meta
    ] + [_const_spec(a) for a in inputs[2:]]

    scratch = [
        pltpu.VMEM((34, 16, ds), jnp.float32),            # a1
        pltpu.VMEM((18, 2, 9, 2 * ds), jnp.float32),      # a2 (W parity split)
        pltpu.VMEM((10, 2, 5, 4 * ds), jnp.float32),      # a3 (W parity split)
        pltpu.VMEM((1, 16 * 8 * ds), jnp.float32),        # a4 == conv5 im2col row
        pltpu.VMEM((32, 16, 4 * c0), jnp.float32),        # cols1
        pltpu.VMEM((16, 16, 4 * ds), jnp.float32),        # cols2
        pltpu.VMEM((8, 8, 16 * 2 * ds), jnp.float32),     # cols3
        pltpu.VMEM((4, 4, 16 * 4 * ds), jnp.float32),     # cols4
    ]

    flops = 2 * n * (4 * c0 * ds * 32 * 16
                     + 4 * ds * 2 * ds * 16 * 16
                     + 16 * 2 * ds * 4 * ds * 8 * 8
                     + 16 * 4 * ds * 8 * ds * 4 * 4
                     + 16 * 8 * ds * 16 * ds
                     + (16 * ds + m) * n_out)
    bytes_accessed = sum(int(a.size) * a.dtype.itemsize for a in inputs) + n * n_out * 4

    out = pl.pallas_call(
        _discriminator_kernel,
        out_shape=jax.ShapeDtypeStruct((n, 1, n_out), jnp.float32),
        grid=(n,),
        in_specs=in_specs,
        out_specs=pl.BlockSpec((None, 1, n_out), lambda b: (b, 0, 0)),
        scratch_shapes=scratch,
        compiler_params=pltpu.CompilerParams(dimension_semantics=("parallel",)),
        cost_estimate=pl.CostEstimate(flops=int(flops), transcendentals=0,
                                      bytes_accessed=int(bytes_accessed)),
    )(*inputs)

    # Matches PyTorch `.squeeze()` semantics for batched input (N > 1).
    # TODO(synk): for N == 1 PyTorch's squeeze() also drops the batch dim.
    return out.reshape(n, n_out)


if __name__ == "__main__":
    # Small config; features_size of the PyTorch module is unused in forward().
    instances_size = 4     # data_size
    classes_size = 3
    meta_length = 5
    lambda_length = 7
    batch = 2

    key = jax.random.PRNGKey(0)
    k_params, k_data, k_meta = jax.random.split(key, 3)

    params = make_discriminator_params(
        k_params, instances_size, classes_size, meta_length, lambda_length)
    prep = prepare_kernel_params(params)

    # Input spatial (64, 16) so conv_5's output is 1x1 (required by the concat).
    data = jax.random.normal(k_data, (batch, classes_size, 64, 16), jnp.float32)
    meta = jax.random.normal(k_meta, (batch, meta_length, 1, 1), jnp.float32)

    fwd = jax.jit(discriminator_forward)
    out = jax.block_until_ready(fwd(prep, data, meta))
    assert out.shape == (batch, lambda_length + 1), out.shape
    print("KERNEL_OK")
</pallas_src>

<mosaic_0001>
module attributes {stable_mosaic.version = 11 : i64} {
  func.func @_discriminator_kernel(%arg0: i32, %arg1: memref<1x66x16x3xf32, #tpu.memory_space<vmem>>, %arg2: memref<1x1x5xf32, #tpu.memory_space<vmem>>, %arg3: memref<12x4xf32, #tpu.memory_space<vmem>>, %arg4: memref<1x4xf32, #tpu.memory_space<vmem>>, %arg5: memref<16x8xf32, #tpu.memory_space<vmem>>, %arg6: memref<1x8xf32, #tpu.memory_space<vmem>>, %arg7: memref<128x16xf32, #tpu.memory_space<vmem>>, %arg8: memref<1x16xf32, #tpu.memory_space<vmem>>, %arg9: memref<256x32xf32, #tpu.memory_space<vmem>>, %arg10: memref<1x32xf32, #tpu.memory_space<vmem>>, %arg11: memref<512x64xf32, #tpu.memory_space<vmem>>, %arg12: memref<1x64xf32, #tpu.memory_space<vmem>>, %arg13: memref<69x8xf32, #tpu.memory_space<vmem>>, %arg14: memref<1x8xf32, #tpu.memory_space<vmem>>, %arg15: memref<1x1x8xf32, #tpu.memory_space<vmem>>, %arg16: memref<34x16x4xf32, #tpu.memory_space<vmem>>, %arg17: memref<18x2x9x8xf32, #tpu.memory_space<vmem>>, %arg18: memref<10x2x5x16xf32, #tpu.memory_space<vmem>>, %arg19: memref<1x512xf32, #tpu.memory_space<vmem>>, %arg20: memref<32x16x12xf32, #tpu.memory_space<vmem>>, %arg21: memref<16x16x16xf32, #tpu.memory_space<vmem>>, %arg22: memref<8x8x128xf32, #tpu.memory_space<vmem>>, %arg23: memref<4x4x256xf32, #tpu.memory_space<vmem>>) attributes {dimension_semantics = [#tpu.dimension_semantics<parallel>], iteration_bounds = array<i64: 2>, scalar_prefetch = 0 : i64, scratch_operands = 8 : i64, tpu.core_type = #tpu.core_type<tc>, window_params = [{transform_indices = @transform_0, window_bounds = array<i64: 1, 66, 16, 3>}, {transform_indices = @transform_1, window_bounds = array<i64: 1, 1, 5>}, {pipeline_mode = #tpu.pipeline_mode<synchronous>, transform_indices = @transform_2, window_bounds = array<i64: 12, 4>}, {pipeline_mode = #tpu.pipeline_mode<synchronous>, transform_indices = @transform_3, window_bounds = array<i64: 1, 4>}, {pipeline_mode = #tpu.pipeline_mode<synchronous>, transform_indices = @transform_4, window_bounds = array<i64: 16, 8>}, {pipeline_mode = #tpu.pipeline_mode<synchronous>, transform_indices = @transform_5, window_bounds = array<i64: 1, 8>}, {pipeline_mode = #tpu.pipeline_mode<synchronous>, transform_indices = @transform_6, window_bounds = array<i64: 128, 16>}, {pipeline_mode = #tpu.pipeline_mode<synchronous>, transform_indices = @transform_7, window_bounds = array<i64: 1, 16>}, {pipeline_mode = #tpu.pipeline_mode<synchronous>, transform_indices = @transform_8, window_bounds = array<i64: 256, 32>}, {pipeline_mode = #tpu.pipeline_mode<synchronous>, transform_indices = @transform_9, window_bounds = array<i64: 1, 32>}, {pipeline_mode = #tpu.pipeline_mode<synchronous>, transform_indices = @transform_10, window_bounds = array<i64: 512, 64>}, {pipeline_mode = #tpu.pipeline_mode<synchronous>, transform_indices = @transform_11, window_bounds = array<i64: 1, 64>}, {pipeline_mode = #tpu.pipeline_mode<synchronous>, transform_indices = @transform_12, window_bounds = array<i64: 69, 8>}, {pipeline_mode = #tpu.pipeline_mode<synchronous>, transform_indices = @transform_13, window_bounds = array<i64: 1, 8>}, {transform_indices = @transform_14, window_bounds = array<i64: 1, 1, 8>}]} {
    %c0 = arith.constant 0 : index
    %c0_0 = arith.constant 0 : index
    %c0_1 = arith.constant 0 : index
    %c0_2 = arith.constant 0 : index
    %0 = vector.load %arg1[%c0, %c0_0, %c0_1, %c0_2] : memref<1x66x16x3xf32, #tpu.memory_space<vmem>>, vector<1x66x16x3xf32>
    %1 = vector.shape_cast %0 : vector<1x66x16x3xf32> to vector<66x16x3xf32>
    %2 = vector.shape_cast %1 : vector<66x16x3xf32> to vector<33x2x16x3xf32>
    %3 = vector.extract_strided_slice %2 {offsets = [0, 0, 0, 0], sizes = [32, 1, 16, 3], strides = [1, 1, 1, 1]} : vector<33x2x16x3xf32> to vector<32x1x16x3xf32>
    %4 = vector.shape_cast %3 : vector<32x1x16x3xf32> to vector<32x16x3xf32>
    %c0_3 = arith.constant 0 : index
    %c0_4 = arith.constant 0 : index
    %c0_5 = arith.constant 0 : index
    %5 = vector.load %arg20[%c0_3, %c0_4, %c0_5] : memref<32x16x12xf32, #tpu.memory_space<vmem>>, vector<32x16x3xf32>
    tpu.vector_store %arg20[%c0_3, %c0_4, %c0_5], %4 {strides = array<i32>} : memref<32x16x12xf32, #tpu.memory_space<vmem>>, vector<32x16x3xf32>,
    %6 = vector.extract_strided_slice %2 {offsets = [0, 1, 0, 0], sizes = [32, 1, 16, 3], strides = [1, 1, 1, 1]} : vector<33x2x16x3xf32> to vector<32x1x16x3xf32>
    %7 = vector.shape_cast %6 : vector<32x1x16x3xf32> to vector<32x16x3xf32>
    %c0_6 = arith.constant 0 : index
    %c0_7 = arith.constant 0 : index
    %c3 = arith.constant 3 : index
    %8 = vector.load %arg20[%c0_6, %c0_7, %c3] : memref<32x16x12xf32, #tpu.memory_space<vmem>>, vector<32x16x3xf32>
    tpu.vector_store %arg20[%c0_6, %c0_7, %c3], %7 {strides = array<i32>} : memref<32x16x12xf32, #tpu.memory_space<vmem>>, vector<32x16x3xf32>,
    %9 = vector.extract_strided_slice %2 {offsets = [1, 0, 0, 0], sizes = [32, 1, 16, 3], strides = [1, 1, 1, 1]} : vector<33x2x16x3xf32> to vector<32x1x16x3xf32>
    %10 = vector.shape_cast %9 : vector<32x1x16x3xf32> to vector<32x16x3xf32>
    %c0_8 = arith.constant 0 : index
    %c0_9 = arith.constant 0 : index
    %c6 = arith.constant 6 : index
    %11 = vector.load %arg20[%c0_8, %c0_9, %c6] : memref<32x16x12xf32, #tpu.memory_space<vmem>>, vector<32x16x3xf32>
    tpu.vector_store %arg20[%c0_8, %c0_9, %c6], %10 {strides = array<i32>} : memref<32x16x12xf32, #tpu.memory_space<vmem>>, vector<32x16x3xf32>,
    %12 = vector.extract_strided_slice %2 {offsets = [1, 1, 0, 0], sizes = [32, 1, 16, 3], strides = [1, 1, 1, 1]} : vector<33x2x16x3xf32> to vector<32x1x16x3xf32>
    %13 = vector.shape_cast %12 : vector<32x1x16x3xf32> to vector<32x16x3xf32>
    %c0_10 = arith.constant 0 : index
    %c0_11 = arith.constant 0 : index
    %c9 = arith.constant 9 : index
    %14 = vector.load %arg20[%c0_10, %c0_11, %c9] : memref<32x16x12xf32, #tpu.memory_space<vmem>>, vector<32x16x3xf32>
    tpu.vector_store %arg20[%c0_10, %c0_11, %c9], %13 {strides = array<i32>} : memref<32x16x12xf32, #tpu.memory_space<vmem>>, vector<32x16x3xf32>,
    %c0_12 = arith.constant 0 : index
    %c0_13 = arith.constant 0 : index
    %c0_14 = arith.constant 0 : index
    %15 = vector.load %arg20[%c0_12, %c0_13, %c0_14] : memref<32x16x12xf32, #tpu.memory_space<vmem>>, vector<32x16x12xf32>
    %16 = vector.shape_cast %15 : vector<32x16x12xf32> to vector<512x12xf32>
    %c0_15 = arith.constant 0 : index
    %c0_16 = arith.constant 0 : index
    %17 = vector.load %arg3[%c0_15, %c0_16] : memref<12x4xf32, #tpu.memory_space<vmem>>, vector<12x4xf32>
    %cst = arith.constant dense<0.000000e+00> : vector<512x4xf32>
    %18 = tpu.matmul %16, %17, %cst {dimension_numbers = #tpu.dot_dimension_numbers<[1], [0], [0], [1], [0, 0, 1, 1], [], []>} : vector<512x12xf32>, vector<12x4xf32>, vector<512x4xf32> -> vector<512x4xf32>
    %c0_17 = arith.constant 0 : index
    %c0_18 = arith.constant 0 : index
    %19 = vector.load %arg4[%c0_17, %c0_18] : memref<1x4xf32, #tpu.memory_space<vmem>>, vector<1x4xf32>
    %20 = vector.broadcast %19 : vector<1x4xf32> to vector<512x4xf32>
    %21 = arith.addf %18, %20 : vector<512x4xf32>
    %cst_19 = arith.constant 0.000000e+00 : f32
    %22 = vector.broadcast %cst_19 : f32 to vector<512x4xf32>
    %23 = arith.cmpf ogt, %21, %22 : vector<512x4xf32>
    %cst_20 = arith.constant 2.000000e-01 : f32
    %24 = vector.broadcast %cst_20 : f32 to vector<512x4xf32>
    %25 = arith.mulf %24, %21 : vector<512x4xf32>
    %26 = arith.select %23, %21, %25 : vector<512x4xi1>, vector<512x4xf32>
    %cst_21 = arith.constant 0.000000e+00 : f32
    %27 = vector.broadcast %cst_21 : f32 to vector<1x16x4xf32>
    %c0_22 = arith.constant 0 : index
    %c0_23 = arith.constant 0 : index
    %c0_24 = arith.constant 0 : index
    %28 = vector.load %arg16[%c0_22, %c0_23, %c0_24] : memref<34x16x4xf32, #tpu.memory_space<vmem>>, vector<1x16x4xf32>
    tpu.vector_store %arg16[%c0_22, %c0_23, %c0_24], %27 {strides = array<i32>} : memref<34x16x4xf32, #tpu.memory_space<vmem>>, vector<1x16x4xf32>,
    %cst_25 = arith.constant 0.000000e+00 : f32
    %29 = vector.broadcast %cst_25 : f32 to vector<1x16x4xf32>
    %c33 = arith.constant 33 : index
    %c0_26 = arith.constant 0 : index
    %c0_27 = arith.constant 0 : index
    %30 = vector.load %arg16[%c33, %c0_26, %c0_27] : memref<34x16x4xf32, #tpu.memory_space<vmem>>, vector<1x16x4xf32>
    tpu.vector_store %arg16[%c33, %c0_26, %c0_27], %29 {strides = array<i32>} : memref<34x16x4xf32, #tpu.memory_space<vmem>>, vector<1x16x4xf32>,
    %31 = vector.shape_cast %26 : vector<512x4xf32> to vector<32x16x4xf32>
    %c1 = arith.constant 1 : index
    %c0_28 = arith.constant 0 : index
    %c0_29 = arith.constant 0 : index
    %32 = vector.load %arg16[%c1, %c0_28, %c0_29] : memref<34x16x4xf32, #tpu.memory_space<vmem>>, vector<32x16x4xf32>
    tpu.vector_store %arg16[%c1, %c0_28, %c0_29], %31 {strides = array<i32>} : memref<34x16x4xf32, #tpu.memory_space<vmem>>, vector<32x16x4xf32>,
    %c0_30 = arith.constant 0 : index
    %c0_31 = arith.constant 0 : index
    %c0_32 = arith.constant 0 : index
    %33 = vector.load %arg16[%c0_30, %c0_31, %c0_32] : memref<34x16x4xf32, #tpu.memory_space<vmem>>, vector<34x16x4xf32>
    %34 = vector.shape_cast %33 : vector<34x16x4xf32> to vector<17x2x16x4xf32>
    %35 = vector.extract_strided_slice %34 {offsets = [0, 0, 0, 0], sizes = [16, 1, 16, 4], strides = [1, 1, 1, 1]} : vector<17x2x16x4xf32> to vector<16x1x16x4xf32>
    %36 = vector.shape_cast %35 : vector<16x1x16x4xf32> to vector<16x16x4xf32>
    %c0_33 = arith.constant 0 : index
    %c0_34 = arith.constant 0 : index
    %c0_35 = arith.constant 0 : index
    %37 = vector.load %arg21[%c0_33, %c0_34, %c0_35] : memref<16x16x16xf32, #tpu.memory_space<vmem>>, vector<16x16x4xf32>
    tpu.vector_store %arg21[%c0_33, %c0_34, %c0_35], %36 {strides = array<i32>} : memref<16x16x16xf32, #tpu.memory_space<vmem>>, vector<16x16x4xf32>,
    %38 = vector.extract_strided_slice %34 {offsets = [0, 1, 0, 0], sizes = [16, 1, 16, 4], strides = [1, 1, 1, 1]} : vector<17x2x16x4xf32> to vector<16x1x16x4xf32>
    %39 = vector.shape_cast %38 : vector<16x1x16x4xf32> to vector<16x16x4xf32>
    %c0_36 = arith.constant 0 : index
    %c0_37 = arith.constant 0 : index
    %c4 = arith.constant 4 : index
    %40 = vector.load %arg21[%c0_36, %c0_37, %c4] : memref<16x16x16xf32, #tpu.memory_space<vmem>>, vector<16x16x4xf32>
    tpu.vector_store %arg21[%c0_36, %c0_37, %c4], %39 {strides = array<i32>} : memref<16x16x16xf32, #tpu.memory_space<vmem>>, vector<16x16x4xf32>,
    %41 = vector.extract_strided_slice %34 {offsets = [1, 0, 0, 0], sizes = [16, 1, 16, 4], strides = [1, 1, 1, 1]} : vector<17x2x16x4xf32> to vector<16x1x16x4xf32>
    %42 = vector.shape_cast %41 : vector<16x1x16x4xf32> to vector<16x16x4xf32>
    %c0_38 = arith.constant 0 : index
    %c0_39 = arith.constant 0 : index
    %c8 = arith.constant 8 : index
    %43 = vector.load %arg21[%c0_38, %c0_39, %c8] : memref<16x16x16xf32, #tpu.memory_space<vmem>>, vector<16x16x4xf32>
    tpu.vector_store %arg21[%c0_38, %c0_39, %c8], %42 {strides = array<i32>} : memref<16x16x16xf32, #tpu.memory_space<vmem>>, vector<16x16x4xf32>,
    %44 = vector.extract_strided_slice %34 {offsets = [1, 1, 0, 0], sizes = [16, 1, 16, 4], strides = [1, 1, 1, 1]} : vector<17x2x16x4xf32> to vector<16x1x16x4xf32>
    %45 = vector.shape_cast %44 : vector<16x1x16x4xf32> to vector<16x16x4xf32>
    %c0_40 = arith.constant 0 : index
    %c0_41 = arith.constant 0 : index
    %c12 = arith.constant 12 : index
    %46 = vector.load %arg21[%c0_40, %c0_41, %c12] : memref<16x16x16xf32, #tpu.memory_space<vmem>>, vector<16x16x4xf32>
    tpu.vector_store %arg21[%c0_40, %c0_41, %c12], %45 {strides = array<i32>} : memref<16x16x16xf32, #tpu.memory_space<vmem>>, vector<16x16x4xf32>,
    %c0_42 = arith.constant 0 : index
    %c0_43 = arith.constant 0 : index
    %c0_44 = arith.constant 0 : index
    %47 = vector.load %arg21[%c0_42, %c0_43, %c0_44] : memref<16x16x16xf32, #tpu.memory_space<vmem>>, vector<16x16x16xf32>
    %48 = vector.shape_cast %47 : vector<16x16x16xf32> to vector<256x16xf32>
    %c0_45 = arith.constant 0 : index
    %c0_46 = arith.constant 0 : index
    %49 = vector.load %arg5[%c0_45, %c0_46] : memref<16x8xf32, #tpu.memory_space<vmem>>, vector<16x8xf32>
    %cst_47 = arith.constant dense<0.000000e+00> : vector<256x8xf32>
    %50 = tpu.matmul %48, %49, %cst_47 {dimension_numbers = #tpu.dot_dimension_numbers<[1], [0], [0], [1], [0, 0, 1, 1], [], []>} : vector<256x16xf32>, vector<16x8xf32>, vector<256x8xf32> -> vector<256x8xf32>
    %c0_48 = arith.constant 0 : index
    %c0_49 = arith.constant 0 : index
    %51 = vector.load %arg6[%c0_48, %c0_49] : memref<1x8xf32, #tpu.memory_space<vmem>>, vector<1x8xf32>
    %52 = vector.broadcast %51 : vector<1x8xf32> to vector<256x8xf32>
    %53 = arith.addf %50, %52 : vector<256x8xf32>
    %cst_50 = arith.constant 0.000000e+00 : f32
    %54 = vector.broadcast %cst_50 : f32 to vector<256x8xf32>
    %55 = arith.cmpf ogt, %53, %54 : vector<256x8xf32>
    %cst_51 = arith.constant 2.000000e-01 : f32
    %56 = vector.broadcast %cst_51 : f32 to vector<256x8xf32>
    %57 = arith.mulf %56, %53 : vector<256x8xf32>
    %58 = arith.select %55, %53, %57 : vector<256x8xi1>, vector<256x8xf32>
    %59 = vector.shape_cast %58 : vector<256x8xf32> to vector<16x16x8xf32>
    %cst_52 = arith.constant 0.000000e+00 : f32
    %60 = vector.broadcast %cst_52 : f32 to vector<1x2x9x8xf32>
    %c0_53 = arith.constant 0 : index
    %c0_54 = arith.constant 0 : index
    %c0_55 = arith.constant 0 : index
    %c0_56 = arith.constant 0 : index
    %61 = vector.load %arg17[%c0_53, %c0_54, %c0_55, %c0_56] : memref<18x2x9x8xf32, #tpu.memory_space<vmem>>, vector<1x2x9x8xf32>
    tpu.vector_store %arg17[%c0_53, %c0_54, %c0_55, %c0_56], %60 {strides = array<i32>} : memref<18x2x9x8xf32, #tpu.memory_space<vmem>>, vector<1x2x9x8xf32>,
    %cst_57 = arith.constant 0.000000e+00 : f32
    %62 = vector.broadcast %cst_57 : f32 to vector<1x2x9x8xf32>
    %c17 = arith.constant 17 : index
    %c0_58 = arith.constant 0 : index
    %c0_59 = arith.constant 0 : index
    %c0_60 = arith.constant 0 : index
    %63 = vector.load %arg17[%c17, %c0_58, %c0_59, %c0_60] : memref<18x2x9x8xf32, #tpu.memory_space<vmem>>, vector<1x2x9x8xf32>
    tpu.vector_store %arg17[%c17, %c0_58, %c0_59, %c0_60], %62 {strides = array<i32>} : memref<18x2x9x8xf32, #tpu.memory_space<vmem>>, vector<1x2x9x8xf32>,
    %cst_61 = arith.constant 0.000000e+00 : f32
    %64 = vector.broadcast %cst_61 : f32 to vector<18x1x1x8xf32>
    %c0_62 = arith.constant 0 : index
    %c0_63 = arith.constant 0 : index
    %c0_64 = arith.constant 0 : index
    %c0_65 = arith.constant 0 : index
    %65 = vector.load %arg17[%c0_62, %c0_63, %c0_64, %c0_65] : memref<18x2x9x8xf32, #tpu.memory_space<vmem>>, vector<18x1x1x8xf32>
    tpu.vector_store %arg17[%c0_62, %c0_63, %c0_64, %c0_65], %64 {strides = array<i32>} : memref<18x2x9x8xf32, #tpu.memory_space<vmem>>, vector<18x1x1x8xf32>,
    %cst_66 = arith.constant 0.000000e+00 : f32
    %66 = vector.broadcast %cst_66 : f32 to vector<18x1x1x8xf32>
    %c0_67 = arith.constant 0 : index
    %c1_68 = arith.constant 1 : index
    %c8_69 = arith.constant 8 : index
    %c0_70 = arith.constant 0 : index
    %67 = vector.load %arg17[%c0_67, %c1_68, %c8_69, %c0_70] : memref<18x2x9x8xf32, #tpu.memory_space<vmem>>, vector<18x1x1x8xf32>
    tpu.vector_store %arg17[%c0_67, %c1_68, %c8_69, %c0_70], %66 {strides = array<i32>} : memref<18x2x9x8xf32, #tpu.memory_space<vmem>>, vector<18x1x1x8xf32>,
    %68 = vector.extract_strided_slice %59 {offsets = [0, 0, 0], sizes = [16, 1, 8], strides = [1, 1, 1]} : vector<16x16x8xf32> to vector<16x1x8xf32>
    %69 = vector.shape_cast %68 : vector<16x1x8xf32> to vector<16x1x1x8xf32>
    %c1_71 = arith.constant 1 : index
    %c1_72 = arith.constant 1 : index
    %c0_73 = arith.constant 0 : index
    %c0_74 = arith.constant 0 : index
    %70 = vector.load %arg17[%c1_71, %c1_72, %c0_73, %c0_74] : memref<18x2x9x8xf32, #tpu.memory_space<vmem>>, vector<16x1x1x8xf32>
    tpu.vector_store %arg17[%c1_71, %c1_72, %c0_73, %c0_74], %69 {strides = array<i32>} : memref<18x2x9x8xf32, #tpu.memory_space<vmem>>, vector<16x1x1x8xf32>,
    %71 = vector.extract_strided_slice %59 {offsets = [0, 1, 0], sizes = [16, 1, 8], strides = [1, 1, 1]} : vector<16x16x8xf32> to vector<16x1x8xf32>
    %72 = vector.shape_cast %71 : vector<16x1x8xf32> to vector<16x1x1x8xf32>
    %c1_75 = arith.constant 1 : index
    %c0_76 = arith.constant 0 : index
    %c1_77 = arith.constant 1 : index
    %c0_78 = arith.constant 0 : index
    %73 = vector.load %arg17[%c1_75, %c0_76, %c1_77, %c0_78] : memref<18x2x9x8xf32, #tpu.memory_space<vmem>>, vector<16x1x1x8xf32>
    tpu.vector_store %arg17[%c1_75, %c0_76, %c1_77, %c0_78], %72 {strides = array<i32>} : memref<18x2x9x8xf32, #tpu.memory_space<vmem>>, vector<16x1x1x8xf32>,
    %74 = vector.extract_strided_slice %59 {offsets = [0, 2, 0], sizes = [16, 1, 8], strides = [1, 1, 1]} : vector<16x16x8xf32> to vector<16x1x8xf32>
    %75 = vector.shape_cast %74 : vector<16x1x8xf32> to vector<16x1x1x8xf32>
    %c1_79 = arith.constant 1 : index
    %c1_80 = arith.constant 1 : index
    %c1_81 = arith.constant 1 : index
    %c0_82 = arith.constant 0 : index
    %76 = vector.load %arg17[%c1_79, %c1_80, %c1_81, %c0_82] : memref<18x2x9x8xf32, #tpu.memory_space<vmem>>, vector<16x1x1x8xf32>
    tpu.vector_store %arg17[%c1_79, %c1_80, %c1_81, %c0_82], %75 {strides = array<i32>} : memref<18x2x9x8xf32, #tpu.memory_space<vmem>>, vector<16x1x1x8xf32>,
    %77 = vector.extract_strided_slice %59 {offsets = [0, 3, 0], sizes = [16, 1, 8], strides = [1, 1, 1]} : vector<16x16x8xf32> to vector<16x1x8xf32>
    %78 = vector.shape_cast %77 : vector<16x1x8xf32> to vector<16x1x1x8xf32>
    %c1_83 = arith.constant 1 : index
    %c0_84 = arith.constant 0 : index
    %c2 = arith.constant 2 : index
    %c0_85 = arith.constant 0 : index
    %79 = vector.load %arg17[%c1_83, %c0_84, %c2, %c0_85] : memref<18x2x9x8xf32, #tpu.memory_space<vmem>>, vector<16x1x1x8xf32>
    tpu.vector_store %arg17[%c1_83, %c0_84, %c2, %c0_85], %78 {strides = array<i32>} : memref<18x2x9x8xf32, #tpu.memory_space<vmem>>, vector<16x1x1x8xf32>,
    %80 = vector.extract_strided_slice %59 {offsets = [0, 4, 0], sizes = [16, 1, 8], strides = [1, 1, 1]} : vector<16x16x8xf32> to vector<16x1x8xf32>
    %81 = vector.shape_cast %80 : vector<16x1x8xf32> to vector<16x1x1x8xf32>
    %c1_86 = arith.constant 1 : index
    %c1_87 = arith.constant 1 : index
    %c2_88 = arith.constant 2 : index
    %c0_89 = arith.constant 0 : index
    %82 = vector.load %arg17[%c1_86, %c1_87, %c2_88, %c0_89] : memref<18x2x9x8xf32, #tpu.memory_space<vmem>>, vector<16x1x1x8xf32>
    tpu.vector_store %arg17[%c1_86, %c1_87, %c2_88, %c0_89], %81 {strides = array<i32>} : memref<18x2x9x8xf32, #tpu.memory_space<vmem>>, vector<16x1x1x8xf32>,
    %83 = vector.extract_strided_slice %59 {offsets = [0, 5, 0], sizes = [16, 1, 8], strides = [1, 1, 1]} : vector<16x16x8xf32> to vector<16x1x8xf32>
    %84 = vector.shape_cast %83 : vector<16x1x8xf32> to vector<16x1x1x8xf32>
    %c1_90 = arith.constant 1 : index
    %c0_91 = arith.constant 0 : index
    %c3_92 = arith.constant 3 : index
    %c0_93 = arith.constant 0 : index
    %85 = vector.load %arg17[%c1_90, %c0_91, %c3_92, %c0_93] : memref<18x2x9x8xf32, #tpu.memory_space<vmem>>, vector<16x1x1x8xf32>
    tpu.vector_store %arg17[%c1_90, %c0_91, %c3_92, %c0_93], %84 {strides = array<i32>} : memref<18x2x9x8xf32, #tpu.memory_space<vmem>>, vector<16x1x1x8xf32>,
    %86 = vector.extract_strided_slice %59 {offsets = [0, 6, 0], sizes = [16, 1, 8], strides = [1, 1, 1]} : vector<16x16x8xf32> to vector<16x1x8xf32>
    %87 = vector.shape_cast %86 : vector<16x1x8xf32> to vector<16x1x1x8xf32>
    %c1_94 = arith.constant 1 : index
    %c1_95 = arith.constant 1 : index
    %c3_96 = arith.constant 3 : index
    %c0_97 = arith.constant 0 : index
    %88 = vector.load %arg17[%c1_94, %c1_95, %c3_96, %c0_97] : memref<18x2x9x8xf32, #tpu.memory_space<vmem>>, vector<16x1x1x8xf32>
    tpu.vector_store %arg17[%c1_94, %c1_95, %c3_96, %c0_97], %87 {strides = array<i32>} : memref<18x2x9x8xf32, #tpu.memory_space<vmem>>, vector<16x1x1x8xf32>,
    %89 = vector.extract_strided_slice %59 {offsets = [0, 7, 0], sizes = [16, 1, 8], strides = [1, 1, 1]} : vector<16x16x8xf32> to vector<16x1x8xf32>
    %90 = vector.shape_cast %89 : vector<16x1x8xf32> to vector<16x1x1x8xf32>
    %c1_98 = arith.constant 1 : index
    %c0_99 = arith.constant 0 : index
    %c4_100 = arith.constant 4 : index
    %c0_101 = arith.constant 0 : index
    %91 = vector.load %arg17[%c1_98, %c0_99, %c4_100, %c0_101] : memref<18x2x9x8xf32, #tpu.memory_space<vmem>>, vector<16x1x1x8xf32>
    tpu.vector_store %arg17[%c1_98, %c0_99, %c4_100, %c0_101], %90 {strides = array<i32>} : memref<18x2x9x8xf32, #tpu.memory_space<vmem>>, vector<16x1x1x8xf32>,
    %92 = vector.extract_strided_slice %59 {offsets = [0, 8, 0], sizes = [16, 1, 8], strides = [1, 1, 1]} : vector<16x16x8xf32> to vector<16x1x8xf32>
    %93 = vector.shape_cast %92 : vector<16x1x8xf32> to vector<16x1x1x8xf32>
    %c1_102 = arith.constant 1 : index
    %c1_103 = arith.constant 1 : index
    %c4_104 = arith.constant 4 : index
    %c0_105 = arith.constant 0 : index
    %94 = vector.load %arg17[%c1_102, %c1_103, %c4_104, %c0_105] : memref<18x2x9x8xf32, #tpu.memory_space<vmem>>, vector<16x1x1x8xf32>
    tpu.vector_store %arg17[%c1_102, %c1_103, %c4_104, %c0_105], %93 {strides = array<i32>} : memref<18x2x9x8xf32, #tpu.memory_space<vmem>>, vector<16x1x1x8xf32>,
    %95 = vector.extract_strided_slice %59 {offsets = [0, 9, 0], sizes = [16, 1, 8], strides = [1, 1, 1]} : vector<16x16x8xf32> to vector<16x1x8xf32>
    %96 = vector.shape_cast %95 : vector<16x1x8xf32> to vector<16x1x1x8xf32>
    %c1_106 = arith.constant 1 : index
    %c0_107 = arith.constant 0 : index
    %c5 = arith.constant 5 : index
    %c0_108 = arith.constant 0 : index
    %97 = vector.load %arg17[%c1_106, %c0_107, %c5, %c0_108] : memref<18x2x9x8xf32, #tpu.memory_space<vmem>>, vector<16x1x1x8xf32>
    tpu.vector_store %arg17[%c1_106, %c0_107, %c5, %c0_108], %96 {strides = array<i32>} : memref<18x2x9x8xf32, #tpu.memory_space<vmem>>, vector<16x1x1x8xf32>,
    %98 = vector.extract_strided_slice %59 {offsets = [0, 10, 0], sizes = [16, 1, 8], strides = [1, 1, 1]} : vector<16x16x8xf32> to vector<16x1x8xf32>
    %99 = vector.shape_cast %98 : vector<16x1x8xf32> to vector<16x1x1x8xf32>
    %c1_109 = arith.constant 1 : index
    %c1_110 = arith.constant 1 : index
    %c5_111 = arith.constant 5 : index
    %c0_112 = arith.constant 0 : index
    %100 = vector.load %arg17[%c1_109, %c1_110, %c5_111, %c0_112] : memref<18x2x9x8xf32, #tpu.memory_space<vmem>>, vector<16x1x1x8xf32>
    tpu.vector_store %arg17[%c1_109, %c1_110, %c5_111, %c0_112], %99 {strides = array<i32>} : memref<18x2x9x8xf32, #tpu.memory_space<vmem>>, vector<16x1x1x8xf32>,
    %101 = vector.extract_strided_slice %59 {offsets = [0, 11, 0], sizes = [16, 1, 8], strides = [1, 1, 1]} : vector<16x16x8xf32> to vector<16x1x8xf32>
    %102 = vector.shape_cast %101 : vector<16x1x8xf32> to vector<16x1x1x8xf32>
    %c1_113 = arith.constant 1 : index
    %c0_114 = arith.constant 0 : index
    %c6_115 = arith.constant 6 : index
    %c0_116 = arith.constant 0 : index
    %103 = vector.load %arg17[%c1_113, %c0_114, %c6_115, %c0_116] : memref<18x2x9x8xf32, #tpu.memory_space<vmem>>, vector<16x1x1x8xf32>
    tpu.vector_store %arg17[%c1_113, %c0_114, %c6_115, %c0_116], %102 {strides = array<i32>} : memref<18x2x9x8xf32, #tpu.memory_space<vmem>>, vector<16x1x1x8xf32>,
    %104 = vector.extract_strided_slice %59 {offsets = [0, 12, 0], sizes = [16, 1, 8], strides = [1, 1, 1]} : vector<16x16x8xf32> to vector<16x1x8xf32>
    %105 = vector.shape_cast %104 : vector<16x1x8xf32> to vector<16x1x1x8xf32>
    %c1_117 = arith.constant 1 : index
    %c1_118 = arith.constant 1 : index
    %c6_119 = arith.constant 6 : index
    %c0_120 = arith.constant 0 : index
    %106 = vector.load %arg17[%c1_117, %c1_118, %c6_119, %c0_120] : memref<18x2x9x8xf32, #tpu.memory_space<vmem>>, vector<16x1x1x8xf32>
    tpu.vector_store %arg17[%c1_117, %c1_118, %c6_119, %c0_120], %105 {strides = array<i32>} : memref<18x2x9x8xf32, #tpu.memory_space<vmem>>, vector<16x1x1x8xf32>,
    %107 = vector.extract_strided_slice %59 {offsets = [0, 13, 0], sizes = [16, 1, 8], strides = [1, 1, 1]} : vector<16x16x8xf32> to vector<16x1x8xf32>
    %108 = vector.shape_cast %107 : vector<16x1x8xf32> to vector<16x1x1x8xf32>
    %c1_121 = arith.constant 1 : index
    %c0_122 = arith.constant 0 : index
    %c7 = arith.constant 7 : index
    %c0_123 = arith.constant 0 : index
    %109 = vector.load %arg17[%c1_121, %c0_122, %c7, %c0_123] : memref<18x2x9x8xf32, #tpu.memory_space<vmem>>, vector<16x1x1x8xf32>
    tpu.vector_store %arg17[%c1_121, %c0_122, %c7, %c0_123], %108 {strides = array<i32>} : memref<18x2x9x8xf32, #tpu.memory_space<vmem>>, vector<16x1x1x8xf32>,
    %110 = vector.extract_strided_slice %59 {offsets = [0, 14, 0], sizes = [16, 1, 8], strides = [1, 1, 1]} : vector<16x16x8xf32> to vector<16x1x8xf32>
    %111 = vector.shape_cast %110 : vector<16x1x8xf32> to vector<16x1x1x8xf32>
    %c1_124 = arith.constant 1 : index
    %c1_125 = arith.constant 1 : index
    %c7_126 = arith.constant 7 : index
    %c0_127 = arith.constant 0 : index
    %112 = vector.load %arg17[%c1_124, %c1_125, %c7_126, %c0_127] : memref<18x2x9x8xf32, #tpu.memory_space<vmem>>, vector<16x1x1x8xf32>
    tpu.vector_store %arg17[%c1_124, %c1_125, %c7_126, %c0_127], %111 {strides = array<i32>} : memref<18x2x9x8xf32, #tpu.memory_space<vmem>>, vector<16x1x1x8xf32>,
    %113 = vector.extract_strided_slice %59 {offsets = [0, 15, 0], sizes = [16, 1, 8], strides = [1, 1, 1]} : vector<16x16x8xf32> to vector<16x1x8xf32>
    %114 = vector.shape_cast %113 : vector<16x1x8xf32> to vector<16x1x1x8xf32>
    %c1_128 = arith.constant 1 : index
    %c0_129 = arith.constant 0 : index
    %c8_130 = arith.constant 8 : index
    %c0_131 = arith.constant 0 : index
    %115 = vector.load %arg17[%c1_128, %c0_129, %c8_130, %c0_131] : memref<18x2x9x8xf32, #tpu.memory_space<vmem>>, vector<16x1x1x8xf32>
    tpu.vector_store %arg17[%c1_128, %c0_129, %c8_130, %c0_131], %114 {strides = array<i32>} : memref<18x2x9x8xf32, #tpu.memory_space<vmem>>, vector<16x1x1x8xf32>,
    %c0_132 = arith.constant 0 : index
    %c0_133 = arith.constant 0 : index
    %c0_134 = arith.constant 0 : index
    %c0_135 = arith.constant 0 : index
    %116 = vector.load %arg17[%c0_132, %c0_133, %c0_134, %c0_135] : memref<18x2x9x8xf32, #tpu.memory_space<vmem>>, vector<18x2x9x8xf32>
    %117 = vector.shape_cast %116 : vector<18x2x9x8xf32> to vector<9x2x2x9x8xf32>
    %118 = vector.extract_strided_slice %117 {offsets = [0, 0, 0, 0, 0], sizes = [8, 1, 1, 8, 8], strides = [1, 1, 1, 1, 1]} : vector<9x2x2x9x8xf32> to vector<8x1x1x8x8xf32>
    %119 = vector.shape_cast %118 : vector<8x1x1x8x8xf32> to vector<8x8x8xf32>
    %c0_136 = arith.constant 0 : index
    %c0_137 = arith.constant 0 : index
    %c0_138 = arith.constant 0 : index
    %120 = vector.load %arg22[%c0_136, %c0_137, %c0_138] : memref<8x8x128xf32, #tpu.memory_space<vmem>>, vector<8x8x8xf32>
    tpu.vector_store %arg22[%c0_136, %c0_137, %c0_138], %119 {strides = array<i32>} : memref<8x8x128xf32, #tpu.memory_space<vmem>>, vector<8x8x8xf32>,
    %121 = vector.extract_strided_slice %117 {offsets = [0, 0, 1, 0, 0], sizes = [8, 1, 1, 8, 8], strides = [1, 1, 1, 1, 1]} : vector<9x2x2x9x8xf32> to vector<8x1x1x8x8xf32>
    %122 = vector.shape_cast %121 : vector<8x1x1x8x8xf32> to vector<8x8x8xf32>
    %c0_139 = arith.constant 0 : index
    %c0_140 = arith.constant 0 : index
    %c8_141 = arith.constant 8 : index
    %123 = vector.load %arg22[%c0_139, %c0_140, %c8_141] : memref<8x8x128xf32, #tpu.memory_space<vmem>>, vector<8x8x8xf32>
    tpu.vector_store %arg22[%c0_139, %c0_140, %c8_141], %122 {strides = array<i32>} : memref<8x8x128xf32, #tpu.memory_space<vmem>>, vector<8x8x8xf32>,
    %124 = vector.extract_strided_slice %117 {offsets = [0, 0, 0, 1, 0], sizes = [8, 1, 1, 8, 8], strides = [1, 1, 1, 1, 1]} : vector<9x2x2x9x8xf32> to vector<8x1x1x8x8xf32>
    %125 = vector.shape_cast %124 : vector<8x1x1x8x8xf32> to vector<8x8x8xf32>
    %c0_142 = arith.constant 0 : index
    %c0_143 = arith.constant 0 : index
    %c16 = arith.constant 16 : index
    %126 = vector.load %arg22[%c0_142, %c0_143, %c16] : memref<8x8x128xf32, #tpu.memory_space<vmem>>, vector<8x8x8xf32>
    tpu.vector_store %arg22[%c0_142, %c0_143, %c16], %125 {strides = array<i32>} : memref<8x8x128xf32, #tpu.memory_space<vmem>>, vector<8x8x8xf32>,
    %127 = vector.extract_strided_slice %117 {offsets = [0, 0, 1, 1, 0], sizes = [8, 1, 1, 8, 8], strides = [1, 1, 1, 1, 1]} : vector<9x2x2x9x8xf32> to vector<8x1x1x8x8xf32>
    %128 = vector.shape_cast %127 : vector<8x1x1x8x8xf32> to vector<8x8x8xf32>
    %c0_144 = arith.constant 0 : index
    %c0_145 = arith.constant 0 : index
    %c24 = arith.constant 24 : index
    %129 = vector.load %arg22[%c0_144, %c0_145, %c24] : memref<8x8x128xf32, #tpu.memory_space<vmem>>, vector<8x8x8xf32>
    tpu.vector_store %arg22[%c0_144, %c0_145, %c24], %128 {strides = array<i32>} : memref<8x8x128xf32, #tpu.memory_space<vmem>>, vector<8x8x8xf32>,
    %130 = vector.extract_strided_slice %117 {offsets = [0, 1, 0, 0, 0], sizes = [8, 1, 1, 8, 8], strides = [1, 1, 1, 1, 1]} : vector<9x2x2x9x8xf32> to vector<8x1x1x8x8xf32>
    %131 = vector.shape_cast %130 : vector<8x1x1x8x8xf32> to vector<8x8x8xf32>
    %c0_146 = arith.constant 0 : index
    %c0_147 = arith.constant 0 : index
    %c32 = arith.constant 32 : index
    %132 = vector.load %arg22[%c0_146, %c0_147, %c32] : memref<8x8x128xf32, #tpu.memory_space<vmem>>, vector<8x8x8xf32>
    tpu.vector_store %arg22[%c0_146, %c0_147, %c32], %131 {strides = array<i32>} : memref<8x8x128xf32, #tpu.memory_space<vmem>>, vector<8x8x8xf32>,
    %133 = vector.extract_strided_slice %117 {offsets = [0, 1, 1, 0, 0], sizes = [8, 1, 1, 8, 8], strides = [1, 1, 1, 1, 1]} : vector<9x2x2x9x8xf32> to vector<8x1x1x8x8xf32>
    %134 = vector.shape_cast %133 : vector<8x1x1x8x8xf32> to vector<8x8x8xf32>
    %c0_148 = arith.constant 0 : index
    %c0_149 = arith.constant 0 : index
    %c40 = arith.constant 40 : index
    %135 = vector.load %arg22[%c0_148, %c0_149, %c40] : memref<8x8x128xf32, #tpu.memory_space<vmem>>, vector<8x8x8xf32>
    tpu.vector_store %arg22[%c0_148, %c0_149, %c40], %134 {strides = array<i32>} : memref<8x8x128xf32, #tpu.memory_space<vmem>>, vector<8x8x8xf32>,
    %136 = vector.extract_strided_slice %117 {offsets = [0, 1, 0, 1, 0], sizes = [8, 1, 1, 8, 8], strides = [1, 1, 1, 1, 1]} : vector<9x2x2x9x8xf32> to vector<8x1x1x8x8xf32>
    %137 = vector.shape_cast %136 : vector<8x1x1x8x8xf32> to vector<8x8x8xf32>
    %c0_150 = arith.constant 0 : index
    %c0_151 = arith.constant 0 : index
    %c48 = arith.constant 48 : index
    %138 = vector.load %arg22[%c0_150, %c0_151, %c48] : memref<8x8x128xf32, #tpu.memory_space<vmem>>, vector<8x8x8xf32>
    tpu.vector_store %arg22[%c0_150, %c0_151, %c48], %137 {strides = array<i32>} : memref<8x8x128xf32, #tpu.memory_space<vmem>>, vector<8x8x8xf32>,
    %139 = vector.extract_strided_slice %117 {offsets = [0, 1, 1, 1, 0], sizes = [8, 1, 1, 8, 8], strides = [1, 1, 1, 1, 1]} : vector<9x2x2x9x8xf32> to vector<8x1x1x8x8xf32>
    %140 = vector.shape_cast %139 : vector<8x1x1x8x8xf32> to vector<8x8x8xf32>
    %c0_152 = arith.constant 0 : index
    %c0_153 = arith.constant 0 : index
    %c56 = arith.constant 56 : index
    %141 = vector.load %arg22[%c0_152, %c0_153, %c56] : memref<8x8x128xf32, #tpu.memory_space<vmem>>, vector<8x8x8xf32>
    tpu.vector_store %arg22[%c0_152, %c0_153, %c56], %140 {strides = array<i32>} : memref<8x8x128xf32, #tpu.memory_space<vmem>>, vector<8x8x8xf32>,
    %142 = vector.extract_strided_slice %117 {offsets = [1, 0, 0, 0, 0], sizes = [8, 1, 1, 8, 8], strides = [1, 1, 1, 1, 1]} : vector<9x2x2x9x8xf32> to vector<8x1x1x8x8xf32>
    %143 = vector.shape_cast %142 : vector<8x1x1x8x8xf32> to vector<8x8x8xf32>
    %c0_154 = arith.constant 0 : index
    %c0_155 = arith.constant 0 : index
    %c64 = arith.constant 64 : index
    %144 = vector.load %arg22[%c0_154, %c0_155, %c64] : memref<8x8x128xf32, #tpu.memory_space<vmem>>, vector<8x8x8xf32>
    tpu.vector_store %arg22[%c0_154, %c0_155, %c64], %143 {strides = array<i32>} : memref<8x8x128xf32, #tpu.memory_space<vmem>>, vector<8x8x8xf32>,
    %145 = vector.extract_strided_slice %117 {offsets = [1, 0, 1, 0, 0], sizes = [8, 1, 1, 8, 8], strides = [1, 1, 1, 1, 1]} : vector<9x2x2x9x8xf32> to vector<8x1x1x8x8xf32>
    %146 = vector.shape_cast %145 : vector<8x1x1x8x8xf32> to vector<8x8x8xf32>
    %c0_156 = arith.constant 0 : index
    %c0_157 = arith.constant 0 : index
    %c72 = arith.constant 72 : index
    %147 = vector.load %arg22[%c0_156, %c0_157, %c72] : memref<8x8x128xf32, #tpu.memory_space<vmem>>, vector<8x8x8xf32>
    tpu.vector_store %arg22[%c0_156, %c0_157, %c72], %146 {strides = array<i32>} : memref<8x8x128xf32, #tpu.memory_space<vmem>>, vector<8x8x8xf32>,
    %148 = vector.extract_strided_slice %117 {offsets = [1, 0, 0, 1, 0], sizes = [8, 1, 1, 8, 8], strides = [1, 1, 1, 1, 1]} : vector<9x2x2x9x8xf32> to vector<8x1x1x8x8xf32>
    %149 = vector.shape_cast %148 : vector<8x1x1x8x8xf32> to vector<8x8x8xf32>
    %c0_158 = arith.constant 0 : index
    %c0_159 = arith.constant 0 : index
    %c80 = arith.constant 80 : index
    %150 = vector.load %arg22[%c0_158, %c0_159, %c80] : memref<8x8x128xf32, #tpu.memory_space<vmem>>, vector<8x8x8xf32>
    tpu.vector_store %arg22[%c0_158, %c0_159, %c80], %149 {strides = array<i32>} : memref<8x8x128xf32, #tpu.memory_space<vmem>>, vector<8x8x8xf32>,
    %151 = vector.extract_strided_slice %117 {offsets = [1, 0, 1, 1, 0], sizes = [8, 1, 1, 8, 8], strides = [1, 1, 1, 1, 1]} : vector<9x2x2x9x8xf32> to vector<8x1x1x8x8xf32>
    %152 = vector.shape_cast %151 : vector<8x1x1x8x8xf32> to vector<8x8x8xf32>
    %c0_160 = arith.constant 0 : index
    %c0_161 = arith.constant 0 : index
    %c88 = arith.constant 88 : index
    %153 = vector.load %arg22[%c0_160, %c0_161, %c88] : memref<8x8x128xf32, #tpu.memory_space<vmem>>, vector<8x8x8xf32>
    tpu.vector_store %arg22[%c0_160, %c0_161, %c88], %152 {strides = array<i32>} : memref<8x8x128xf32, #tpu.memory_space<vmem>>, vector<8x8x8xf32>,
    %154 = vector.extract_strided_slice %117 {offsets = [1, 1, 0, 0, 0], sizes = [8, 1, 1, 8, 8], strides = [1, 1, 1, 1, 1]} : vector<9x2x2x9x8xf32> to vector<8x1x1x8x8xf32>
    %155 = vector.shape_cast %154 : vector<8x1x1x8x8xf32> to vector<8x8x8xf32>
    %c0_162 = arith.constant 0 : index
    %c0_163 = arith.constant 0 : index
    %c96 = arith.constant 96 : index
    %156 = vector.load %arg22[%c0_162, %c0_163, %c96] : memref<8x8x128xf32, #tpu.memory_space<vmem>>, vector<8x8x8xf32>
    tpu.vector_store %arg22[%c0_162, %c0_163, %c96], %155 {strides = array<i32>} : memref<8x8x128xf32, #tpu.memory_space<vmem>>, vector<8x8x8xf32>,
    %157 = vector.extract_strided_slice %117 {offsets = [1, 1, 1, 0, 0], sizes = [8, 1, 1, 8, 8], strides = [1, 1, 1, 1, 1]} : vector<9x2x2x9x8xf32> to vector<8x1x1x8x8xf32>
    %158 = vector.shape_cast %157 : vector<8x1x1x8x8xf32> to vector<8x8x8xf32>
    %c0_164 = arith.constant 0 : index
    %c0_165 = arith.constant 0 : index
    %c104 = arith.constant 104 : index
    %159 = vector.load %arg22[%c0_164, %c0_165, %c104] : memref<8x8x128xf32, #tpu.memory_space<vmem>>, vector<8x8x8xf32>
    tpu.vector_store %arg22[%c0_164, %c0_165, %c104], %158 {strides = array<i32>} : memref<8x8x128xf32, #tpu.memory_space<vmem>>, vector<8x8x8xf32>,
    %160 = vector.extract_strided_slice %117 {offsets = [1, 1, 0, 1, 0], sizes = [8, 1, 1, 8, 8], strides = [1, 1, 1, 1, 1]} : vector<9x2x2x9x8xf32> to vector<8x1x1x8x8xf32>
    %161 = vector.shape_cast %160 : vector<8x1x1x8x8xf32> to vector<8x8x8xf32>
    %c0_166 = arith.constant 0 : index
    %c0_167 = arith.constant 0 : index
    %c112 = arith.constant 112 : index
    %162 = vector.load %arg22[%c0_166, %c0_167, %c112] : memref<8x8x128xf32, #tpu.memory_space<vmem>>, vector<8x8x8xf32>
    tpu.vector_store %arg22[%c0_166, %c0_167, %c112], %161 {strides = array<i32>} : memref<8x8x128xf32, #tpu.memory_space<vmem>>, vector<8x8x8xf32>,
    %163 = vector.extract_strided_slice %117 {offsets = [1, 1, 1, 1, 0], sizes = [8, 1, 1, 8, 8], strides = [1, 1, 1, 1, 1]} : vector<9x2x2x9x8xf32> to vector<8x1x1x8x8xf32>
    %164 = vector.shape_cast %163 : vector<8x1x1x8x8xf32> to vector<8x8x8xf32>
    %c0_168 = arith.constant 0 : index
    %c0_169 = arith.constant 0 : index
    %c120 = arith.constant 120 : index
    %165 = vector.load %arg22[%c0_168, %c0_169, %c120] : memref<8x8x128xf32, #tpu.memory_space<vmem>>, vector<8x8x8xf32>
    tpu.vector_store %arg22[%c0_168, %c0_169, %c120], %164 {strides = array<i32>} : memref<8x8x128xf32, #tpu.memory_space<vmem>>, vector<8x8x8xf32>,
    %c0_170 = arith.constant 0 : index
    %c0_171 = arith.constant 0 : index
    %c0_172 = arith.constant 0 : index
    %166 = vector.load %arg22[%c0_170, %c0_171, %c0_172] : memref<8x8x128xf32, #tpu.memory_space<vmem>>, vector<8x8x128xf32>
    %167 = vector.shape_cast %166 : vector<8x8x128xf32> to vector<64x128xf32>
    %c0_173 = arith.constant 0 : index
    %c0_174 = arith.constant 0 : index
    %168 = vector.load %arg7[%c0_173, %c0_174] : memref<128x16xf32, #tpu.memory_space<vmem>>, vector<128x16xf32>
    %cst_175 = arith.constant dense<0.000000e+00> : vector<64x16xf32>
    %169 = tpu.matmul %167, %168, %cst_175 {dimension_numbers = #tpu.dot_dimension_numbers<[1], [0], [0], [1], [0, 0, 1, 1], [], []>} : vector<64x128xf32>, vector<128x16xf32>, vector<64x16xf32> -> vector<64x16xf32>
    %c0_176 = arith.constant 0 : index
    %c0_177 = arith.constant 0 : index
    %170 = vector.load %arg8[%c0_176, %c0_177] : memref<1x16xf32, #tpu.memory_space<vmem>>, vector<1x16xf32>
    %171 = vector.broadcast %170 : vector<1x16xf32> to vector<64x16xf32>
    %172 = arith.addf %169, %171 : vector<64x16xf32>
    %cst_178 = arith.constant 0.000000e+00 : f32
    %173 = vector.broadcast %cst_178 : f32 to vector<64x16xf32>
    %174 = arith.cmpf ogt, %172, %173 : vector<64x16xf32>
    %cst_179 = arith.constant 2.000000e-01 : f32
    %175 = vector.broadcast %cst_179 : f32 to vector<64x16xf32>
    %176 = arith.mulf %175, %172 : vector<64x16xf32>
    %177 = arith.select %174, %172, %176 : vector<64x16xi1>, vector<64x16xf32>
    %178 = vector.shape_cast %177 : vector<64x16xf32> to vector<8x8x16xf32>
    %cst_180 = arith.constant 0.000000e+00 : f32
    %179 = vector.broadcast %cst_180 : f32 to vector<1x2x5x16xf32>
    %c0_181 = arith.constant 0 : index
    %c0_182 = arith.constant 0 : index
    %c0_183 = arith.constant 0 : index
    %c0_184 = arith.constant 0 : index
    %180 = vector.load %arg18[%c0_181, %c0_182, %c0_183, %c0_184] : memref<10x2x5x16xf32, #tpu.memory_space<vmem>>, vector<1x2x5x16xf32>
    tpu.vector_store %arg18[%c0_181, %c0_182, %c0_183, %c0_184], %179 {strides = array<i32>} : memref<10x2x5x16xf32, #tpu.memory_space<vmem>>, vector<1x2x5x16xf32>,
    %cst_185 = arith.constant 0.000000e+00 : f32
    %181 = vector.broadcast %cst_185 : f32 to vector<1x2x5x16xf32>
    %c9_186 = arith.constant 9 : index
    %c0_187 = arith.constant 0 : index
    %c0_188 = arith.constant 0 : index
    %c0_189 = arith.constant 0 : index
    %182 = vector.load %arg18[%c9_186, %c0_187, %c0_188, %c0_189] : memref<10x2x5x16xf32, #tpu.memory_space<vmem>>, vector<1x2x5x16xf32>
    tpu.vector_store %arg18[%c9_186, %c0_187, %c0_188, %c0_189], %181 {strides = array<i32>} : memref<10x2x5x16xf32, #tpu.memory_space<vmem>>, vector<1x2x5x16xf32>,
    %cst_190 = arith.constant 0.000000e+00 : f32
    %183 = vector.broadcast %cst_190 : f32 to vector<10x1x1x16xf32>
    %c0_191 = arith.constant 0 : index
    %c0_192 = arith.constant 0 : index
    %c0_193 = arith.constant 0 : index
    %c0_194 = arith.constant 0 : index
    %184 = vector.load %arg18[%c0_191, %c0_192, %c0_193, %c0_194] : memref<10x2x5x16xf32, #tpu.memory_space<vmem>>, vector<10x1x1x16xf32>
    tpu.vector_store %arg18[%c0_191, %c0_192, %c0_193, %c0_194], %183 {strides = array<i32>} : memref<10x2x5x16xf32, #tpu.memory_space<vmem>>, vector<10x1x1x16xf32>,
    %cst_195 = arith.constant 0.000000e+00 : f32
    %185 = vector.broadcast %cst_195 : f32 to vector<10x1x1x16xf32>
    %c0_196 = arith.constant 0 : index
    %c1_197 = arith.constant 1 : index
    %c4_198 = arith.constant 4 : index
    %c0_199 = arith.constant 0 : index
    %186 = vector.load %arg18[%c0_196, %c1_197, %c4_198, %c0_199] : memref<10x2x5x16xf32, #tpu.memory_space<vmem>>, vector<10x1x1x16xf32>
    tpu.vector_store %arg18[%c0_196, %c1_197, %c4_198, %c0_199], %185 {strides = array<i32>} : memref<10x2x5x16xf32, #tpu.memory_space<vmem>>, vector<10x1x1x16xf32>,
    %187 = vector.extract_strided_slice %178 {offsets = [0, 0, 0], sizes = [8, 1, 16], strides = [1, 1, 1]} : vector<8x8x16xf32> to vector<8x1x16xf32>
    %188 = vector.shape_cast %187 : vector<8x1x16xf32> to vector<8x1x1x16xf32>
    %c1_200 = arith.constant 1 : index
    %c1_201 = arith.constant 1 : index
    %c0_202 = arith.constant 0 : index
    %c0_203 = arith.constant 0 : index
    %189 = vector.load %arg18[%c1_200, %c1_201, %c0_202, %c0_203] : memref<10x2x5x16xf32, #tpu.memory_space<vmem>>, vector<8x1x1x16xf32>
    tpu.vector_store %arg18[%c1_200, %c1_201, %c0_202, %c0_203], %188 {strides = array<i32>} : memref<10x2x5x16xf32, #tpu.memory_space<vmem>>, vector<8x1x1x16xf32>,
    %190 = vector.extract_strided_slice %178 {offsets = [0, 1, 0], sizes = [8, 1, 16], strides = [1, 1, 1]} : vector<8x8x16xf32> to vector<8x1x16xf32>
    %191 = vector.shape_cast %190 : vector<8x1x16xf32> to vector<8x1x1x16xf32>
    %c1_204 = arith.constant 1 : index
    %c0_205 = arith.constant 0 : index
    %c1_206 = arith.constant 1 : index
    %c0_207 = arith.constant 0 : index
    %192 = vector.load %arg18[%c1_204, %c0_205, %c1_206, %c0_207] : memref<10x2x5x16xf32, #tpu.memory_space<vmem>>, vector<8x1x1x16xf32>
    tpu.vector_store %arg18[%c1_204, %c0_205, %c1_206, %c0_207], %191 {strides = array<i32>} : memref<10x2x5x16xf32, #tpu.memory_space<vmem>>, vector<8x1x1x16xf32>,
    %193 = vector.extract_strided_slice %178 {offsets = [0, 2, 0], sizes = [8, 1, 16], strides = [1, 1, 1]} : vector<8x8x16xf32> to vector<8x1x16xf32>
    %194 = vector.shape_cast %193 : vector<8x1x16xf32> to vector<8x1x1x16xf32>
    %c1_208 = arith.constant 1 : index
    %c1_209 = arith.constant 1 : index
    %c1_210 = arith.constant 1 : index
    %c0_211 = arith.constant 0 : index
    %195 = vector.load %arg18[%c1_208, %c1_209, %c1_210, %c0_211] : memref<10x2x5x16xf32, #tpu.memory_space<vmem>>, vector<8x1x1x16xf32>
    tpu.vector_store %arg18[%c1_208, %c1_209, %c1_210, %c0_211], %194 {strides = array<i32>} : memref<10x2x5x16xf32, #tpu.memory_space<vmem>>, vector<8x1x1x16xf32>,
    %196 = vector.extract_strided_slice %178 {offsets = [0, 3, 0], sizes = [8, 1, 16], strides = [1, 1, 1]} : vector<8x8x16xf32> to vector<8x1x16xf32>
    %197 = vector.shape_cast %196 : vector<8x1x16xf32> to vector<8x1x1x16xf32>
    %c1_212 = arith.constant 1 : index
    %c0_213 = arith.constant 0 : index
    %c2_214 = arith.constant 2 : index
    %c0_215 = arith.constant 0 : index
    %198 = vector.load %arg18[%c1_212, %c0_213, %c2_214, %c0_215] : memref<10x2x5x16xf32, #tpu.memory_space<vmem>>, vector<8x1x1x16xf32>
    tpu.vector_store %arg18[%c1_212, %c0_213, %c2_214, %c0_215], %197 {strides = array<i32>} : memref<10x2x5x16xf32, #tpu.memory_space<vmem>>, vector<8x1x1x16xf32>,
    %199 = vector.extract_strided_slice %178 {offsets = [0, 4, 0], sizes = [8, 1, 16], strides = [1, 1, 1]} : vector<8x8x16xf32> to vector<8x1x16xf32>
    %200 = vector.shape_cast %199 : vector<8x1x16xf32> to vector<8x1x1x16xf32>
    %c1_216 = arith.constant 1 : index
    %c1_217 = arith.constant 1 : index
    %c2_218 = arith.constant 2 : index
    %c0_219 = arith.constant 0 : index
    %201 = vector.load %arg18[%c1_216, %c1_217, %c2_218, %c0_219] : memref<10x2x5x16xf32, #tpu.memory_space<vmem>>, vector<8x1x1x16xf32>
    tpu.vector_store %arg18[%c1_216, %c1_217, %c2_218, %c0_219], %200 {strides = array<i32>} : memref<10x2x5x16xf32, #tpu.memory_space<vmem>>, vector<8x1x1x16xf32>,
    %202 = vector.extract_strided_slice %178 {offsets = [0, 5, 0], sizes = [8, 1, 16], strides = [1, 1, 1]} : vector<8x8x16xf32> to vector<8x1x16xf32>
    %203 = vector.shape_cast %202 : vector<8x1x16xf32> to vector<8x1x1x16xf32>
    %c1_220 = arith.constant 1 : index
    %c0_221 = arith.constant 0 : index
    %c3_222 = arith.constant 3 : index
    %c0_223 = arith.constant 0 : index
    %204 = vector.load %arg18[%c1_220, %c0_221, %c3_222, %c0_223] : memref<10x2x5x16xf32, #tpu.memory_space<vmem>>, vector<8x1x1x16xf32>
    tpu.vector_store %arg18[%c1_220, %c0_221, %c3_222, %c0_223], %203 {strides = array<i32>} : memref<10x2x5x16xf32, #tpu.memory_space<vmem>>, vector<8x1x1x16xf32>,
    %205 = vector.extract_strided_slice %178 {offsets = [0, 6, 0], sizes = [8, 1, 16], strides = [1, 1, 1]} : vector<8x8x16xf32> to vector<8x1x16xf32>
    %206 = vector.shape_cast %205 : vector<8x1x16xf32> to vector<8x1x1x16xf32>
    %c1_224 = arith.constant 1 : index
    %c1_225 = arith.constant 1 : index
    %c3_226 = arith.constant 3 : index
    %c0_227 = arith.constant 0 : index
    %207 = vector.load %arg18[%c1_224, %c1_225, %c3_226, %c0_227] : memref<10x2x5x16xf32, #tpu.memory_space<vmem>>, vector<8x1x1x16xf32>
    tpu.vector_store %arg18[%c1_224, %c1_225, %c3_226, %c0_227], %206 {strides = array<i32>} : memref<10x2x5x16xf32, #tpu.memory_space<vmem>>, vector<8x1x1x16xf32>,
    %208 = vector.extract_strided_slice %178 {offsets = [0, 7, 0], sizes = [8, 1, 16], strides = [1, 1, 1]} : vector<8x8x16xf32> to vector<8x1x16xf32>
    %209 = vector.shape_cast %208 : vector<8x1x16xf32> to vector<8x1x1x16xf32>
    %c1_228 = arith.constant 1 : index
    %c0_229 = arith.constant 0 : index
    %c4_230 = arith.constant 4 : index
    %c0_231 = arith.constant 0 : index
    %210 = vector.load %arg18[%c1_228, %c0_229, %c4_230, %c0_231] : memref<10x2x5x16xf32, #tpu.memory_space<vmem>>, vector<8x1x1x16xf32>
    tpu.vector_store %arg18[%c1_228, %c0_229, %c4_230, %c0_231], %209 {strides = array<i32>} : memref<10x2x5x16xf32, #tpu.memory_space<vmem>>, vector<8x1x1x16xf32>,
    %c0_232 = arith.constant 0 : index
    %c0_233 = arith.constant 0 : index
    %c0_234 = arith.constant 0 : index
    %c0_235 = arith.constant 0 : index
    %211 = vector.load %arg18[%c0_232, %c0_233, %c0_234, %c0_235] : memref<10x2x5x16xf32, #tpu.memory_space<vmem>>, vector<10x2x5x16xf32>
    %212 = vector.shape_cast %211 : vector<10x2x5x16xf32> to vector<5x2x2x5x16xf32>
    %213 = vector.extract_strided_slice %212 {offsets = [0, 0, 0, 0, 0], sizes = [4, 1, 1, 4, 16], strides = [1, 1, 1, 1, 1]} : vector<5x2x2x5x16xf32> to vector<4x1x1x4x16xf32>
    %214 = vector.shape_cast %213 : vector<4x1x1x4x16xf32> to vector<4x4x16xf32>
    %c0_236 = arith.constant 0 : index
    %c0_237 = arith.constant 0 : index
    %c0_238 = arith.constant 0 : index
    %215 = vector.load %arg23[%c0_236, %c0_237, %c0_238] : memref<4x4x256xf32, #tpu.memory_space<vmem>>, vector<4x4x16xf32>
    tpu.vector_store %arg23[%c0_236, %c0_237, %c0_238], %214 {strides = array<i32>} : memref<4x4x256xf32, #tpu.memory_space<vmem>>, vector<4x4x16xf32>,
    %216 = vector.extract_strided_slice %212 {offsets = [0, 0, 1, 0, 0], sizes = [4, 1, 1, 4, 16], strides = [1, 1, 1, 1, 1]} : vector<5x2x2x5x16xf32> to vector<4x1x1x4x16xf32>
    %217 = vector.shape_cast %216 : vector<4x1x1x4x16xf32> to vector<4x4x16xf32>
    %c0_239 = arith.constant 0 : index
    %c0_240 = arith.constant 0 : index
    %c16_241 = arith.constant 16 : index
    %218 = vector.load %arg23[%c0_239, %c0_240, %c16_241] : memref<4x4x256xf32, #tpu.memory_space<vmem>>, vector<4x4x16xf32>
    tpu.vector_store %arg23[%c0_239, %c0_240, %c16_241], %217 {strides = array<i32>} : memref<4x4x256xf32, #tpu.memory_space<vmem>>, vector<4x4x16xf32>,
    %219 = vector.extract_strided_slice %212 {offsets = [0, 0, 0, 1, 0], sizes = [4, 1, 1, 4, 16], strides = [1, 1, 1, 1, 1]} : vector<5x2x2x5x16xf32> to vector<4x1x1x4x16xf32>
    %220 = vector.shape_cast %219 : vector<4x1x1x4x16xf32> to vector<4x4x16xf32>
    %c0_242 = arith.constant 0 : index
    %c0_243 = arith.constant 0 : index
    %c32_244 = arith.constant 32 : index
    %221 = vector.load %arg23[%c0_242, %c0_243, %c32_244] : memref<4x4x256xf32, #tpu.memory_space<vmem>>, vector<4x4x16xf32>
    tpu.vector_store %arg23[%c0_242, %c0_243, %c32_244], %220 {strides = array<i32>} : memref<4x4x256xf32, #tpu.memory_space<vmem>>, vector<4x4x16xf32>,
    %222 = vector.extract_strided_slice %212 {offsets = [0, 0, 1, 1, 0], sizes = [4, 1, 1, 4, 16], strides = [1, 1, 1, 1, 1]} : vector<5x2x2x5x16xf32> to vector<4x1x1x4x16xf32>
    %223 = vector.shape_cast %222 : vector<4x1x1x4x16xf32> to vector<4x4x16xf32>
    %c0_245 = arith.constant 0 : index
    %c0_246 = arith.constant 0 : index
    %c48_247 = arith.constant 48 : index
    %224 = vector.load %arg23[%c0_245, %c0_246, %c48_247] : memref<4x4x256xf32, #tpu.memory_space<vmem>>, vector<4x4x16xf32>
    tpu.vector_store %arg23[%c0_245, %c0_246, %c48_247], %223 {strides = array<i32>} : memref<4x4x256xf32, #tpu.memory_space<vmem>>, vector<4x4x16xf32>,
    %225 = vector.extract_strided_slice %212 {offsets = [0, 1, 0, 0, 0], sizes = [4, 1, 1, 4, 16], strides = [1, 1, 1, 1, 1]} : vector<5x2x2x5x16xf32> to vector<4x1x1x4x16xf32>
    %226 = vector.shape_cast %225 : vector<4x1x1x4x16xf32> to vector<4x4x16xf32>
    %c0_248 = arith.constant 0 : index
    %c0_249 = arith.constant 0 : index
    %c64_250 = arith.constant 64 : index
    %227 = vector.load %arg23[%c0_248, %c0_249, %c64_250] : memref<4x4x256xf32, #tpu.memory_space<vmem>>, vector<4x4x16xf32>
    tpu.vector_store %arg23[%c0_248, %c0_249, %c64_250], %226 {strides = array<i32>} : memref<4x4x256xf32, #tpu.memory_space<vmem>>, vector<4x4x16xf32>,
    %228 = vector.extract_strided_slice %212 {offsets = [0, 1, 1, 0, 0], sizes = [4, 1, 1, 4, 16], strides = [1, 1, 1, 1, 1]} : vector<5x2x2x5x16xf32> to vector<4x1x1x4x16xf32>
    %229 = vector.shape_cast %228 : vector<4x1x1x4x16xf32> to vector<4x4x16xf32>
    %c0_251 = arith.constant 0 : index
    %c0_252 = arith.constant 0 : index
    %c80_253 = arith.constant 80 : index
    %230 = vector.load %arg23[%c0_251, %c0_252, %c80_253] : memref<4x4x256xf32, #tpu.memory_space<vmem>>, vector<4x4x16xf32>
    tpu.vector_store %arg23[%c0_251, %c0_252, %c80_253], %229 {strides = array<i32>} : memref<4x4x256xf32, #tpu.memory_space<vmem>>, vector<4x4x16xf32>,
    %231 = vector.extract_strided_slice %212 {offsets = [0, 1, 0, 1, 0], sizes = [4, 1, 1, 4, 16], strides = [1, 1, 1, 1, 1]} : vector<5x2x2x5x16xf32> to vector<4x1x1x4x16xf32>
    %232 = vector.shape_cast %231 : vector<4x1x1x4x16xf32> to vector<4x4x16xf32>
    %c0_254 = arith.constant 0 : index
    %c0_255 = arith.constant 0 : index
    %c96_256 = arith.constant 96 : index
    %233 = vector.load %arg23[%c0_254, %c0_255, %c96_256] : memref<4x4x256xf32, #tpu.memory_space<vmem>>, vector<4x4x16xf32>
    tpu.vector_store %arg23[%c0_254, %c0_255, %c96_256], %232 {strides = array<i32>} : memref<4x4x256xf32, #tpu.memory_space<vmem>>, vector<4x4x16xf32>,
    %234 = vector.extract_strided_slice %212 {offsets = [0, 1, 1, 1, 0], sizes = [4, 1, 1, 4, 16], strides = [1, 1, 1, 1, 1]} : vector<5x2x2x5x16xf32> to vector<4x1x1x4x16xf32>
    %235 = vector.shape_cast %234 : vector<4x1x1x4x16xf32> to vector<4x4x16xf32>
    %c0_257 = arith.constant 0 : index
    %c0_258 = arith.constant 0 : index
    %c112_259 = arith.constant 112 : index
    %236 = vector.load %arg23[%c0_257, %c0_258, %c112_259] : memref<4x4x256xf32, #tpu.memory_space<vmem>>, vector<4x4x16xf32>
    tpu.vector_store %arg23[%c0_257, %c0_258, %c112_259], %235 {strides = array<i32>} : memref<4x4x256xf32, #tpu.memory_space<vmem>>, vector<4x4x16xf32>,
    %237 = vector.extract_strided_slice %212 {offsets = [1, 0, 0, 0, 0], sizes = [4, 1, 1, 4, 16], strides = [1, 1, 1, 1, 1]} : vector<5x2x2x5x16xf32> to vector<4x1x1x4x16xf32>
    %238 = vector.shape_cast %237 : vector<4x1x1x4x16xf32> to vector<4x4x16xf32>
    %c0_260 = arith.constant 0 : index
    %c0_261 = arith.constant 0 : index
    %c128 = arith.constant 128 : index
    %239 = vector.load %arg23[%c0_260, %c0_261, %c128] : memref<4x4x256xf32, #tpu.memory_space<vmem>>, vector<4x4x16xf32>
    tpu.vector_store %arg23[%c0_260, %c0_261, %c128], %238 {strides = array<i32>} : memref<4x4x256xf32, #tpu.memory_space<vmem>>, vector<4x4x16xf32>,
    %240 = vector.extract_strided_slice %212 {offsets = [1, 0, 1, 0, 0], sizes = [4, 1, 1, 4, 16], strides = [1, 1, 1, 1, 1]} : vector<5x2x2x5x16xf32> to vector<4x1x1x4x16xf32>
    %241 = vector.shape_cast %240 : vector<4x1x1x4x16xf32> to vector<4x4x16xf32>
    %c0_262 = arith.constant 0 : index
    %c0_263 = arith.constant 0 : index
    %c144 = arith.constant 144 : index
    %242 = vector.load %arg23[%c0_262, %c0_263, %c144] : memref<4x4x256xf32, #tpu.memory_space<vmem>>, vector<4x4x16xf32>
    tpu.vector_store %arg23[%c0_262, %c0_263, %c144], %241 {strides = array<i32>} : memref<4x4x256xf32, #tpu.memory_space<vmem>>, vector<4x4x16xf32>,
    %243 = vector.extract_strided_slice %212 {offsets = [1, 0, 0, 1, 0], sizes = [4, 1, 1, 4, 16], strides = [1, 1, 1, 1, 1]} : vector<5x2x2x5x16xf32> to vector<4x1x1x4x16xf32>
    %244 = vector.shape_cast %243 : vector<4x1x1x4x16xf32> to vector<4x4x16xf32>
    %c0_264 = arith.constant 0 : index
    %c0_265 = arith.constant 0 : index
    %c160 = arith.constant 160 : index
    %245 = vector.load %arg23[%c0_264, %c0_265, %c160] : memref<4x4x256xf32, #tpu.memory_space<vmem>>, vector<4x4x16xf32>
    tpu.vector_store %arg23[%c0_264, %c0_265, %c160], %244 {strides = array<i32>} : memref<4x4x256xf32, #tpu.memory_space<vmem>>, vector<4x4x16xf32>,
    %246 = vector.extract_strided_slice %212 {offsets = [1, 0, 1, 1, 0], sizes = [4, 1, 1, 4, 16], strides = [1, 1, 1, 1, 1]} : vector<5x2x2x5x16xf32> to vector<4x1x1x4x16xf32>
    %247 = vector.shape_cast %246 : vector<4x1x1x4x16xf32> to vector<4x4x16xf32>
    %c0_266 = arith.constant 0 : index
    %c0_267 = arith.constant 0 : index
    %c176 = arith.constant 176 : index
    %248 = vector.load %arg23[%c0_266, %c0_267, %c176] : memref<4x4x256xf32, #tpu.memory_space<vmem>>, vector<4x4x16xf32>
    tpu.vector_store %arg23[%c0_266, %c0_267, %c176], %247 {strides = array<i32>} : memref<4x4x256xf32, #tpu.memory_space<vmem>>, vector<4x4x16xf32>,
    %249 = vector.extract_strided_slice %212 {offsets = [1, 1, 0, 0, 0], sizes = [4, 1, 1, 4, 16], strides = [1, 1, 1, 1, 1]} : vector<5x2x2x5x16xf32> to vector<4x1x1x4x16xf32>
    %250 = vector.shape_cast %249 : vector<4x1x1x4x16xf32> to vector<4x4x16xf32>
    %c0_268 = arith.constant 0 : index
    %c0_269 = arith.constant 0 : index
    %c192 = arith.constant 192 : index
    %251 = vector.load %arg23[%c0_268, %c0_269, %c192] : memref<4x4x256xf32, #tpu.memory_space<vmem>>, vector<4x4x16xf32>
    tpu.vector_store %arg23[%c0_268, %c0_269, %c192], %250 {strides = array<i32>} : memref<4x4x256xf32, #tpu.memory_space<vmem>>, vector<4x4x16xf32>,
    %252 = vector.extract_strided_slice %212 {offsets = [1, 1, 1, 0, 0], sizes = [4, 1, 1, 4, 16], strides = [1, 1, 1, 1, 1]} : vector<5x2x2x5x16xf32> to vector<4x1x1x4x16xf32>
    %253 = vector.shape_cast %252 : vector<4x1x1x4x16xf32> to vector<4x4x16xf32>
    %c0_270 = arith.constant 0 : index
    %c0_271 = arith.constant 0 : index
    %c208 = arith.constant 208 : index
    %254 = vector.load %arg23[%c0_270, %c0_271, %c208] : memref<4x4x256xf32, #tpu.memory_space<vmem>>, vector<4x4x16xf32>
    tpu.vector_store %arg23[%c0_270, %c0_271, %c208], %253 {strides = array<i32>} : memref<4x4x256xf32, #tpu.memory_space<vmem>>, vector<4x4x16xf32>,
    %255 = vector.extract_strided_slice %212 {offsets = [1, 1, 0, 1, 0], sizes = [4, 1, 1, 4, 16], strides = [1, 1, 1, 1, 1]} : vector<5x2x2x5x16xf32> to vector<4x1x1x4x16xf32>
    %256 = vector.shape_cast %255 : vector<4x1x1x4x16xf32> to vector<4x4x16xf32>
    %c0_272 = arith.constant 0 : index
    %c0_273 = arith.constant 0 : index
    %c224 = arith.constant 224 : index
    %257 = vector.load %arg23[%c0_272, %c0_273, %c224] : memref<4x4x256xf32, #tpu.memory_space<vmem>>, vector<4x4x16xf32>
    tpu.vector_store %arg23[%c0_272, %c0_273, %c224], %256 {strides = array<i32>} : memref<4x4x256xf32, #tpu.memory_space<vmem>>, vector<4x4x16xf32>,
    %258 = vector.extract_strided_slice %212 {offsets = [1, 1, 1, 1, 0], sizes = [4, 1, 1, 4, 16], strides = [1, 1, 1, 1, 1]} : vector<5x2x2x5x16xf32> to vector<4x1x1x4x16xf32>
    %259 = vector.shape_cast %258 : vector<4x1x1x4x16xf32> to vector<4x4x16xf32>
    %c0_274 = arith.constant 0 : index
    %c0_275 = arith.constant 0 : index
    %c240 = arith.constant 240 : index
    %260 = vector.load %arg23[%c0_274, %c0_275, %c240] : memref<4x4x256xf32, #tpu.memory_space<vmem>>, vector<4x4x16xf32>
    tpu.vector_store %arg23[%c0_274, %c0_275, %c240], %259 {strides = array<i32>} : memref<4x4x256xf32, #tpu.memory_space<vmem>>, vector<4x4x16xf32>,
    %c0_276 = arith.constant 0 : index
    %c0_277 = arith.constant 0 : index
    %c0_278 = arith.constant 0 : index
    %261 = vector.load %arg23[%c0_276, %c0_277, %c0_278] : memref<4x4x256xf32, #tpu.memory_space<vmem>>, vector<4x4x256xf32>
    %c0_279 = arith.constant 0 : index
    %c0_280 = arith.constant 0 : index
    %262 = vector.load %arg9[%c0_279, %c0_280] : memref<256x32xf32, #tpu.memory_space<vmem>>, vector<256x32xf32>
    %c0_281 = arith.constant 0 : index
    %c0_282 = arith.constant 0 : index
    %263 = vector.load %arg10[%c0_281, %c0_282] : memref<1x32xf32, #tpu.memory_space<vmem>>, vector<1x32xf32>
    %264 = vector.extract_strided_slice %261 {offsets = [0, 0, 0], sizes = [1, 1, 256], strides = [1, 1, 1]} : vector<4x4x256xf32> to vector<1x1x256xf32>
    %265 = vector.shape_cast %264 : vector<1x1x256xf32> to vector<1x256xf32>
    %cst_283 = arith.constant dense<0.000000e+00> : vector<1x32xf32>
    %266 = tpu.matmul %265, %262, %cst_283 {dimension_numbers = #tpu.dot_dimension_numbers<[1], [0], [0], [1], [0, 0, 1, 1], [], []>} : vector<1x256xf32>, vector<256x32xf32>, vector<1x32xf32> -> vector<1x32xf32>
    %267 = arith.addf %266, %263 : vector<1x32xf32>
    %cst_284 = arith.constant 0.000000e+00 : f32
    %268 = vector.broadcast %cst_284 : f32 to vector<1x32xf32>
    %269 = arith.cmpf ogt, %267, %268 : vector<1x32xf32>
    %cst_285 = arith.constant 2.000000e-01 : f32
    %270 = vector.broadcast %cst_285 : f32 to vector<1x32xf32>
    %271 = arith.mulf %270, %267 : vector<1x32xf32>
    %272 = arith.select %269, %267, %271 : vector<1x32xi1>, vector<1x32xf32>
    %c0_286 = arith.constant 0 : index
    %c0_287 = arith.constant 0 : index
    %273 = vector.load %arg19[%c0_286, %c0_287] : memref<1x512xf32, #tpu.memory_space<vmem>>, vector<1x32xf32>
    tpu.vector_store %arg19[%c0_286, %c0_287], %272 {strides = array<i32>} : memref<1x512xf32, #tpu.memory_space<vmem>>, vector<1x32xf32>,
    %274 = vector.extract_strided_slice %261 {offsets = [0, 1, 0], sizes = [1, 1, 256], strides = [1, 1, 1]} : vector<4x4x256xf32> to vector<1x1x256xf32>
    %275 = vector.shape_cast %274 : vector<1x1x256xf32> to vector<1x256xf32>
    %cst_288 = arith.constant dense<0.000000e+00> : vector<1x32xf32>
    %276 = tpu.matmul %275, %262, %cst_288 {dimension_numbers = #tpu.dot_dimension_numbers<[1], [0], [0], [1], [0, 0, 1, 1], [], []>} : vector<1x256xf32>, vector<256x32xf32>, vector<1x32xf32> -> vector<1x32xf32>
    %277 = arith.addf %276, %263 : vector<1x32xf32>
    %cst_289 = arith.constant 0.000000e+00 : f32
    %278 = vector.broadcast %cst_289 : f32 to vector<1x32xf32>
    %279 = arith.cmpf ogt, %277, %278 : vector<1x32xf32>
    %cst_290 = arith.constant 2.000000e-01 : f32
    %280 = vector.broadcast %cst_290 : f32 to vector<1x32xf32>
    %281 = arith.mulf %280, %277 : vector<1x32xf32>
    %282 = arith.select %279, %277, %281 : vector<1x32xi1>, vector<1x32xf32>
    %c0_291 = arith.constant 0 : index
    %c32_292 = arith.constant 32 : index
    %283 = vector.load %arg19[%c0_291, %c32_292] : memref<1x512xf32, #tpu.memory_space<vmem>>, vector<1x32xf32>
    tpu.vector_store %arg19[%c0_291, %c32_292], %282 {strides = array<i32>} : memref<1x512xf32, #tpu.memory_space<vmem>>, vector<1x32xf32>,
    %284 = vector.extract_strided_slice %261 {offsets = [0, 2, 0], sizes = [1, 1, 256], strides = [1, 1, 1]} : vector<4x4x256xf32> to vector<1x1x256xf32>
    %285 = vector.shape_cast %284 : vector<1x1x256xf32> to vector<1x256xf32>
    %cst_293 = arith.constant dense<0.000000e+00> : vector<1x32xf32>
    %286 = tpu.matmul %285, %262, %cst_293 {dimension_numbers = #tpu.dot_dimension_numbers<[1], [0], [0], [1], [0, 0, 1, 1], [], []>} : vector<1x256xf32>, vector<256x32xf32>, vector<1x32xf32> -> vector<1x32xf32>
    %287 = arith.addf %286, %263 : vector<1x32xf32>
    %cst_294 = arith.constant 0.000000e+00 : f32
    %288 = vector.broadcast %cst_294 : f32 to vector<1x32xf32>
    %289 = arith.cmpf ogt, %287, %288 : vector<1x32xf32>
    %cst_295 = arith.constant 2.000000e-01 : f32
    %290 = vector.broadcast %cst_295 : f32 to vector<1x32xf32>
    %291 = arith.mulf %290, %287 : vector<1x32xf32>
    %292 = arith.select %289, %287, %291 : vector<1x32xi1>, vector<1x32xf32>
    %c0_296 = arith.constant 0 : index
    %c64_297 = arith.constant 64 : index
    %293 = vector.load %arg19[%c0_296, %c64_297] : memref<1x512xf32, #tpu.memory_space<vmem>>, vector<1x32xf32>
    tpu.vector_store %arg19[%c0_296, %c64_297], %292 {strides = array<i32>} : memref<1x512xf32, #tpu.memory_space<vmem>>, vector<1x32xf32>,
    %294 = vector.extract_strided_slice %261 {offsets = [0, 3, 0], sizes = [1, 1, 256], strides = [1, 1, 1]} : vector<4x4x256xf32> to vector<1x1x256xf32>
    %295 = vector.shape_cast %294 : vector<1x1x256xf32> to vector<1x256xf32>
    %cst_298 = arith.constant dense<0.000000e+00> : vector<1x32xf32>
    %296 = tpu.matmul %295, %262, %cst_298 {dimension_numbers = #tpu.dot_dimension_numbers<[1], [0], [0], [1], [0, 0, 1, 1], [], []>} : vector<1x256xf32>, vector<256x32xf32>, vector<1x32xf32> -> vector<1x32xf32>
    %297 = arith.addf %296, %263 : vector<1x32xf32>
    %cst_299 = arith.constant 0.000000e+00 : f32
    %298 = vector.broadcast %cst_299 : f32 to vector<1x32xf32>
    %299 = arith.cmpf ogt, %297, %298 : vector<1x32xf32>
    %cst_300 = arith.constant 2.000000e-01 : f32
    %300 = vector.broadcast %cst_300 : f32 to vector<1x32xf32>
    %301 = arith.mulf %300, %297 : vector<1x32xf32>
    %302 = arith.select %299, %297, %301 : vector<1x32xi1>, vector<1x32xf32>
    %c0_301 = arith.constant 0 : index
    %c96_302 = arith.constant 96 : index
    %303 = vector.load %arg19[%c0_301, %c96_302] : memref<1x512xf32, #tpu.memory_space<vmem>>, vector<1x32xf32>
    tpu.vector_store %arg19[%c0_301, %c96_302], %302 {strides = array<i32>} : memref<1x512xf32, #tpu.memory_space<vmem>>, vector<1x32xf32>,
    %304 = vector.extract_strided_slice %261 {offsets = [1, 0, 0], sizes = [1, 1, 256], strides = [1, 1, 1]} : vector<4x4x256xf32> to vector<1x1x256xf32>
    %305 = vector.shape_cast %304 : vector<1x1x256xf32> to vector<1x256xf32>
    %cst_303 = arith.constant dense<0.000000e+00> : vector<1x32xf32>
    %306 = tpu.matmul %305, %262, %cst_303 {dimension_numbers = #tpu.dot_dimension_numbers<[1], [0], [0], [1], [0, 0, 1, 1], [], []>} : vector<1x256xf32>, vector<256x32xf32>, vector<1x32xf32> -> vector<1x32xf32>
    %307 = arith.addf %306, %263 : vector<1x32xf32>
    %cst_304 = arith.constant 0.000000e+00 : f32
    %308 = vector.broadcast %cst_304 : f32 to vector<1x32xf32>
    %309 = arith.cmpf ogt, %307, %308 : vector<1x32xf32>
    %cst_305 = arith.constant 2.000000e-01 : f32
    %310 = vector.broadcast %cst_305 : f32 to vector<1x32xf32>
    %311 = arith.mulf %310, %307 : vector<1x32xf32>
    %312 = arith.select %309, %307, %311 : vector<1x32xi1>, vector<1x32xf32>
    %c0_306 = arith.constant 0 : index
    %c128_307 = arith.constant 128 : index
    %313 = vector.load %arg19[%c0_306, %c128_307] : memref<1x512xf32, #tpu.memory_space<vmem>>, vector<1x32xf32>
    tpu.vector_store %arg19[%c0_306, %c128_307], %312 {strides = array<i32>} : memref<1x512xf32, #tpu.memory_space<vmem>>, vector<1x32xf32>,
    %314 = vector.extract_strided_slice %261 {offsets = [1, 1, 0], sizes = [1, 1, 256], strides = [1, 1, 1]} : vector<4x4x256xf32> to vector<1x1x256xf32>
    %315 = vector.shape_cast %314 : vector<1x1x256xf32> to vector<1x256xf32>
    %cst_308 = arith.constant dense<0.000000e+00> : vector<1x32xf32>
    %316 = tpu.matmul %315, %262, %cst_308 {dimension_numbers = #tpu.dot_dimension_numbers<[1], [0], [0], [1], [0, 0, 1, 1], [], []>} : vector<1x256xf32>, vector<256x32xf32>, vector<1x32xf32> -> vector<1x32xf32>
    %317 = arith.addf %316, %263 : vector<1x32xf32>
    %cst_309 = arith.constant 0.000000e+00 : f32
    %318 = vector.broadcast %cst_309 : f32 to vector<1x32xf32>
    %319 = arith.cmpf ogt, %317, %318 : vector<1x32xf32>
    %cst_310 = arith.constant 2.000000e-01 : f32
    %320 = vector.broadcast %cst_310 : f32 to vector<1x32xf32>
    %321 = arith.mulf %320, %317 : vector<1x32xf32>
    %322 = arith.select %319, %317, %321 : vector<1x32xi1>, vector<1x32xf32>
    %c0_311 = arith.constant 0 : index
    %c160_312 = arith.constant 160 : index
    %323 = vector.load %arg19[%c0_311, %c160_312] : memref<1x512xf32, #tpu.memory_space<vmem>>, vector<1x32xf32>
    tpu.vector_store %arg19[%c0_311, %c160_312], %322 {strides = array<i32>} : memref<1x512xf32, #tpu.memory_space<vmem>>, vector<1x32xf32>,
    %324 = vector.extract_strided_slice %261 {offsets = [1, 2, 0], sizes = [1, 1, 256], strides = [1, 1, 1]} : vector<4x4x256xf32> to vector<1x1x256xf32>
    %325 = vector.shape_cast %324 : vector<1x1x256xf32> to vector<1x256xf32>
    %cst_313 = arith.constant dense<0.000000e+00> : vector<1x32xf32>
    %326 = tpu.matmul %325, %262, %cst_313 {dimension_numbers = #tpu.dot_dimension_numbers<[1], [0], [0], [1], [0, 0, 1, 1], [], []>} : vector<1x256xf32>, vector<256x32xf32>, vector<1x32xf32> -> vector<1x32xf32>
    %327 = arith.addf %326, %263 : vector<1x32xf32>
    %cst_314 = arith.constant 0.000000e+00 : f32
    %328 = vector.broadcast %cst_314 : f32 to vector<1x32xf32>
    %329 = arith.cmpf ogt, %327, %328 : vector<1x32xf32>
    %cst_315 = arith.constant 2.000000e-01 : f32
    %330 = vector.broadcast %cst_315 : f32 to vector<1x32xf32>
    %331 = arith.mulf %330, %327 : vector<1x32xf32>
    %332 = arith.select %329, %327, %331 : vector<1x32xi1>, vector<1x32xf32>
    %c0_316 = arith.constant 0 : index
    %c192_317 = arith.constant 192 : index
    %333 = vector.load %arg19[%c0_316, %c192_317] : memref<1x512xf32, #tpu.memory_space<vmem>>, vector<1x32xf32>
    tpu.vector_store %arg19[%c0_316, %c192_317], %332 {strides = array<i32>} : memref<1x512xf32, #tpu.memory_space<vmem>>, vector<1x32xf32>,
    %334 = vector.extract_strided_slice %261 {offsets = [1, 3, 0], sizes = [1, 1, 256], strides = [1, 1, 1]} : vector<4x4x256xf32> to vector<1x1x256xf32>
    %335 = vector.shape_cast %334 : vector<1x1x256xf32> to vector<1x256xf32>
    %cst_318 = arith.constant dense<0.000000e+00> : vector<1x32xf32>
    %336 = tpu.matmul %335, %262, %cst_318 {dimension_numbers = #tpu.dot_dimension_numbers<[1], [0], [0], [1], [0, 0, 1, 1], [], []>} : vector<1x256xf32>, vector<256x32xf32>, vector<1x32xf32> -> vector<1x32xf32>
    %337 = arith.addf %336, %263 : vector<1x32xf32>
    %cst_319 = arith.constant 0.000000e+00 : f32
    %338 = vector.broadcast %cst_319 : f32 to vector<1x32xf32>
    %339 = arith.cmpf ogt, %337, %338 : vector<1x32xf32>
    %cst_320 = arith.constant 2.000000e-01 : f32
    %340 = vector.broadcast %cst_320 : f32 to vector<1x32xf32>
    %341 = arith.mulf %340, %337 : vector<1x32xf32>
    %342 = arith.select %339, %337, %341 : vector<1x32xi1>, vector<1x32xf32>
    %c0_321 = arith.constant 0 : index
    %c224_322 = arith.constant 224 : index
    %343 = vector.load %arg19[%c0_321, %c224_322] : memref<1x512xf32, #tpu.memory_space<vmem>>, vector<1x32xf32>
    tpu.vector_store %arg19[%c0_321, %c224_322], %342 {strides = array<i32>} : memref<1x512xf32, #tpu.memory_space<vmem>>, vector<1x32xf32>,
    %344 = vector.extract_strided_slice %261 {offsets = [2, 0, 0], sizes = [1, 1, 256], strides = [1, 1, 1]} : vector<4x4x256xf32> to vector<1x1x256xf32>
    %345 = vector.shape_cast %344 : vector<1x1x256xf32> to vector<1x256xf32>
    %cst_323 = arith.constant dense<0.000000e+00> : vector<1x32xf32>
    %346 = tpu.matmul %345, %262, %cst_323 {dimension_numbers = #tpu.dot_dimension_numbers<[1], [0], [0], [1], [0, 0, 1, 1], [], []>} : vector<1x256xf32>, vector<256x32xf32>, vector<1x32xf32> -> vector<1x32xf32>
    %347 = arith.addf %346, %263 : vector<1x32xf32>
    %cst_324 = arith.constant 0.000000e+00 : f32
    %348 = vector.broadcast %cst_324 : f32 to vector<1x32xf32>
    %349 = arith.cmpf ogt, %347, %348 : vector<1x32xf32>
    %cst_325 = arith.constant 2.000000e-01 : f32
    %350 = vector.broadcast %cst_325 : f32 to vector<1x32xf32>
    %351 = arith.mulf %350, %347 : vector<1x32xf32>
    %352 = arith.select %349, %347, %351 : vector<1x32xi1>, vector<1x32xf32>
    %c0_326 = arith.constant 0 : index
    %c256 = arith.constant 256 : index
    %353 = vector.load %arg19[%c0_326, %c256] : memref<1x512xf32, #tpu.memory_space<vmem>>, vector<1x32xf32>
    tpu.vector_store %arg19[%c0_326, %c256], %352 {strides = array<i32>} : memref<1x512xf32, #tpu.memory_space<vmem>>, vector<1x32xf32>,
    %354 = vector.extract_strided_slice %261 {offsets = [2, 1, 0], sizes = [1, 1, 256], strides = [1, 1, 1]} : vector<4x4x256xf32> to vector<1x1x256xf32>
    %355 = vector.shape_cast %354 : vector<1x1x256xf32> to vector<1x256xf32>
    %cst_327 = arith.constant dense<0.000000e+00> : vector<1x32xf32>
    %356 = tpu.matmul %355, %262, %cst_327 {dimension_numbers = #tpu.dot_dimension_numbers<[1], [0], [0], [1], [0, 0, 1, 1], [], []>} : vector<1x256xf32>, vector<256x32xf32>, vector<1x32xf32> -> vector<1x32xf32>
    %357 = arith.addf %356, %263 : vector<1x32xf32>
    %cst_328 = arith.constant 0.000000e+00 : f32
    %358 = vector.broadcast %cst_328 : f32 to vector<1x32xf32>
    %359 = arith.cmpf ogt, %357, %358 : vector<1x32xf32>
    %cst_329 = arith.constant 2.000000e-01 : f32
    %360 = vector.broadcast %cst_329 : f32 to vector<1x32xf32>
    %361 = arith.mulf %360, %357 : vector<1x32xf32>
    %362 = arith.select %359, %357, %361 : vector<1x32xi1>, vector<1x32xf32>
    %c0_330 = arith.constant 0 : index
    %c288 = arith.constant 288 : index
    %363 = vector.load %arg19[%c0_330, %c288] : memref<1x512xf32, #tpu.memory_space<vmem>>, vector<1x32xf32>
    tpu.vector_store %arg19[%c0_330, %c288], %362 {strides = array<i32>} : memref<1x512xf32, #tpu.memory_space<vmem>>, vector<1x32xf32>,
    %364 = vector.extract_strided_slice %261 {offsets = [2, 2, 0], sizes = [1, 1, 256], strides = [1, 1, 1]} : vector<4x4x256xf32> to vector<1x1x256xf32>
    %365 = vector.shape_cast %364 : vector<1x1x256xf32> to vector<1x256xf32>
    %cst_331 = arith.constant dense<0.000000e+00> : vector<1x32xf32>
    %366 = tpu.matmul %365, %262, %cst_331 {dimension_numbers = #tpu.dot_dimension_numbers<[1], [0], [0], [1], [0, 0, 1, 1], [], []>} : vector<1x256xf32>, vector<256x32xf32>, vector<1x32xf32> -> vector<1x32xf32>
    %367 = arith.addf %366, %263 : vector<1x32xf32>
    %cst_332 = arith.constant 0.000000e+00 : f32
    %368 = vector.broadcast %cst_332 : f32 to vector<1x32xf32>
    %369 = arith.cmpf ogt, %367, %368 : vector<1x32xf32>
    %cst_333 = arith.constant 2.000000e-01 : f32
    %370 = vector.broadcast %cst_333 : f32 to vector<1x32xf32>
    %371 = arith.mulf %370, %367 : vector<1x32xf32>
    %372 = arith.select %369, %367, %371 : vector<1x32xi1>, vector<1x32xf32>
    %c0_334 = arith.constant 0 : index
    %c320 = arith.constant 320 : index
    %373 = vector.load %arg19[%c0_334, %c320] : memref<1x512xf32, #tpu.memory_space<vmem>>, vector<1x32xf32>
    tpu.vector_store %arg19[%c0_334, %c320], %372 {strides = array<i32>} : memref<1x512xf32, #tpu.memory_space<vmem>>, vector<1x32xf32>,
    %374 = vector.extract_strided_slice %261 {offsets = [2, 3, 0], sizes = [1, 1, 256], strides = [1, 1, 1]} : vector<4x4x256xf32> to vector<1x1x256xf32>
    %375 = vector.shape_cast %374 : vector<1x1x256xf32> to vector<1x256xf32>
    %cst_335 = arith.constant dense<0.000000e+00> : vector<1x32xf32>
    %376 = tpu.matmul %375, %262, %cst_335 {dimension_numbers = #tpu.dot_dimension_numbers<[1], [0], [0], [1], [0, 0, 1, 1], [], []>} : vector<1x256xf32>, vector<256x32xf32>, vector<1x32xf32> -> vector<1x32xf32>
    %377 = arith.addf %376, %263 : vector<1x32xf32>
    %cst_336 = arith.constant 0.000000e+00 : f32
    %378 = vector.broadcast %cst_336 : f32 to vector<1x32xf32>
    %379 = arith.cmpf ogt, %377, %378 : vector<1x32xf32>
    %cst_337 = arith.constant 2.000000e-01 : f32
    %380 = vector.broadcast %cst_337 : f32 to vector<1x32xf32>
    %381 = arith.mulf %380, %377 : vector<1x32xf32>
    %382 = arith.select %379, %377, %381 : vector<1x32xi1>, vector<1x32xf32>
    %c0_338 = arith.constant 0 : index
    %c352 = arith.constant 352 : index
    %383 = vector.load %arg19[%c0_338, %c352] : memref<1x512xf32, #tpu.memory_space<vmem>>, vector<1x32xf32>
    tpu.vector_store %arg19[%c0_338, %c352], %382 {strides = array<i32>} : memref<1x512xf32, #tpu.memory_space<vmem>>, vector<1x32xf32>,
    %384 = vector.extract_strided_slice %261 {offsets = [3, 0, 0], sizes = [1, 1, 256], strides = [1, 1, 1]} : vector<4x4x256xf32> to vector<1x1x256xf32>
    %385 = vector.shape_cast %384 : vector<1x1x256xf32> to vector<1x256xf32>
    %cst_339 = arith.constant dense<0.000000e+00> : vector<1x32xf32>
    %386 = tpu.matmul %385, %262, %cst_339 {dimension_numbers = #tpu.dot_dimension_numbers<[1], [0], [0], [1], [0, 0, 1, 1], [], []>} : vector<1x256xf32>, vector<256x32xf32>, vector<1x32xf32> -> vector<1x32xf32>
    %387 = arith.addf %386, %263 : vector<1x32xf32>
    %cst_340 = arith.constant 0.000000e+00 : f32
    %388 = vector.broadcast %cst_340 : f32 to vector<1x32xf32>
    %389 = arith.cmpf ogt, %387, %388 : vector<1x32xf32>
    %cst_341 = arith.constant 2.000000e-01 : f32
    %390 = vector.broadcast %cst_341 : f32 to vector<1x32xf32>
    %391 = arith.mulf %390, %387 : vector<1x32xf32>
    %392 = arith.select %389, %387, %391 : vector<1x32xi1>, vector<1x32xf32>
    %c0_342 = arith.constant 0 : index
    %c384 = arith.constant 384 : index
    %393 = vector.load %arg19[%c0_342, %c384] : memref<1x512xf32, #tpu.memory_space<vmem>>, vector<1x32xf32>
    tpu.vector_store %arg19[%c0_342, %c384], %392 {strides = array<i32>} : memref<1x512xf32, #tpu.memory_space<vmem>>, vector<1x32xf32>,
    %394 = vector.extract_strided_slice %261 {offsets = [3, 1, 0], sizes = [1, 1, 256], strides = [1, 1, 1]} : vector<4x4x256xf32> to vector<1x1x256xf32>
    %395 = vector.shape_cast %394 : vector<1x1x256xf32> to vector<1x256xf32>
    %cst_343 = arith.constant dense<0.000000e+00> : vector<1x32xf32>
    %396 = tpu.matmul %395, %262, %cst_343 {dimension_numbers = #tpu.dot_dimension_numbers<[1], [0], [0], [1], [0, 0, 1, 1], [], []>} : vector<1x256xf32>, vector<256x32xf32>, vector<1x32xf32> -> vector<1x32xf32>
    %397 = arith.addf %396, %263 : vector<1x32xf32>
    %cst_344 = arith.constant 0.000000e+00 : f32
    %398 = vector.broadcast %cst_344 : f32 to vector<1x32xf32>
    %399 = arith.cmpf ogt, %397, %398 : vector<1x32xf32>
    %cst_345 = arith.constant 2.000000e-01 : f32
    %400 = vector.broadcast %cst_345 : f32 to vector<1x32xf32>
    %401 = arith.mulf %400, %397 : vector<1x32xf32>
    %402 = arith.select %399, %397, %401 : vector<1x32xi1>, vector<1x32xf32>
    %c0_346 = arith.constant 0 : index
    %c416 = arith.constant 416 : index
    %403 = vector.load %arg19[%c0_346, %c416] : memref<1x512xf32, #tpu.memory_space<vmem>>, vector<1x32xf32>
    tpu.vector_store %arg19[%c0_346, %c416], %402 {strides = array<i32>} : memref<1x512xf32, #tpu.memory_space<vmem>>, vector<1x32xf32>,
    %404 = vector.extract_strided_slice %261 {offsets = [3, 2, 0], sizes = [1, 1, 256], strides = [1, 1, 1]} : vector<4x4x256xf32> to vector<1x1x256xf32>
    %405 = vector.shape_cast %404 : vector<1x1x256xf32> to vector<1x256xf32>
    %cst_347 = arith.constant dense<0.000000e+00> : vector<1x32xf32>
    %406 = tpu.matmul %405, %262, %cst_347 {dimension_numbers = #tpu.dot_dimension_numbers<[1], [0], [0], [1], [0, 0, 1, 1], [], []>} : vector<1x256xf32>, vector<256x32xf32>, vector<1x32xf32> -> vector<1x32xf32>
    %407 = arith.addf %406, %263 : vector<1x32xf32>
    %cst_348 = arith.constant 0.000000e+00 : f32
    %408 = vector.broadcast %cst_348 : f32 to vector<1x32xf32>
    %409 = arith.cmpf ogt, %407, %408 : vector<1x32xf32>
    %cst_349 = arith.constant 2.000000e-01 : f32
    %410 = vector.broadcast %cst_349 : f32 to vector<1x32xf32>
    %411 = arith.mulf %410, %407 : vector<1x32xf32>
    %412 = arith.select %409, %407, %411 : vector<1x32xi1>, vector<1x32xf32>
    %c0_350 = arith.constant 0 : index
    %c448 = arith.constant 448 : index
    %413 = vector.load %arg19[%c0_350, %c448] : memref<1x512xf32, #tpu.memory_space<vmem>>, vector<1x32xf32>
    tpu.vector_store %arg19[%c0_350, %c448], %412 {strides = array<i32>} : memref<1x512xf32, #tpu.memory_space<vmem>>, vector<1x32xf32>,
    %414 = vector.extract_strided_slice %261 {offsets = [3, 3, 0], sizes = [1, 1, 256], strides = [1, 1, 1]} : vector<4x4x256xf32> to vector<1x1x256xf32>
    %415 = vector.shape_cast %414 : vector<1x1x256xf32> to vector<1x256xf32>
    %cst_351 = arith.constant dense<0.000000e+00> : vector<1x32xf32>
    %416 = tpu.matmul %415, %262, %cst_351 {dimension_numbers = #tpu.dot_dimension_numbers<[1], [0], [0], [1], [0, 0, 1, 1], [], []>} : vector<1x256xf32>, vector<256x32xf32>, vector<1x32xf32> -> vector<1x32xf32>
    %417 = arith.addf %416, %263 : vector<1x32xf32>
    %cst_352 = arith.constant 0.000000e+00 : f32
    %418 = vector.broadcast %cst_352 : f32 to vector<1x32xf32>
    %419 = arith.cmpf ogt, %417, %418 : vector<1x32xf32>
    %cst_353 = arith.constant 2.000000e-01 : f32
    %420 = vector.broadcast %cst_353 : f32 to vector<1x32xf32>
    %421 = arith.mulf %420, %417 : vector<1x32xf32>
    %422 = arith.select %419, %417, %421 : vector<1x32xi1>, vector<1x32xf32>
    %c0_354 = arith.constant 0 : index
    %c480 = arith.constant 480 : index
    %423 = vector.load %arg19[%c0_354, %c480] : memref<1x512xf32, #tpu.memory_space<vmem>>, vector<1x32xf32>
    tpu.vector_store %arg19[%c0_354, %c480], %422 {strides = array<i32>} : memref<1x512xf32, #tpu.memory_space<vmem>>, vector<1x32xf32>,
    %c0_355 = arith.constant 0 : index
    %c0_356 = arith.constant 0 : index
    %424 = vector.load %arg19[%c0_355, %c0_356] : memref<1x512xf32, #tpu.memory_space<vmem>>, vector<1x512xf32>
    %c0_357 = arith.constant 0 : index
    %c0_358 = arith.constant 0 : index
    %425 = vector.load %arg11[%c0_357, %c0_358] : memref<512x64xf32, #tpu.memory_space<vmem>>, vector<512x64xf32>
    %cst_359 = arith.constant dense<0.000000e+00> : vector<1x64xf32>
    %426 = tpu.matmul %424, %425, %cst_359 {dimension_numbers = #tpu.dot_dimension_numbers<[1], [0], [0], [1], [0, 0, 1, 1], [], []>} : vector<1x512xf32>, vector<512x64xf32>, vector<1x64xf32> -> vector<1x64xf32>
    %c0_360 = arith.constant 0 : index
    %c0_361 = arith.constant 0 : index
    %427 = vector.load %arg12[%c0_360, %c0_361] : memref<1x64xf32, #tpu.memory_space<vmem>>, vector<1x64xf32>
    %428 = arith.addf %426, %427 : vector<1x64xf32>
    %cst_362 = arith.constant 0.000000e+00 : f32
    %429 = vector.broadcast %cst_362 : f32 to vector<1x64xf32>
    %430 = arith.cmpf ogt, %428, %429 : vector<1x64xf32>
    %cst_363 = arith.constant 2.000000e-01 : f32
    %431 = vector.broadcast %cst_363 : f32 to vector<1x64xf32>
    %432 = arith.mulf %431, %428 : vector<1x64xf32>
    %433 = arith.select %430, %428, %432 : vector<1x64xi1>, vector<1x64xf32>
    %c0_364 = arith.constant 0 : index
    %c0_365 = arith.constant 0 : index
    %c0_366 = arith.constant 0 : index
    %434 = vector.load %arg2[%c0_364, %c0_365, %c0_366] : memref<1x1x5xf32, #tpu.memory_space<vmem>>, vector<1x1x5xf32>
    %435 = vector.shape_cast %434 : vector<1x1x5xf32> to vector<1x5xf32>
    %436 = tpu.concatenate %433, %435 in 1 : vector<1x64xf32>, vector<1x5xf32> -> vector<1x69xf32>
    %c0_367 = arith.constant 0 : index
    %c0_368 = arith.constant 0 : index
    %437 = vector.load %arg13[%c0_367, %c0_368] : memref<69x8xf32, #tpu.memory_space<vmem>>, vector<69x8xf32>
    %cst_369 = arith.constant dense<0.000000e+00> : vector<1x8xf32>
    %438 = tpu.matmul %436, %437, %cst_369 {dimension_numbers = #tpu.dot_dimension_numbers<[1], [0], [0], [1], [0, 0, 1, 1], [], []>} : vector<1x69xf32>, vector<69x8xf32>, vector<1x8xf32> -> vector<1x8xf32>
    %c0_370 = arith.constant 0 : index
    %c0_371 = arith.constant 0 : index
    %439 = vector.load %arg14[%c0_370, %c0_371] : memref<1x8xf32, #tpu.memory_space<vmem>>, vector<1x8xf32>
    %440 = arith.addf %438, %439 : vector<1x8xf32>
    %c0_372 = arith.constant 0 : index
    %c0_373 = arith.constant 0 : index
    %c0_374 = arith.constant 0 : index
    %441 = vector.load %arg15[%c0_372, %c0_373, %c0_374] : memref<1x1x8xf32, #tpu.memory_space<vmem>>, vector<1x1x8xf32>
    %442 = vector.shape_cast %441 : vector<1x1x8xf32> to vector<1x8xf32>
    %443 = vector.shape_cast %440 : vector<1x8xf32> to vector<1x1x8xf32>
    tpu.vector_store %arg15[%c0_372, %c0_373, %c0_374], %443 {strides = array<i32>} : memref<1x1x8xf32, #tpu.memory_space<vmem>>, vector<1x1x8xf32>,
    return
  }
  func.func @transform_0(%arg0: i32) -> (i32, i32, i32, i32) {
    %c0_i32 = arith.constant 0 : i32
    %c0_i32_0 = arith.constant 0 : i32
    %c0_i32_1 = arith.constant 0 : i32
    %c0_i32_2 = arith.constant 0 : i32
    return %arg0, %c0_i32, %c0_i32_0, %c0_i32_1 : i32, i32, i32, i32
  }
  func.func @transform_1(%arg0: i32) -> (i32, i32, i32) {
    %c0_i32 = arith.constant 0 : i32
    %c0_i32_0 = arith.constant 0 : i32
    %c0_i32_1 = arith.constant 0 : i32
    return %arg0, %c0_i32, %c0_i32_0 : i32, i32, i32
  }
  func.func @transform_2(%arg0: i32) -> (i32, i32) {
    %c0_i32 = arith.constant 0 : i32
    %c0_i32_0 = arith.constant 0 : i32
    %c0_i32_1 = arith.constant 0 : i32
    return %c0_i32, %c0_i32_0 : i32, i32
  }
  func.func @transform_3(%arg0: i32) -> (i32, i32) {
    %c0_i32 = arith.constant 0 : i32
    %c0_i32_0 = arith.constant 0 : i32
    %c0_i32_1 = arith.constant 0 : i32
    return %c0_i32, %c0_i32_0 : i32, i32
  }
  func.func @transform_4(%arg0: i32) -> (i32, i32) {
    %c0_i32 = arith.constant 0 : i32
    %c0_i32_0 = arith.constant 0 : i32
    %c0_i32_1 = arith.constant 0 : i32
    return %c0_i32, %c0_i32_0 : i32, i32
  }
  func.func @transform_5(%arg0: i32) -> (i32, i32) {
    %c0_i32 = arith.constant 0 : i32
    %c0_i32_0 = arith.constant 0 : i32
    %c0_i32_1 = arith.constant 0 : i32
    return %c0_i32, %c0_i32_0 : i32, i32
  }
  func.func @transform_6(%arg0: i32) -> (i32, i32) {
    %c0_i32 = arith.constant 0 : i32
    %c0_i32_0 = arith.constant 0 : i32
    %c0_i32_1 = arith.constant 0 : i32
    return %c0_i32, %c0_i32_0 : i32, i32
  }
  func.func @transform_7(%arg0: i32) -> (i32, i32) {
    %c0_i32 = arith.constant 0 : i32
    %c0_i32_0 = arith.constant 0 : i32
    %c0_i32_1 = arith.constant 0 : i32
    return %c0_i32, %c0_i32_0 : i32, i32
  }
  func.func @transform_8(%arg0: i32) -> (i32, i32) {
    %c0_i32 = arith.constant 0 : i32
    %c0_i32_0 = arith.constant 0 : i32
    %c0_i32_1 = arith.constant 0 : i32
    return %c0_i32, %c0_i32_0 : i32, i32
  }
  func.func @transform_9(%arg0: i32) -> (i32, i32) {
    %c0_i32 = arith.constant 0 : i32
    %c0_i32_0 = arith.constant 0 : i32
    %c0_i32_1 = arith.constant 0 : i32
    return %c0_i32, %c0_i32_0 : i32, i32
  }
  func.func @transform_10(%arg0: i32) -> (i32, i32) {
    %c0_i32 = arith.constant 0 : i32
    %c0_i32_0 = arith.constant 0 : i32
    %c0_i32_1 = arith.constant 0 : i32
    return %c0_i32, %c0_i32_0 : i32, i32
  }
  func.func @transform_11(%arg0: i32) -> (i32, i32) {
    %c0_i32 = arith.constant 0 : i32
    %c0_i32_0 = arith.constant 0 : i32
    %c0_i32_1 = arith.constant 0 : i32
    return %c0_i32, %c0_i32_0 : i32, i32
  }
  func.func @transform_12(%arg0: i32) -> (i32, i32) {
    %c0_i32 = arith.constant 0 : i32
    %c0_i32_0 = arith.constant 0 : i32
    %c0_i32_1 = arith.constant 0 : i32
    return %c0_i32, %c0_i32_0 : i32, i32
  }
  func.func @transform_13(%arg0: i32) -> (i32, i32) {
    %c0_i32 = arith.constant 0 : i32
    %c0_i32_0 = arith.constant 0 : i32
    %c0_i32_1 = arith.constant 0 : i32
    return %c0_i32, %c0_i32_0 : i32, i32
  }
  func.func @transform_14(%arg0: i32) -> (i32, i32, i32) {
    %c0_i32 = arith.constant 0 : i32
    %c0_i32_0 = arith.constant 0 : i32
    %c0_i32_1 = arith.constant 0 : i32
    return %arg0, %c0_i32, %c0_i32_0 : i32, i32, i32
  }
}

</mosaic_0001>

<llo_original>
// kernel: discriminator_forward.1
$region0: #{discriminator_forward.1}
  #allocation0 [shape = 'u32[]', space=smem, size = 0x4, offset = 0x4, fixed_abs, tag = 'smem constant byte address 0x4 - core index']
  #allocation1 [shape = 'u32[144,128]{1,0:T(1,128)}', space=vmem, size = 0x12000, scoped, tag = 'internal scratch']
  #allocation2 [shape = 'f32[34,16,4]{2,1,0:T(8,128)}', space=vmem, size = 0x44000, scoped, tag = 'scratch operand']
  #allocation3 [shape = 'f32[18,2,9,8]{3,2,1,0:T(8,128)}', space=vmem, size = 0x48000, scoped, tag = 'scratch operand']
  #allocation4 [shape = 'f32[10,2,5,16]{3,2,1,0:T(8,128)}', space=vmem, size = 0x14000, scoped, tag = 'scratch operand']
  #allocation5 [shape = 'f32[1,512]{1,0:T(1,128)}', space=vmem, size = 0x800, scoped, tag = 'scratch operand']
  #allocation6 [shape = 'f32[32,16,12]{2,1,0:T(8,128)}', space=vmem, size = 0x40000, scoped, tag = 'scratch operand']
  #allocation7 [shape = 'f32[16,16,16]{2,1,0:T(8,128)}', space=vmem, size = 0x20000, scoped, tag = 'scratch operand']
  #allocation8 [shape = 'f32[8,8,128]{2,1,0:T(8,128)}', space=vmem, size = 0x8000, scoped, tag = 'scratch operand']
  #allocation9 [shape = 'f32[4,4,256]{2,1,0:T(4,128)}', space=vmem, size = 0x4000, scoped, tag = 'scratch operand']
  %s0 = inlined_call_operand.vmem [shape: f32[2,66,16,3], index: 0, kind: input, shape index: {}]
  %s1 = inlined_call_operand.vmem [shape: f32[2,1,5], index: 1, kind: input, shape index: {}]
  %s2 = inlined_call_operand.vmem [shape: f32[12,4], index: 2, kind: input, shape index: {}]
  %s3 = inlined_call_operand.vmem [shape: f32[1,4], index: 3, kind: input, shape index: {}]
  %s4 = inlined_call_operand.vmem [shape: f32[16,8], index: 4, kind: input, shape index: {}]
  %s5 = inlined_call_operand.vmem [shape: f32[1,8], index: 5, kind: input, shape index: {}]
  %s6 = inlined_call_operand.vmem [shape: f32[128,16], index: 6, kind: input, shape index: {}]
  %s7 = inlined_call_operand.vmem [shape: f32[1,16], index: 7, kind: input, shape index: {}]
  %s8 = inlined_call_operand.vmem [shape: f32[256,32], index: 8, kind: input, shape index: {}]
  %s9 = inlined_call_operand.vmem [shape: f32[1,32], index: 9, kind: input, shape index: {}]
  %s10 = inlined_call_operand.vmem [shape: f32[512,64], index: 10, kind: input, shape index: {}]
  %s11 = inlined_call_operand.vmem [shape: f32[1,64], index: 11, kind: input, shape index: {}]
  %s12 = inlined_call_operand.vmem [shape: f32[69,8], index: 12, kind: input, shape index: {}]
  %s13 = inlined_call_operand.vmem [shape: f32[1,8], index: 13, kind: input, shape index: {}]
  %s14 = inlined_call_operand.hbm [shape: f32[2,1,8], index: 14, kind: output, shape index: {}]
  %s15 = sld [smem:[#allocation0]]
  $region89: #{discriminator_forward.1} parent=0
    _
  %s17 = ssub.s32 1, %s15
  %s18 = scalar_select 0, %s17, %s15
  $region1: #{discriminator_forward.1} parent=0
    #allocation10 [shape = 'u8[1024]{0}', space=vmem, size = 0x400, scoped, tag = 'output window, operand 0']
    #allocation11 [shape = 's32[2]{0}', space=sflag, size = 0x8, scoped, tag = 'scoped memory for discriminator_forward.1']
    %19 = vsyncpa [#allocation11], 0
    %s20 = scalar_lea.sflag [#allocation11], 1
    %21 = vsyncpa %s20, 0
    loop: start=0, step=1, limit=4
    $region2: #{discriminator_forward.1} parent=1 // loop_pre_header
      _
    $region3: #{discriminator_forward.1} parent=1 // loop_header
      %s23 = sphi 0, %s27
      %p24 = scmp.ge.s32.totalorder %s23, 4
      %s33 = sphi 0, %s35
      %s36 = sphi 0, %s33
      %s37 = sphi 0, %s36
      %s53 = sphi 0, %s37
      %s59 = sphi 0, %s61
      %s62 = sphi 0, %s59
      %s63 = sphi 0, %s62
      %s79 = sphi 0, %s63
      %s83 = sphi 0, %s83
      %s85 = sphi 0, %s83
      %s86 = sphi 0, %s85
      %s100 = sphi 0, %s86
      %s104 = sphi 0, %s104
      %s106 = sphi 0, %s104
      %s107 = sphi 0, %s106
      %s121 = sphi 0, %s107
      %s125 = sphi 0, %s125
      %s127 = sphi 0, %s125
      %s128 = sphi 0, %s127
      %s142 = sphi 0, %s128
      %s146 = sphi 0, %s146
      %s148 = sphi 0, %s146
      %s149 = sphi 0, %s148
      %s163 = sphi 0, %s149
      %s167 = sphi 0, %s167
      %s169 = sphi 0, %s167
      %s170 = sphi 0, %s169
      %s184 = sphi 0, %s170
      %s188 = sphi 0, %s188
      %s190 = sphi 0, %s188
      %s191 = sphi 0, %s190
      %s205 = sphi 0, %s191
      %s209 = sphi 0, %s209
      %s211 = sphi 0, %s209
      %s212 = sphi 0, %s211
      %s226 = sphi 0, %s212
      %s230 = sphi 0, %s230
      %s232 = sphi 0, %s230
      %s233 = sphi 0, %s232
      %s247 = sphi 0, %s233
      %s251 = sphi 0, %s251
      %s253 = sphi 0, %s251
      %s254 = sphi 0, %s253
      %s268 = sphi 0, %s254
      %s272 = sphi 0, %s272
      %s274 = sphi 0, %s272
      %s275 = sphi 0, %s274
      %s289 = sphi 0, %s275
      %s293 = sphi 0, %s293
      %s295 = sphi 0, %s293
      %s296 = sphi 0, %s295
      %s310 = sphi 0, %s296
      %s314 = sphi 0, %s314
      %s316 = sphi 0, %s314
      %s317 = sphi 0, %s316
      %s331 = sphi 0, %s317
      %s337 = sphi 0, %s339
      %s340 = sphi 0, %s337
      %s341 = sphi 0, %s340
      %s357 = sphi 0, %s341
    $region4: #{discriminator_forward.1} parent=1 // loop_header_branch
      %26 = sbr.rel (%p24) target = $region8
    $region5: #{discriminator_forward.1} parent=1 // loop_body
      %s28 = ssub.s32 %s23, 1
      %s29 = ssub.s32 %s23, 2
      %s30 = sadd.s32 %s23, 1
      %s31 = ssub.s32 %s23, %s30
      %p32 = scmp.eq.s32.totalorder %s31, 0
      %s34 = sadd.s32 %s33, 1
      %s35 = scalar_select %p32, %s33, %s34
      %p38 = pneg %p32
      %p39 = scmp.eq.s32.totalorder %s23, 1
      %p40 = por %p38, %p39
      %p41 = scmp.ne.s32.totalorder %s33, %s36
      %p42 = scmp.eq.s32.totalorder %s23, 0
      %p43 = por %p41, %p42
      %p44 = scmp.ne.s32.totalorder %s33, %s36
      %p45 = scmp.eq.s32.totalorder %s28, 1
      %p46 = por %p44, %p45
      %p47 = scmp.ne.s32.totalorder %s36, %s37
      %p48 = scmp.eq.s32.totalorder %s28, 0
      %p49 = por %p47, %p48
      %p50 = scmp.ne.s32.totalorder %s36, %s37
      %p51 = scmp.eq.s32.totalorder %s29, 1
      %p52 = por %p50, %p51
      %p54 = scmp.ne.s32.totalorder %s37, %s53
      %p55 = scmp.eq.s32.totalorder %s29, 0
      %p56 = por %p54, %p55
      %s57 = ssub.s32 %s23, %s30
      %p58 = scmp.eq.s32.totalorder %s57, 0
      %s60 = sadd.s32 %s59, 1
      %s61 = scalar_select %p58, %s59, %s60
      %p64 = pneg %p58
      %p65 = scmp.eq.s32.totalorder %s23, 1
      %p66 = por %p64, %p65
      %p67 = scmp.ne.s32.totalorder %s59, %s62
      %p68 = scmp.eq.s32.totalorder %s23, 0
      %p69 = por %p67, %p68
      %p70 = scmp.ne.s32.totalorder %s59, %s62
      %p71 = scmp.eq.s32.totalorder %s28, 1
      %p72 = por %p70, %p71
      %p73 = scmp.ne.s32.totalorder %s62, %s63
      %p74 = scmp.eq.s32.totalorder %s28, 0
      %p75 = por %p73, %p74
      %p76 = scmp.ne.s32.totalorder %s62, %s63
      %p77 = scmp.eq.s32.totalorder %s29, 1
      %p78 = por %p76, %p77
      %p80 = scmp.ne.s32.totalorder %s63, %s79
      %p81 = scmp.eq.s32.totalorder %s29, 0
      %p82 = por %p80, %p81
      %s84 = sadd.s32 %s83, 1
      %p87 = scmp.eq.s32.totalorder %s23, 1
      %p88 = scmp.ne.s32.totalorder %s83, %s85
      %p89 = scmp.eq.s32.totalorder %s23, 0
      %p90 = por %p88, %p89
      %p91 = scmp.ne.s32.totalorder %s83, %s85
      %p92 = scmp.eq.s32.totalorder %s28, 1
      %p93 = por %p91, %p92
      %p94 = scmp.ne.s32.totalorder %s85, %s86
      %p95 = scmp.eq.s32.totalorder %s28, 0
      %p96 = por %p94, %p95
      %p97 = scmp.ne.s32.totalorder %s85, %s86
      %p98 = scmp.eq.s32.totalorder %s29, 1
      %p99 = por %p97, %p98
      %p101 = scmp.ne.s32.totalorder %s86, %s100
      %p102 = scmp.eq.s32.totalorder %s29, 0
      %p103 = por %p101, %p102
      %s105 = sadd.s32 %s104, 1
      %p108 = scmp.eq.s32.totalorder %s23, 1
      %p109 = scmp.ne.s32.totalorder %s104, %s106
      %p110 = scmp.eq.s32.totalorder %s23, 0
      %p111 = por %p109, %p110
      %p112 = scmp.ne.s32.totalorder %s104, %s106
      %p113 = scmp.eq.s32.totalorder %s28, 1
      %p114 = por %p112, %p113
      %p115 = scmp.ne.s32.totalorder %s106, %s107
      %p116 = scmp.eq.s32.totalorder %s28, 0
      %p117 = por %p115, %p116
      %p118 = scmp.ne.s32.totalorder %s106, %s107
      %p119 = scmp.eq.s32.totalorder %s29, 1
      %p120 = por %p118, %p119
      %p122 = scmp.ne.s32.totalorder %s107, %s121
      %p123 = scmp.eq.s32.totalorder %s29, 0
      %p124 = por %p122, %p123
      %s126 = sadd.s32 %s125, 1
      %p129 = scmp.eq.s32.totalorder %s23, 1
      %p130 = scmp.ne.s32.totalorder %s125, %s127
      %p131 = scmp.eq.s32.totalorder %s23, 0
      %p132 = por %p130, %p131
      %p133 = scmp.ne.s32.totalorder %s125, %s127
      %p134 = scmp.eq.s32.totalorder %s28, 1
      %p135 = por %p133, %p134
      %p136 = scmp.ne.s32.totalorder %s127, %s128
      %p137 = scmp.eq.s32.totalorder %s28, 0
      %p138 = por %p136, %p137
      %p139 = scmp.ne.s32.totalorder %s127, %s128
      %p140 = scmp.eq.s32.totalorder %s29, 1
      %p141 = por %p139, %p140
      %p143 = scmp.ne.s32.totalorder %s128, %s142
      %p144 = scmp.eq.s32.totalorder %s29, 0
      %p145 = por %p143, %p144
      %s147 = sadd.s32 %s146, 1
      %p150 = scmp.eq.s32.totalorder %s23, 1
      %p151 = scmp.ne.s32.totalorder %s146, %s148
      %p152 = scmp.eq.s32.totalorder %s23, 0
      %p153 = por %p151, %p152
      %p154 = scmp.ne.s32.totalorder %s146, %s148
      %p155 = scmp.eq.s32.totalorder %s28, 1
      %p156 = por %p154, %p155
      %p157 = scmp.ne.s32.totalorder %s148, %s149
      %p158 = scmp.eq.s32.totalorder %s28, 0
      %p159 = por %p157, %p158
      %p160 = scmp.ne.s32.totalorder %s148, %s149
      %p161 = scmp.eq.s32.totalorder %s29, 1
      %p162 = por %p160, %p161
      %p164 = scmp.ne.s32.totalorder %s149, %s163
      %p165 = scmp.eq.s32.totalorder %s29, 0
      %p166 = por %p164, %p165
      %s168 = sadd.s32 %s167, 1
      %p171 = scmp.eq.s32.totalorder %s23, 1
      %p172 = scmp.ne.s32.totalorder %s167, %s169
      %p173 = scmp.eq.s32.totalorder %s23, 0
      %p174 = por %p172, %p173
      %p175 = scmp.ne.s32.totalorder %s167, %s169
      %p176 = scmp.eq.s32.totalorder %s28, 1
      %p177 = por %p175, %p176
      %p178 = scmp.ne.s32.totalorder %s169, %s170
      %p179 = scmp.eq.s32.totalorder %s28, 0
      %p180 = por %p178, %p179
      %p181 = scmp.ne.s32.totalorder %s169, %s170
      %p182 = scmp.eq.s32.totalorder %s29, 1
      %p183 = por %p181, %p182
      %p185 = scmp.ne.s32.totalorder %s170, %s184
      %p186 = scmp.eq.s32.totalorder %s29, 0
      %p187 = por %p185, %p186
      %s189 = sadd.s32 %s188, 1
      %p192 = scmp.eq.s32.totalorder %s23, 1
      %p193 = scmp.ne.s32.totalorder %s188, %s190
      %p194 = scmp.eq.s32.totalorder %s23, 0
      %p195 = por %p193, %p194
      %p196 = scmp.ne.s32.totalorder %s188, %s190
      %p197 = scmp.eq.s32.totalorder %s28, 1
      %p198 = por %p196, %p197
      %p199 = scmp.ne.s32.totalorder %s190, %s191
      %p200 = scmp.eq.s32.totalorder %s28, 0
      %p201 = por %p199, %p200
      %p202 = scmp.ne.s32.totalorder %s190, %s191
      %p203 = scmp.eq.s32.totalorder %s29, 1
      %p204 = por %p202, %p203
      %p206 = scmp.ne.s32.totalorder %s191, %s205
      %p207 = scmp.eq.s32.totalorder %s29, 0
      %p208 = por %p206, %p207
      %s210 = sadd.s32 %s209, 1
      %p213 = scmp.eq.s32.totalorder %s23, 1
      %p214 = scmp.ne.s32.totalorder %s209, %s211
      %p215 = scmp.eq.s32.totalorder %s23, 0
      %p216 = por %p214, %p215
      %p217 = scmp.ne.s32.totalorder %s209, %s211
      %p218 = scmp.eq.s32.totalorder %s28, 1
      %p219 = por %p217, %p218
      %p220 = scmp.ne.s32.totalorder %s211, %s212
      %p221 = scmp.eq.s32.totalorder %s28, 0
      %p222 = por %p220, %p221
      %p223 = scmp.ne.s32.totalorder %s211, %s212
      %p224 = scmp.eq.s32.totalorder %s29, 1
      %p225 = por %p223, %p224
      %p227 = scmp.ne.s32.totalorder %s212, %s226
      %p228 = scmp.eq.s32.totalorder %s29, 0
      %p229 = por %p227, %p228
      %s231 = sadd.s32 %s230, 1
      %p234 = scmp.eq.s32.totalorder %s23, 1
      %p235 = scmp.ne.s32.totalorder %s230, %s232
      %p236 = scmp.eq.s32.totalorder %s23, 0
      %p237 = por %p235, %p236
      %p238 = scmp.ne.s32.totalorder %s230, %s232
      %p239 = scmp.eq.s32.totalorder %s28, 1
      %p240 = por %p238, %p239
      %p241 = scmp.ne.s32.totalorder %s232, %s233
      %p242 = scmp.eq.s32.totalorder %s28, 0
      %p243 = por %p241, %p242
      %p244 = scmp.ne.s32.totalorder %s232, %s233
      %p245 = scmp.eq.s32.totalorder %s29, 1
      %p246 = por %p244, %p245
      %p248 = scmp.ne.s32.totalorder %s233, %s247
      %p249 = scmp.eq.s32.totalorder %s29, 0
      %p250 = por %p248, %p249
      %s252 = sadd.s32 %s251, 1
      %p255 = scmp.eq.s32.totalorder %s23, 1
      %p256 = scmp.ne.s32.totalorder %s251, %s253
      %p257 = scmp.eq.s32.totalorder %s23, 0
      %p258 = por %p256, %p257
      %p259 = scmp.ne.s32.totalorder %s251, %s253
      %p260 = scmp.eq.s32.totalorder %s28, 1
      %p261 = por %p259, %p260
      %p262 = scmp.ne.s32.totalorder %s253, %s254
      %p263 = scmp.eq.s32.totalorder %s28, 0
      %p264 = por %p262, %p263
      %p265 = scmp.ne.s32.totalorder %s253, %s254
      %p266 = scmp.eq.s32.totalorder %s29, 1
      %p267 = por %p265, %p266
      %p269 = scmp.ne.s32.totalorder %s254, %s268
      %p270 = scmp.eq.s32.totalorder %s29, 0
      %p271 = por %p269, %p270
      %s273 = sadd.s32 %s272, 1
      %p276 = scmp.eq.s32.totalorder %s23, 1
      %p277 = scmp.ne.s32.totalorder %s272, %s274
      %p278 = scmp.eq.s32.totalorder %s23, 0
      %p279 = por %p277, %p278
      %p280 = scmp.ne.s32.totalorder %s272, %s274
      %p281 = scmp.eq.s32.totalorder %s28, 1
      %p282 = por %p280, %p281
      %p283 = scmp.ne.s32.totalorder %s274, %s275
      %p284 = scmp.eq.s32.totalorder %s28, 0
      %p285 = por %p283, %p284
      %p286 = scmp.ne.s32.totalorder %s274, %s275
      %p287 = scmp.eq.s32.totalorder %s29, 1
      %p288 = por %p286, %p287
      %p290 = scmp.ne.s32.totalorder %s275, %s289
      %p291 = scmp.eq.s32.totalorder %s29, 0
      %p292 = por %p290, %p291
      %s294 = sadd.s32 %s293, 1
      %p297 = scmp.eq.s32.totalorder %s23, 1
      %p298 = scmp.ne.s32.totalorder %s293, %s295
      %p299 = scmp.eq.s32.totalorder %s23, 0
      %p300 = por %p298, %p299
      %p301 = scmp.ne.s32.totalorder %s293, %s295
      %p302 = scmp.eq.s32.totalorder %s28, 1
      %p303 = por %p301, %p302
      %p304 = scmp.ne.s32.totalorder %s295, %s296
      %p305 = scmp.eq.s32.totalorder %s28, 0
      %p306 = por %p304, %p305
      %p307 = scmp.ne.s32.totalorder %s295, %s296
      %p308 = scmp.eq.s32.totalorder %s29, 1
      %p309 = por %p307, %p308
      %p311 = scmp.ne.s32.totalorder %s296, %s310
      %p312 = scmp.eq.s32.totalorder %s29, 0
      %p313 = por %p311, %p312
      %s315 = sadd.s32 %s314, 1
      %p318 = scmp.eq.s32.totalorder %s23, 1
      %p319 = scmp.ne.s32.totalorder %s314, %s316
      %p320 = scmp.eq.s32.totalorder %s23, 0
      %p321 = por %p319, %p320
      %p322 = scmp.ne.s32.totalorder %s314, %s316
      %p323 = scmp.eq.s32.totalorder %s28, 1
      %p324 = por %p322, %p323
      %p325 = scmp.ne.s32.totalorder %s316, %s317
      %p326 = scmp.eq.s32.totalorder %s28, 0
      %p327 = por %p325, %p326
      %p328 = scmp.ne.s32.totalorder %s316, %s317
      %p329 = scmp.eq.s32.totalorder %s29, 1
      %p330 = por %p328, %p329
      %p332 = scmp.ne.s32.totalorder %s317, %s331
      %p333 = scmp.eq.s32.totalorder %s29, 0
      %p334 = por %p332, %p333
      %s335 = ssub.s32 %s23, %s30
      %p336 = scmp.eq.s32.totalorder %s335, 0
      %s338 = sadd.s32 %s337, 1
      %s339 = scalar_select %p336, %s337, %s338
      %p342 = pneg %p336
      %p343 = scmp.eq.s32.totalorder %s23, 1
      %p344 = por %p342, %p343
      %p345 = scmp.ne.s32.totalorder %s337, %s340
      %p346 = scmp.eq.s32.totalorder %s23, 0
      %p347 = por %p345, %p346
      %p348 = scmp.ne.s32.totalorder %s337, %s340
      %p349 = scmp.eq.s32.totalorder %s28, 1
      %p350 = por %p348, %p349
      %p351 = scmp.ne.s32.totalorder %s340, %s341
      %p352 = scmp.eq.s32.totalorder %s28, 0
      %p353 = por %p351, %p352
      %p354 = scmp.ne.s32.totalorder %s340, %s341
      %p355 = scmp.eq.s32.totalorder %s29, 1
      %p356 = por %p354, %p355
      %p358 = scmp.ne.s32.totalorder %s341, %s357
      %p359 = scmp.eq.s32.totalorder %s29, 0
      %p360 = por %p358, %p359
      %p361 = scmp.le.s32.totalorder 1, %s23
      %p362 = scmp.lt.s32.totalorder %s23, 3
      %p363 = pnand %p361, %p362
      %p364 = pneg %p363
      // Predicated region
      $region9: #{discriminator_forward.1} parent=5 // pred_check
        _
      $region10: #{discriminator_forward.1} parent=5 // pred_check_branch
        %366 = sbr.rel (%p363) target = $region12
      $region11: #{discriminator_forward.1} parent=5 // pred_region
        %s367 = ssub.s32 %s23, 1
        // Predicated region
        $region13: #{discriminator_forward.1} parent=11 // pred_check
          %p368 = pneg %p96
        $region14: #{discriminator_forward.1} parent=11 // pred_check_branch
          %370 = sbr.rel (%p368) target = $region16
        $region15: #{discriminator_forward.1} parent=11 // pred_region
          _
        $region16: #{discriminator_forward.1} parent=11 // pred_fallthru
          _
        // Predicated region
        $region17: #{discriminator_forward.1} parent=11 // pred_check
          %p371 = pneg %p117
        $region18: #{discriminator_forward.1} parent=11 // pred_check_branch
          %373 = sbr.rel (%p371) target = $region20
        $region19: #{discriminator_forward.1} parent=11 // pred_region
          _
        $region20: #{discriminator_forward.1} parent=11 // pred_fallthru
          _
        // Predicated region
        $region21: #{discriminator_forward.1} parent=11 // pred_check
          %p374 = pneg %p138
        $region22: #{discriminator_forward.1} parent=11 // pred_check_branch
          %376 = sbr.rel (%p374) target = $region24
        $region23: #{discriminator_forward.1} parent=11 // pred_region
          _
        $region24: #{discriminator_forward.1} parent=11 // pred_fallthru
          _
        // Predicated region
        $region25: #{discriminator_forward.1} parent=11 // pred_check
          %p377 = pneg %p159
        $region26: #{discriminator_forward.1} parent=11 // pred_check_branch
          %379 = sbr.rel (%p377) target = $region28
        $region27: #{discriminator_forward.1} parent=11 // pred_region
          _
        $region28: #{discriminator_forward.1} parent=11 // pred_fallthru
          _
        // Predicated region
        $region29: #{discriminator_forward.1} parent=11 // pred_check
          %p380 = pneg %p180
        $region30: #{discriminator_forward.1} parent=11 // pred_check_branch
          %382 = sbr.rel (%p380) target = $region32
        $region31: #{discriminator_forward.1} parent=11 // pred_region
          _
        $region32: #{discriminator_forward.1} parent=11 // pred_fallthru
          _
        // Predicated region
        $region33: #{discriminator_forward.1} parent=11 // pred_check
          %p383 = pneg %p201
        $region34: #{discriminator_forward.1} parent=11 // pred_check_branch
          %385 = sbr.rel (%p383) target = $region36
        $region35: #{discriminator_forward.1} parent=11 // pred_region
          _
        $region36: #{discriminator_forward.1} parent=11 // pred_fallthru
          _
        // Predicated region
        $region37: #{discriminator_forward.1} parent=11 // pred_check
          %p386 = pneg %p222
        $region38: #{discriminator_forward.1} parent=11 // pred_check_branch
          %388 = sbr.rel (%p386) target = $region40
        $region39: #{discriminator_forward.1} parent=11 // pred_region
          _
        $region40: #{discriminator_forward.1} parent=11 // pred_fallthru
          _
        // Predicated region
        $region41: #{discriminator_forward.1} parent=11 // pred_check
          %p389 = pneg %p243
        $region42: #{discriminator_forward.1} parent=11 // pred_check_branch
          %391 = sbr.rel (%p389) target = $region44
        $region43: #{discriminator_forward.1} parent=11 // pred_region
          _
        $region44: #{discriminator_forward.1} parent=11 // pred_fallthru
          _
        // Predicated region
        $region45: #{discriminator_forward.1} parent=11 // pred_check
          %p392 = pneg %p264
        $region46: #{discriminator_forward.1} parent=11 // pred_check_branch
          %394 = sbr.rel (%p392) target = $region48
        $region47: #{discriminator_forward.1} parent=11 // pred_region
          _
        $region48: #{discriminator_forward.1} parent=11 // pred_fallthru
          _
        // Predicated region
        $region49: #{discriminator_forward.1} parent=11 // pred_check
          %p395 = pneg %p285
        $region50: #{discriminator_forward.1} parent=11 // pred_check_branch
          %397 = sbr.rel (%p395) target = $region52
        $region51: #{discriminator_forward.1} parent=11 // pred_region
          _
        $region52: #{discriminator_forward.1} parent=11 // pred_fallthru
          _
        // Predicated region
        $region53: #{discriminator_forward.1} parent=11 // pred_check
          %p398 = pneg %p306
        $region54: #{discriminator_forward.1} parent=11 // pred_check_branch
          %400 = sbr.rel (%p398) target = $region56
        $region55: #{discriminator_forward.1} parent=11 // pred_region
          _
        $region56: #{discriminator_forward.1} parent=11 // pred_fallthru
          _
        // Predicated region
        $region57: #{discriminator_forward.1} parent=11 // pred_check
          %p401 = pneg %p327
        $region58: #{discriminator_forward.1} parent=11 // pred_check_branch
          %403 = sbr.rel (%p401) target = $region60
        $region59: #{discriminator_forward.1} parent=11 // pred_region
          _
        $region60: #{discriminator_forward.1} parent=11 // pred_fallthru
          _
      $region12: #{discriminator_forward.1} parent=5 // pred_fallthru
        _
      %p404 = scmp.lt.s32.totalorder %s23, 2
      // Predicated region
      $region61: #{discriminator_forward.1} parent=5 // pred_check
        %p405 = pneg %p404
      $region62: #{discriminator_forward.1} parent=5 // pred_check_branch
        %407 = sbr.rel (%p405) target = $region64
      $region63: #{discriminator_forward.1} parent=5 // pred_region
        // Predicated region
        $region65: #{discriminator_forward.1} parent=63 // pred_check
          %p408 = pneg %p43
        $region66: #{discriminator_forward.1} parent=63 // pred_check_branch
          %410 = sbr.rel (%p408) target = $region68
        $region67: #{discriminator_forward.1} parent=63 // pred_region
          %p411 = scmp.lt.s32.totalorder %s23, 1
          %s412 = scalar_select %p411, %s23, 1
          %s413 = smul.addr %s412, 132
          %s414 = smul.addr %s413, 8
          %s415 = scalar_lea.vmem %s0, %s414
        $region68: #{discriminator_forward.1} parent=63 // pred_fallthru
          _
        // Predicated region
        $region69: #{discriminator_forward.1} parent=63 // pred_check
          %p416 = pneg %p69
        $region70: #{discriminator_forward.1} parent=63 // pred_check_branch
          %418 = sbr.rel (%p416) target = $region72
        $region71: #{discriminator_forward.1} parent=63 // pred_region
          %p419 = scmp.lt.s32.totalorder %s23, 1
          %s420 = scalar_select %p419, %s23, 1
          %s421 = scalar_lea.vmem %s1, %s420
        $region72: #{discriminator_forward.1} parent=63 // pred_fallthru
          _
      $region64: #{discriminator_forward.1} parent=5 // pred_fallthru
        _
      %p422 = scmp.le.s32.totalorder 1, %s23
      %p423 = scmp.lt.s32.totalorder %s23, 3
      %p424 = pnand %p422, %p423
      %p425 = pneg %p424
      // Predicated region
      $region73: #{discriminator_forward.1} parent=5 // pred_check
        _
      $region74: #{discriminator_forward.1} parent=5 // pred_check_branch
        %427 = sbr.rel (%p424) target = $region76
      $region75: #{discriminator_forward.1} parent=5 // pred_region
        %s428 = ssub.s32 %s23, 1
        %p429 = scmp.lt.s32.totalorder %s28, 1
        %s430 = scalar_select %p429, %s28, 1
        %s431 = smul.addr %s430, 132
        %s432 = smul.addr %s431, 8
        %s433 = scalar_lea.vmem %s0, %s432
        %p434 = pneg %p49
        %p435 = pneg %p46
        %p436 = scmp.lt.s32.totalorder %s28, 1
        %s437 = scalar_select %p436, %s28, 1
        %s438 = scalar_lea.vmem %s1, %s437
        %p439 = pneg %p75
        %p440 = pneg %p72
        %p441 = pneg %p96
        %p442 = pneg %p93
        %p443 = pneg %p117
        %p444 = pneg %p114
        %p445 = pneg %p138
        %p446 = pneg %p135
        %p447 = pneg %p159
        %p448 = pneg %p156
        %p449 = pneg %p180
        %p450 = pneg %p177
        %p451 = pneg %p201
        %p452 = pneg %p198
        %p453 = pneg %p222
        %p454 = pneg %p219
        %p455 = pneg %p243
        %p456 = pneg %p240
        %p457 = pneg %p264
        %p458 = pneg %p261
        %p459 = pneg %p285
        %p460 = pneg %p282
        %p461 = pneg %p306
        %p462 = pneg %p303
        %p463 = pneg %p327
        %p464 = pneg %p324
        %p465 = pneg %p353
        %p466 = pneg %p350
        %s467 = sand.u32 %s340, 1
        %s468 = scalar_lea.sflag [#allocation11], %s467
        %s469 = sand.u32 %s340, 1
        %s470 = scalar_lea.vmem [#allocation10], %s469
        %p471 = scmp.lt.s32.totalorder %s28, 1
        %s472 = scalar_select %p471, %s28, 1
        %s473 = smul.addr %s472, 132
        %s474 = smul.addr %s473, 8
        %s475 = scalar_lea.vmem %s0, %s474
        %p476 = scmp.lt.s32.totalorder %s28, 1
        %s477 = scalar_select %p476, %s28, 1
        %s478 = scalar_lea.vmem %s1, %s477
        %v479 = vld [vmem:[%s475] sm:$0xff]
        %v480 = vld [vmem:[%s475 + $0x8] sm:$0xff]
        %v481 = vld [vmem:[%s475 + $0x10] sm:$0xff]
        %v482 = vld [vmem:[%s475 + $0x18] sm:$0xff]
        %v483 = vld [vmem:[%s475 + $0x20] sm:$0xff]
        %v484 = vld [vmem:[%s475 + $0x28] sm:$0xff]
        %v485 = vld [vmem:[%s475 + $0x30] sm:$0xff]
        %v486 = vld [vmem:[%s475 + $0x38] sm:$0xff]
        %v487 = vld [vmem:[%s475 + $0x40] sm:$0xff]
        %v488 = vld [vmem:[%s475 + $0x48] sm:$0xff]
        %v489 = vld [vmem:[%s475 + $0x50] sm:$0xff]
        %v490 = vld [vmem:[%s475 + $0x58] sm:$0xff]
        %v491 = vld [vmem:[%s475 + $0x60] sm:$0xff]
        %v492 = vld [vmem:[%s475 + $0x68] sm:$0xff]
        %v493 = vld [vmem:[%s475 + $0x70] sm:$0xff]
        %v494 = vld [vmem:[%s475 + $0x78] sm:$0xff]
        %v495 = vld [vmem:[%s475 + $0x80] sm:$0xff]
        %v496 = vld [vmem:[%s475 + $0x88] sm:$0xff]
        %v497 = vld [vmem:[%s475 + $0x90] sm:$0xff]
        %v498 = vld [vmem:[%s475 + $0x98] sm:$0xff]
        %v499 = vld [vmem:[%s475 + $0xa0] sm:$0xff]
        %v500 = vld [vmem:[%s475 + $0xa8] sm:$0xff]
        %v501 = vld [vmem:[%s475 + $0xb0] sm:$0xff]
        %v502 = vld [vmem:[%s475 + $0xb8] sm:$0xff]
        %v503 = vld [vmem:[%s475 + $0xc0] sm:$0xff]
        %v504 = vld [vmem:[%s475 + $0xc8] sm:$0xff]
        %v505 = vld [vmem:[%s475 + $0xd0] sm:$0xff]
        %v506 = vld [vmem:[%s475 + $0xd8] sm:$0xff]
        %v507 = vld [vmem:[%s475 + $0xe0] sm:$0xff]
        %v508 = vld [vmem:[%s475 + $0xe8] sm:$0xff]
        %v509 = vld [vmem:[%s475 + $0xf0] sm:$0xff]
        %v510 = vld [vmem:[%s475 + $0xf8] sm:$0xff]
        %v511 = vld [vmem:[%s475 + $0x100] sm:$0xff]
        %v512 = vld [vmem:[%s475 + $0x108] sm:$0xff]
        %v513 = vld [vmem:[%s475 + $0x110] sm:$0xff]
        %v514 = vld [vmem:[%s475 + $0x118] sm:$0xff]
        %v515 = vld [vmem:[%s475 + $0x120] sm:$0xff]
        %v516 = vld [vmem:[%s475 + $0x128] sm:$0xff]
        %v517 = vld [vmem:[%s475 + $0x130] sm:$0xff]
        %v518 = vld [vmem:[%s475 + $0x138] sm:$0xff]
        %v519 = vld [vmem:[%s475 + $0x140] sm:$0xff]
        %v520 = vld [vmem:[%s475 + $0x148] sm:$0xff]
        %v521 = vld [vmem:[%s475 + $0x150] sm:$0xff]
        %v522 = vld [vmem:[%s475 + $0x158] sm:$0xff]
        %v523 = vld [vmem:[%s475 + $0x160] sm:$0xff]
        %v524 = vld [vmem:[%s475 + $0x168] sm:$0xff]
        %v525 = vld [vmem:[%s475 + $0x170] sm:$0xff]
        %v526 = vld [vmem:[%s475 + $0x178] sm:$0xff]
        %v527 = vld [vmem:[%s475 + $0x180] sm:$0xff]
        %v528 = vld [vmem:[%s475 + $0x188] sm:$0xff]
        %v529 = vld [vmem:[%s475 + $0x190] sm:$0xff]
        %v530 = vld [vmem:[%s475 + $0x198] sm:$0xff]
        %v531 = vld [vmem:[%s475 + $0x1a0] sm:$0xff]
        %v532 = vld [vmem:[%s475 + $0x1a8] sm:$0xff]
        %v533 = vld [vmem:[%s475 + $0x1b0] sm:$0xff]
        %v534 = vld [vmem:[%s475 + $0x1b8] sm:$0xff]
        %v535 = vld [vmem:[%s475 + $0x1c0] sm:$0xff]
        %v536 = vld [vmem:[%s475 + $0x1c8] sm:$0xff]
        %v537 = vld [vmem:[%s475 + $0x1d0] sm:$0xff]
        %v538 = vld [vmem:[%s475 + $0x1d8] sm:$0xff]
        %v539 = vld [vmem:[%s475 + $0x1e0] sm:$0xff]
        %v540 = vld [vmem:[%s475 + $0x1e8] sm:$0xff]
        %v541 = vld [vmem:[%s475 + $0x1f0] sm:$0xff]
        %v542 = vld [vmem:[%s475 + $0x1f8] sm:$0xff]
        %v543 = vld [vmem:[%s475 + $0x200] sm:$0xff]
        %v544 = vld [vmem:[%s475 + $0x208] sm:$0xff]
        %v545 = vld [vmem:[%s475 + $0x210] sm:$0xff]
        %v546 = vld [vmem:[%s475 + $0x218] sm:$0xff]
        %v547 = vld [vmem:[%s475 + $0x220] sm:$0xff]
        %v548 = vld [vmem:[%s475 + $0x228] sm:$0xff]
        %v549 = vld [vmem:[%s475 + $0x230] sm:$0xff]
        %v550 = vld [vmem:[%s475 + $0x238] sm:$0xff]
        %v551 = vld [vmem:[%s475 + $0x240] sm:$0xff]
        %v552 = vld [vmem:[%s475 + $0x248] sm:$0xff]
        %v553 = vld [vmem:[%s475 + $0x250] sm:$0xff]
        %v554 = vld [vmem:[%s475 + $0x258] sm:$0xff]
        %v555 = vld [vmem:[%s475 + $0x260] sm:$0xff]
        %v556 = vld [vmem:[%s475 + $0x268] sm:$0xff]
        %v557 = vld [vmem:[%s475 + $0x270] sm:$0xff]
        %v558 = vld [vmem:[%s475 + $0x278] sm:$0xff]
        %v559 = vld [vmem:[%s475 + $0x280] sm:$0xff]
        %v560 = vld [vmem:[%s475 + $0x288] sm:$0xff]
        %v561 = vld [vmem:[%s475 + $0x290] sm:$0xff]
        %v562 = vld [vmem:[%s475 + $0x298] sm:$0xff]
        %v563 = vld [vmem:[%s475 + $0x2a0] sm:$0xff]
        %v564 = vld [vmem:[%s475 + $0x2a8] sm:$0xff]
        %v565 = vld [vmem:[%s475 + $0x2b0] sm:$0xff]
        %v566 = vld [vmem:[%s475 + $0x2b8] sm:$0xff]
        %v567 = vld [vmem:[%s475 + $0x2c0] sm:$0xff]
        %v568 = vld [vmem:[%s475 + $0x2c8] sm:$0xff]
        %v569 = vld [vmem:[%s475 + $0x2d0] sm:$0xff]
        %v570 = vld [vmem:[%s475 + $0x2d8] sm:$0xff]
        %v571 = vld [vmem:[%s475 + $0x2e0] sm:$0xff]
        %v572 = vld [vmem:[%s475 + $0x2e8] sm:$0xff]
        %v573 = vld [vmem:[%s475 + $0x2f0] sm:$0xff]
        %v574 = vld [vmem:[%s475 + $0x2f8] sm:$0xff]
        %v575 = vld [vmem:[%s475 + $0x300] sm:$0xff]
        %v576 = vld [vmem:[%s475 + $0x308] sm:$0xff]
        %v577 = vld [vmem:[%s475 + $0x310] sm:$0xff]
        %v578 = vld [vmem:[%s475 + $0x318] sm:$0xff]
        %v579 = vld [vmem:[%s475 + $0x320] sm:$0xff]
        %v580 = vld [vmem:[%s475 + $0x328] sm:$0xff]
        %v581 = vld [vmem:[%s475 + $0x330] sm:$0xff]
        %v582 = vld [vmem:[%s475 + $0x338] sm:$0xff]
        %v583 = vld [vmem:[%s475 + $0x340] sm:$0xff]
        %v584 = vld [vmem:[%s475 + $0x348] sm:$0xff]
        %v585 = vld [vmem:[%s475 + $0x350] sm:$0xff]
        %v586 = vld [vmem:[%s475 + $0x358] sm:$0xff]
        %v587 = vld [vmem:[%s475 + $0x360] sm:$0xff]
        %v588 = vld [vmem:[%s475 + $0x368] sm:$0xff]
        %v589 = vld [vmem:[%s475 + $0x370] sm:$0xff]
        %v590 = vld [vmem:[%s475 + $0x378] sm:$0xff]
        %v591 = vld [vmem:[%s475 + $0x380] sm:$0xff]
        %v592 = vld [vmem:[%s475 + $0x388] sm:$0xff]
        %v593 = vld [vmem:[%s475 + $0x390] sm:$0xff]
        %v594 = vld [vmem:[%s475 + $0x398] sm:$0xff]
        %v595 = vld [vmem:[%s475 + $0x3a0] sm:$0xff]
        %v596 = vld [vmem:[%s475 + $0x3a8] sm:$0xff]
        %v597 = vld [vmem:[%s475 + $0x3b0] sm:$0xff]
        %v598 = vld [vmem:[%s475 + $0x3b8] sm:$0xff]
        %v599 = vld [vmem:[%s475 + $0x3c0] sm:$0xff]
        %v600 = vld [vmem:[%s475 + $0x3c8] sm:$0xff]
        %v601 = vld [vmem:[%s475 + $0x3d0] sm:$0xff]
        %v602 = vld [vmem:[%s475 + $0x3d8] sm:$0xff]
        %v603 = vld [vmem:[%s475 + $0x3e0] sm:$0xff]
        %v604 = vld [vmem:[%s475 + $0x3e8] sm:$0xff]
        %v605 = vld [vmem:[%s475 + $0x3f0] sm:$0xff]
        %v606 = vld [vmem:[%s475 + $0x3f8] sm:$0xff]
        %v607 = vld [vmem:[%s475 + $0x400] sm:$0xff]
        %v608 = vld [vmem:[%s475 + $0x408] sm:$0xff]
        %v609 = vld [vmem:[%s475 + $0x410] sm:$0xff]
        %v610 = vld [vmem:[%s475 + $0x418] sm:$0xff]
        %vm611 = vcmask 23552
        %612 = vst.msk [vmem:[#allocation6] sm:$0xff] %vm611, %v479
        %613 = vst.msk [vmem:[#allocation6 + $0x8] sm:$0xff] %vm611, %v480
        %614 = vst.msk [vmem:[#allocation6 + $0x10] sm:$0xff] %vm611, %v483
        %615 = vst.msk [vmem:[#allocation6 + $0x18] sm:$0xff] %vm611, %v484
        %616 = vst.msk [vmem:[#allocation6 + $0x20] sm:$0xff] %vm611, %v487
        %617 = vst.msk [vmem:[#allocation6 + $0x28] sm:$0xff] %vm611, %v488
        %618 = vst.msk [vmem:[#allocation6 + $0x30] sm:$0xff] %vm611, %v491
        %619 = vst.msk [vmem:[#allocation6 + $0x38] sm:$0xff] %vm611, %v492
        %620 = vst.msk [vmem:[#allocation6 + $0x40] sm:$0xff] %vm611, %v495
        %621 = vst.msk [vmem:[#allocation6 + $0x48] sm:$0xff] %vm611, %v496
        %622 = vst.msk [vmem:[#allocation6 + $0x50] sm:$0xff] %vm611, %v499
        %623 = vst.msk [vmem:[#allocation6 + $0x58] sm:$0xff] %vm611, %v500
        %624 = vst.msk [vmem:[#allocation6 + $0x60] sm:$0xff] %vm611, %v503
        %625 = vst.msk [vmem:[#allocation6 + $0x68] sm:$0xff] %vm611, %v504
        %626 = vst.msk [vmem:[#allocation6 + $0x70] sm:$0xff] %vm611, %v507
        %627 = vst.msk [vmem:[#allocation6 + $0x78] sm:$0xff] %vm611, %v508
        %628 = vst.msk [vmem:[#allocation6 + $0x80] sm:$0xff] %vm611, %v511
        %629 = vst.msk [vmem:[#allocation6 + $0x88] sm:$0xff] %vm611, %v512
        %630 = vst.msk [vmem:[#allocation6 + $0x90] sm:$0xff] %vm611, %v515
        %631 = vst.msk [vmem:[#allocation6 + $0x98] sm:$0xff] %vm611, %v516
        %632 = vst.msk [vmem:[#allocation6 + $0xa0] sm:$0xff] %vm611, %v519
        %633 = vst.msk [vmem:[#allocation6 + $0xa8] sm:$0xff] %vm611, %v520
        %634 = vst.msk [vmem:[#allocation6 + $0xb0] sm:$0xff] %vm611, %v523
        %635 = vst.msk [vmem:[#allocation6 + $0xb8] sm:$0xff] %vm611, %v524
        %636 = vst.msk [vmem:[#allocation6 + $0xc0] sm:$0xff] %vm611, %v527
        %637 = vst.msk [vmem:[#allocation6 + $0xc8] sm:$0xff] %vm611, %v528
        %638 = vst.msk [vmem:[#allocation6 + $0xd0] sm:$0xff] %vm611, %v531
        %639 = vst.msk [vmem:[#allocation6 + $0xd8] sm:$0xff] %vm611, %v532
        %640 = vst.msk [vmem:[#allocation6 + $0xe0] sm:$0xff] %vm611, %v535
        %641 = vst.msk [vmem:[#allocation6 + $0xe8] sm:$0xff] %vm611, %v536
        %642 = vst.msk [vmem:[#allocation6 + $0xf0] sm:$0xff] %vm611, %v539
        %643 = vst.msk [vmem:[#allocation6 + $0xf8] sm:$0xff] %vm611, %v540
        %644 = vst.msk [vmem:[#allocation6 + $0x100] sm:$0xff] %vm611, %v543
        %645 = vst.msk [vmem:[#allocation6 + $0x108] sm:$0xff] %vm611, %v544
        %646 = vst.msk [vmem:[#allocation6 + $0x110] sm:$0xff] %vm611, %v547
        %647 = vst.msk [vmem:[#allocation6 + $0x118] sm:$0xff] %vm611, %v548
        %648 = vst.msk [vmem:[#allocation6 + $0x120] sm:$0xff] %vm611, %v551
        %649 = vst.msk [vmem:[#allocation6 + $0x128] sm:$0xff] %vm611, %v552
        %650 = vst.msk [vmem:[#allocation6 + $0x130] sm:$0xff] %vm611, %v555
        %651 = vst.msk [vmem:[#allocation6 + $0x138] sm:$0xff] %vm611, %v556
        %652 = vst.msk [vmem:[#allocation6 + $0x140] sm:$0xff] %vm611, %v559
        %653 = vst.msk [vmem:[#allocation6 + $0x148] sm:$0xff] %vm611, %v560
        %654 = vst.msk [vmem:[#allocation6 + $0x150] sm:$0xff] %vm611, %v563
        %655 = vst.msk [vmem:[#allocation6 + $0x158] sm:$0xff] %vm611, %v564
        %656 = vst.msk [vmem:[#allocation6 + $0x160] sm:$0xff] %vm611, %v567
        %657 = vst.msk [vmem:[#allocation6 + $0x168] sm:$0xff] %vm611, %v568
        %658 = vst.msk [vmem:[#allocation6 + $0x170] sm:$0xff] %vm611, %v571
        %659 = vst.msk [vmem:[#allocation6 + $0x178] sm:$0xff] %vm611, %v572
        %660 = vst.msk [vmem:[#allocation6 + $0x180] sm:$0xff] %vm611, %v575
        %661 = vst.msk [vmem:[#allocation6 + $0x188] sm:$0xff] %vm611, %v576
        %662 = vst.msk [vmem:[#allocation6 + $0x190] sm:$0xff] %vm611, %v579
        %663 = vst.msk [vmem:[#allocation6 + $0x198] sm:$0xff] %vm611, %v580
        %664 = vst.msk [vmem:[#allocation6 + $0x1a0] sm:$0xff] %vm611, %v583
        %665 = vst.msk [vmem:[#allocation6 + $0x1a8] sm:$0xff] %vm611, %v584
        %666 = vst.msk [vmem:[#allocation6 + $0x1b0] sm:$0xff] %vm611, %v587
        %667 = vst.msk [vmem:[#allocation6 + $0x1b8] sm:$0xff] %vm611, %v588
        %668 = vst.msk [vmem:[#allocation6 + $0x1c0] sm:$0xff] %vm611, %v591
        %669 = vst.msk [vmem:[#allocation6 + $0x1c8] sm:$0xff] %vm611, %v592
        %670 = vst.msk [vmem:[#allocation6 + $0x1d0] sm:$0xff] %vm611, %v595
        %671 = vst.msk [vmem:[#allocation6 + $0x1d8] sm:$0xff] %vm611, %v596
        %672 = vst.msk [vmem:[#allocation6 + $0x1e0] sm:$0xff] %vm611, %v599
        %673 = vst.msk [vmem:[#allocation6 + $0x1e8] sm:$0xff] %vm611, %v600
        %674 = vst.msk [vmem:[#allocation6 + $0x1f0] sm:$0xff] %vm611, %v603
        %675 = vst.msk [vmem:[#allocation6 + $0x1f8] sm:$0xff] %vm611, %v604
        %740 = vrot.lane.b32.xlu0 %v481, 3
        %v741 = vpop.permute.xlu0 %740
        %742 = vrot.lane.b32.xlu0 %v482, 3
        %v743 = vpop.permute.xlu0 %742
        %744 = vrot.lane.b32.xlu0 %v485, 3
        %v745 = vpop.permute.xlu0 %744
        %746 = vrot.lane.b32.xlu0 %v486, 3
        %v747 = vpop.permute.xlu0 %746
        %748 = vrot.lane.b32.xlu0 %v489, 3
        %v749 = vpop.permute.xlu0 %748
        %750 = vrot.lane.b32.xlu0 %v490, 3
        %v751 = vpop.permute.xlu0 %750
        %752 = vrot.lane.b32.xlu0 %v493, 3
        %v753 = vpop.permute.xlu0 %752
        %754 = vrot.lane.b32.xlu0 %v494, 3
        %v755 = vpop.permute.xlu0 %754
        %756 = vrot.lane.b32.xlu0 %v497, 3
        %v757 = vpop.permute.xlu0 %756
        %758 = vrot.lane.b32.xlu0 %v498, 3
        %v759 = vpop.permute.xlu0 %758
        %760 = vrot.lane.b32.xlu0 %v501, 3
        %v761 = vpop.permute.xlu0 %760
        %762 = vrot.lane.b32.xlu0 %v502, 3
        %v763 = vpop.permute.xlu0 %762
        %764 = vrot.lane.b32.xlu0 %v505, 3
        %v765 = vpop.permute.xlu0 %764
        %766 = vrot.lane.b32.xlu0 %v506, 3
        %v767 = vpop.permute.xlu0 %766
        %768 = vrot.lane.b32.xlu0 %v509, 3
        %v769 = vpop.permute.xlu0 %768
        %770 = vrot.lane.b32.xlu0 %v510, 3
        %v771 = vpop.permute.xlu0 %770
        %772 = vrot.lane.b32.xlu0 %v513, 3
        %v773 = vpop.permute.xlu0 %772
        %774 = vrot.lane.b32.xlu0 %v514, 3
        %v775 = vpop.permute.xlu0 %774
        %776 = vrot.lane.b32.xlu0 %v517, 3
        %v777 = vpop.permute.xlu0 %776
        %778 = vrot.lane.b32.xlu0 %v518, 3
        %v779 = vpop.permute.xlu0 %778
        %780 = vrot.lane.b32.xlu0 %v521, 3
        %v781 = vpop.permute.xlu0 %780
        %782 = vrot.lane.b32.xlu0 %v522, 3
        %v783 = vpop.permute.xlu0 %782
        %784 = vrot.lane.b32.xlu0 %v525, 3
        %v785 = vpop.permute.xlu0 %784
        %786 = vrot.lane.b32.xlu0 %v526, 3
        %v787 = vpop.permute.xlu0 %786
        %788 = vrot.lane.b32.xlu0 %v529, 3
        %v789 = vpop.permute.xlu0 %788
        %790 = vrot.lane.b32.xlu0 %v530, 3
        %v791 = vpop.permute.xlu0 %790
        %792 = vrot.lane.b32.xlu0 %v533, 3
        %v793 = vpop.permute.xlu0 %792
        %794 = vrot.lane.b32.xlu0 %v534, 3
        %v795 = vpop.permute.xlu0 %794
        %796 = vrot.lane.b32.xlu0 %v537, 3
        %v797 = vpop.permute.xlu0 %796
        %798 = vrot.lane.b32.xlu0 %v538, 3
        %v799 = vpop.permute.xlu0 %798
        %800 = vrot.lane.b32.xlu0 %v541, 3
        %v801 = vpop.permute.xlu0 %800
        %802 = vrot.lane.b32.xlu0 %v542, 3
        %v803 = vpop.permute.xlu0 %802
        %804 = vrot.lane.b32.xlu0 %v545, 3
        %v805 = vpop.permute.xlu0 %804
        %806 = vrot.lane.b32.xlu0 %v546, 3
        %v807 = vpop.permute.xlu0 %806
        %808 = vrot.lane.b32.xlu0 %v549, 3
        %v809 = vpop.permute.xlu0 %808
        %810 = vrot.lane.b32.xlu0 %v550, 3
        %v811 = vpop.permute.xlu0 %810
        %812 = vrot.lane.b32.xlu0 %v553, 3
        %v813 = vpop.permute.xlu0 %812
        %814 = vrot.lane.b32.xlu0 %v554, 3
        %v815 = vpop.permute.xlu0 %814
        %816 = vrot.lane.b32.xlu0 %v557, 3
        %v817 = vpop.permute.xlu0 %816
        %818 = vrot.lane.b32.xlu0 %v558, 3
        %v819 = vpop.permute.xlu0 %818
        %820 = vrot.lane.b32.xlu0 %v561, 3
        %v821 = vpop.permute.xlu0 %820
        %822 = vrot.lane.b32.xlu0 %v562, 3
        %v823 = vpop.permute.xlu0 %822
        %824 = vrot.lane.b32.xlu0 %v565, 3
        %v825 = vpop.permute.xlu0 %824
        %826 = vrot.lane.b32.xlu0 %v566, 3
        %v827 = vpop.permute.xlu0 %826
        %828 = vrot.lane.b32.xlu0 %v569, 3
        %v829 = vpop.permute.xlu0 %828
        %830 = vrot.lane.b32.xlu0 %v570, 3
        %v831 = vpop.permute.xlu0 %830
        %832 = vrot.lane.b32.xlu0 %v573, 3
        %v833 = vpop.permute.xlu0 %832
        %834 = vrot.lane.b32.xlu0 %v574, 3
        %v835 = vpop.permute.xlu0 %834
        %836 = vrot.lane.b32.xlu0 %v577, 3
        %v837 = vpop.permute.xlu0 %836
        %838 = vrot.lane.b32.xlu0 %v578, 3
        %v839 = vpop.permute.xlu0 %838
        %840 = vrot.lane.b32.xlu0 %v581, 3
        %v841 = vpop.permute.xlu0 %840
        %842 = vrot.lane.b32.xlu0 %v582, 3
        %v843 = vpop.permute.xlu0 %842
        %844 = vrot.lane.b32.xlu0 %v585, 3
        %v845 = vpop.permute.xlu0 %844
        %846 = vrot.lane.b32.xlu0 %v586, 3
        %v847 = vpop.permute.xlu0 %846
        %848 = vrot.lane.b32.xlu0 %v589, 3
        %v849 = vpop.permute.xlu0 %848
        %850 = vrot.lane.b32.xlu0 %v590, 3
        %v851 = vpop.permute.xlu0 %850
        %852 = vrot.lane.b32.xlu0 %v593, 3
        %v853 = vpop.permute.xlu0 %852
        %854 = vrot.lane.b32.xlu0 %v594, 3
        %v855 = vpop.permute.xlu0 %854
        %856 = vrot.lane.b32.xlu0 %v597, 3
        %v857 = vpop.permute.xlu0 %856
        %858 = vrot.lane.b32.xlu0 %v598, 3
        %v859 = vpop.permute.xlu0 %858
        %860 = vrot.lane.b32.xlu0 %v601, 3
        %v861 = vpop.permute.xlu0 %860
        %862 = vrot.lane.b32.xlu0 %v602, 3
        %v863 = vpop.permute.xlu0 %862
        %864 = vrot.lane.b32.xlu0 %v605, 3
        %v865 = vpop.permute.xlu0 %864
        %866 = vrot.lane.b32.xlu0 %v606, 3
        %v867 = vpop.permute.xlu0 %866
        %vm932 = vcmask 48152
        %933 = vst.msk [vmem:[#allocation6] sm:$0xff] %vm932, %v741
        %934 = vst.msk [vmem:[#allocation6 + $0x8] sm:$0xff] %vm932, %v743
        %935 = vst.msk [vmem:[#allocation6 + $0x10] sm:$0xff] %vm932, %v745
        %936 = vst.msk [vmem:[#allocation6 + $0x18] sm:$0xff] %vm932, %v747
        %937 = vst.msk [vmem:[#allocation6 + $0x20] sm:$0xff] %vm932, %v749
        %938 = vst.msk [vmem:[#allocation6 + $0x28] sm:$0xff] %vm932, %v751
        %939 = vst.msk [vmem:[#allocation6 + $0x30] sm:$0xff] %vm932, %v753
        %940 = vst.msk [vmem:[#allocation6 + $0x38] sm:$0xff] %vm932, %v755
        %941 = vst.msk [vmem:[#allocation6 + $0x40] sm:$0xff] %vm932, %v757
        %942 = vst.msk [vmem:[#allocation6 + $0x48] sm:$0xff] %vm932, %v759
        %943 = vst.msk [vmem:[#allocation6 + $0x50] sm:$0xff] %vm932, %v761
        %944 = vst.msk [vmem:[#allocation6 + $0x58] sm:$0xff] %vm932, %v763
        %945 = vst.msk [vmem:[#allocation6 + $0x60] sm:$0xff] %vm932, %v765
        %946 = vst.msk [vmem:[#allocation6 + $0x68] sm:$0xff] %vm932, %v767
        %947 = vst.msk [vmem:[#allocation6 + $0x70] sm:$0xff] %vm932, %v769
        %948 = vst.msk [vmem:[#allocation6 + $0x78] sm:$0xff] %vm932, %v771
        %949 = vst.msk [vmem:[#allocation6 + $0x80] sm:$0xff] %vm932, %v773
        %950 = vst.msk [vmem:[#allocation6 + $0x88] sm:$0xff] %vm932, %v775
        %951 = vst.msk [vmem:[#allocation6 + $0x90] sm:$0xff] %vm932, %v777
        %952 = vst.msk [vmem:[#allocation6 + $0x98] sm:$0xff] %vm932, %v779
        %953 = vst.msk [vmem:[#allocation6 + $0xa0] sm:$0xff] %vm932, %v781
        %954 = vst.msk [vmem:[#allocation6 + $0xa8] sm:$0xff] %vm932, %v783
        %955 = vst.msk [vmem:[#allocation6 + $0xb0] sm:$0xff] %vm932, %v785
        %956 = vst.msk [vmem:[#allocation6 + $0xb8] sm:$0xff] %vm932, %v787
        %957 = vst.msk [vmem:[#allocation6 + $0xc0] sm:$0xff] %vm932, %v789
        %958 = vst.msk [vmem:[#allocation6 + $0xc8] sm:$0xff] %vm932, %v791
        %959 = vst.msk [vmem:[#allocation6 + $0xd0] sm:$0xff] %vm932, %v793
        %960 = vst.msk [vmem:[#allocation6 + $0xd8] sm:$0xff] %vm932, %v795
        %961 = vst.msk [vmem:[#allocation6 + $0xe0] sm:$0xff] %vm932, %v797
        %962 = vst.msk [vmem:[#allocation6 + $0xe8] sm:$0xff] %vm932, %v799
        %963 = vst.msk [vmem:[#allocation6 + $0xf0] sm:$0xff] %vm932, %v801
        %964 = vst.msk [vmem:[#allocation6 + $0xf8] sm:$0xff] %vm932, %v803
        %965 = vst.msk [vmem:[#allocation6 + $0x100] sm:$0xff] %vm932, %v805
        %966 = vst.msk [vmem:[#allocation6 + $0x108] sm:$0xff] %vm932, %v807
        %967 = vst.msk [vmem:[#allocation6 + $0x110] sm:$0xff] %vm932, %v809
        %968 = vst.msk [vmem:[#allocation6 + $0x118] sm:$0xff] %vm932, %v811
        %969 = vst.msk [vmem:[#allocation6 + $0x120] sm:$0xff] %vm932, %v813
        %970 = vst.msk [vmem:[#allocation6 + $0x128] sm:$0xff] %vm932, %v815
        %971 = vst.msk [vmem:[#allocation6 + $0x130] sm:$0xff] %vm932, %v817
        %972 = vst.msk [vmem:[#allocation6 + $0x138] sm:$0xff] %vm932, %v819
        %973 = vst.msk [vmem:[#allocation6 + $0x140] sm:$0xff] %vm932, %v821
        %974 = vst.msk [vmem:[#allocation6 + $0x148] sm:$0xff] %vm932, %v823
        %975 = vst.msk [vmem:[#allocation6 + $0x150] sm:$0xff] %vm932, %v825
        %976 = vst.msk [vmem:[#allocation6 + $0x158] sm:$0xff] %vm932, %v827
        %977 = vst.msk [vmem:[#allocation6 + $0x160] sm:$0xff] %vm932, %v829
        %978 = vst.msk [vmem:[#allocation6 + $0x168] sm:$0xff] %vm932, %v831
        %979 = vst.msk [vmem:[#allocation6 + $0x170] sm:$0xff] %vm932, %v833
        %980 = vst.msk [vmem:[#allocation6 + $0x178] sm:$0xff] %vm932, %v835
        %981 = vst.msk [vmem:[#allocation6 + $0x180] sm:$0xff] %vm932, %v837
        %982 = vst.msk [vmem:[#allocation6 + $0x188] sm:$0xff] %vm932, %v839
        %983 = vst.msk [vmem:[#allocation6 + $0x190] sm:$0xff] %vm932, %v841
        %984 = vst.msk [vmem:[#allocation6 + $0x198] sm:$0xff] %vm932, %v843
        %985 = vst.msk [vmem:[#allocation6 + $0x1a0] sm:$0xff] %vm932, %v845
        %986 = vst.msk [vmem:[#allocation6 + $0x1a8] sm:$0xff] %vm932, %v847
        %987 = vst.msk [vmem:[#allocation6 + $0x1b0] sm:$0xff] %vm932, %v849
        %988 = vst.msk [vmem:[#allocation6 + $0x1b8] sm:$0xff] %vm932, %v851
        %989 = vst.msk [vmem:[#allocation6 + $0x1c0] sm:$0xff] %vm932, %v853
        %990 = vst.msk [vmem:[#allocation6 + $0x1c8] sm:$0xff] %vm932, %v855
        %991 = vst.msk [vmem:[#allocation6 + $0x1d0] sm:$0xff] %vm932, %v857
        %992 = vst.msk [vmem:[#allocation6 + $0x1d8] sm:$0xff] %vm932, %v859
        %993 = vst.msk [vmem:[#allocation6 + $0x1e0] sm:$0xff] %vm932, %v861
        %994 = vst.msk [vmem:[#allocation6 + $0x1e8] sm:$0xff] %vm932, %v863
        %995 = vst.msk [vmem:[#allocation6 + $0x1f0] sm:$0xff] %vm932, %v865
        %996 = vst.msk [vmem:[#allocation6 + $0x1f8] sm:$0xff] %vm932, %v867
        %1061 = vrot.lane.b32.xlu0 %v483, 6
        %v1062 = vpop.permute.xlu0 %1061
        %1063 = vrot.lane.b32.xlu0 %v484, 6
        %v1064 = vpop.permute.xlu0 %1063
        %1065 = vrot.lane.b32.xlu0 %v487, 6
        %v1066 = vpop.permute.xlu0 %1065
        %1067 = vrot.lane.b32.xlu0 %v488, 6
        %v1068 = vpop.permute.xlu0 %1067
        %1069 = vrot.lane.b32.xlu0 %v491, 6
        %v1070 = vpop.permute.xlu0 %1069
        %1071 = vrot.lane.b32.xlu0 %v492, 6
        %v1072 = vpop.permute.xlu0 %1071
        %1073 = vrot.lane.b32.xlu0 %v495, 6
        %v1074 = vpop.permute.xlu0 %1073
        %1075 = vrot.lane.b32.xlu0 %v496, 6
        %v1076 = vpop.permute.xlu0 %1075
        %1077 = vrot.lane.b32.xlu0 %v499, 6
        %v1078 = vpop.permute.xlu0 %1077
        %1079 = vrot.lane.b32.xlu0 %v500, 6
        %v1080 = vpop.permute.xlu0 %1079
        %1081 = vrot.lane.b32.xlu0 %v503, 6
        %v1082 = vpop.permute.xlu0 %1081
        %1083 = vrot.lane.b32.xlu0 %v504, 6
        %v1084 = vpop.permute.xlu0 %1083
        %1085 = vrot.lane.b32.xlu0 %v507, 6
        %v1086 = vpop.permute.xlu0 %1085
        %1087 = vrot.lane.b32.xlu0 %v508, 6
        %v1088 = vpop.permute.xlu0 %1087
        %1089 = vrot.lane.b32.xlu0 %v511, 6
        %v1090 = vpop.permute.xlu0 %1089
        %1091 = vrot.lane.b32.xlu0 %v512, 6
        %v1092 = vpop.permute.xlu0 %1091
        %1093 = vrot.lane.b32.xlu0 %v515, 6
        %v1094 = vpop.permute.xlu0 %1093
        %1095 = vrot.lane.b32.xlu0 %v516, 6
        %v1096 = vpop.permute.xlu0 %1095
        %1097 = vrot.lane.b32.xlu0 %v519, 6
        %v1098 = vpop.permute.xlu0 %1097
        %1099 = vrot.lane.b32.xlu0 %v520, 6
        %v1100 = vpop.permute.xlu0 %1099
        %1101 = vrot.lane.b32.xlu0 %v523, 6
        %v1102 = vpop.permute.xlu0 %1101
        %1103 = vrot.lane.b32.xlu0 %v524, 6
        %v1104 = vpop.permute.xlu0 %1103
        %1105 = vrot.lane.b32.xlu0 %v527, 6
        %v1106 = vpop.permute.xlu0 %1105
        %1107 = vrot.lane.b32.xlu0 %v528, 6
        %v1108 = vpop.permute.xlu0 %1107
        %1109 = vrot.lane.b32.xlu0 %v531, 6
        %v1110 = vpop.permute.xlu0 %1109
        %1111 = vrot.lane.b32.xlu0 %v532, 6
        %v1112 = vpop.permute.xlu0 %1111
        %1113 = vrot.lane.b32.xlu0 %v535, 6
        %v1114 = vpop.permute.xlu0 %1113
        %1115 = vrot.lane.b32.xlu0 %v536, 6
        %v1116 = vpop.permute.xlu0 %1115
        %1117 = vrot.lane.b32.xlu0 %v539, 6
        %v1118 = vpop.permute.xlu0 %1117
        %1119 = vrot.lane.b32.xlu0 %v540, 6
        %v1120 = vpop.permute.xlu0 %1119
        %1121 = vrot.lane.b32.xlu0 %v543, 6
        %v1122 = vpop.permute.xlu0 %1121
        %1123 = vrot.lane.b32.xlu0 %v544, 6
        %v1124 = vpop.permute.xlu0 %1123
        %1125 = vrot.lane.b32.xlu0 %v547, 6
        %v1126 = vpop.permute.xlu0 %1125
        %1127 = vrot.lane.b32.xlu0 %v548, 6
        %v1128 = vpop.permute.xlu0 %1127
        %1129 = vrot.lane.b32.xlu0 %v551, 6
        %v1130 = vpop.permute.xlu0 %1129
        %1131 = vrot.lane.b32.xlu0 %v552, 6
        %v1132 = vpop.permute.xlu0 %1131
        %1133 = vrot.lane.b32.xlu0 %v555, 6
        %v1134 = vpop.permute.xlu0 %1133
        %1135 = vrot.lane.b32.xlu0 %v556, 6
        %v1136 = vpop.permute.xlu0 %1135
        %1137 = vrot.lane.b32.xlu0 %v559, 6
        %v1138 = vpop.permute.xlu0 %1137
        %1139 = vrot.lane.b32.xlu0 %v560, 6
        %v1140 = vpop.permute.xlu0 %1139
        %1141 = vrot.lane.b32.xlu0 %v563, 6
        %v1142 = vpop.permute.xlu0 %1141
        %1143 = vrot.lane.b32.xlu0 %v564, 6
        %v1144 = vpop.permute.xlu0 %1143
        %1145 = vrot.lane.b32.xlu0 %v567, 6
        %v1146 = vpop.permute.xlu0 %1145
        %1147 = vrot.lane.b32.xlu0 %v568, 6
        %v1148 = vpop.permute.xlu0 %1147
        %1149 = vrot.lane.b32.xlu0 %v571, 6
        %v1150 = vpop.permute.xlu0 %1149
        %1151 = vrot.lane.b32.xlu0 %v572, 6
        %v1152 = vpop.permute.xlu0 %1151
        %1153 = vrot.lane.b32.xlu0 %v575, 6
        %v1154 = vpop.permute.xlu0 %1153
        %1155 = vrot.lane.b32.xlu0 %v576, 6
        %v1156 = vpop.permute.xlu0 %1155
        %1157 = vrot.lane.b32.xlu0 %v579, 6
        %v1158 = vpop.permute.xlu0 %1157
        %1159 = vrot.lane.b32.xlu0 %v580, 6
        %v1160 = vpop.permute.xlu0 %1159
        %1161 = vrot.lane.b32.xlu0 %v583, 6
        %v1162 = vpop.permute.xlu0 %1161
        %1163 = vrot.lane.b32.xlu0 %v584, 6
        %v1164 = vpop.permute.xlu0 %1163
        %1165 = vrot.lane.b32.xlu0 %v587, 6
        %v1166 = vpop.permute.xlu0 %1165
        %1167 = vrot.lane.b32.xlu0 %v588, 6
        %v1168 = vpop.permute.xlu0 %1167
        %1169 = vrot.lane.b32.xlu0 %v591, 6
        %v1170 = vpop.permute.xlu0 %1169
        %1171 = vrot.lane.b32.xlu0 %v592, 6
        %v1172 = vpop.permute.xlu0 %1171
        %1173 = vrot.lane.b32.xlu0 %v595, 6
        %v1174 = vpop.permute.xlu0 %1173
        %1175 = vrot.lane.b32.xlu0 %v596, 6
        %v1176 = vpop.permute.xlu0 %1175
        %1177 = vrot.lane.b32.xlu0 %v599, 6
        %v1178 = vpop.permute.xlu0 %1177
        %1179 = vrot.lane.b32.xlu0 %v600, 6
        %v1180 = vpop.permute.xlu0 %1179
        %1181 = vrot.lane.b32.xlu0 %v603, 6
        %v1182 = vpop.permute.xlu0 %1181
        %1183 = vrot.lane.b32.xlu0 %v604, 6
        %v1184 = vpop.permute.xlu0 %1183
        %1185 = vrot.lane.b32.xlu0 %v607, 6
        %v1186 = vpop.permute.xlu0 %1185
        %1187 = vrot.lane.b32.xlu0 %v608, 6
        %v1188 = vpop.permute.xlu0 %1187
        %vm1253 = vcmask 72752
        %1254 = vst.msk [vmem:[#allocation6] sm:$0xff] %vm1253, %v1062
        %1255 = vst.msk [vmem:[#allocation6 + $0x8] sm:$0xff] %vm1253, %v1064
        %1256 = vst.msk [vmem:[#allocation6 + $0x10] sm:$0xff] %vm1253, %v1066
        %1257 = vst.msk [vmem:[#allocation6 + $0x18] sm:$0xff] %vm1253, %v1068
        %1258 = vst.msk [vmem:[#allocation6 + $0x20] sm:$0xff] %vm1253, %v1070
        %1259 = vst.msk [vmem:[#allocation6 + $0x28] sm:$0xff] %vm1253, %v1072
        %1260 = vst.msk [vmem:[#allocation6 + $0x30] sm:$0xff] %vm1253, %v1074
        %1261 = vst.msk [vmem:[#allocation6 + $0x38] sm:$0xff] %vm1253, %v1076
        %1262 = vst.msk [vmem:[#allocation6 + $0x40] sm:$0xff] %vm1253, %v1078
        %1263 = vst.msk [vmem:[#allocation6 + $0x48] sm:$0xff] %vm1253, %v1080
        %1264 = vst.msk [vmem:[#allocation6 + $0x50] sm:$0xff] %vm1253, %v1082
        %1265 = vst.msk [vmem:[#allocation6 + $0x58] sm:$0xff] %vm1253, %v1084
        %1266 = vst.msk [vmem:[#allocation6 + $0x60] sm:$0xff] %vm1253, %v1086
        %1267 = vst.msk [vmem:[#allocation6 + $0x68] sm:$0xff] %vm1253, %v1088
        %1268 = vst.msk [vmem:[#allocation6 + $0x70] sm:$0xff] %vm1253, %v1090
        %1269 = vst.msk [vmem:[#allocation6 + $0x78] sm:$0xff] %vm1253, %v1092
        %1270 = vst.msk [vmem:[#allocation6 + $0x80] sm:$0xff] %vm1253, %v1094
        %1271 = vst.msk [vmem:[#allocation6 + $0x88] sm:$0xff] %vm1253, %v1096
        %1272 = vst.msk [vmem:[#allocation6 + $0x90] sm:$0xff] %vm1253, %v1098
        %1273 = vst.msk [vmem:[#allocation6 + $0x98] sm:$0xff] %vm1253, %v1100
        %1274 = vst.msk [vmem:[#allocation6 + $0xa0] sm:$0xff] %vm1253, %v1102
        %1275 = vst.msk [vmem:[#allocation6 + $0xa8] sm:$0xff] %vm1253, %v1104
        %1276 = vst.msk [vmem:[#allocation6 + $0xb0] sm:$0xff] %vm1253, %v1106
        %1277 = vst.msk [vmem:[#allocation6 + $0xb8] sm:$0xff] %vm1253, %v1108
        %1278 = vst.msk [vmem:[#allocation6 + $0xc0] sm:$0xff] %vm1253, %v1110
        %1279 = vst.msk [vmem:[#allocation6 + $0xc8] sm:$0xff] %vm1253, %v1112
        %1280 = vst.msk [vmem:[#allocation6 + $0xd0] sm:$0xff] %vm1253, %v1114
        %1281 = vst.msk [vmem:[#allocation6 + $0xd8] sm:$0xff] %vm1253, %v1116
        %1282 = vst.msk [vmem:[#allocation6 + $0xe0] sm:$0xff] %vm1253, %v1118
        %1283 = vst.msk [vmem:[#allocation6 + $0xe8] sm:$0xff] %vm1253, %v1120
        %1284 = vst.msk [vmem:[#allocation6 + $0xf0] sm:$0xff] %vm1253, %v1122
        %1285 = vst.msk [vmem:[#allocation6 + $0xf8] sm:$0xff] %vm1253, %v1124
        %1286 = vst.msk [vmem:[#allocation6 + $0x100] sm:$0xff] %vm1253, %v1126
        %1287 = vst.msk [vmem:[#allocation6 + $0x108] sm:$0xff] %vm1253, %v1128
        %1288 = vst.msk [vmem:[#allocation6 + $0x110] sm:$0xff] %vm1253, %v1130
        %1289 = vst.msk [vmem:[#allocation6 + $0x118] sm:$0xff] %vm1253, %v1132
        %1290 = vst.msk [vmem:[#allocation6 + $0x120] sm:$0xff] %vm1253, %v1134
        %1291 = vst.msk [vmem:[#allocation6 + $0x128] sm:$0xff] %vm1253, %v1136
        %1292 = vst.msk [vmem:[#allocation6 + $0x130] sm:$0xff] %vm1253, %v1138
        %1293 = vst.msk [vmem:[#allocation6 + $0x138] sm:$0xff] %vm1253, %v1140
        %1294 = vst.msk [vmem:[#allocation6 + $0x140] sm:$0xff] %vm1253, %v1142
        %1295 = vst.msk [vmem:[#allocation6 + $0x148] sm:$0xff] %vm1253, %v1144
        %1296 = vst.msk [vmem:[#allocation6 + $0x150] sm:$0xff] %vm1253, %v1146
        %1297 = vst.msk [vmem:[#allocation6 + $0x158] sm:$0xff] %vm1253, %v1148
        %1298 = vst.msk [vmem:[#allocation6 + $0x160] sm:$0xff] %vm1253, %v1150
        %1299 = vst.msk [vmem:[#allocation6 + $0x168] sm:$0xff] %vm1253, %v1152
        %1300 = vst.msk [vmem:[#allocation6 + $0x170] sm:$0xff] %vm1253, %v1154
        %1301 = vst.msk [vmem:[#allocation6 + $0x178] sm:$0xff] %vm1253, %v1156
        %1302 = vst.msk [vmem:[#allocation6 + $0x180] sm:$0xff] %vm1253, %v1158
        %1303 = vst.msk [vmem:[#allocation6 + $0x188] sm:$0xff] %vm1253, %v1160
        %1304 = vst.msk [vmem:[#allocation6 + $0x190] sm:$0xff] %vm1253, %v1162
        %1305 = vst.msk [vmem:[#allocation6 + $0x198] sm:$0xff] %vm1253, %v1164
        %1306 = vst.msk [vmem:[#allocation6 + $0x1a0] sm:$0xff] %vm1253, %v1166
        %1307 = vst.msk [vmem:[#allocation6 + $0x1a8] sm:$0xff] %vm1253, %v1168
        %1308 = vst.msk [vmem:[#allocation6 + $0x1b0] sm:$0xff] %vm1253, %v1170
        %1309 = vst.msk [vmem:[#allocation6 + $0x1b8] sm:$0xff] %vm1253, %v1172
        %1310 = vst.msk [vmem:[#allocation6 + $0x1c0] sm:$0xff] %vm1253, %v1174
        %1311 = vst.msk [vmem:[#allocation6 + $0x1c8] sm:$0xff] %vm1253, %v1176
        %1312 = vst.msk [vmem:[#allocation6 + $0x1d0] sm:$0xff] %vm1253, %v1178
        %1313 = vst.msk [vmem:[#allocation6 + $0x1d8] sm:$0xff] %vm1253, %v1180
        %1314 = vst.msk [vmem:[#allocation6 + $0x1e0] sm:$0xff] %vm1253, %v1182
        %1315 = vst.msk [vmem:[#allocation6 + $0x1e8] sm:$0xff] %vm1253, %v1184
        %1316 = vst.msk [vmem:[#allocation6 + $0x1f0] sm:$0xff] %vm1253, %v1186
        %1317 = vst.msk [vmem:[#allocation6 + $0x1f8] sm:$0xff] %vm1253, %v1188
        %1320 = vrot.lane.b32.xlu0 %v485, 9
        %v1321 = vpop.permute.xlu0 %1320
        %1322 = vrot.lane.b32.xlu0 %v486, 9
        %v1323 = vpop.permute.xlu0 %1322
        %1324 = vrot.lane.b32.xlu0 %v489, 9
        %v1325 = vpop.permute.xlu0 %1324
        %1326 = vrot.lane.b32.xlu0 %v490, 9
        %v1327 = vpop.permute.xlu0 %1326
        %1328 = vrot.lane.b32.xlu0 %v493, 9
        %v1329 = vpop.permute.xlu0 %1328
        %1330 = vrot.lane.b32.xlu0 %v494, 9
        %v1331 = vpop.permute.xlu0 %1330
        %1332 = vrot.lane.b32.xlu0 %v497, 9
        %v1333 = vpop.permute.xlu0 %1332
        %1334 = vrot.lane.b32.xlu0 %v498, 9
        %v1335 = vpop.permute.xlu0 %1334
        %1336 = vrot.lane.b32.xlu0 %v501, 9
        %v1337 = vpop.permute.xlu0 %1336
        %1338 = vrot.lane.b32.xlu0 %v502, 9
        %v1339 = vpop.permute.xlu0 %1338
        %1340 = vrot.lane.b32.xlu0 %v505, 9
        %v1341 = vpop.permute.xlu0 %1340
        %1342 = vrot.lane.b32.xlu0 %v506, 9
        %v1343 = vpop.permute.xlu0 %1342
        %1344 = vrot.lane.b32.xlu0 %v509, 9
        %v1345 = vpop.permute.xlu0 %1344
        %1346 = vrot.lane.b32.xlu0 %v510, 9
        %v1347 = vpop.permute.xlu0 %1346
        %1348 = vrot.lane.b32.xlu0 %v513, 9
        %v1349 = vpop.permute.xlu0 %1348
        %1350 = vrot.lane.b32.xlu0 %v514, 9
        %v1351 = vpop.permute.xlu0 %1350
        %1352 = vrot.lane.b32.xlu0 %v517, 9
        %v1353 = vpop.permute.xlu0 %1352
        %1354 = vrot.lane.b32.xlu0 %v518, 9
        %v1355 = vpop.permute.xlu0 %1354
        %1356 = vrot.lane.b32.xlu0 %v521, 9
        %v1357 = vpop.permute.xlu0 %1356
        %1358 = vrot.lane.b32.xlu0 %v522, 9
        %v1359 = vpop.permute.xlu0 %1358
        %1360 = vrot.lane.b32.xlu0 %v525, 9
        %v1361 = vpop.permute.xlu0 %1360
        %1362 = vrot.lane.b32.xlu0 %v526, 9
        %v1363 = vpop.permute.xlu0 %1362
        %1364 = vrot.lane.b32.xlu0 %v529, 9
        %v1365 = vpop.permute.xlu0 %1364
        %1366 = vrot.lane.b32.xlu0 %v530, 9
        %v1367 = vpop.permute.xlu0 %1366
        %1368 = vrot.lane.b32.xlu0 %v533, 9
        %v1369 = vpop.permute.xlu0 %1368
        %1370 = vrot.lane.b32.xlu0 %v534, 9
        %v1371 = vpop.permute.xlu0 %1370
        %1372 = vrot.lane.b32.xlu0 %v537, 9
        %v1373 = vpop.permute.xlu0 %1372
        %1374 = vrot.lane.b32.xlu0 %v538, 9
        %v1375 = vpop.permute.xlu0 %1374
        %1376 = vrot.lane.b32.xlu0 %v541, 9
        %v1377 = vpop.permute.xlu0 %1376
        %1378 = vrot.lane.b32.xlu0 %v542, 9
        %v1379 = vpop.permute.xlu0 %1378
        %1380 = vrot.lane.b32.xlu0 %v545, 9
        %v1381 = vpop.permute.xlu0 %1380
        %1382 = vrot.lane.b32.xlu0 %v546, 9
        %v1383 = vpop.permute.xlu0 %1382
        %1384 = vrot.lane.b32.xlu0 %v549, 9
        %v1385 = vpop.permute.xlu0 %1384
        %1386 = vrot.lane.b32.xlu0 %v550, 9
        %v1387 = vpop.permute.xlu0 %1386
        %1388 = vrot.lane.b32.xlu0 %v553, 9
        %v1389 = vpop.permute.xlu0 %1388
        %1390 = vrot.lane.b32.xlu0 %v554, 9
        %v1391 = vpop.permute.xlu0 %1390
        %1392 = vrot.lane.b32.xlu0 %v557, 9
        %v1393 = vpop.permute.xlu0 %1392
        %1394 = vrot.lane.b32.xlu0 %v558, 9
        %v1395 = vpop.permute.xlu0 %1394
        %1396 = vrot.lane.b32.xlu0 %v561, 9
        %v1397 = vpop.permute.xlu0 %1396
        %1398 = vrot.lane.b32.xlu0 %v562, 9
        %v1399 = vpop.permute.xlu0 %1398
        %1400 = vrot.lane.b32.xlu0 %v565, 9
        %v1401 = vpop.permute.xlu0 %1400
        %1402 = vrot.lane.b32.xlu0 %v566, 9
        %v1403 = vpop.permute.xlu0 %1402
        %1404 = vrot.lane.b32.xlu0 %v569, 9
        %v1405 = vpop.permute.xlu0 %1404
        %1406 = vrot.lane.b32.xlu0 %v570, 9
        %v1407 = vpop.permute.xlu0 %1406
        %1408 = vrot.lane.b32.xlu0 %v573, 9
        %v1409 = vpop.permute.xlu0 %1408
        %1410 = vrot.lane.b32.xlu0 %v574, 9
        %v1411 = vpop.permute.xlu0 %1410
        %1412 = vrot.lane.b32.xlu0 %v577, 9
        %v1413 = vpop.permute.xlu0 %1412
        %1414 = vrot.lane.b32.xlu0 %v578, 9
        %v1415 = vpop.permute.xlu0 %1414
        %1416 = vrot.lane.b32.xlu0 %v581, 9
        %v1417 = vpop.permute.xlu0 %1416
        %1418 = vrot.lane.b32.xlu0 %v582, 9
        %v1419 = vpop.permute.xlu0 %1418
        %1420 = vrot.lane.b32.xlu0 %v585, 9
        %v1421 = vpop.permute.xlu0 %1420
        %1422 = vrot.lane.b32.xlu0 %v586, 9
        %v1423 = vpop.permute.xlu0 %1422
        %1424 = vrot.lane.b32.xlu0 %v589, 9
        %v1425 = vpop.permute.xlu0 %1424
        %1426 = vrot.lane.b32.xlu0 %v590, 9
        %v1427 = vpop.permute.xlu0 %1426
        %1428 = vrot.lane.b32.xlu0 %v593, 9
        %v1429 = vpop.permute.xlu0 %1428
        %1430 = vrot.lane.b32.xlu0 %v594, 9
        %v1431 = vpop.permute.xlu0 %1430
        %1432 = vrot.lane.b32.xlu0 %v597, 9
        %v1433 = vpop.permute.xlu0 %1432
        %1434 = vrot.lane.b32.xlu0 %v598, 9
        %v1435 = vpop.permute.xlu0 %1434
        %1436 = vrot.lane.b32.xlu0 %v601, 9
        %v1437 = vpop.permute.xlu0 %1436
        %1438 = vrot.lane.b32.xlu0 %v602, 9
        %v1439 = vpop.permute.xlu0 %1438
        %1440 = vrot.lane.b32.xlu0 %v605, 9
        %v1441 = vpop.permute.xlu0 %1440
        %1442 = vrot.lane.b32.xlu0 %v606, 9
        %v1443 = vpop.permute.xlu0 %1442
        %1444 = vrot.lane.b32.xlu0 %v609, 9
        %v1445 = vpop.permute.xlu0 %1444
        %1446 = vrot.lane.b32.xlu0 %v610, 9
        %v1447 = vpop.permute.xlu0 %1446
        %vm1512 = vcmask 97352
        %1513 = vst.msk [vmem:[#allocation6] sm:$0xff] %vm1512, %v1321
        %1514 = vst.msk [vmem:[#allocation6 + $0x8] sm:$0xff] %vm1512, %v1323
        %1515 = vst.msk [vmem:[#allocation6 + $0x10] sm:$0xff] %vm1512, %v1325
        %1516 = vst.msk [vmem:[#allocation6 + $0x18] sm:$0xff] %vm1512, %v1327
        %1517 = vst.msk [vmem:[#allocation6 + $0x20] sm:$0xff] %vm1512, %v1329
        %1518 = vst.msk [vmem:[#allocation6 + $0x28] sm:$0xff] %vm1512, %v1331
        %1519 = vst.msk [vmem:[#allocation6 + $0x30] sm:$0xff] %vm1512, %v1333
        %1520 = vst.msk [vmem:[#allocation6 + $0x38] sm:$0xff] %vm1512, %v1335
        %1521 = vst.msk [vmem:[#allocation6 + $0x40] sm:$0xff] %vm1512, %v1337
        %1522 = vst.msk [vmem:[#allocation6 + $0x48] sm:$0xff] %vm1512, %v1339
        %1523 = vst.msk [vmem:[#allocation6 + $0x50] sm:$0xff] %vm1512, %v1341
        %1524 = vst.msk [vmem:[#allocation6 + $0x58] sm:$0xff] %vm1512, %v1343
        %1525 = vst.msk [vmem:[#allocation6 + $0x60] sm:$0xff] %vm1512, %v1345
        %1526 = vst.msk [vmem:[#allocation6 + $0x68] sm:$0xff] %vm1512, %v1347
        %1527 = vst.msk [vmem:[#allocation6 + $0x70] sm:$0xff] %vm1512, %v1349
        %1528 = vst.msk [vmem:[#allocation6 + $0x78] sm:$0xff] %vm1512, %v1351
        %1529 = vst.msk [vmem:[#allocation6 + $0x80] sm:$0xff] %vm1512, %v1353
        %1530 = vst.msk [vmem:[#allocation6 + $0x88] sm:$0xff] %vm1512, %v1355
        %1531 = vst.msk [vmem:[#allocation6 + $0x90] sm:$0xff] %vm1512, %v1357
        %1532 = vst.msk [vmem:[#allocation6 + $0x98] sm:$0xff] %vm1512, %v1359
        %1533 = vst.msk [vmem:[#allocation6 + $0xa0] sm:$0xff] %vm1512, %v1361
        %1534 = vst.msk [vmem:[#allocation6 + $0xa8] sm:$0xff] %vm1512, %v1363
        %1535 = vst.msk [vmem:[#allocation6 + $0xb0] sm:$0xff] %vm1512, %v1365
        %1536 = vst.msk [vmem:[#allocation6 + $0xb8] sm:$0xff] %vm1512, %v1367
        %1537 = vst.msk [vmem:[#allocation6 + $0xc0] sm:$0xff] %vm1512, %v1369
        %1538 = vst.msk [vmem:[#allocation6 + $0xc8] sm:$0xff] %vm1512, %v1371
        %1539 = vst.msk [vmem:[#allocation6 + $0xd0] sm:$0xff] %vm1512, %v1373
        %1540 = vst.msk [vmem:[#allocation6 + $0xd8] sm:$0xff] %vm1512, %v1375
        %1541 = vst.msk [vmem:[#allocation6 + $0xe0] sm:$0xff] %vm1512, %v1377
        %1542 = vst.msk [vmem:[#allocation6 + $0xe8] sm:$0xff] %vm1512, %v1379
        %1543 = vst.msk [vmem:[#allocation6 + $0xf0] sm:$0xff] %vm1512, %v1381
        %1544 = vst.msk [vmem:[#allocation6 + $0xf8] sm:$0xff] %vm1512, %v1383
        %1545 = vst.msk [vmem:[#allocation6 + $0x100] sm:$0xff] %vm1512, %v1385
        %1546 = vst.msk [vmem:[#allocation6 + $0x108] sm:$0xff] %vm1512, %v1387
        %1547 = vst.msk [vmem:[#allocation6 + $0x110] sm:$0xff] %vm1512, %v1389
        %1548 = vst.msk [vmem:[#allocation6 + $0x118] sm:$0xff] %vm1512, %v1391
        %1549 = vst.msk [vmem:[#allocation6 + $0x120] sm:$0xff] %vm1512, %v1393
        %1550 = vst.msk [vmem:[#allocation6 + $0x128] sm:$0xff] %vm1512, %v1395
        %1551 = vst.msk [vmem:[#allocation6 + $0x130] sm:$0xff] %vm1512, %v1397
        %1552 = vst.msk [vmem:[#allocation6 + $0x138] sm:$0xff] %vm1512, %v1399
        %1553 = vst.msk [vmem:[#allocation6 + $0x140] sm:$0xff] %vm1512, %v1401
        %1554 = vst.msk [vmem:[#allocation6 + $0x148] sm:$0xff] %vm1512, %v1403
        %1555 = vst.msk [vmem:[#allocation6 + $0x150] sm:$0xff] %vm1512, %v1405
        %1556 = vst.msk [vmem:[#allocation6 + $0x158] sm:$0xff] %vm1512, %v1407
        %1557 = vst.msk [vmem:[#allocation6 + $0x160] sm:$0xff] %vm1512, %v1409
        %1558 = vst.msk [vmem:[#allocation6 + $0x168] sm:$0xff] %vm1512, %v1411
        %1559 = vst.msk [vmem:[#allocation6 + $0x170] sm:$0xff] %vm1512, %v1413
        %1560 = vst.msk [vmem:[#allocation6 + $0x178] sm:$0xff] %vm1512, %v1415
        %1561 = vst.msk [vmem:[#allocation6 + $0x180] sm:$0xff] %vm1512, %v1417
        %1562 = vst.msk [vmem:[#allocation6 + $0x188] sm:$0xff] %vm1512, %v1419
        %1563 = vst.msk [vmem:[#allocation6 + $0x190] sm:$0xff] %vm1512, %v1421
        %1564 = vst.msk [vmem:[#allocation6 + $0x198] sm:$0xff] %vm1512, %v1423
        %1565 = vst.msk [vmem:[#allocation6 + $0x1a0] sm:$0xff] %vm1512, %v1425
        %1566 = vst.msk [vmem:[#allocation6 + $0x1a8] sm:$0xff] %vm1512, %v1427
        %1567 = vst.msk [vmem:[#allocation6 + $0x1b0] sm:$0xff] %vm1512, %v1429
        %1568 = vst.msk [vmem:[#allocation6 + $0x1b8] sm:$0xff] %vm1512, %v1431
        %1569 = vst.msk [vmem:[#allocation6 + $0x1c0] sm:$0xff] %vm1512, %v1433
        %1570 = vst.msk [vmem:[#allocation6 + $0x1c8] sm:$0xff] %vm1512, %v1435
        %1571 = vst.msk [vmem:[#allocation6 + $0x1d0] sm:$0xff] %vm1512, %v1437
        %1572 = vst.msk [vmem:[#allocation6 + $0x1d8] sm:$0xff] %vm1512, %v1439
        %1573 = vst.msk [vmem:[#allocation6 + $0x1e0] sm:$0xff] %vm1512, %v1441
        %1574 = vst.msk [vmem:[#allocation6 + $0x1e8] sm:$0xff] %vm1512, %v1443
        %1575 = vst.msk [vmem:[#allocation6 + $0x1f0] sm:$0xff] %vm1512, %v1445
        %1576 = vst.msk [vmem:[#allocation6 + $0x1f8] sm:$0xff] %vm1512, %v1447
        %v1577 = vld [vmem:[#allocation6] sm:$0xff]
        %v1578 = vld [vmem:[#allocation6 + $0x8] sm:$0xff]
        %v1579 = vld [vmem:[#allocation6 + $0x10] sm:$0xff]
        %v1580 = vld [vmem:[#allocation6 + $0x18] sm:$0xff]
        %v1581 = vld [vmem:[#allocation6 + $0x20] sm:$0xff]
        %v1582 = vld [vmem:[#allocation6 + $0x28] sm:$0xff]
        %v1583 = vld [vmem:[#allocation6 + $0x30] sm:$0xff]
        %v1584 = vld [vmem:[#allocation6 + $0x38] sm:$0xff]
        %v1585 = vld [vmem:[#allocation6 + $0x40] sm:$0xff]
        %v1586 = vld [vmem:[#allocation6 + $0x48] sm:$0xff]
        %v1587 = vld [vmem:[#allocation6 + $0x50] sm:$0xff]
        %v1588 = vld [vmem:[#allocation6 + $0x58] sm:$0xff]
        %v1589 = vld [vmem:[#allocation6 + $0x60] sm:$0xff]
        %v1590 = vld [vmem:[#allocation6 + $0x68] sm:$0xff]
        %v1591 = vld [vmem:[#allocation6 + $0x70] sm:$0xff]
        %v1592 = vld [vmem:[#allocation6 + $0x78] sm:$0xff]
        %v1593 = vld [vmem:[#allocation6 + $0x80] sm:$0xff]
        %v1594 = vld [vmem:[#allocation6 + $0x88] sm:$0xff]
        %v1595 = vld [vmem:[#allocation6 + $0x90] sm:$0xff]
        %v1596 = vld [vmem:[#allocation6 + $0x98] sm:$0xff]
        %v1597 = vld [vmem:[#allocation6 + $0xa0] sm:$0xff]
        %v1598 = vld [vmem:[#allocation6 + $0xa8] sm:$0xff]
        %v1599 = vld [vmem:[#allocation6 + $0xb0] sm:$0xff]
        %v1600 = vld [vmem:[#allocation6 + $0xb8] sm:$0xff]
        %v1601 = vld [vmem:[#allocation6 + $0xc0] sm:$0xff]
        %v1602 = vld [vmem:[#allocation6 + $0xc8] sm:$0xff]
        %v1603 = vld [vmem:[#allocation6 + $0xd0] sm:$0xff]
        %v1604 = vld [vmem:[#allocation6 + $0xd8] sm:$0xff]
        %v1605 = vld [vmem:[#allocation6 + $0xe0] sm:$0xff]
        %v1606 = vld [vmem:[#allocation6 + $0xe8] sm:$0xff]
        %v1607 = vld [vmem:[#allocation6 + $0xf0] sm:$0xff]
        %v1608 = vld [vmem:[#allocation6 + $0xf8] sm:$0xff]
        %v1609 = vld [vmem:[#allocation6 + $0x100] sm:$0xff]
        %v1610 = vld [vmem:[#allocation6 + $0x108] sm:$0xff]
        %v1611 = vld [vmem:[#allocation6 + $0x110] sm:$0xff]
        %v1612 = vld [vmem:[#allocation6 + $0x118] sm:$0xff]
        %v1613 = vld [vmem:[#allocation6 + $0x120] sm:$0xff]
        %v1614 = vld [vmem:[#allocation6 + $0x128] sm:$0xff]
        %v1615 = vld [vmem:[#allocation6 + $0x130] sm:$0xff]
        %v1616 = vld [vmem:[#allocation6 + $0x138] sm:$0xff]
        %v1617 = vld [vmem:[#allocation6 + $0x140] sm:$0xff]
        %v1618 = vld [vmem:[#allocation6 + $0x148] sm:$0xff]
        %v1619 = vld [vmem:[#allocation6 + $0x150] sm:$0xff]
        %v1620 = vld [vmem:[#allocation6 + $0x158] sm:$0xff]
        %v1621 = vld [vmem:[#allocation6 + $0x160] sm:$0xff]
        %v1622 = vld [vmem:[#allocation6 + $0x168] sm:$0xff]
        %v1623 = vld [vmem:[#allocation6 + $0x170] sm:$0xff]
        %v1624 = vld [vmem:[#allocation6 + $0x178] sm:$0xff]
        %v1625 = vld [vmem:[#allocation6 + $0x180] sm:$0xff]
        %v1626 = vld [vmem:[#allocation6 + $0x188] sm:$0xff]
        %v1627 = vld [vmem:[#allocation6 + $0x190] sm:$0xff]
        %v1628 = vld [vmem:[#allocation6 + $0x198] sm:$0xff]
        %v1629 = vld [vmem:[#allocation6 + $0x1a0] sm:$0xff]
        %v1630 = vld [vmem:[#allocation6 + $0x1a8] sm:$0xff]
        %v1631 = vld [vmem:[#allocation6 + $0x1b0] sm:$0xff]
        %v1632 = vld [vmem:[#allocation6 + $0x1b8] sm:$0xff]
        %v1633 = vld [vmem:[#allocation6 + $0x1c0] sm:$0xff]
        %v1634 = vld [vmem:[#allocation6 + $0x1c8] sm:$0xff]
        %v1635 = vld [vmem:[#allocation6 + $0x1d0] sm:$0xff]
        %v1636 = vld [vmem:[#allocation6 + $0x1d8] sm:$0xff]
        %v1637 = vld [vmem:[#allocation6 + $0x1e0] sm:$0xff]
        %v1638 = vld [vmem:[#allocation6 + $0x1e8] sm:$0xff]
        %v1639 = vld [vmem:[#allocation6 + $0x1f0] sm:$0xff]
        %v1640 = vld [vmem:[#allocation6 + $0x1f8] sm:$0xff]
        %v1641 = vld [vmem:[%s2] sm:$0xff]
        %v1642 = vld [vmem:[%s2 + $0x8] sm:$0xf]
        %v1643 = vld [vmem:[%s3] sm:$0x1]
        %v1645 = vlaneseq
        %v1646 = vshrl.u32 %v1645, 7
        %v1647 = vsub.s32 0, %v1646
        %v1648 = vrot.slane %v1643, %v1647
        %vm1650 = vcmask 97280
        %v1652 = vsel %vm1650, %v1577, 0
        %v1655 = vsel %vm1650, %v1578, 0
        %v1658 = vsel %vm1650, %v1579, 0
        %v1661 = vsel %vm1650, %v1580, 0
        %v1664 = vsel %vm1650, %v1581, 0
        %v1667 = vsel %vm1650, %v1582, 0
        %v1670 = vsel %vm1650, %v1583, 0
        %v1673 = vsel %vm1650, %v1584, 0
        %v1676 = vsel %vm1650, %v1585, 0
        %v1679 = vsel %vm1650, %v1586, 0
        %v1682 = vsel %vm1650, %v1587, 0
        %v1685 = vsel %vm1650, %v1588, 0
        %v1688 = vsel %vm1650, %v1589, 0
        %v1691 = vsel %vm1650, %v1590, 0
        %v1694 = vsel %vm1650, %v1591, 0
        %v1697 = vsel %vm1650, %v1592, 0
        %v1700 = vsel %vm1650, %v1593, 0
        %v1703 = vsel %vm1650, %v1594, 0
        %v1706 = vsel %vm1650, %v1595, 0
        %v1709 = vsel %vm1650, %v1596, 0
        %v1712 = vsel %vm1650, %v1597, 0
        %v1715 = vsel %vm1650, %v1598, 0
        %v1718 = vsel %vm1650, %v1599, 0
        %v1721 = vsel %vm1650, %v1600, 0
        %v1724 = vsel %vm1650, %v1601, 0
        %v1727 = vsel %vm1650, %v1602, 0
        %v1730 = vsel %vm1650, %v1603, 0
        %v1733 = vsel %vm1650, %v1604, 0
        %v1736 = vsel %vm1650, %v1605, 0
        %v1739 = vsel %vm1650, %v1606, 0
        %v1742 = vsel %vm1650, %v1607, 0
        %v1745 = vsel %vm1650, %v1608, 0
        %v1748 = vsel %vm1650, %v1609, 0
        %v1751 = vsel %vm1650, %v1610, 0
        %v1754 = vsel %vm1650, %v1611, 0
        %v1757 = vsel %vm1650, %v1612, 0
        %v1760 = vsel %vm1650, %v1613, 0
        %v1763 = vsel %vm1650, %v1614, 0
        %v1766 = vsel %vm1650, %v1615, 0
        %v1769 = vsel %vm1650, %v1616, 0
        %v1772 = vsel %vm1650, %v1617, 0
        %v1775 = vsel %vm1650, %v1618, 0
        %v1778 = vsel %vm1650, %v1619, 0
        %v1781 = vsel %vm1650, %v1620, 0
        %v1784 = vsel %vm1650, %v1621, 0
        %v1787 = vsel %vm1650, %v1622, 0
        %v1790 = vsel %vm1650, %v1623, 0
        %v1793 = vsel %vm1650, %v1624, 0
        %v1796 = vsel %vm1650, %v1625, 0
        %v1799 = vsel %vm1650, %v1626, 0
        %v1802 = vsel %vm1650, %v1627, 0
        %v1805 = vsel %vm1650, %v1628, 0
        %v1808 = vsel %vm1650, %v1629, 0
        %v1811 = vsel %vm1650, %v1630, 0
        %v1814 = vsel %vm1650, %v1631, 0
        %v1817 = vsel %vm1650, %v1632, 0
        %v1820 = vsel %vm1650, %v1633, 0
        %v1823 = vsel %vm1650, %v1634, 0
        %v1826 = vsel %vm1650, %v1635, 0
        %v1829 = vsel %vm1650, %v1636, 0
        %v1832 = vsel %vm1650, %v1637, 0
        %v1835 = vsel %vm1650, %v1638, 0
        %v1838 = vsel %vm1650, %v1639, 0
        %v1841 = vsel %vm1650, %v1640, 0
        %vm1843 = vcmask 1043456
        %v1845 = vsel %vm1843, %v1642, 0
        %1847 = vmatprep.subr.mxu0 0.0
        %1848 = vmatpush1.msra.mxu0 0.0
        %1849 = vmatprep.subr.mxu0 0.0
        %1850 = vmatpush1.msra.mxu0 0.0
        %1851 = vmatprep.subr.mxu0 0.0
        %1852 = vmatpush1.msra.mxu0 0.0
        %1853 = vmatprep.subr.mxu0 0.0
        %1854 = vmatpush1.msra.mxu0 0.0
        %1855 = vmatprep.subr.mxu0 0.0
        %1856 = vmatpush1.msra.mxu0 0.0
        %1857 = vmatprep.subr.mxu0 0.0
        %1858 = vmatpush1.msra.mxu0 0.0
        %1859 = vmatprep.subr.mxu0 0.0
        %1860 = vmatpush1.msra.mxu0 0.0
        %1861 = vmatprep.subr.mxu0 0.0
        %1862 = vmatpush1.msra.mxu0 0.0
        %1863 = vmatprep.subr.mxu0 0.0
        %1864 = vmatpush1.msra.mxu0 0.0
        %1865 = vmatprep.subr.mxu0 0.0
        %1866 = vmatpush1.msra.mxu0 0.0
        %1867 = vmatprep.subr.mxu0 0.0
        %1868 = vmatpush1.msra.mxu0 0.0
        %1869 = vmatprep.subr.mxu0 0.0
        %1870 = vmatpush1.msra.mxu0 0.0
        %1871 = vmatprep.subr.mxu0 0.0
        %1872 = vmatpush1.msra.mxu0 0.0
        %1873 = vmatprep.subr.mxu0 0.0
        %1874 = vmatpush1.msra.mxu0 0.0
        %1875 = vmatprep.subr.mxu0 0.0
        %1876 = vmatpush1.msra.mxu0 %v1845
        %1877 = vmatprep.subr.mxu0 0.0
        %1878 = vmatpush1.msra.mxu0 %v1641
        %1879 = vmatprep.subr.mxu0 0.0
        %1880 = vmatpush2.msra.mxu0 0.0
        %1881 = vmatprep.subr.mxu0 0.0
        %1882 = vmatpush2.msra.mxu0 0.0
        %1883 = vmatprep.subr.mxu0 0.0
        %1884 = vmatpush2.msra.mxu0 0.0
        %1885 = vmatprep.subr.mxu0 0.0
        %1886 = vmatpush2.msra.mxu0 0.0
        %1887 = vmatprep.subr.mxu0 0.0
        %1888 = vmatpush2.msra.mxu0 0.0
        %1889 = vmatprep.subr.mxu0 0.0
        %1890 = vmatpush2.msra.mxu0 0.0
        %1891 = vmatprep.subr.mxu0 0.0
        %1892 = vmatpush2.msra.mxu0 0.0
        %1893 = vmatprep.subr.mxu0 0.0
        %1894 = vmatpush2.msra.mxu0 0.0
        %1895 = vmatprep.subr.mxu0 0.0
        %1896 = vmatpush2.msra.mxu0 0.0
        %1897 = vmatprep.subr.mxu0 0.0
        %1898 = vmatpush2.msra.mxu0 0.0
        %1899 = vmatprep.subr.mxu0 0.0
        %1900 = vmatpush2.msra.mxu0 0.0
        %1901 = vmatprep.subr.mxu0 0.0
        %1902 = vmatpush2.msra.mxu0 0.0
        %1903 = vmatprep.subr.mxu0 0.0
        %1904 = vmatpush2.msra.mxu0 0.0
        %1905 = vmatprep.subr.mxu0 0.0
        %1906 = vmatpush2.msra.mxu0 0.0
        %1907 = vmatprep.subr.mxu0 0.0
        %1908 = vmatpush2.msra.mxu0 0.0
        %1909 = vmatprep.subr.mxu0 0.0
        %1910 = vmatpush2.msra.mxu0 0.0
        %1911 = vmatprep.mubr.f32.mxu0 0.0
        %1912 = vmatmul.mubr.f32.gmra.mxu0 %v1652
        %v1913 = vpop.f32.mrf.mxu0
        %v1914 = vadd.f32 %v1648, %v1913
        %v1915 = vpop.f32.mrf.mxu0
        %1916 = vmatprep.mubr.f32.mxu0 0.0
        %1917 = vmatmul.mubr.f32.gmra.mxu0 %v1655
        %v1918 = vpop.f32.mrf.mxu0
        %v1919 = vadd.f32 %v1648, %v1918
        %v1920 = vpop.f32.mrf.mxu0
        %1921 = vmatprep.mubr.f32.mxu0 0.0
        %1922 = vmatmul.mubr.f32.gmra.mxu0 %v1658
        %v1923 = vpop.f32.mrf.mxu0
        %v1924 = vadd.f32 %v1648, %v1923
        %v1925 = vpop.f32.mrf.mxu0
        %1926 = vmatprep.mubr.f32.mxu0 0.0
        %1927 = vmatmul.mubr.f32.gmra.mxu0 %v1661
        %v1928 = vpop.f32.mrf.mxu0
        %v1929 = vadd.f32 %v1648, %v1928
        %v1930 = vpop.f32.mrf.mxu0
        %1931 = vmatprep.mubr.f32.mxu0 0.0
        %1932 = vmatmul.mubr.f32.gmra.mxu0 %v1664
        %v1933 = vpop.f32.mrf.mxu0
        %v1934 = vadd.f32 %v1648, %v1933
        %v1935 = vpop.f32.mrf.mxu0
        %1936 = vmatprep.mubr.f32.mxu0 0.0
        %1937 = vmatmul.mubr.f32.gmra.mxu0 %v1667
        %v1938 = vpop.f32.mrf.mxu0
        %v1939 = vadd.f32 %v1648, %v1938
        %v1940 = vpop.f32.mrf.mxu0
        %1941 = vmatprep.mubr.f32.mxu0 0.0
        %1942 = vmatmul.mubr.f32.gmra.mxu0 %v1670
        %v1943 = vpop.f32.mrf.mxu0
        %v1944 = vadd.f32 %v1648, %v1943
        %v1945 = vpop.f32.mrf.mxu0
        %1946 = vmatprep.mubr.f32.mxu0 0.0
        %1947 = vmatmul.mubr.f32.gmra.mxu0 %v1673
        %v1948 = vpop.f32.mrf.mxu0
        %v1949 = vadd.f32 %v1648, %v1948
        %v1950 = vpop.f32.mrf.mxu0
        %1951 = vmatprep.mubr.f32.mxu0 0.0
        %1952 = vmatmul.mubr.f32.gmra.mxu0 %v1676
        %v1953 = vpop.f32.mrf.mxu0
        %v1954 = vadd.f32 %v1648, %v1953
        %v1955 = vpop.f32.mrf.mxu0
        %1956 = vmatprep.mubr.f32.mxu0 0.0
        %1957 = vmatmul.mubr.f32.gmra.mxu0 %v1679
        %v1958 = vpop.f32.mrf.mxu0
        %v1959 = vadd.f32 %v1648, %v1958
        %v1960 = vpop.f32.mrf.mxu0
        %1961 = vmatprep.mubr.f32.mxu0 0.0
        %1962 = vmatmul.mubr.f32.gmra.mxu0 %v1682
        %v1963 = vpop.f32.mrf.mxu0
        %v1964 = vadd.f32 %v1648, %v1963
        %v1965 = vpop.f32.mrf.mxu0
        %1966 = vmatprep.mubr.f32.mxu0 0.0
        %1967 = vmatmul.mubr.f32.gmra.mxu0 %v1685
        %v1968 = vpop.f32.mrf.mxu0
        %v1969 = vadd.f32 %v1648, %v1968
        %v1970 = vpop.f32.mrf.mxu0
        %1971 = vmatprep.mubr.f32.mxu0 0.0
        %1972 = vmatmul.mubr.f32.gmra.mxu0 %v1688
        %v1973 = vpop.f32.mrf.mxu0
        %v1974 = vadd.f32 %v1648, %v1973
        %v1975 = vpop.f32.mrf.mxu0
        %1976 = vmatprep.mubr.f32.mxu0 0.0
        %1977 = vmatmul.mubr.f32.gmra.mxu0 %v1691
        %v1978 = vpop.f32.mrf.mxu0
        %v1979 = vadd.f32 %v1648, %v1978
        %v1980 = vpop.f32.mrf.mxu0
        %1981 = vmatprep.mubr.f32.mxu0 0.0
        %1982 = vmatmul.mubr.f32.gmra.mxu0 %v1694
        %v1983 = vpop.f32.mrf.mxu0
        %v1984 = vadd.f32 %v1648, %v1983
        %v1985 = vpop.f32.mrf.mxu0
        %1986 = vmatprep.mubr.f32.mxu0 0.0
        %1987 = vmatmul.mubr.f32.gmra.mxu0 %v1697
        %v1988 = vpop.f32.mrf.mxu0
        %v1989 = vadd.f32 %v1648, %v1988
        %v1990 = vpop.f32.mrf.mxu0
        %1991 = vmatprep.mubr.f32.mxu0 0.0
        %1992 = vmatmul.mubr.f32.gmra.mxu0 %v1700
        %v1993 = vpop.f32.mrf.mxu0
        %v1994 = vadd.f32 %v1648, %v1993
        %v1995 = vpop.f32.mrf.mxu0
        %1996 = vmatprep.mubr.f32.mxu0 0.0
        %1997 = vmatmul.mubr.f32.gmra.mxu0 %v1703
        %v1998 = vpop.f32.mrf.mxu0
        %v1999 = vadd.f32 %v1648, %v1998
        %v2000 = vpop.f32.mrf.mxu0
        %2001 = vmatprep.mubr.f32.mxu0 0.0
        %2002 = vmatmul.mubr.f32.gmra.mxu0 %v1706
        %v2003 = vpop.f32.mrf.mxu0
        %v2004 = vadd.f32 %v1648, %v2003
        %v2005 = vpop.f32.mrf.mxu0
        %2006 = vmatprep.mubr.f32.mxu0 0.0
        %2007 = vmatmul.mubr.f32.gmra.mxu0 %v1709
        %v2008 = vpop.f32.mrf.mxu0
        %v2009 = vadd.f32 %v1648, %v2008
        %v2010 = vpop.f32.mrf.mxu0
        %2011 = vmatprep.mubr.f32.mxu0 0.0
        %2012 = vmatmul.mubr.f32.gmra.mxu0 %v1712
        %v2013 = vpop.f32.mrf.mxu0
        %v2014 = vadd.f32 %v1648, %v2013
        %v2015 = vpop.f32.mrf.mxu0
        %2016 = vmatprep.mubr.f32.mxu0 0.0
        %2017 = vmatmul.mubr.f32.gmra.mxu0 %v1715
        %v2018 = vpop.f32.mrf.mxu0
        %v2019 = vadd.f32 %v1648, %v2018
        %v2020 = vpop.f32.mrf.mxu0
        %2021 = vmatprep.mubr.f32.mxu0 0.0
        %2022 = vmatmul.mubr.f32.gmra.mxu0 %v1718
        %v2023 = vpop.f32.mrf.mxu0
        %v2024 = vadd.f32 %v1648, %v2023
        %v2025 = vpop.f32.mrf.mxu0
        %2026 = vmatprep.mubr.f32.mxu0 0.0
        %2027 = vmatmul.mubr.f32.gmra.mxu0 %v1721
        %v2028 = vpop.f32.mrf.mxu0
        %v2029 = vadd.f32 %v1648, %v2028
        %v2030 = vpop.f32.mrf.mxu0
        %2031 = vmatprep.mubr.f32.mxu0 0.0
        %2032 = vmatmul.mubr.f32.gmra.mxu0 %v1724
        %v2033 = vpop.f32.mrf.mxu0
        %v2034 = vadd.f32 %v1648, %v2033
        %v2035 = vpop.f32.mrf.mxu0
        %2036 = vmatprep.mubr.f32.mxu0 0.0
        %2037 = vmatmul.mubr.f32.gmra.mxu0 %v1727
        %v2038 = vpop.f32.mrf.mxu0
        %v2039 = vadd.f32 %v1648, %v2038
        %v2040 = vpop.f32.mrf.mxu0
        %2041 = vmatprep.mubr.f32.mxu0 0.0
        %2042 = vmatmul.mubr.f32.gmra.mxu0 %v1730
        %v2043 = vpop.f32.mrf.mxu0
        %v2044 = vadd.f32 %v1648, %v2043
        %v2045 = vpop.f32.mrf.mxu0
        %2046 = vmatprep.mubr.f32.mxu0 0.0
        %2047 = vmatmul.mubr.f32.gmra.mxu0 %v1733
        %v2048 = vpop.f32.mrf.mxu0
        %v2049 = vadd.f32 %v1648, %v2048
        %v2050 = vpop.f32.mrf.mxu0
        %2051 = vmatprep.mubr.f32.mxu0 0.0
        %2052 = vmatmul.mubr.f32.gmra.mxu0 %v1736
        %v2053 = vpop.f32.mrf.mxu0
        %v2054 = vadd.f32 %v1648, %v2053
        %v2055 = vpop.f32.mrf.mxu0
        %2056 = vmatprep.mubr.f32.mxu0 0.0
        %2057 = vmatmul.mubr.f32.gmra.mxu0 %v1739
        %v2058 = vpop.f32.mrf.mxu0
        %v2059 = vadd.f32 %v1648, %v2058
        %v2060 = vpop.f32.mrf.mxu0
        %2061 = vmatprep.mubr.f32.mxu0 0.0
        %2062 = vmatmul.mubr.f32.gmra.mxu0 %v1742
        %v2063 = vpop.f32.mrf.mxu0
        %v2064 = vadd.f32 %v1648, %v2063
        %v2065 = vpop.f32.mrf.mxu0
        %2066 = vmatprep.mubr.f32.mxu0 0.0
        %2067 = vmatmul.mubr.f32.gmra.mxu0 %v1745
        %v2068 = vpop.f32.mrf.mxu0
        %v2069 = vadd.f32 %v1648, %v2068
        %v2070 = vpop.f32.mrf.mxu0
        %2071 = vmatprep.mubr.f32.mxu0 0.0
        %2072 = vmatmul.mubr.f32.gmra.mxu0 %v1748
        %v2073 = vpop.f32.mrf.mxu0
        %v2074 = vadd.f32 %v1648, %v2073
        %v2075 = vpop.f32.mrf.mxu0
        %2076 = vmatprep.mubr.f32.mxu0 0.0
        %2077 = vmatmul.mubr.f32.gmra.mxu0 %v1751
        %v2078 = vpop.f32.mrf.mxu0
        %v2079 = vadd.f32 %v1648, %v2078
        %v2080 = vpop.f32.mrf.mxu0
        %2081 = vmatprep.mubr.f32.mxu0 0.0
        %2082 = vmatmul.mubr.f32.gmra.mxu0 %v1754
        %v2083 = vpop.f32.mrf.mxu0
        %v2084 = vadd.f32 %v1648, %v2083
        %v2085 = vpop.f32.mrf.mxu0
        %2086 = vmatprep.mubr.f32.mxu0 0.0
        %2087 = vmatmul.mubr.f32.gmra.mxu0 %v1757
        %v2088 = vpop.f32.mrf.mxu0
        %v2089 = vadd.f32 %v1648, %v2088
        %v2090 = vpop.f32.mrf.mxu0
        %2091 = vmatprep.mubr.f32.mxu0 0.0
        %2092 = vmatmul.mubr.f32.gmra.mxu0 %v1760
        %v2093 = vpop.f32.mrf.mxu0
        %v2094 = vadd.f32 %v1648, %v2093
        %v2095 = vpop.f32.mrf.mxu0
        %2096 = vmatprep.mubr.f32.mxu0 0.0
        %2097 = vmatmul.mubr.f32.gmra.mxu0 %v1763
        %v2098 = vpop.f32.mrf.mxu0
        %v2099 = vadd.f32 %v1648, %v2098
        %v2100 = vpop.f32.mrf.mxu0
        %2101 = vmatprep.mubr.f32.mxu0 0.0
        %2102 = vmatmul.mubr.f32.gmra.mxu0 %v1766
        %v2103 = vpop.f32.mrf.mxu0
        %v2104 = vadd.f32 %v1648, %v2103
        %v2105 = vpop.f32.mrf.mxu0
        %2106 = vmatprep.mubr.f32.mxu0 0.0
        %2107 = vmatmul.mubr.f32.gmra.mxu0 %v1769
        %v2108 = vpop.f32.mrf.mxu0
        %v2109 = vadd.f32 %v1648, %v2108
        %v2110 = vpop.f32.mrf.mxu0
        %2111 = vmatprep.mubr.f32.mxu0 0.0
        %2112 = vmatmul.mubr.f32.gmra.mxu0 %v1772
        %v2113 = vpop.f32.mrf.mxu0
        %v2114 = vadd.f32 %v1648, %v2113
        %v2115 = vpop.f32.mrf.mxu0
        %2116 = vmatprep.mubr.f32.mxu0 0.0
        %2117 = vmatmul.mubr.f32.gmra.mxu0 %v1775
        %v2118 = vpop.f32.mrf.mxu0
        %v2119 = vadd.f32 %v1648, %v2118
        %v2120 = vpop.f32.mrf.mxu0
        %2121 = vmatprep.mubr.f32.mxu0 0.0
        %2122 = vmatmul.mubr.f32.gmra.mxu0 %v1778
        %v2123 = vpop.f32.mrf.mxu0
        %v2124 = vadd.f32 %v1648, %v2123
        %v2125 = vpop.f32.mrf.mxu0
        %2126 = vmatprep.mubr.f32.mxu0 0.0
        %2127 = vmatmul.mubr.f32.gmra.mxu0 %v1781
        %v2128 = vpop.f32.mrf.mxu0
        %v2129 = vadd.f32 %v1648, %v2128
        %v2130 = vpop.f32.mrf.mxu0
        %2131 = vmatprep.mubr.f32.mxu0 0.0
        %2132 = vmatmul.mubr.f32.gmra.mxu0 %v1784
        %v2133 = vpop.f32.mrf.mxu0
        %v2134 = vadd.f32 %v1648, %v2133
        %v2135 = vpop.f32.mrf.mxu0
        %2136 = vmatprep.mubr.f32.mxu0 0.0
        %2137 = vmatmul.mubr.f32.gmra.mxu0 %v1787
        %v2138 = vpop.f32.mrf.mxu0
        %v2139 = vadd.f32 %v1648, %v2138
        %v2140 = vpop.f32.mrf.mxu0
        %2141 = vmatprep.mubr.f32.mxu0 0.0
        %2142 = vmatmul.mubr.f32.gmra.mxu0 %v1790
        %v2143 = vpop.f32.mrf.mxu0
        %v2144 = vadd.f32 %v1648, %v2143
        %v2145 = vpop.f32.mrf.mxu0
        %2146 = vmatprep.mubr.f32.mxu0 0.0
        %2147 = vmatmul.mubr.f32.gmra.mxu0 %v1793
        %v2148 = vpop.f32.mrf.mxu0
        %v2149 = vadd.f32 %v1648, %v2148
        %v2150 = vpop.f32.mrf.mxu0
        %2151 = vmatprep.mubr.f32.mxu0 0.0
        %2152 = vmatmul.mubr.f32.gmra.mxu0 %v1796
        %v2153 = vpop.f32.mrf.mxu0
        %v2154 = vadd.f32 %v1648, %v2153
        %v2155 = vpop.f32.mrf.mxu0
        %2156 = vmatprep.mubr.f32.mxu0 0.0
        %2157 = vmatmul.mubr.f32.gmra.mxu0 %v1799
        %v2158 = vpop.f32.mrf.mxu0
        %v2159 = vadd.f32 %v1648, %v2158
        %v2160 = vpop.f32.mrf.mxu0
        %2161 = vmatprep.mubr.f32.mxu0 0.0
        %2162 = vmatmul.mubr.f32.gmra.mxu0 %v1802
        %v2163 = vpop.f32.mrf.mxu0
        %v2164 = vadd.f32 %v1648, %v2163
        %v2165 = vpop.f32.mrf.mxu0
        %2166 = vmatprep.mubr.f32.mxu0 0.0
        %2167 = vmatmul.mubr.f32.gmra.mxu0 %v1805
        %v2168 = vpop.f32.mrf.mxu0
        %v2169 = vadd.f32 %v1648, %v2168
        %v2170 = vpop.f32.mrf.mxu0
        %2171 = vmatprep.mubr.f32.mxu0 0.0
        %2172 = vmatmul.mubr.f32.gmra.mxu0 %v1808
        %v2173 = vpop.f32.mrf.mxu0
        %v2174 = vadd.f32 %v1648, %v2173
        %v2175 = vpop.f32.mrf.mxu0
        %2176 = vmatprep.mubr.f32.mxu0 0.0
        %2177 = vmatmul.mubr.f32.gmra.mxu0 %v1811
        %v2178 = vpop.f32.mrf.mxu0
        %v2179 = vadd.f32 %v1648, %v2178
        %v2180 = vpop.f32.mrf.mxu0
        %2181 = vmatprep.mubr.f32.mxu0 0.0
        %2182 = vmatmul.mubr.f32.gmra.mxu0 %v1814
        %v2183 = vpop.f32.mrf.mxu0
        %v2184 = vadd.f32 %v1648, %v2183
        %v2185 = vpop.f32.mrf.mxu0
        %2186 = vmatprep.mubr.f32.mxu0 0.0
        %2187 = vmatmul.mubr.f32.gmra.mxu0 %v1817
        %v2188 = vpop.f32.mrf.mxu0
        %v2189 = vadd.f32 %v1648, %v2188
        %v2190 = vpop.f32.mrf.mxu0
        %2191 = vmatprep.mubr.f32.mxu0 0.0
        %2192 = vmatmul.mubr.f32.gmra.mxu0 %v1820
        %v2193 = vpop.f32.mrf.mxu0
        %v2194 = vadd.f32 %v1648, %v2193
        %v2195 = vpop.f32.mrf.mxu0
        %2196 = vmatprep.mubr.f32.mxu0 0.0
        %2197 = vmatmul.mubr.f32.gmra.mxu0 %v1823
        %v2198 = vpop.f32.mrf.mxu0
        %v2199 = vadd.f32 %v1648, %v2198
        %v2200 = vpop.f32.mrf.mxu0
        %2201 = vmatprep.mubr.f32.mxu0 0.0
        %2202 = vmatmul.mubr.f32.gmra.mxu0 %v1826
        %v2203 = vpop.f32.mrf.mxu0
        %v2204 = vadd.f32 %v1648, %v2203
        %v2205 = vpop.f32.mrf.mxu0
        %2206 = vmatprep.mubr.f32.mxu0 0.0
        %2207 = vmatmul.mubr.f32.gmra.mxu0 %v1829
        %v2208 = vpop.f32.mrf.mxu0
        %v2209 = vadd.f32 %v1648, %v2208
        %v2210 = vpop.f32.mrf.mxu0
        %2211 = vmatprep.mubr.f32.mxu0 0.0
        %2212 = vmatmul.mubr.f32.gmra.mxu0 %v1832
        %v2213 = vpop.f32.mrf.mxu0
        %v2214 = vadd.f32 %v1648, %v2213
        %v2215 = vpop.f32.mrf.mxu0
        %2216 = vmatprep.mubr.f32.mxu0 0.0
        %2217 = vmatmul.mubr.f32.gmra.mxu0 %v1835
        %v2218 = vpop.f32.mrf.mxu0
        %v2219 = vadd.f32 %v1648, %v2218
        %v2220 = vpop.f32.mrf.mxu0
        %2221 = vmatprep.mubr.f32.mxu0 0.0
        %2222 = vmatmul.mubr.f32.gmra.mxu0 %v1838
        %v2223 = vpop.f32.mrf.mxu0
        %v2224 = vadd.f32 %v1648, %v2223
        %v2225 = vpop.f32.mrf.mxu0
        %2226 = vmatprep.mubr.f32.mxu0 0.0
        %2227 = vmatmul.mubr.f32.gmra.mxu0 %v1841
        %v2228 = vpop.f32.mrf.mxu0
        %v2229 = vadd.f32 %v1648, %v2228
        %v2230 = vpop.f32.mrf.mxu0
        %2231 = vdwg.mxu0
        %vm2232 = vcmp.gt.f32.partialorder %v1914, 0.0
        %vm2233 = vcmp.gt.f32.partialorder %v1919, 0.0
        %vm2234 = vcmp.gt.f32.partialorder %v1924, 0.0
        %vm2235 = vcmp.gt.f32.partialorder %v1929, 0.0
        %vm2236 = vcmp.gt.f32.partialorder %v1934, 0.0
        %vm2237 = vcmp.gt.f32.partialorder %v1939, 0.0
        %vm2238 = vcmp.gt.f32.partialorder %v1944, 0.0
        %vm2239 = vcmp.gt.f32.partialorder %v1949, 0.0
        %vm2240 = vcmp.gt.f32.partialorder %v1954, 0.0
        %vm2241 = vcmp.gt.f32.partialorder %v1959, 0.0
        %vm2242 = vcmp.gt.f32.partialorder %v1964, 0.0
        %vm2243 = vcmp.gt.f32.partialorder %v1969, 0.0
        %vm2244 = vcmp.gt.f32.partialorder %v1974, 0.0
        %vm2245 = vcmp.gt.f32.partialorder %v1979, 0.0
        %vm2246 = vcmp.gt.f32.partialorder %v1984, 0.0
        %vm2247 = vcmp.gt.f32.partialorder %v1989, 0.0
        %vm2248 = vcmp.gt.f32.partialorder %v1994, 0.0
        %vm2249 = vcmp.gt.f32.partialorder %v1999, 0.0
        %vm2250 = vcmp.gt.f32.partialorder %v2004, 0.0
        %vm2251 = vcmp.gt.f32.partialorder %v2009, 0.0
        %vm2252 = vcmp.gt.f32.partialorder %v2014, 0.0
        %vm2253 = vcmp.gt.f32.partialorder %v2019, 0.0
        %vm2254 = vcmp.gt.f32.partialorder %v2024, 0.0
        %vm2255 = vcmp.gt.f32.partialorder %v2029, 0.0
        %vm2256 = vcmp.gt.f32.partialorder %v2034, 0.0
        %vm2257 = vcmp.gt.f32.partialorder %v2039, 0.0
        %vm2258 = vcmp.gt.f32.partialorder %v2044, 0.0
        %vm2259 = vcmp.gt.f32.partialorder %v2049, 0.0
        %vm2260 = vcmp.gt.f32.partialorder %v2054, 0.0
        %vm2261 = vcmp.gt.f32.partialorder %v2059, 0.0
        %vm2262 = vcmp.gt.f32.partialorder %v2064, 0.0
        %vm2263 = vcmp.gt.f32.partialorder %v2069, 0.0
        %vm2264 = vcmp.gt.f32.partialorder %v2074, 0.0
        %vm2265 = vcmp.gt.f32.partialorder %v2079, 0.0
        %vm2266 = vcmp.gt.f32.partialorder %v2084, 0.0
        %vm2267 = vcmp.gt.f32.partialorder %v2089, 0.0
        %vm2268 = vcmp.gt.f32.partialorder %v2094, 0.0
        %vm2269 = vcmp.gt.f32.partialorder %v2099, 0.0
        %vm2270 = vcmp.gt.f32.partialorder %v2104, 0.0
        %vm2271 = vcmp.gt.f32.partialorder %v2109, 0.0
        %vm2272 = vcmp.gt.f32.partialorder %v2114, 0.0
        %vm2273 = vcmp.gt.f32.partialorder %v2119, 0.0
        %vm2274 = vcmp.gt.f32.partialorder %v2124, 0.0
        %vm2275 = vcmp.gt.f32.partialorder %v2129, 0.0
        %vm2276 = vcmp.gt.f32.partialorder %v2134, 0.0
        %vm2277 = vcmp.gt.f32.partialorder %v2139, 0.0
        %vm2278 = vcmp.gt.f32.partialorder %v2144, 0.0
        %vm2279 = vcmp.gt.f32.partialorder %v2149, 0.0
        %vm2280 = vcmp.gt.f32.partialorder %v2154, 0.0
        %vm2281 = vcmp.gt.f32.partialorder %v2159, 0.0
        %vm2282 = vcmp.gt.f32.partialorder %v2164, 0.0
        %vm2283 = vcmp.gt.f32.partialorder %v2169, 0.0
        %vm2284 = vcmp.gt.f32.partialorder %v2174, 0.0
        %vm2285 = vcmp.gt.f32.partialorder %v2179, 0.0
        %vm2286 = vcmp.gt.f32.partialorder %v2184, 0.0
        %vm2287 = vcmp.gt.f32.partialorder %v2189, 0.0
        %vm2288 = vcmp.gt.f32.partialorder %v2194, 0.0
        %vm2289 = vcmp.gt.f32.partialorder %v2199, 0.0
        %vm2290 = vcmp.gt.f32.partialorder %v2204, 0.0
        %vm2291 = vcmp.gt.f32.partialorder %v2209, 0.0
        %vm2292 = vcmp.gt.f32.partialorder %v2214, 0.0
        %vm2293 = vcmp.gt.f32.partialorder %v2219, 0.0
        %vm2294 = vcmp.gt.f32.partialorder %v2224, 0.0
        %vm2295 = vcmp.gt.f32.partialorder %v2229, 0.0
        %v2296 = vmul.f32 %v1914, 0.2
        %v2297 = vmul.f32 %v1919, 0.2
        %v2298 = vmul.f32 %v1924, 0.2
        %v2299 = vmul.f32 %v1929, 0.2
        %v2300 = vmul.f32 %v1934, 0.2
        %v2301 = vmul.f32 %v1939, 0.2
        %v2302 = vmul.f32 %v1944, 0.2
        %v2303 = vmul.f32 %v1949, 0.2
        %v2304 = vmul.f32 %v1954, 0.2
        %v2305 = vmul.f32 %v1959, 0.2
        %v2306 = vmul.f32 %v1964, 0.2
        %v2307 = vmul.f32 %v1969, 0.2
        %v2308 = vmul.f32 %v1974, 0.2
        %v2309 = vmul.f32 %v1979, 0.2
        %v2310 = vmul.f32 %v1984, 0.2
        %v2311 = vmul.f32 %v1989, 0.2
        %v2312 = vmul.f32 %v1994, 0.2
        %v2313 = vmul.f32 %v1999, 0.2
        %v2314 = vmul.f32 %v2004, 0.2
        %v2315 = vmul.f32 %v2009, 0.2
        %v2316 = vmul.f32 %v2014, 0.2
        %v2317 = vmul.f32 %v2019, 0.2
        %v2318 = vmul.f32 %v2024, 0.2
        %v2319 = vmul.f32 %v2029, 0.2
        %v2320 = vmul.f32 %v2034, 0.2
        %v2321 = vmul.f32 %v2039, 0.2
        %v2322 = vmul.f32 %v2044, 0.2
        %v2323 = vmul.f32 %v2049, 0.2
        %v2324 = vmul.f32 %v2054, 0.2
        %v2325 = vmul.f32 %v2059, 0.2
        %v2326 = vmul.f32 %v2064, 0.2
        %v2327 = vmul.f32 %v2069, 0.2
        %v2328 = vmul.f32 %v2074, 0.2
        %v2329 = vmul.f32 %v2079, 0.2
        %v2330 = vmul.f32 %v2084, 0.2
        %v2331 = vmul.f32 %v2089, 0.2
        %v2332 = vmul.f32 %v2094, 0.2
        %v2333 = vmul.f32 %v2099, 0.2
        %v2334 = vmul.f32 %v2104, 0.2
        %v2335 = vmul.f32 %v2109, 0.2
        %v2336 = vmul.f32 %v2114, 0.2
        %v2337 = vmul.f32 %v2119, 0.2
        %v2338 = vmul.f32 %v2124, 0.2
        %v2339 = vmul.f32 %v2129, 0.2
        %v2340 = vmul.f32 %v2134, 0.2
        %v2341 = vmul.f32 %v2139, 0.2
        %v2342 = vmul.f32 %v2144, 0.2
        %v2343 = vmul.f32 %v2149, 0.2
        %v2344 = vmul.f32 %v2154, 0.2
        %v2345 = vmul.f32 %v2159, 0.2
        %v2346 = vmul.f32 %v2164, 0.2
        %v2347 = vmul.f32 %v2169, 0.2
        %v2348 = vmul.f32 %v2174, 0.2
        %v2349 = vmul.f32 %v2179, 0.2
        %v2350 = vmul.f32 %v2184, 0.2
        %v2351 = vmul.f32 %v2189, 0.2
        %v2352 = vmul.f32 %v2194, 0.2
        %v2353 = vmul.f32 %v2199, 0.2
        %v2354 = vmul.f32 %v2204, 0.2
        %v2355 = vmul.f32 %v2209, 0.2
        %v2356 = vmul.f32 %v2214, 0.2
        %v2357 = vmul.f32 %v2219, 0.2
        %v2358 = vmul.f32 %v2224, 0.2
        %v2359 = vmul.f32 %v2229, 0.2
        %v2360 = vsel %vm2232, %v1914, %v2296
        %v2361 = vsel %vm2233, %v1919, %v2297
        %v2362 = vsel %vm2234, %v1924, %v2298
        %v2363 = vsel %vm2235, %v1929, %v2299
        %v2364 = vsel %vm2236, %v1934, %v2300
        %v2365 = vsel %vm2237, %v1939, %v2301
        %v2366 = vsel %vm2238, %v1944, %v2302
        %v2367 = vsel %vm2239, %v1949, %v2303
        %v2368 = vsel %vm2240, %v1954, %v2304
        %v2369 = vsel %vm2241, %v1959, %v2305
        %v2370 = vsel %vm2242, %v1964, %v2306
        %v2371 = vsel %vm2243, %v1969, %v2307
        %v2372 = vsel %vm2244, %v1974, %v2308
        %v2373 = vsel %vm2245, %v1979, %v2309
        %v2374 = vsel %vm2246, %v1984, %v2310
        %v2375 = vsel %vm2247, %v1989, %v2311
        %v2376 = vsel %vm2248, %v1994, %v2312
        %v2377 = vsel %vm2249, %v1999, %v2313
        %v2378 = vsel %vm2250, %v2004, %v2314
        %v2379 = vsel %vm2251, %v2009, %v2315
        %v2380 = vsel %vm2252, %v2014, %v2316
        %v2381 = vsel %vm2253, %v2019, %v2317
        %v2382 = vsel %vm2254, %v2024, %v2318
        %v2383 = vsel %vm2255, %v2029, %v2319
        %v2384 = vsel %vm2256, %v2034, %v2320
        %v2385 = vsel %vm2257, %v2039, %v2321
        %v2386 = vsel %vm2258, %v2044, %v2322
        %v2387 = vsel %vm2259, %v2049, %v2323
        %v2388 = vsel %vm2260, %v2054, %v2324
        %v2389 = vsel %vm2261, %v2059, %v2325
        %v2390 = vsel %vm2262, %v2064, %v2326
        %v2391 = vsel %vm2263, %v2069, %v2327
        %v2392 = vsel %vm2264, %v2074, %v2328
        %v2393 = vsel %vm2265, %v2079, %v2329
        %v2394 = vsel %vm2266, %v2084, %v2330
        %v2395 = vsel %vm2267, %v2089, %v2331
        %v2396 = vsel %vm2268, %v2094, %v2332
        %v2397 = vsel %vm2269, %v2099, %v2333
        %v2398 = vsel %vm2270, %v2104, %v2334
        %v2399 = vsel %vm2271, %v2109, %v2335
        %v2400 = vsel %vm2272, %v2114, %v2336
        %v2401 = vsel %vm2273, %v2119, %v2337
        %v2402 = vsel %vm2274, %v2124, %v2338
        %v2403 = vsel %vm2275, %v2129, %v2339
        %v2404 = vsel %vm2276, %v2134, %v2340
        %v2405 = vsel %vm2277, %v2139, %v2341
        %v2406 = vsel %vm2278, %v2144, %v2342
        %v2407 = vsel %vm2279, %v2149, %v2343
        %v2408 = vsel %vm2280, %v2154, %v2344
        %v2409 = vsel %vm2281, %v2159, %v2345
        %v2410 = vsel %vm2282, %v2164, %v2346
        %v2411 = vsel %vm2283, %v2169, %v2347
        %v2412 = vsel %vm2284, %v2174, %v2348
        %v2413 = vsel %vm2285, %v2179, %v2349
        %v2414 = vsel %vm2286, %v2184, %v2350
        %v2415 = vsel %vm2287, %v2189, %v2351
        %v2416 = vsel %vm2288, %v2194, %v2352
        %v2417 = vsel %vm2289, %v2199, %v2353
        %v2418 = vsel %vm2290, %v2204, %v2354
        %v2419 = vsel %vm2291, %v2209, %v2355
        %v2420 = vsel %vm2292, %v2214, %v2356
        %v2421 = vsel %vm2293, %v2219, %v2357
        %v2422 = vsel %vm2294, %v2224, %v2358
        %v2423 = vsel %vm2295, %v2229, %v2359
        %vm2424 = vcmask 31744
        %2425 = vst.msk [vmem:[#allocation2] sm:$0xff] %vm2424, 0.0
        %2426 = vst.msk [vmem:[#allocation2 + $0x8] sm:$0xff] %vm2424, 0.0
        %s2427 = scalar_lea.vmem [#allocation2], 528
        %2428 = vst.msk [vmem:[%s2427] sm:$0xff] %vm2424, 0.0
        %2429 = vst.msk [vmem:[%s2427 + $0x8] sm:$0xff] %vm2424, 0.0
        %s2430 = scalar_lea.vmem [#allocation2], 16
        %2431 = vst.msk [vmem:[%s2430] sm:$0xff] %vm2424, %v2360
        %2432 = vst.msk [vmem:[%s2430 + $0x8] sm:$0xff] %vm2424, %v2361
        %2433 = vst.msk [vmem:[%s2430 + $0x10] sm:$0xff] %vm2424, %v2362
        %2434 = vst.msk [vmem:[%s2430 + $0x18] sm:$0xff] %vm2424, %v2363
        %2435 = vst.msk [vmem:[%s2430 + $0x20] sm:$0xff] %vm2424, %v2364
        %2436 = vst.msk [vmem:[%s2430 + $0x28] sm:$0xff] %vm2424, %v2365
        %2437 = vst.msk [vmem:[%s2430 + $0x30] sm:$0xff] %vm2424, %v2366
        %2438 = vst.msk [vmem:[%s2430 + $0x38] sm:$0xff] %vm2424, %v2367
        %2439 = vst.msk [vmem:[%s2430 + $0x40] sm:$0xff] %vm2424, %v2368
        %2440 = vst.msk [vmem:[%s2430 + $0x48] sm:$0xff] %vm2424, %v2369
        %2441 = vst.msk [vmem:[%s2430 + $0x50] sm:$0xff] %vm2424, %v2370
        %2442 = vst.msk [vmem:[%s2430 + $0x58] sm:$0xff] %vm2424, %v2371
        %2443 = vst.msk [vmem:[%s2430 + $0x60] sm:$0xff] %vm2424, %v2372
        %2444 = vst.msk [vmem:[%s2430 + $0x68] sm:$0xff] %vm2424, %v2373
        %2445 = vst.msk [vmem:[%s2430 + $0x70] sm:$0xff] %vm2424, %v2374
        %2446 = vst.msk [vmem:[%s2430 + $0x78] sm:$0xff] %vm2424, %v2375
        %2447 = vst.msk [vmem:[%s2430 + $0x80] sm:$0xff] %vm2424, %v2376
        %2448 = vst.msk [vmem:[%s2430 + $0x88] sm:$0xff] %vm2424, %v2377
        %2449 = vst.msk [vmem:[%s2430 + $0x90] sm:$0xff] %vm2424, %v2378
        %2450 = vst.msk [vmem:[%s2430 + $0x98] sm:$0xff] %vm2424, %v2379
        %2451 = vst.msk [vmem:[%s2430 + $0xa0] sm:$0xff] %vm2424, %v2380
        %2452 = vst.msk [vmem:[%s2430 + $0xa8] sm:$0xff] %vm2424, %v2381
        %2453 = vst.msk [vmem:[%s2430 + $0xb0] sm:$0xff] %vm2424, %v2382
        %2454 = vst.msk [vmem:[%s2430 + $0xb8] sm:$0xff] %vm2424, %v2383
        %2455 = vst.msk [vmem:[%s2430 + $0xc0] sm:$0xff] %vm2424, %v2384
        %2456 = vst.msk [vmem:[%s2430 + $0xc8] sm:$0xff] %vm2424, %v2385
        %2457 = vst.msk [vmem:[%s2430 + $0xd0] sm:$0xff] %vm2424, %v2386
        %2458 = vst.msk [vmem:[%s2430 + $0xd8] sm:$0xff] %vm2424, %v2387
        %2459 = vst.msk [vmem:[%s2430 + $0xe0] sm:$0xff] %vm2424, %v2388
        %2460 = vst.msk [vmem:[%s2430 + $0xe8] sm:$0xff] %vm2424, %v2389
        %2461 = vst.msk [vmem:[%s2430 + $0xf0] sm:$0xff] %vm2424, %v2390
        %2462 = vst.msk [vmem:[%s2430 + $0xf8] sm:$0xff] %vm2424, %v2391
        %2463 = vst.msk [vmem:[%s2430 + $0x100] sm:$0xff] %vm2424, %v2392
        %2464 = vst.msk [vmem:[%s2430 + $0x108] sm:$0xff] %vm2424, %v2393
        %2465 = vst.msk [vmem:[%s2430 + $0x110] sm:$0xff] %vm2424, %v2394
        %2466 = vst.msk [vmem:[%s2430 + $0x118] sm:$0xff] %vm2424, %v2395
        %2467 = vst.msk [vmem:[%s2430 + $0x120] sm:$0xff] %vm2424, %v2396
        %2468 = vst.msk [vmem:[%s2430 + $0x128] sm:$0xff] %vm2424, %v2397
        %2469 = vst.msk [vmem:[%s2430 + $0x130] sm:$0xff] %vm2424, %v2398
        %2470 = vst.msk [vmem:[%s2430 + $0x138] sm:$0xff] %vm2424, %v2399
        %2471 = vst.msk [vmem:[%s2430 + $0x140] sm:$0xff] %vm2424, %v2400
        %2472 = vst.msk [vmem:[%s2430 + $0x148] sm:$0xff] %vm2424, %v2401
        %2473 = vst.msk [vmem:[%s2430 + $0x150] sm:$0xff] %vm2424, %v2402
        %2474 = vst.msk [vmem:[%s2430 + $0x158] sm:$0xff] %vm2424, %v2403
        %2475 = vst.msk [vmem:[%s2430 + $0x160] sm:$0xff] %vm2424, %v2404
        %2476 = vst.msk [vmem:[%s2430 + $0x168] sm:$0xff] %vm2424, %v2405
        %2477 = vst.msk [vmem:[%s2430 + $0x170] sm:$0xff] %vm2424, %v2406
        %2478 = vst.msk [vmem:[%s2430 + $0x178] sm:$0xff] %vm2424, %v2407
        %2479 = vst.msk [vmem:[%s2430 + $0x180] sm:$0xff] %vm2424, %v2408
        %2480 = vst.msk [vmem:[%s2430 + $0x188] sm:$0xff] %vm2424, %v2409
        %2481 = vst.msk [vmem:[%s2430 + $0x190] sm:$0xff] %vm2424, %v2410
        %2482 = vst.msk [vmem:[%s2430 + $0x198] sm:$0xff] %vm2424, %v2411
        %2483 = vst.msk [vmem:[%s2430 + $0x1a0] sm:$0xff] %vm2424, %v2412
        %2484 = vst.msk [vmem:[%s2430 + $0x1a8] sm:$0xff] %vm2424, %v2413
        %2485 = vst.msk [vmem:[%s2430 + $0x1b0] sm:$0xff] %vm2424, %v2414
        %2486 = vst.msk [vmem:[%s2430 + $0x1b8] sm:$0xff] %vm2424, %v2415
        %2487 = vst.msk [vmem:[%s2430 + $0x1c0] sm:$0xff] %vm2424, %v2416
        %2488 = vst.msk [vmem:[%s2430 + $0x1c8] sm:$0xff] %vm2424, %v2417
        %2489 = vst.msk [vmem:[%s2430 + $0x1d0] sm:$0xff] %vm2424, %v2418
        %2490 = vst.msk [vmem:[%s2430 + $0x1d8] sm:$0xff] %vm2424, %v2419
        %2491 = vst.msk [vmem:[%s2430 + $0x1e0] sm:$0xff] %vm2424, %v2420
        %2492 = vst.msk [vmem:[%s2430 + $0x1e8] sm:$0xff] %vm2424, %v2421
        %2493 = vst.msk [vmem:[%s2430 + $0x1f0] sm:$0xff] %vm2424, %v2422
        %2494 = vst.msk [vmem:[%s2430 + $0x1f8] sm:$0xff] %vm2424, %v2423
        %v2495 = vld [vmem:[#allocation2] sm:$0xff]
        %v2496 = vld [vmem:[#allocation2 + $0x8] sm:$0xff]
        %v2497 = vld [vmem:[#allocation2 + $0x10] sm:$0xff]
        %v2498 = vld [vmem:[#allocation2 + $0x18] sm:$0xff]
        %v2499 = vld [vmem:[#allocation2 + $0x20] sm:$0xff]
        %v2500 = vld [vmem:[#allocation2 + $0x28] sm:$0xff]
        %v2501 = vld [vmem:[#allocation2 + $0x30] sm:$0xff]
        %v2502 = vld [vmem:[#allocation2 + $0x38] sm:$0xff]
        %v2503 = vld [vmem:[#allocation2 + $0x40] sm:$0xff]
        %v2504 = vld [vmem:[#allocation2 + $0x48] sm:$0xff]
        %v2505 = vld [vmem:[#allocation2 + $0x50] sm:$0xff]
        %v2506 = vld [vmem:[#allocation2 + $0x58] sm:$0xff]
        %v2507 = vld [vmem:[#allocation2 + $0x60] sm:$0xff]
        %v2508 = vld [vmem:[#allocation2 + $0x68] sm:$0xff]
        %v2509 = vld [vmem:[#allocation2 + $0x70] sm:$0xff]
        %v2510 = vld [vmem:[#allocation2 + $0x78] sm:$0xff]
        %v2511 = vld [vmem:[#allocation2 + $0x80] sm:$0xff]
        %v2512 = vld [vmem:[#allocation2 + $0x88] sm:$0xff]
        %v2513 = vld [vmem:[#allocation2 + $0x90] sm:$0xff]
        %v2514 = vld [vmem:[#allocation2 + $0x98] sm:$0xff]
        %v2515 = vld [vmem:[#allocation2 + $0xa0] sm:$0xff]
        %v2516 = vld [vmem:[#allocation2 + $0xa8] sm:$0xff]
        %v2517 = vld [vmem:[#allocation2 + $0xb0] sm:$0xff]
        %v2518 = vld [vmem:[#allocation2 + $0xb8] sm:$0xff]
        %v2519 = vld [vmem:[#allocation2 + $0xc0] sm:$0xff]
        %v2520 = vld [vmem:[#allocation2 + $0xc8] sm:$0xff]
        %v2521 = vld [vmem:[#allocation2 + $0xd0] sm:$0xff]
        %v2522 = vld [vmem:[#allocation2 + $0xd8] sm:$0xff]
        %v2523 = vld [vmem:[#allocation2 + $0xe0] sm:$0xff]
        %v2524 = vld [vmem:[#allocation2 + $0xe8] sm:$0xff]
        %v2525 = vld [vmem:[#allocation2 + $0xf0] sm:$0xff]
        %v2526 = vld [vmem:[#allocation2 + $0xf8] sm:$0xff]
        %v2527 = vld [vmem:[#allocation2 + $0x100] sm:$0xff]
        %v2528 = vld [vmem:[#allocation2 + $0x108] sm:$0xff]
        %v2529 = vld [vmem:[#allocation2 + $0x110] sm:$0xff]
        %v2530 = vld [vmem:[#allocation2 + $0x118] sm:$0xff]
        %v2531 = vld [vmem:[#allocation2 + $0x120] sm:$0xff]
        %v2532 = vld [vmem:[#allocation2 + $0x128] sm:$0xff]
        %v2533 = vld [vmem:[#allocation2 + $0x130] sm:$0xff]
        %v2534 = vld [vmem:[#allocation2 + $0x138] sm:$0xff]
        %v2535 = vld [vmem:[#allocation2 + $0x140] sm:$0xff]
        %v2536 = vld [vmem:[#allocation2 + $0x148] sm:$0xff]
        %v2537 = vld [vmem:[#allocation2 + $0x150] sm:$0xff]
        %v2538 = vld [vmem:[#allocation2 + $0x158] sm:$0xff]
        %v2539 = vld [vmem:[#allocation2 + $0x160] sm:$0xff]
        %v2540 = vld [vmem:[#allocation2 + $0x168] sm:$0xff]
        %v2541 = vld [vmem:[#allocation2 + $0x170] sm:$0xff]
        %v2542 = vld [vmem:[#allocation2 + $0x178] sm:$0xff]
        %v2543 = vld [vmem:[#allocation2 + $0x180] sm:$0xff]
        %v2544 = vld [vmem:[#allocation2 + $0x188] sm:$0xff]
        %v2545 = vld [vmem:[#allocation2 + $0x190] sm:$0xff]
        %v2546 = vld [vmem:[#allocation2 + $0x198] sm:$0xff]
        %v2547 = vld [vmem:[#allocation2 + $0x1a0] sm:$0xff]
        %v2548 = vld [vmem:[#allocation2 + $0x1a8] sm:$0xff]
        %v2549 = vld [vmem:[#allocation2 + $0x1b0] sm:$0xff]
        %v2550 = vld [vmem:[#allocation2 + $0x1b8] sm:$0xff]
        %v2551 = vld [vmem:[#allocation2 + $0x1c0] sm:$0xff]
        %v2552 = vld [vmem:[#allocation2 + $0x1c8] sm:$0xff]
        %v2553 = vld [vmem:[#allocation2 + $0x1d0] sm:$0xff]
        %v2554 = vld [vmem:[#allocation2 + $0x1d8] sm:$0xff]
        %v2555 = vld [vmem:[#allocation2 + $0x1e0] sm:$0xff]
        %v2556 = vld [vmem:[#allocation2 + $0x1e8] sm:$0xff]
        %v2557 = vld [vmem:[#allocation2 + $0x1f0] sm:$0xff]
        %v2558 = vld [vmem:[#allocation2 + $0x1f8] sm:$0xff]
        %v2559 = vld [vmem:[#allocation2 + $0x200] sm:$0xff]
        %v2560 = vld [vmem:[#allocation2 + $0x208] sm:$0xff]
        %v2561 = vld [vmem:[#allocation2 + $0x210] sm:$0xff]
        %v2562 = vld [vmem:[#allocation2 + $0x218] sm:$0xff]
        %2563 = vst.msk [vmem:[#allocation7] sm:$0xff] %vm2424, %v2495
        %2564 = vst.msk [vmem:[#allocation7 + $0x8] sm:$0xff] %vm2424, %v2496
        %2565 = vst.msk [vmem:[#allocation7 + $0x10] sm:$0xff] %vm2424, %v2499
        %2566 = vst.msk [vmem:[#allocation7 + $0x18] sm:$0xff] %vm2424, %v2500
        %2567 = vst.msk [vmem:[#allocation7 + $0x20] sm:$0xff] %vm2424, %v2503
        %2568 = vst.msk [vmem:[#allocation7 + $0x28] sm:$0xff] %vm2424, %v2504
        %2569 = vst.msk [vmem:[#allocation7 + $0x30] sm:$0xff] %vm2424, %v2507
        %2570 = vst.msk [vmem:[#allocation7 + $0x38] sm:$0xff] %vm2424, %v2508
        %2571 = vst.msk [vmem:[#allocation7 + $0x40] sm:$0xff] %vm2424, %v2511
        %2572 = vst.msk [vmem:[#allocation7 + $0x48] sm:$0xff] %vm2424, %v2512
        %2573 = vst.msk [vmem:[#allocation7 + $0x50] sm:$0xff] %vm2424, %v2515
        %2574 = vst.msk [vmem:[#allocation7 + $0x58] sm:$0xff] %vm2424, %v2516
        %2575 = vst.msk [vmem:[#allocation7 + $0x60] sm:$0xff] %vm2424, %v2519
        %2576 = vst.msk [vmem:[#allocation7 + $0x68] sm:$0xff] %vm2424, %v2520
        %2577 = vst.msk [vmem:[#allocation7 + $0x70] sm:$0xff] %vm2424, %v2523
        %2578 = vst.msk [vmem:[#allocation7 + $0x78] sm:$0xff] %vm2424, %v2524
        %2579 = vst.msk [vmem:[#allocation7 + $0x80] sm:$0xff] %vm2424, %v2527
        %2580 = vst.msk [vmem:[#allocation7 + $0x88] sm:$0xff] %vm2424, %v2528
        %2581 = vst.msk [vmem:[#allocation7 + $0x90] sm:$0xff] %vm2424, %v2531
        %2582 = vst.msk [vmem:[#allocation7 + $0x98] sm:$0xff] %vm2424, %v2532
        %2583 = vst.msk [vmem:[#allocation7 + $0xa0] sm:$0xff] %vm2424, %v2535
        %2584 = vst.msk [vmem:[#allocation7 + $0xa8] sm:$0xff] %vm2424, %v2536
        %2585 = vst.msk [vmem:[#allocation7 + $0xb0] sm:$0xff] %vm2424, %v2539
        %2586 = vst.msk [vmem:[#allocation7 + $0xb8] sm:$0xff] %vm2424, %v2540
        %2587 = vst.msk [vmem:[#allocation7 + $0xc0] sm:$0xff] %vm2424, %v2543
        %2588 = vst.msk [vmem:[#allocation7 + $0xc8] sm:$0xff] %vm2424, %v2544
        %2589 = vst.msk [vmem:[#allocation7 + $0xd0] sm:$0xff] %vm2424, %v2547
        %2590 = vst.msk [vmem:[#allocation7 + $0xd8] sm:$0xff] %vm2424, %v2548
        %2591 = vst.msk [vmem:[#allocation7 + $0xe0] sm:$0xff] %vm2424, %v2551
        %2592 = vst.msk [vmem:[#allocation7 + $0xe8] sm:$0xff] %vm2424, %v2552
        %2593 = vst.msk [vmem:[#allocation7 + $0xf0] sm:$0xff] %vm2424, %v2555
        %2594 = vst.msk [vmem:[#allocation7 + $0xf8] sm:$0xff] %vm2424, %v2556
        %2627 = vrot.lane.b32.xlu0 %v2497, 4
        %v2628 = vpop.permute.xlu0 %2627
        %2629 = vrot.lane.b32.xlu0 %v2498, 4
        %v2630 = vpop.permute.xlu0 %2629
        %2631 = vrot.lane.b32.xlu0 %v2501, 4
        %v2632 = vpop.permute.xlu0 %2631
        %2633 = vrot.lane.b32.xlu0 %v2502, 4
        %v2634 = vpop.permute.xlu0 %2633
        %2635 = vrot.lane.b32.xlu0 %v2505, 4
        %v2636 = vpop.permute.xlu0 %2635
        %2637 = vrot.lane.b32.xlu0 %v2506, 4
        %v2638 = vpop.permute.xlu0 %2637
        %2639 = vrot.lane.b32.xlu0 %v2509, 4
        %v2640 = vpop.permute.xlu0 %2639
        %2641 = vrot.lane.b32.xlu0 %v2510, 4
        %v2642 = vpop.permute.xlu0 %2641
        %2643 = vrot.lane.b32.xlu0 %v2513, 4
        %v2644 = vpop.permute.xlu0 %2643
        %2645 = vrot.lane.b32.xlu0 %v2514, 4
        %v2646 = vpop.permute.xlu0 %2645
        %2647 = vrot.lane.b32.xlu0 %v2517, 4
        %v2648 = vpop.permute.xlu0 %2647
        %2649 = vrot.lane.b32.xlu0 %v2518, 4
        %v2650 = vpop.permute.xlu0 %2649
        %2651 = vrot.lane.b32.xlu0 %v2521, 4
        %v2652 = vpop.permute.xlu0 %2651
        %2653 = vrot.lane.b32.xlu0 %v2522, 4
        %v2654 = vpop.permute.xlu0 %2653
        %2655 = vrot.lane.b32.xlu0 %v2525, 4
        %v2656 = vpop.permute.xlu0 %2655
        %2657 = vrot.lane.b32.xlu0 %v2526, 4
        %v2658 = vpop.permute.xlu0 %2657
        %2659 = vrot.lane.b32.xlu0 %v2529, 4
        %v2660 = vpop.permute.xlu0 %2659
        %2661 = vrot.lane.b32.xlu0 %v2530, 4
        %v2662 = vpop.permute.xlu0 %2661
        %2663 = vrot.lane.b32.xlu0 %v2533, 4
        %v2664 = vpop.permute.xlu0 %2663
        %2665 = vrot.lane.b32.xlu0 %v2534, 4
        %v2666 = vpop.permute.xlu0 %2665
        %2667 = vrot.lane.b32.xlu0 %v2537, 4
        %v2668 = vpop.permute.xlu0 %2667
        %2669 = vrot.lane.b32.xlu0 %v2538, 4
        %v2670 = vpop.permute.xlu0 %2669
        %2671 = vrot.lane.b32.xlu0 %v2541, 4
        %v2672 = vpop.permute.xlu0 %2671
        %2673 = vrot.lane.b32.xlu0 %v2542, 4
        %v2674 = vpop.permute.xlu0 %2673
        %2675 = vrot.lane.b32.xlu0 %v2545, 4
        %v2676 = vpop.permute.xlu0 %2675
        %2677 = vrot.lane.b32.xlu0 %v2546, 4
        %v2678 = vpop.permute.xlu0 %2677
        %2679 = vrot.lane.b32.xlu0 %v2549, 4
        %v2680 = vpop.permute.xlu0 %2679
        %2681 = vrot.lane.b32.xlu0 %v2550, 4
        %v2682 = vpop.permute.xlu0 %2681
        %2683 = vrot.lane.b32.xlu0 %v2553, 4
        %v2684 = vpop.permute.xlu0 %2683
        %2685 = vrot.lane.b32.xlu0 %v2554, 4
        %v2686 = vpop.permute.xlu0 %2685
        %2687 = vrot.lane.b32.xlu0 %v2557, 4
        %v2688 = vpop.permute.xlu0 %2687
        %2689 = vrot.lane.b32.xlu0 %v2558, 4
        %v2690 = vpop.permute.xlu0 %2689
        %vm2723 = vcmask 64544
        %2724 = vst.msk [vmem:[#allocation7] sm:$0xff] %vm2723, %v2628
        %2725 = vst.msk [vmem:[#allocation7 + $0x8] sm:$0xff] %vm2723, %v2630
        %2726 = vst.msk [vmem:[#allocation7 + $0x10] sm:$0xff] %vm2723, %v2632
        %2727 = vst.msk [vmem:[#allocation7 + $0x18] sm:$0xff] %vm2723, %v2634
        %2728 = vst.msk [vmem:[#allocation7 + $0x20] sm:$0xff] %vm2723, %v2636
        %2729 = vst.msk [vmem:[#allocation7 + $0x28] sm:$0xff] %vm2723, %v2638
        %2730 = vst.msk [vmem:[#allocation7 + $0x30] sm:$0xff] %vm2723, %v2640
        %2731 = vst.msk [vmem:[#allocation7 + $0x38] sm:$0xff] %vm2723, %v2642
        %2732 = vst.msk [vmem:[#allocation7 + $0x40] sm:$0xff] %vm2723, %v2644
        %2733 = vst.msk [vmem:[#allocation7 + $0x48] sm:$0xff] %vm2723, %v2646
        %2734 = vst.msk [vmem:[#allocation7 + $0x50] sm:$0xff] %vm2723, %v2648
        %2735 = vst.msk [vmem:[#allocation7 + $0x58] sm:$0xff] %vm2723, %v2650
        %2736 = vst.msk [vmem:[#allocation7 + $0x60] sm:$0xff] %vm2723, %v2652
        %2737 = vst.msk [vmem:[#allocation7 + $0x68] sm:$0xff] %vm2723, %v2654
        %2738 = vst.msk [vmem:[#allocation7 + $0x70] sm:$0xff] %vm2723, %v2656
        %2739 = vst.msk [vmem:[#allocation7 + $0x78] sm:$0xff] %vm2723, %v2658
        %2740 = vst.msk [vmem:[#allocation7 + $0x80] sm:$0xff] %vm2723, %v2660
        %2741 = vst.msk [vmem:[#allocation7 + $0x88] sm:$0xff] %vm2723, %v2662
        %2742 = vst.msk [vmem:[#allocation7 + $0x90] sm:$0xff] %vm2723, %v2664
        %2743 = vst.msk [vmem:[#allocation7 + $0x98] sm:$0xff] %vm2723, %v2666
        %2744 = vst.msk [vmem:[#allocation7 + $0xa0] sm:$0xff] %vm2723, %v2668
        %2745 = vst.msk [vmem:[#allocation7 + $0xa8] sm:$0xff] %vm2723, %v2670
        %2746 = vst.msk [vmem:[#allocation7 + $0xb0] sm:$0xff] %vm2723, %v2672
        %2747 = vst.msk [vmem:[#allocation7 + $0xb8] sm:$0xff] %vm2723, %v2674
        %2748 = vst.msk [vmem:[#allocation7 + $0xc0] sm:$0xff] %vm2723, %v2676
        %2749 = vst.msk [vmem:[#allocation7 + $0xc8] sm:$0xff] %vm2723, %v2678
        %2750 = vst.msk [vmem:[#allocation7 + $0xd0] sm:$0xff] %vm2723, %v2680
        %2751 = vst.msk [vmem:[#allocation7 + $0xd8] sm:$0xff] %vm2723, %v2682
        %2752 = vst.msk [vmem:[#allocation7 + $0xe0] sm:$0xff] %vm2723, %v2684
        %2753 = vst.msk [vmem:[#allocation7 + $0xe8] sm:$0xff] %vm2723, %v2686
        %2754 = vst.msk [vmem:[#allocation7 + $0xf0] sm:$0xff] %vm2723, %v2688
        %2755 = vst.msk [vmem:[#allocation7 + $0xf8] sm:$0xff] %vm2723, %v2690
        %2788 = vrot.lane.b32.xlu0 %v2499, 8
        %v2789 = vpop.permute.xlu0 %2788
        %2790 = vrot.lane.b32.xlu0 %v2500, 8
        %v2791 = vpop.permute.xlu0 %2790
        %2792 = vrot.lane.b32.xlu0 %v2503, 8
        %v2793 = vpop.permute.xlu0 %2792
        %2794 = vrot.lane.b32.xlu0 %v2504, 8
        %v2795 = vpop.permute.xlu0 %2794
        %2796 = vrot.lane.b32.xlu0 %v2507, 8
        %v2797 = vpop.permute.xlu0 %2796
        %2798 = vrot.lane.b32.xlu0 %v2508, 8
        %v2799 = vpop.permute.xlu0 %2798
        %2800 = vrot.lane.b32.xlu0 %v2511, 8
        %v2801 = vpop.permute.xlu0 %2800
        %2802 = vrot.lane.b32.xlu0 %v2512, 8
        %v2803 = vpop.permute.xlu0 %2802
        %2804 = vrot.lane.b32.xlu0 %v2515, 8
        %v2805 = vpop.permute.xlu0 %2804
        %2806 = vrot.lane.b32.xlu0 %v2516, 8
        %v2807 = vpop.permute.xlu0 %2806
        %2808 = vrot.lane.b32.xlu0 %v2519, 8
        %v2809 = vpop.permute.xlu0 %2808
        %2810 = vrot.lane.b32.xlu0 %v2520, 8
        %v2811 = vpop.permute.xlu0 %2810
        %2812 = vrot.lane.b32.xlu0 %v2523, 8
        %v2813 = vpop.permute.xlu0 %2812
        %2814 = vrot.lane.b32.xlu0 %v2524, 8
        %v2815 = vpop.permute.xlu0 %2814
        %2816 = vrot.lane.b32.xlu0 %v2527, 8
        %v2817 = vpop.permute.xlu0 %2816
        %2818 = vrot.lane.b32.xlu0 %v2528, 8
        %v2819 = vpop.permute.xlu0 %2818
        %2820 = vrot.lane.b32.xlu0 %v2531, 8
        %v2821 = vpop.permute.xlu0 %2820
        %2822 = vrot.lane.b32.xlu0 %v2532, 8
        %v2823 = vpop.permute.xlu0 %2822
        %2824 = vrot.lane.b32.xlu0 %v2535, 8
        %v2825 = vpop.permute.xlu0 %2824
        %2826 = vrot.lane.b32.xlu0 %v2536, 8
        %v2827 = vpop.permute.xlu0 %2826
        %2828 = vrot.lane.b32.xlu0 %v2539, 8
        %v2829 = vpop.permute.xlu0 %2828
        %2830 = vrot.lane.b32.xlu0 %v2540, 8
        %v2831 = vpop.permute.xlu0 %2830
        %2832 = vrot.lane.b32.xlu0 %v2543, 8
        %v2833 = vpop.permute.xlu0 %2832
        %2834 = vrot.lane.b32.xlu0 %v2544, 8
        %v2835 = vpop.permute.xlu0 %2834
        %2836 = vrot.lane.b32.xlu0 %v2547, 8
        %v2837 = vpop.permute.xlu0 %2836
        %2838 = vrot.lane.b32.xlu0 %v2548, 8
        %v2839 = vpop.permute.xlu0 %2838
        %2840 = vrot.lane.b32.xlu0 %v2551, 8
        %v2841 = vpop.permute.xlu0 %2840
        %2842 = vrot.lane.b32.xlu0 %v2552, 8
        %v2843 = vpop.permute.xlu0 %2842
        %2844 = vrot.lane.b32.xlu0 %v2555, 8
        %v2845 = vpop.permute.xlu0 %2844
        %2846 = vrot.lane.b32.xlu0 %v2556, 8
        %v2847 = vpop.permute.xlu0 %2846
        %2848 = vrot.lane.b32.xlu0 %v2559, 8
        %v2849 = vpop.permute.xlu0 %2848
        %2850 = vrot.lane.b32.xlu0 %v2560, 8
        %v2851 = vpop.permute.xlu0 %2850
        %vm2884 = vcmask 97344
        %2885 = vst.msk [vmem:[#allocation7] sm:$0xff] %vm2884, %v2789
        %2886 = vst.msk [vmem:[#allocation7 + $0x8] sm:$0xff] %vm2884, %v2791
        %2887 = vst.msk [vmem:[#allocation7 + $0x10] sm:$0xff] %vm2884, %v2793
        %2888 = vst.msk [vmem:[#allocation7 + $0x18] sm:$0xff] %vm2884, %v2795
        %2889 = vst.msk [vmem:[#allocation7 + $0x20] sm:$0xff] %vm2884, %v2797
        %2890 = vst.msk [vmem:[#allocation7 + $0x28] sm:$0xff] %vm2884, %v2799
        %2891 = vst.msk [vmem:[#allocation7 + $0x30] sm:$0xff] %vm2884, %v2801
        %2892 = vst.msk [vmem:[#allocation7 + $0x38] sm:$0xff] %vm2884, %v2803
        %2893 = vst.msk [vmem:[#allocation7 + $0x40] sm:$0xff] %vm2884, %v2805
        %2894 = vst.msk [vmem:[#allocation7 + $0x48] sm:$0xff] %vm2884, %v2807
        %2895 = vst.msk [vmem:[#allocation7 + $0x50] sm:$0xff] %vm2884, %v2809
        %2896 = vst.msk [vmem:[#allocation7 + $0x58] sm:$0xff] %vm2884, %v2811
        %2897 = vst.msk [vmem:[#allocation7 + $0x60] sm:$0xff] %vm2884, %v2813
        %2898 = vst.msk [vmem:[#allocation7 + $0x68] sm:$0xff] %vm2884, %v2815
        %2899 = vst.msk [vmem:[#allocation7 + $0x70] sm:$0xff] %vm2884, %v2817
        %2900 = vst.msk [vmem:[#allocation7 + $0x78] sm:$0xff] %vm2884, %v2819
        %2901 = vst.msk [vmem:[#allocation7 + $0x80] sm:$0xff] %vm2884, %v2821
        %2902 = vst.msk [vmem:[#allocation7 + $0x88] sm:$0xff] %vm2884, %v2823
        %2903 = vst.msk [vmem:[#allocation7 + $0x90] sm:$0xff] %vm2884, %v2825
        %2904 = vst.msk [vmem:[#allocation7 + $0x98] sm:$0xff] %vm2884, %v2827
        %2905 = vst.msk [vmem:[#allocation7 + $0xa0] sm:$0xff] %vm2884, %v2829
        %2906 = vst.msk [vmem:[#allocation7 + $0xa8] sm:$0xff] %vm2884, %v2831
        %2907 = vst.msk [vmem:[#allocation7 + $0xb0] sm:$0xff] %vm2884, %v2833
        %2908 = vst.msk [vmem:[#allocation7 + $0xb8] sm:$0xff] %vm2884, %v2835
        %2909 = vst.msk [vmem:[#allocation7 + $0xc0] sm:$0xff] %vm2884, %v2837
        %2910 = vst.msk [vmem:[#allocation7 + $0xc8] sm:$0xff] %vm2884, %v2839
        %2911 = vst.msk [vmem:[#allocation7 + $0xd0] sm:$0xff] %vm2884, %v2841
        %2912 = vst.msk [vmem:[#allocation7 + $0xd8] sm:$0xff] %vm2884, %v2843
        %2913 = vst.msk [vmem:[#allocation7 + $0xe0] sm:$0xff] %vm2884, %v2845
        %2914 = vst.msk [vmem:[#allocation7 + $0xe8] sm:$0xff] %vm2884, %v2847
        %2915 = vst.msk [vmem:[#allocation7 + $0xf0] sm:$0xff] %vm2884, %v2849
        %2916 = vst.msk [vmem:[#allocation7 + $0xf8] sm:$0xff] %vm2884, %v2851
        %2919 = vrot.lane.b32.xlu0 %v2501, 12
        %v2920 = vpop.permute.xlu0 %2919
        %2921 = vrot.lane.b32.xlu0 %v2502, 12
        %v2922 = vpop.permute.xlu0 %2921
        %2923 = vrot.lane.b32.xlu0 %v2505, 12
        %v2924 = vpop.permute.xlu0 %2923
        %2925 = vrot.lane.b32.xlu0 %v2506, 12
        %v2926 = vpop.permute.xlu0 %2925
        %2927 = vrot.lane.b32.xlu0 %v2509, 12
        %v2928 = vpop.permute.xlu0 %2927
        %2929 = vrot.lane.b32.xlu0 %v2510, 12
        %v2930 = vpop.permute.xlu0 %2929
        %2931 = vrot.lane.b32.xlu0 %v2513, 12
        %v2932 = vpop.permute.xlu0 %2931
        %2933 = vrot.lane.b32.xlu0 %v2514, 12
        %v2934 = vpop.permute.xlu0 %2933
        %2935 = vrot.lane.b32.xlu0 %v2517, 12
        %v2936 = vpop.permute.xlu0 %2935
        %2937 = vrot.lane.b32.xlu0 %v2518, 12
        %v2938 = vpop.permute.xlu0 %2937
        %2939 = vrot.lane.b32.xlu0 %v2521, 12
        %v2940 = vpop.permute.xlu0 %2939
        %2941 = vrot.lane.b32.xlu0 %v2522, 12
        %v2942 = vpop.permute.xlu0 %2941
        %2943 = vrot.lane.b32.xlu0 %v2525, 12
        %v2944 = vpop.permute.xlu0 %2943
        %2945 = vrot.lane.b32.xlu0 %v2526, 12
        %v2946 = vpop.permute.xlu0 %2945
        %2947 = vrot.lane.b32.xlu0 %v2529, 12
        %v2948 = vpop.permute.xlu0 %2947
        %2949 = vrot.lane.b32.xlu0 %v2530, 12
        %v2950 = vpop.permute.xlu0 %2949
        %2951 = vrot.lane.b32.xlu0 %v2533, 12
        %v2952 = vpop.permute.xlu0 %2951
        %2953 = vrot.lane.b32.xlu0 %v2534, 12
        %v2954 = vpop.permute.xlu0 %2953
        %2955 = vrot.lane.b32.xlu0 %v2537, 12
        %v2956 = vpop.permute.xlu0 %2955
        %2957 = vrot.lane.b32.xlu0 %v2538, 12
        %v2958 = vpop.permute.xlu0 %2957
        %2959 = vrot.lane.b32.xlu0 %v2541, 12
        %v2960 = vpop.permute.xlu0 %2959
        %2961 = vrot.lane.b32.xlu0 %v2542, 12
        %v2962 = vpop.permute.xlu0 %2961
        %2963 = vrot.lane.b32.xlu0 %v2545, 12
        %v2964 = vpop.permute.xlu0 %2963
        %2965 = vrot.lane.b32.xlu0 %v2546, 12
        %v2966 = vpop.permute.xlu0 %2965
        %2967 = vrot.lane.b32.xlu0 %v2549, 12
        %v2968 = vpop.permute.xlu0 %2967
        %2969 = vrot.lane.b32.xlu0 %v2550, 12
        %v2970 = vpop.permute.xlu0 %2969
        %2971 = vrot.lane.b32.xlu0 %v2553, 12
        %v2972 = vpop.permute.xlu0 %2971
        %2973 = vrot.lane.b32.xlu0 %v2554, 12
        %v2974 = vpop.permute.xlu0 %2973
        %2975 = vrot.lane.b32.xlu0 %v2557, 12
        %v2976 = vpop.permute.xlu0 %2975
        %2977 = vrot.lane.b32.xlu0 %v2558, 12
        %v2978 = vpop.permute.xlu0 %2977
        %2979 = vrot.lane.b32.xlu0 %v2561, 12
        %v2980 = vpop.permute.xlu0 %2979
        %2981 = vrot.lane.b32.xlu0 %v2562, 12
        %v2982 = vpop.permute.xlu0 %2981
        %vm3015 = vcmask 130144
        %3016 = vst.msk [vmem:[#allocation7] sm:$0xff] %vm3015, %v2920
        %3017 = vst.msk [vmem:[#allocation7 + $0x8] sm:$0xff] %vm3015, %v2922
        %3018 = vst.msk [vmem:[#allocation7 + $0x10] sm:$0xff] %vm3015, %v2924
        %3019 = vst.msk [vmem:[#allocation7 + $0x18] sm:$0xff] %vm3015, %v2926
        %3020 = vst.msk [vmem:[#allocation7 + $0x20] sm:$0xff] %vm3015, %v2928
        %3021 = vst.msk [vmem:[#allocation7 + $0x28] sm:$0xff] %vm3015, %v2930
        %3022 = vst.msk [vmem:[#allocation7 + $0x30] sm:$0xff] %vm3015, %v2932
        %3023 = vst.msk [vmem:[#allocation7 + $0x38] sm:$0xff] %vm3015, %v2934
        %3024 = vst.msk [vmem:[#allocation7 + $0x40] sm:$0xff] %vm3015, %v2936
        %3025 = vst.msk [vmem:[#allocation7 + $0x48] sm:$0xff] %vm3015, %v2938
        %3026 = vst.msk [vmem:[#allocation7 + $0x50] sm:$0xff] %vm3015, %v2940
        %3027 = vst.msk [vmem:[#allocation7 + $0x58] sm:$0xff] %vm3015, %v2942
        %3028 = vst.msk [vmem:[#allocation7 + $0x60] sm:$0xff] %vm3015, %v2944
        %3029 = vst.msk [vmem:[#allocation7 + $0x68] sm:$0xff] %vm3015, %v2946
        %3030 = vst.msk [vmem:[#allocation7 + $0x70] sm:$0xff] %vm3015, %v2948
        %3031 = vst.msk [vmem:[#allocation7 + $0x78] sm:$0xff] %vm3015, %v2950
        %3032 = vst.msk [vmem:[#allocation7 + $0x80] sm:$0xff] %vm3015, %v2952
        %3033 = vst.msk [vmem:[#allocation7 + $0x88] sm:$0xff] %vm3015, %v2954
        %3034 = vst.msk [vmem:[#allocation7 + $0x90] sm:$0xff] %vm3015, %v2956
        %3035 = vst.msk [vmem:[#allocation7 + $0x98] sm:$0xff] %vm3015, %v2958
        %3036 = vst.msk [vmem:[#allocation7 + $0xa0] sm:$0xff] %vm3015, %v2960
        %3037 = vst.msk [vmem:[#allocation7 + $0xa8] sm:$0xff] %vm3015, %v2962
        %3038 = vst.msk [vmem:[#allocation7 + $0xb0] sm:$0xff] %vm3015, %v2964
        %3039 = vst.msk [vmem:[#allocation7 + $0xb8] sm:$0xff] %vm3015, %v2966
        %3040 = vst.msk [vmem:[#allocation7 + $0xc0] sm:$0xff] %vm3015, %v2968
        %3041 = vst.msk [vmem:[#allocation7 + $0xc8] sm:$0xff] %vm3015, %v2970
        %3042 = vst.msk [vmem:[#allocation7 + $0xd0] sm:$0xff] %vm3015, %v2972
        %3043 = vst.msk [vmem:[#allocation7 + $0xd8] sm:$0xff] %vm3015, %v2974
        %3044 = vst.msk [vmem:[#allocation7 + $0xe0] sm:$0xff] %vm3015, %v2976
        %3045 = vst.msk [vmem:[#allocation7 + $0xe8] sm:$0xff] %vm3015, %v2978
        %3046 = vst.msk [vmem:[#allocation7 + $0xf0] sm:$0xff] %vm3015, %v2980
        %3047 = vst.msk [vmem:[#allocation7 + $0xf8] sm:$0xff] %vm3015, %v2982
        %v3048 = vld [vmem:[#allocation7] sm:$0xff]
        %v3049 = vld [vmem:[#allocation7 + $0x8] sm:$0xff]
        %v3050 = vld [vmem:[#allocation7 + $0x10] sm:$0xff]
        %v3051 = vld [vmem:[#allocation7 + $0x18] sm:$0xff]
        %v3052 = vld [vmem:[#allocation7 + $0x20] sm:$0xff]
        %v3053 = vld [vmem:[#allocation7 + $0x28] sm:$0xff]
        %v3054 = vld [vmem:[#allocation7 + $0x30] sm:$0xff]
        %v3055 = vld [vmem:[#allocation7 + $0x38] sm:$0xff]
        %v3056 = vld [vmem:[#allocation7 + $0x40] sm:$0xff]
        %v3057 = vld [vmem:[#allocation7 + $0x48] sm:$0xff]
        %v3058 = vld [vmem:[#allocation7 + $0x50] sm:$0xff]
        %v3059 = vld [vmem:[#allocation7 + $0x58] sm:$0xff]
        %v3060 = vld [vmem:[#allocation7 + $0x60] sm:$0xff]
        %v3061 = vld [vmem:[#allocation7 + $0x68] sm:$0xff]
        %v3062 = vld [vmem:[#allocation7 + $0x70] sm:$0xff]
        %v3063 = vld [vmem:[#allocation7 + $0x78] sm:$0xff]
        %v3064 = vld [vmem:[#allocation7 + $0x80] sm:$0xff]
        %v3065 = vld [vmem:[#allocation7 + $0x88] sm:$0xff]
        %v3066 = vld [vmem:[#allocation7 + $0x90] sm:$0xff]
        %v3067 = vld [vmem:[#allocation7 + $0x98] sm:$0xff]
        %v3068 = vld [vmem:[#allocation7 + $0xa0] sm:$0xff]
        %v3069 = vld [vmem:[#allocation7 + $0xa8] sm:$0xff]
        %v3070 = vld [vmem:[#allocation7 + $0xb0] sm:$0xff]
        %v3071 = vld [vmem:[#allocation7 + $0xb8] sm:$0xff]
        %v3072 = vld [vmem:[#allocation7 + $0xc0] sm:$0xff]
        %v3073 = vld [vmem:[#allocation7 + $0xc8] sm:$0xff]
        %v3074 = vld [vmem:[#allocation7 + $0xd0] sm:$0xff]
        %v3075 = vld [vmem:[#allocation7 + $0xd8] sm:$0xff]
        %v3076 = vld [vmem:[#allocation7 + $0xe0] sm:$0xff]
        %v3077 = vld [vmem:[#allocation7 + $0xe8] sm:$0xff]
        %v3078 = vld [vmem:[#allocation7 + $0xf0] sm:$0xff]
        %v3079 = vld [vmem:[#allocation7 + $0xf8] sm:$0xff]
        %v3080 = vld [vmem:[%s4] sm:$0xff]
        %v3081 = vld [vmem:[%s4 + $0x8] sm:$0xff]
        %v3082 = vld [vmem:[%s5] sm:$0x1]
        %v3084 = vlaneseq
        %v3085 = vshrl.u32 %v3084, 7
        %v3086 = vsub.s32 0, %v3085
        %v3087 = vrot.slane %v3082, %v3086
        %vm3089 = vcmask 130048
        %v3091 = vsel %vm3089, %v3048, 0
        %v3094 = vsel %vm3089, %v3049, 0
        %v3097 = vsel %vm3089, %v3050, 0
        %v3100 = vsel %vm3089, %v3051, 0
        %v3103 = vsel %vm3089, %v3052, 0
        %v3106 = vsel %vm3089, %v3053, 0
        %v3109 = vsel %vm3089, %v3054, 0
        %v3112 = vsel %vm3089, %v3055, 0
        %v3115 = vsel %vm3089, %v3056, 0
        %v3118 = vsel %vm3089, %v3057, 0
        %v3121 = vsel %vm3089, %v3058, 0
        %v3124 = vsel %vm3089, %v3059, 0
        %v3127 = vsel %vm3089, %v3060, 0
        %v3130 = vsel %vm3089, %v3061, 0
        %v3133 = vsel %vm3089, %v3062, 0
        %v3136 = vsel %vm3089, %v3063, 0
        %v3139 = vsel %vm3089, %v3064, 0
        %v3142 = vsel %vm3089, %v3065, 0
        %v3145 = vsel %vm3089, %v3066, 0
        %v3148 = vsel %vm3089, %v3067, 0
        %v3151 = vsel %vm3089, %v3068, 0
        %v3154 = vsel %vm3089, %v3069, 0
        %v3157 = vsel %vm3089, %v3070, 0
        %v3160 = vsel %vm3089, %v3071, 0
        %v3163 = vsel %vm3089, %v3072, 0
        %v3166 = vsel %vm3089, %v3073, 0
        %v3169 = vsel %vm3089, %v3074, 0
        %v3172 = vsel %vm3089, %v3075, 0
        %v3175 = vsel %vm3089, %v3076, 0
        %v3178 = vsel %vm3089, %v3077, 0
        %v3181 = vsel %vm3089, %v3078, 0
        %v3184 = vsel %vm3089, %v3079, 0
        %3186 = vmatprep.subr.mxu0 0.0
        %3187 = vmatpush1.msra.mxu0 0.0
        %3188 = vmatprep.subr.mxu0 0.0
        %3189 = vmatpush1.msra.mxu0 0.0
        %3190 = vmatprep.subr.mxu0 0.0
        %3191 = vmatpush1.msra.mxu0 0.0
        %3192 = vmatprep.subr.mxu0 0.0
        %3193 = vmatpush1.msra.mxu0 0.0
        %3194 = vmatprep.subr.mxu0 0.0
        %3195 = vmatpush1.msra.mxu0 0.0
        %3196 = vmatprep.subr.mxu0 0.0
        %3197 = vmatpush1.msra.mxu0 0.0
        %3198 = vmatprep.subr.mxu0 0.0
        %3199 = vmatpush1.msra.mxu0 0.0
        %3200 = vmatprep.subr.mxu0 0.0
        %3201 = vmatpush1.msra.mxu0 0.0
        %3202 = vmatprep.subr.mxu0 0.0
        %3203 = vmatpush1.msra.mxu0 0.0
        %3204 = vmatprep.subr.mxu0 0.0
        %3205 = vmatpush1.msra.mxu0 0.0
        %3206 = vmatprep.subr.mxu0 0.0
        %3207 = vmatpush1.msra.mxu0 0.0
        %3208 = vmatprep.subr.mxu0 0.0
        %3209 = vmatpush1.msra.mxu0 0.0
        %3210 = vmatprep.subr.mxu0 0.0
        %3211 = vmatpush1.msra.mxu0 0.0
        %3212 = vmatprep.subr.mxu0 0.0
        %3213 = vmatpush1.msra.mxu0 0.0
        %3214 = vmatprep.subr.mxu0 0.0
        %3215 = vmatpush1.msra.mxu0 %v3081
        %3216 = vmatprep.subr.mxu0 0.0
        %3217 = vmatpush1.msra.mxu0 %v3080
        %3218 = vmatprep.subr.mxu0 0.0
        %3219 = vmatpush2.msra.mxu0 0.0
        %3220 = vmatprep.subr.mxu0 0.0
        %3221 = vmatpush2.msra.mxu0 0.0
        %3222 = vmatprep.subr.mxu0 0.0
        %3223 = vmatpush2.msra.mxu0 0.0
        %3224 = vmatprep.subr.mxu0 0.0
        %3225 = vmatpush2.msra.mxu0 0.0
        %3226 = vmatprep.subr.mxu0 0.0
        %3227 = vmatpush2.msra.mxu0 0.0
        %3228 = vmatprep.subr.mxu0 0.0
        %3229 = vmatpush2.msra.mxu0 0.0
        %3230 = vmatprep.subr.mxu0 0.0
        %3231 = vmatpush2.msra.mxu0 0.0
        %3232 = vmatprep.subr.mxu0 0.0
        %3233 = vmatpush2.msra.mxu0 0.0
        %3234 = vmatprep.subr.mxu0 0.0
        %3235 = vmatpush2.msra.mxu0 0.0
        %3236 = vmatprep.subr.mxu0 0.0
        %3237 = vmatpush2.msra.mxu0 0.0
        %3238 = vmatprep.subr.mxu0 0.0
        %3239 = vmatpush2.msra.mxu0 0.0
        %3240 = vmatprep.subr.mxu0 0.0
        %3241 = vmatpush2.msra.mxu0 0.0
        %3242 = vmatprep.subr.mxu0 0.0
        %3243 = vmatpush2.msra.mxu0 0.0
        %3244 = vmatprep.subr.mxu0 0.0
        %3245 = vmatpush2.msra.mxu0 0.0
        %3246 = vmatprep.subr.mxu0 0.0
        %3247 = vmatpush2.msra.mxu0 0.0
        %3248 = vmatprep.subr.mxu0 0.0
        %3249 = vmatpush2.msra.mxu0 0.0
        %3250 = vmatprep.mubr.f32.mxu0 0.0
        %3251 = vmatmul.mubr.f32.gmra.mxu0 %v3091
        %v3252 = vpop.f32.mrf.mxu0
        %v3253 = vadd.f32 %v3087, %v3252
        %v3254 = vpop.f32.mrf.mxu0
        %3255 = vmatprep.mubr.f32.mxu0 0.0
        %3256 = vmatmul.mubr.f32.gmra.mxu0 %v3094
        %v3257 = vpop.f32.mrf.mxu0
        %v3258 = vadd.f32 %v3087, %v3257
        %v3259 = vpop.f32.mrf.mxu0
        %3260 = vmatprep.mubr.f32.mxu0 0.0
        %3261 = vmatmul.mubr.f32.gmra.mxu0 %v3097
        %v3262 = vpop.f32.mrf.mxu0
        %v3263 = vadd.f32 %v3087, %v3262
        %v3264 = vpop.f32.mrf.mxu0
        %3265 = vmatprep.mubr.f32.mxu0 0.0
        %3266 = vmatmul.mubr.f32.gmra.mxu0 %v3100
        %v3267 = vpop.f32.mrf.mxu0
        %v3268 = vadd.f32 %v3087, %v3267
        %v3269 = vpop.f32.mrf.mxu0
        %3270 = vmatprep.mubr.f32.mxu0 0.0
        %3271 = vmatmul.mubr.f32.gmra.mxu0 %v3103
        %v3272 = vpop.f32.mrf.mxu0
        %v3273 = vadd.f32 %v3087, %v3272
        %v3274 = vpop.f32.mrf.mxu0
        %3275 = vmatprep.mubr.f32.mxu0 0.0
        %3276 = vmatmul.mubr.f32.gmra.mxu0 %v3106
        %v3277 = vpop.f32.mrf.mxu0
        %v3278 = vadd.f32 %v3087, %v3277
        %v3279 = vpop.f32.mrf.mxu0
        %3280 = vmatprep.mubr.f32.mxu0 0.0
        %3281 = vmatmul.mubr.f32.gmra.mxu0 %v3109
        %v3282 = vpop.f32.mrf.mxu0
        %v3283 = vadd.f32 %v3087, %v3282
        %v3284 = vpop.f32.mrf.mxu0
        %3285 = vmatprep.mubr.f32.mxu0 0.0
        %3286 = vmatmul.mubr.f32.gmra.mxu0 %v3112
        %v3287 = vpop.f32.mrf.mxu0
        %v3288 = vadd.f32 %v3087, %v3287
        %v3289 = vpop.f32.mrf.mxu0
        %3290 = vmatprep.mubr.f32.mxu0 0.0
        %3291 = vmatmul.mubr.f32.gmra.mxu0 %v3115
        %v3292 = vpop.f32.mrf.mxu0
        %v3293 = vadd.f32 %v3087, %v3292
        %v3294 = vpop.f32.mrf.mxu0
        %3295 = vmatprep.mubr.f32.mxu0 0.0
        %3296 = vmatmul.mubr.f32.gmra.mxu0 %v3118
        %v3297 = vpop.f32.mrf.mxu0
        %v3298 = vadd.f32 %v3087, %v3297
        %v3299 = vpop.f32.mrf.mxu0
        %3300 = vmatprep.mubr.f32.mxu0 0.0
        %3301 = vmatmul.mubr.f32.gmra.mxu0 %v3121
        %v3302 = vpop.f32.mrf.mxu0
        %v3303 = vadd.f32 %v3087, %v3302
        %v3304 = vpop.f32.mrf.mxu0
        %3305 = vmatprep.mubr.f32.mxu0 0.0
        %3306 = vmatmul.mubr.f32.gmra.mxu0 %v3124
        %v3307 = vpop.f32.mrf.mxu0
        %v3308 = vadd.f32 %v3087, %v3307
        %v3309 = vpop.f32.mrf.mxu0
        %3310 = vmatprep.mubr.f32.mxu0 0.0
        %3311 = vmatmul.mubr.f32.gmra.mxu0 %v3127
        %v3312 = vpop.f32.mrf.mxu0
        %v3313 = vadd.f32 %v3087, %v3312
        %v3314 = vpop.f32.mrf.mxu0
        %3315 = vmatprep.mubr.f32.mxu0 0.0
        %3316 = vmatmul.mubr.f32.gmra.mxu0 %v3130
        %v3317 = vpop.f32.mrf.mxu0
        %v3318 = vadd.f32 %v3087, %v3317
        %v3319 = vpop.f32.mrf.mxu0
        %3320 = vmatprep.mubr.f32.mxu0 0.0
        %3321 = vmatmul.mubr.f32.gmra.mxu0 %v3133
        %v3322 = vpop.f32.mrf.mxu0
        %v3323 = vadd.f32 %v3087, %v3322
        %v3324 = vpop.f32.mrf.mxu0
        %3325 = vmatprep.mubr.f32.mxu0 0.0
        %3326 = vmatmul.mubr.f32.gmra.mxu0 %v3136
        %v3327 = vpop.f32.mrf.mxu0
        %v3328 = vadd.f32 %v3087, %v3327
        %v3329 = vpop.f32.mrf.mxu0
        %3330 = vmatprep.mubr.f32.mxu0 0.0
        %3331 = vmatmul.mubr.f32.gmra.mxu0 %v3139
        %v3332 = vpop.f32.mrf.mxu0
        %v3333 = vadd.f32 %v3087, %v3332
        %v3334 = vpop.f32.mrf.mxu0
        %3335 = vmatprep.mubr.f32.mxu0 0.0
        %3336 = vmatmul.mubr.f32.gmra.mxu0 %v3142
        %v3337 = vpop.f32.mrf.mxu0
        %v3338 = vadd.f32 %v3087, %v3337
        %v3339 = vpop.f32.mrf.mxu0
        %3340 = vmatprep.mubr.f32.mxu0 0.0
        %3341 = vmatmul.mubr.f32.gmra.mxu0 %v3145
        %v3342 = vpop.f32.mrf.mxu0
        %v3343 = vadd.f32 %v3087, %v3342
        %v3344 = vpop.f32.mrf.mxu0
        %3345 = vmatprep.mubr.f32.mxu0 0.0
        %3346 = vmatmul.mubr.f32.gmra.mxu0 %v3148
        %v3347 = vpop.f32.mrf.mxu0
        %v3348 = vadd.f32 %v3087, %v3347
        %v3349 = vpop.f32.mrf.mxu0
        %3350 = vmatprep.mubr.f32.mxu0 0.0
        %3351 = vmatmul.mubr.f32.gmra.mxu0 %v3151
        %v3352 = vpop.f32.mrf.mxu0
        %v3353 = vadd.f32 %v3087, %v3352
        %v3354 = vpop.f32.mrf.mxu0
        %3355 = vmatprep.mubr.f32.mxu0 0.0
        %3356 = vmatmul.mubr.f32.gmra.mxu0 %v3154
        %v3357 = vpop.f32.mrf.mxu0
        %v3358 = vadd.f32 %v3087, %v3357
        %v3359 = vpop.f32.mrf.mxu0
        %3360 = vmatprep.mubr.f32.mxu0 0.0
        %3361 = vmatmul.mubr.f32.gmra.mxu0 %v3157
        %v3362 = vpop.f32.mrf.mxu0
        %v3363 = vadd.f32 %v3087, %v3362
        %v3364 = vpop.f32.mrf.mxu0
        %3365 = vmatprep.mubr.f32.mxu0 0.0
        %3366 = vmatmul.mubr.f32.gmra.mxu0 %v3160
        %v3367 = vpop.f32.mrf.mxu0
        %v3368 = vadd.f32 %v3087, %v3367
        %v3369 = vpop.f32.mrf.mxu0
        %3370 = vmatprep.mubr.f32.mxu0 0.0
        %3371 = vmatmul.mubr.f32.gmra.mxu0 %v3163
        %v3372 = vpop.f32.mrf.mxu0
        %v3373 = vadd.f32 %v3087, %v3372
        %v3374 = vpop.f32.mrf.mxu0
        %3375 = vmatprep.mubr.f32.mxu0 0.0
        %3376 = vmatmul.mubr.f32.gmra.mxu0 %v3166
        %v3377 = vpop.f32.mrf.mxu0
        %v3378 = vadd.f32 %v3087, %v3377
        %v3379 = vpop.f32.mrf.mxu0
        %3380 = vmatprep.mubr.f32.mxu0 0.0
        %3381 = vmatmul.mubr.f32.gmra.mxu0 %v3169
        %v3382 = vpop.f32.mrf.mxu0
        %v3383 = vadd.f32 %v3087, %v3382
        %v3384 = vpop.f32.mrf.mxu0
        %3385 = vmatprep.mubr.f32.mxu0 0.0
        %3386 = vmatmul.mubr.f32.gmra.mxu0 %v3172
        %v3387 = vpop.f32.mrf.mxu0
        %v3388 = vadd.f32 %v3087, %v3387
        %v3389 = vpop.f32.mrf.mxu0
        %3390 = vmatprep.mubr.f32.mxu0 0.0
        %3391 = vmatmul.mubr.f32.gmra.mxu0 %v3175
        %v3392 = vpop.f32.mrf.mxu0
        %v3393 = vadd.f32 %v3087, %v3392
        %v3394 = vpop.f32.mrf.mxu0
        %3395 = vmatprep.mubr.f32.mxu0 0.0
        %3396 = vmatmul.mubr.f32.gmra.mxu0 %v3178
        %v3397 = vpop.f32.mrf.mxu0
        %v3398 = vadd.f32 %v3087, %v3397
        %v3399 = vpop.f32.mrf.mxu0
        %3400 = vmatprep.mubr.f32.mxu0 0.0
        %3401 = vmatmul.mubr.f32.gmra.mxu0 %v3181
        %v3402 = vpop.f32.mrf.mxu0
        %v3403 = vadd.f32 %v3087, %v3402
        %v3404 = vpop.f32.mrf.mxu0
        %3405 = vmatprep.mubr.f32.mxu0 0.0
        %3406 = vmatmul.mubr.f32.gmra.mxu0 %v3184
        %v3407 = vpop.f32.mrf.mxu0
        %v3408 = vadd.f32 %v3087, %v3407
        %v3409 = vpop.f32.mrf.mxu0
        %3410 = vdwg.mxu0
        %vm3411 = vcmp.gt.f32.partialorder %v3253, 0.0
        %vm3412 = vcmp.gt.f32.partialorder %v3258, 0.0
        %vm3413 = vcmp.gt.f32.partialorder %v3263, 0.0
        %vm3414 = vcmp.gt.f32.partialorder %v3268, 0.0
        %vm3415 = vcmp.gt.f32.partialorder %v3273, 0.0
        %vm3416 = vcmp.gt.f32.partialorder %v3278, 0.0
        %vm3417 = vcmp.gt.f32.partialorder %v3283, 0.0
        %vm3418 = vcmp.gt.f32.partialorder %v3288, 0.0
        %vm3419 = vcmp.gt.f32.partialorder %v3293, 0.0
        %vm3420 = vcmp.gt.f32.partialorder %v3298, 0.0
        %vm3421 = vcmp.gt.f32.partialorder %v3303, 0.0
        %vm3422 = vcmp.gt.f32.partialorder %v3308, 0.0
        %vm3423 = vcmp.gt.f32.partialorder %v3313, 0.0
        %vm3424 = vcmp.gt.f32.partialorder %v3318, 0.0
        %vm3425 = vcmp.gt.f32.partialorder %v3323, 0.0
        %vm3426 = vcmp.gt.f32.partialorder %v3328, 0.0
        %vm3427 = vcmp.gt.f32.partialorder %v3333, 0.0
        %vm3428 = vcmp.gt.f32.partialorder %v3338, 0.0
        %vm3429 = vcmp.gt.f32.partialorder %v3343, 0.0
        %vm3430 = vcmp.gt.f32.partialorder %v3348, 0.0
        %vm3431 = vcmp.gt.f32.partialorder %v3353, 0.0
        %vm3432 = vcmp.gt.f32.partialorder %v3358, 0.0
        %vm3433 = vcmp.gt.f32.partialorder %v3363, 0.0
        %vm3434 = vcmp.gt.f32.partialorder %v3368, 0.0
        %vm3435 = vcmp.gt.f32.partialorder %v3373, 0.0
        %vm3436 = vcmp.gt.f32.partialorder %v3378, 0.0
        %vm3437 = vcmp.gt.f32.partialorder %v3383, 0.0
        %vm3438 = vcmp.gt.f32.partialorder %v3388, 0.0
        %vm3439 = vcmp.gt.f32.partialorder %v3393, 0.0
        %vm3440 = vcmp.gt.f32.partialorder %v3398, 0.0
        %vm3441 = vcmp.gt.f32.partialorder %v3403, 0.0
        %vm3442 = vcmp.gt.f32.partialorder %v3408, 0.0
        %v3443 = vmul.f32 %v3253, 0.2
        %v3444 = vmul.f32 %v3258, 0.2
        %v3445 = vmul.f32 %v3263, 0.2
        %v3446 = vmul.f32 %v3268, 0.2
        %v3447 = vmul.f32 %v3273, 0.2
        %v3448 = vmul.f32 %v3278, 0.2
        %v3449 = vmul.f32 %v3283, 0.2
        %v3450 = vmul.f32 %v3288, 0.2
        %v3451 = vmul.f32 %v3293, 0.2
        %v3452 = vmul.f32 %v3298, 0.2
        %v3453 = vmul.f32 %v3303, 0.2
        %v3454 = vmul.f32 %v3308, 0.2
        %v3455 = vmul.f32 %v3313, 0.2
        %v3456 = vmul.f32 %v3318, 0.2
        %v3457 = vmul.f32 %v3323, 0.2
        %v3458 = vmul.f32 %v3328, 0.2
        %v3459 = vmul.f32 %v3333, 0.2
        %v3460 = vmul.f32 %v3338, 0.2
        %v3461 = vmul.f32 %v3343, 0.2
        %v3462 = vmul.f32 %v3348, 0.2
        %v3463 = vmul.f32 %v3353, 0.2
        %v3464 = vmul.f32 %v3358, 0.2
        %v3465 = vmul.f32 %v3363, 0.2
        %v3466 = vmul.f32 %v3368, 0.2
        %v3467 = vmul.f32 %v3373, 0.2
        %v3468 = vmul.f32 %v3378, 0.2
        %v3469 = vmul.f32 %v3383, 0.2
        %v3470 = vmul.f32 %v3388, 0.2
        %v3471 = vmul.f32 %v3393, 0.2
        %v3472 = vmul.f32 %v3398, 0.2
        %v3473 = vmul.f32 %v3403, 0.2
        %v3474 = vmul.f32 %v3408, 0.2
        %v3475 = vsel %vm3411, %v3253, %v3443
        %v3476 = vsel %vm3412, %v3258, %v3444
        %v3477 = vsel %vm3413, %v3263, %v3445
        %v3478 = vsel %vm3414, %v3268, %v3446
        %v3479 = vsel %vm3415, %v3273, %v3447
        %v3480 = vsel %vm3416, %v3278, %v3448
        %v3481 = vsel %vm3417, %v3283, %v3449
        %v3482 = vsel %vm3418, %v3288, %v3450
        %v3483 = vsel %vm3419, %v3293, %v3451
        %v3484 = vsel %vm3420, %v3298, %v3452
        %v3485 = vsel %vm3421, %v3303, %v3453
        %v3486 = vsel %vm3422, %v3308, %v3454
        %v3487 = vsel %vm3423, %v3313, %v3455
        %v3488 = vsel %vm3424, %v3318, %v3456
        %v3489 = vsel %vm3425, %v3323, %v3457
        %v3490 = vsel %vm3426, %v3328, %v3458
        %v3491 = vsel %vm3427, %v3333, %v3459
        %v3492 = vsel %vm3428, %v3338, %v3460
        %v3493 = vsel %vm3429, %v3343, %v3461
        %v3494 = vsel %vm3430, %v3348, %v3462
        %v3495 = vsel %vm3431, %v3353, %v3463
        %v3496 = vsel %vm3432, %v3358, %v3464
        %v3497 = vsel %vm3433, %v3363, %v3465
        %v3498 = vsel %vm3434, %v3368, %v3466
        %v3499 = vsel %vm3435, %v3373, %v3467
        %v3500 = vsel %vm3436, %v3378, %v3468
        %v3501 = vsel %vm3437, %v3383, %v3469
        %v3502 = vsel %vm3438, %v3388, %v3470
        %v3503 = vsel %vm3439, %v3393, %v3471
        %v3504 = vsel %vm3440, %v3398, %v3472
        %v3505 = vsel %vm3441, %v3403, %v3473
        %v3506 = vsel %vm3442, %v3408, %v3474
        %vm3507 = vcmask 64512
        %3508 = vst.msk [vmem:[#allocation3] sm:$0xff] %vm3507, 0.0
        %vm3509 = vcmask 57344
        %3510 = vst.msk [vmem:[#allocation3 + $0x8] sm:$0x1] %vm3509, 0.0
        %3511 = vst.msk [vmem:[#allocation3 + $0x10] sm:$0xff] %vm3507, 0.0
        %3512 = vst.msk [vmem:[#allocation3 + $0x18] sm:$0x1] %vm3509, 0.0
        %s3513 = scalar_lea.vmem [#allocation3], 544
        %3514 = vst.msk [vmem:[%s3513] sm:$0xff] %vm3507, 0.0
        %3515 = vst.msk [vmem:[%s3513 + $0x8] sm:$0x1] %vm3509, 0.0
        %3516 = vst.msk [vmem:[%s3513 + $0x10] sm:$0xff] %vm3507, 0.0
        %3517 = vst.msk [vmem:[%s3513 + $0x18] sm:$0x1] %vm3509, 0.0
        %3518 = vst.msk [vmem:[#allocation3] sm:$0x1] %vm3509, 0.0
        %3519 = vst.msk [vmem:[#allocation3 + $0x20] sm:$0x1] %vm3509, 0.0
        %3520 = vst.msk [vmem:[#allocation3 + $0x40] sm:$0x1] %vm3509, 0.0
        %3521 = vst.msk [vmem:[#allocation3 + $0x60] sm:$0x1] %vm3509, 0.0
        %3522 = vst.msk [vmem:[#allocation3 + $0x80] sm:$0x1] %vm3509, 0.0
        %3523 = vst.msk [vmem:[#allocation3 + $0xa0] sm:$0x1] %vm3509, 0.0
        %3524 = vst.msk [vmem:[#allocation3 + $0xc0] sm:$0x1] %vm3509, 0.0
        %3525 = vst.msk [vmem:[#allocation3 + $0xe0] sm:$0x1] %vm3509, 0.0
        %3526 = vst.msk [vmem:[#allocation3 + $0x100] sm:$0x1] %vm3509, 0.0
        %3527 = vst.msk [vmem:[#allocation3 + $0x120] sm:$0x1] %vm3509, 0.0
        %3528 = vst.msk [vmem:[#allocation3 + $0x140] sm:$0x1] %vm3509, 0.0
        %3529 = vst.msk [vmem:[#allocation3 + $0x160] sm:$0x1] %vm3509, 0.0
        %3530 = vst.msk [vmem:[#allocation3 + $0x180] sm:$0x1] %vm3509, 0.0
        %3531 = vst.msk [vmem:[#allocation3 + $0x1a0] sm:$0x1] %vm3509, 0.0
        %3532 = vst.msk [vmem:[#allocation3 + $0x1c0] sm:$0x1] %vm3509, 0.0
        %3533 = vst.msk [vmem:[#allocation3 + $0x1e0] sm:$0x1] %vm3509, 0.0
        %3534 = vst.msk [vmem:[#allocation3 + $0x200] sm:$0x1] %vm3509, 0.0
        %3535 = vst.msk [vmem:[#allocation3 + $0x220] sm:$0x1] %vm3509, 0.0
        %s3536 = scalar_lea.vmem [#allocation3], 16
        %3537 = vst.msk [vmem:[%s3536 + $0x8] sm:$0x1] %vm3509, 0.0
        %3538 = vst.msk [vmem:[%s3536 + $0x28] sm:$0x1] %vm3509, 0.0
        %3539 = vst.msk [vmem:[%s3536 + $0x48] sm:$0x1] %vm3509, 0.0
        %3540 = vst.msk [vmem:[%s3536 + $0x68] sm:$0x1] %vm3509, 0.0
        %3541 = vst.msk [vmem:[%s3536 + $0x88] sm:$0x1] %vm3509, 0.0
        %3542 = vst.msk [vmem:[%s3536 + $0xa8] sm:$0x1] %vm3509, 0.0
        %3543 = vst.msk [vmem:[%s3536 + $0xc8] sm:$0x1] %vm3509, 0.0
        %3544 = vst.msk [vmem:[%s3536 + $0xe8] sm:$0x1] %vm3509, 0.0
        %3545 = vst.msk [vmem:[%s3536 + $0x108] sm:$0x1] %vm3509, 0.0
        %3546 = vst.msk [vmem:[%s3536 + $0x128] sm:$0x1] %vm3509, 0.0
        %3547 = vst.msk [vmem:[%s3536 + $0x148] sm:$0x1] %vm3509, 0.0
        %3548 = vst.msk [vmem:[%s3536 + $0x168] sm:$0x1] %vm3509, 0.0
        %3549 = vst.msk [vmem:[%s3536 + $0x188] sm:$0x1] %vm3509, 0.0
        %3550 = vst.msk [vmem:[%s3536 + $0x1a8] sm:$0x1] %vm3509, 0.0
        %3551 = vst.msk [vmem:[%s3536 + $0x1c8] sm:$0x1] %vm3509, 0.0
        %3552 = vst.msk [vmem:[%s3536 + $0x1e8] sm:$0x1] %vm3509, 0.0
        %3553 = vst.msk [vmem:[%s3536 + $0x208] sm:$0x1] %vm3509, 0.0
        %3554 = vst.msk [vmem:[%s3536 + $0x228] sm:$0x1] %vm3509, 0.0
        %s3555 = scalar_lea.vmem [#allocation3], 48
        %3556 = vst.msk [vmem:[%s3555] sm:$0x1] %vm3509, %v3475
        %3557 = vst.msk [vmem:[%s3555 + $0x20] sm:$0x1] %vm3509, %v3477
        %3558 = vst.msk [vmem:[%s3555 + $0x40] sm:$0x1] %vm3509, %v3479
        %3559 = vst.msk [vmem:[%s3555 + $0x60] sm:$0x1] %vm3509, %v3481
        %3560 = vst.msk [vmem:[%s3555 + $0x80] sm:$0x1] %vm3509, %v3483
        %3561 = vst.msk [vmem:[%s3555 + $0xa0] sm:$0x1] %vm3509, %v3485
        %3562 = vst.msk [vmem:[%s3555 + $0xc0] sm:$0x1] %vm3509, %v3487
        %3563 = vst.msk [vmem:[%s3555 + $0xe0] sm:$0x1] %vm3509, %v3489
        %3564 = vst.msk [vmem:[%s3555 + $0x100] sm:$0x1] %vm3509, %v3491
        %3565 = vst.msk [vmem:[%s3555 + $0x120] sm:$0x1] %vm3509, %v3493
        %3566 = vst.msk [vmem:[%s3555 + $0x140] sm:$0x1] %vm3509, %v3495
        %3567 = vst.msk [vmem:[%s3555 + $0x160] sm:$0x1] %vm3509, %v3497
        %3568 = vst.msk [vmem:[%s3555 + $0x180] sm:$0x1] %vm3509, %v3499
        %3569 = vst.msk [vmem:[%s3555 + $0x1a0] sm:$0x1] %vm3509, %v3501
        %3570 = vst.msk [vmem:[%s3555 + $0x1c0] sm:$0x1] %vm3509, %v3503
        %3571 = vst.msk [vmem:[%s3555 + $0x1e0] sm:$0x1] %vm3509, %v3505
        %s3572 = scalar_lea.vmem [#allocation3], 32
        %vm3573 = vcmask 58369
        %3574 = vst.msk [vmem:[%s3572] sm:$0x2] %vm3573, %v3475
        %3575 = vst.msk [vmem:[%s3572 + $0x20] sm:$0x2] %vm3573, %v3477
        %3576 = vst.msk [vmem:[%s3572 + $0x40] sm:$0x2] %vm3573, %v3479
        %3577 = vst.msk [vmem:[%s3572 + $0x60] sm:$0x2] %vm3573, %v3481
        %3578 = vst.msk [vmem:[%s3572 + $0x80] sm:$0x2] %vm3573, %v3483
        %3579 = vst.msk [vmem:[%s3572 + $0xa0] sm:$0x2] %vm3573, %v3485
        %3580 = vst.msk [vmem:[%s3572 + $0xc0] sm:$0x2] %vm3573, %v3487
        %3581 = vst.msk [vmem:[%s3572 + $0xe0] sm:$0x2] %vm3573, %v3489
        %3582 = vst.msk [vmem:[%s3572 + $0x100] sm:$0x2] %vm3573, %v3491
        %3583 = vst.msk [vmem:[%s3572 + $0x120] sm:$0x2] %vm3573, %v3493
        %3584 = vst.msk [vmem:[%s3572 + $0x140] sm:$0x2] %vm3573, %v3495
        %3585 = vst.msk [vmem:[%s3572 + $0x160] sm:$0x2] %vm3573, %v3497
        %3586 = vst.msk [vmem:[%s3572 + $0x180] sm:$0x2] %vm3573, %v3499
        %3587 = vst.msk [vmem:[%s3572 + $0x1a0] sm:$0x2] %vm3573, %v3501
        %3588 = vst.msk [vmem:[%s3572 + $0x1c0] sm:$0x2] %vm3573, %v3503
        %3589 = vst.msk [vmem:[%s3572 + $0x1e0] sm:$0x2] %vm3573, %v3505
        %vm3590 = vcmask 59394
        %3591 = vst.msk [vmem:[%s3555 - $0x1] sm:$0x4] %vm3590, %v3475
        %3592 = vst.msk [vmem:[%s3555 + $0x1f] sm:$0x4] %vm3590, %v3477
        %3593 = vst.msk [vmem:[%s3555 + $0x3f] sm:$0x4] %vm3590, %v3479
        %3594 = vst.msk [vmem:[%s3555 + $0x5f] sm:$0x4] %vm3590, %v3481
        %3595 = vst.msk [vmem:[%s3555 + $0x7f] sm:$0x4] %vm3590, %v3483
        %3596 = vst.msk [vmem:[%s3555 + $0x9f] sm:$0x4] %vm3590, %v3485
        %3597 = vst.msk [vmem:[%s3555 + $0xbf] sm:$0x4] %vm3590, %v3487
        %3598 = vst.msk [vmem:[%s3555 + $0xdf] sm:$0x4] %vm3590, %v3489
        %3599 = vst.msk [vmem:[%s3555 + $0xff] sm:$0x4] %vm3590, %v3491
        %3600 = vst.msk [vmem:[%s3555 + $0x11f] sm:$0x4] %vm3590, %v3493
        %3601 = vst.msk [vmem:[%s3555 + $0x13f] sm:$0x4] %vm3590, %v3495
        %3602 = vst.msk [vmem:[%s3555 + $0x15f] sm:$0x4] %vm3590, %v3497
        %3603 = vst.msk [vmem:[%s3555 + $0x17f] sm:$0x4] %vm3590, %v3499
        %3604 = vst.msk [vmem:[%s3555 + $0x19f] sm:$0x4] %vm3590, %v3501
        %3605 = vst.msk [vmem:[%s3555 + $0x1bf] sm:$0x4] %vm3590, %v3503
        %3606 = vst.msk [vmem:[%s3555 + $0x1df] sm:$0x4] %vm3590, %v3505
        %vm3607 = vcmask 60419
        %3608 = vst.msk [vmem:[%s3572 - $0x1] sm:$0x8] %vm3607, %v3475
        %3609 = vst.msk [vmem:[%s3572 + $0x1f] sm:$0x8] %vm3607, %v3477
        %3610 = vst.msk [vmem:[%s3572 + $0x3f] sm:$0x8] %vm3607, %v3479
        %3611 = vst.msk [vmem:[%s3572 + $0x5f] sm:$0x8] %vm3607, %v3481
        %3612 = vst.msk [vmem:[%s3572 + $0x7f] sm:$0x8] %vm3607, %v3483
        %3613 = vst.msk [vmem:[%s3572 + $0x9f] sm:$0x8] %vm3607, %v3485
        %3614 = vst.msk [vmem:[%s3572 + $0xbf] sm:$0x8] %vm3607, %v3487
        %3615 = vst.msk [vmem:[%s3572 + $0xdf] sm:$0x8] %vm3607, %v3489
        %3616 = vst.msk [vmem:[%s3572 + $0xff] sm:$0x8] %vm3607, %v3491
        %3617 = vst.msk [vmem:[%s3572 + $0x11f] sm:$0x8] %vm3607, %v3493
        %3618 = vst.msk [vmem:[%s3572 + $0x13f] sm:$0x8] %vm3607, %v3495
        %3619 = vst.msk [vmem:[%s3572 + $0x15f] sm:$0x8] %vm3607, %v3497
        %3620 = vst.msk [vmem:[%s3572 + $0x17f] sm:$0x8] %vm3607, %v3499
        %3621 = vst.msk [vmem:[%s3572 + $0x19f] sm:$0x8] %vm3607, %v3501
        %3622 = vst.msk [vmem:[%s3572 + $0x1bf] sm:$0x8] %vm3607, %v3503
        %3623 = vst.msk [vmem:[%s3572 + $0x1df] sm:$0x8] %vm3607, %v3505
        %vm3624 = vcmask 61444
        %3625 = vst.msk [vmem:[%s3555 - $0x2] sm:$0x10] %vm3624, %v3475
        %3626 = vst.msk [vmem:[%s3555 + $0x1e] sm:$0x10] %vm3624, %v3477
        %3627 = vst.msk [vmem:[%s3555 + $0x3e] sm:$0x10] %vm3624, %v3479
        %3628 = vst.msk [vmem:[%s3555 + $0x5e] sm:$0x10] %vm3624, %v3481
        %3629 = vst.msk [vmem:[%s3555 + $0x7e] sm:$0x10] %vm3624, %v3483
        %3630 = vst.msk [vmem:[%s3555 + $0x9e] sm:$0x10] %vm3624, %v3485
        %3631 = vst.msk [vmem:[%s3555 + $0xbe] sm:$0x10] %vm3624, %v3487
        %3632 = vst.msk [vmem:[%s3555 + $0xde] sm:$0x10] %vm3624, %v3489
        %3633 = vst.msk [vmem:[%s3555 + $0xfe] sm:$0x10] %vm3624, %v3491
        %3634 = vst.msk [vmem:[%s3555 + $0x11e] sm:$0x10] %vm3624, %v3493
        %3635 = vst.msk [vmem:[%s3555 + $0x13e] sm:$0x10] %vm3624, %v3495
        %3636 = vst.msk [vmem:[%s3555 + $0x15e] sm:$0x10] %vm3624, %v3497
        %3637 = vst.msk [vmem:[%s3555 + $0x17e] sm:$0x10] %vm3624, %v3499
        %3638 = vst.msk [vmem:[%s3555 + $0x19e] sm:$0x10] %vm3624, %v3501
        %3639 = vst.msk [vmem:[%s3555 + $0x1be] sm:$0x10] %vm3624, %v3503
        %3640 = vst.msk [vmem:[%s3555 + $0x1de] sm:$0x10] %vm3624, %v3505
        %vm3641 = vcmask 62469
        %3642 = vst.msk [vmem:[%s3572 - $0x2] sm:$0x20] %vm3641, %v3475
        %3643 = vst.msk [vmem:[%s3572 + $0x1e] sm:$0x20] %vm3641, %v3477
        %3644 = vst.msk [vmem:[%s3572 + $0x3e] sm:$0x20] %vm3641, %v3479
        %3645 = vst.msk [vmem:[%s3572 + $0x5e] sm:$0x20] %vm3641, %v3481
        %3646 = vst.msk [vmem:[%s3572 + $0x7e] sm:$0x20] %vm3641, %v3483
        %3647 = vst.msk [vmem:[%s3572 + $0x9e] sm:$0x20] %vm3641, %v3485
        %3648 = vst.msk [vmem:[%s3572 + $0xbe] sm:$0x20] %vm3641, %v3487
        %3649 = vst.msk [vmem:[%s3572 + $0xde] sm:$0x20] %vm3641, %v3489
        %3650 = vst.msk [vmem:[%s3572 + $0xfe] sm:$0x20] %vm3641, %v3491
        %3651 = vst.msk [vmem:[%s3572 + $0x11e] sm:$0x20] %vm3641, %v3493
        %3652 = vst.msk [vmem:[%s3572 + $0x13e] sm:$0x20] %vm3641, %v3495
        %3653 = vst.msk [vmem:[%s3572 + $0x15e] sm:$0x20] %vm3641, %v3497
        %3654 = vst.msk [vmem:[%s3572 + $0x17e] sm:$0x20] %vm3641, %v3499
        %3655 = vst.msk [vmem:[%s3572 + $0x19e] sm:$0x20] %vm3641, %v3501
        %3656 = vst.msk [vmem:[%s3572 + $0x1be] sm:$0x20] %vm3641, %v3503
        %3657 = vst.msk [vmem:[%s3572 + $0x1de] sm:$0x20] %vm3641, %v3505
        %vm3658 = vcmask 63494
        %3659 = vst.msk [vmem:[%s3555 - $0x3] sm:$0x40] %vm3658, %v3475
        %3660 = vst.msk [vmem:[%s3555 + $0x1d] sm:$0x40] %vm3658, %v3477
        %3661 = vst.msk [vmem:[%s3555 + $0x3d] sm:$0x40] %vm3658, %v3479
        %3662 = vst.msk [vmem:[%s3555 + $0x5d] sm:$0x40] %vm3658, %v3481
        %3663 = vst.msk [vmem:[%s3555 + $0x7d] sm:$0x40] %vm3658, %v3483
        %3664 = vst.msk [vmem:[%s3555 + $0x9d] sm:$0x40] %vm3658, %v3485
        %3665 = vst.msk [vmem:[%s3555 + $0xbd] sm:$0x40] %vm3658, %v3487
        %3666 = vst.msk [vmem:[%s3555 + $0xdd] sm:$0x40] %vm3658, %v3489
        %3667 = vst.msk [vmem:[%s3555 + $0xfd] sm:$0x40] %vm3658, %v3491
        %3668 = vst.msk [vmem:[%s3555 + $0x11d] sm:$0x40] %vm3658, %v3493
        %3669 = vst.msk [vmem:[%s3555 + $0x13d] sm:$0x40] %vm3658, %v3495
        %3670 = vst.msk [vmem:[%s3555 + $0x15d] sm:$0x40] %vm3658, %v3497
        %3671 = vst.msk [vmem:[%s3555 + $0x17d] sm:$0x40] %vm3658, %v3499
        %3672 = vst.msk [vmem:[%s3555 + $0x19d] sm:$0x40] %vm3658, %v3501
        %3673 = vst.msk [vmem:[%s3555 + $0x1bd] sm:$0x40] %vm3658, %v3503
        %3674 = vst.msk [vmem:[%s3555 + $0x1dd] sm:$0x40] %vm3658, %v3505
        %vm3675 = vcmask 64519
        %3676 = vst.msk [vmem:[%s3572 - $0x3] sm:$0x80] %vm3675, %v3475
        %3677 = vst.msk [vmem:[%s3572 + $0x1d] sm:$0x80] %vm3675, %v3477
        %3678 = vst.msk [vmem:[%s3572 + $0x3d] sm:$0x80] %vm3675, %v3479
        %3679 = vst.msk [vmem:[%s3572 + $0x5d] sm:$0x80] %vm3675, %v3481
        %3680 = vst.msk [vmem:[%s3572 + $0x7d] sm:$0x80] %vm3675, %v3483
        %3681 = vst.msk [vmem:[%s3572 + $0x9d] sm:$0x80] %vm3675, %v3485
        %3682 = vst.msk [vmem:[%s3572 + $0xbd] sm:$0x80] %vm3675, %v3487
        %3683 = vst.msk [vmem:[%s3572 + $0xdd] sm:$0x80] %vm3675, %v3489
        %3684 = vst.msk [vmem:[%s3572 + $0xfd] sm:$0x80] %vm3675, %v3491
        %3685 = vst.msk [vmem:[%s3572 + $0x11d] sm:$0x80] %vm3675, %v3493
        %3686 = vst.msk [vmem:[%s3572 + $0x13d] sm:$0x80] %vm3675, %v3495
        %3687 = vst.msk [vmem:[%s3572 + $0x15d] sm:$0x80] %vm3675, %v3497
        %3688 = vst.msk [vmem:[%s3572 + $0x17d] sm:$0x80] %vm3675, %v3499
        %3689 = vst.msk [vmem:[%s3572 + $0x19d] sm:$0x80] %vm3675, %v3501
        %3690 = vst.msk [vmem:[%s3572 + $0x1bd] sm:$0x80] %vm3675, %v3503
        %3691 = vst.msk [vmem:[%s3572 + $0x1dd] sm:$0x80] %vm3675, %v3505
        %3692 = vst.msk [vmem:[%s3555 + $0x4] sm:$0x1] %vm3509, %v3476
        %3693 = vst.msk [vmem:[%s3555 + $0x24] sm:$0x1] %vm3509, %v3478
        %3694 = vst.msk [vmem:[%s3555 + $0x44] sm:$0x1] %vm3509, %v3480
        %3695 = vst.msk [vmem:[%s3555 + $0x64] sm:$0x1] %vm3509, %v3482
        %3696 = vst.msk [vmem:[%s3555 + $0x84] sm:$0x1] %vm3509, %v3484
        %3697 = vst.msk [vmem:[%s3555 + $0xa4] sm:$0x1] %vm3509, %v3486
        %3698 = vst.msk [vmem:[%s3555 + $0xc4] sm:$0x1] %vm3509, %v3488
        %3699 = vst.msk [vmem:[%s3555 + $0xe4] sm:$0x1] %vm3509, %v3490
        %3700 = vst.msk [vmem:[%s3555 + $0x104] sm:$0x1] %vm3509, %v3492
        %3701 = vst.msk [vmem:[%s3555 + $0x124] sm:$0x1] %vm3509, %v3494
        %3702 = vst.msk [vmem:[%s3555 + $0x144] sm:$0x1] %vm3509, %v3496
        %3703 = vst.msk [vmem:[%s3555 + $0x164] sm:$0x1] %vm3509, %v3498
        %3704 = vst.msk [vmem:[%s3555 + $0x184] sm:$0x1] %vm3509, %v3500
        %3705 = vst.msk [vmem:[%s3555 + $0x1a4] sm:$0x1] %vm3509, %v3502
        %3706 = vst.msk [vmem:[%s3555 + $0x1c4] sm:$0x1] %vm3509, %v3504
        %3707 = vst.msk [vmem:[%s3555 + $0x1e4] sm:$0x1] %vm3509, %v3506
        %3708 = vst.msk [vmem:[%s3572 + $0x4] sm:$0x2] %vm3573, %v3476
        %3709 = vst.msk [vmem:[%s3572 + $0x24] sm:$0x2] %vm3573, %v3478
        %3710 = vst.msk [vmem:[%s3572 + $0x44] sm:$0x2] %vm3573, %v3480
        %3711 = vst.msk [vmem:[%s3572 + $0x64] sm:$0x2] %vm3573, %v3482
        %3712 = vst.msk [vmem:[%s3572 + $0x84] sm:$0x2] %vm3573, %v3484
        %3713 = vst.msk [vmem:[%s3572 + $0xa4] sm:$0x2] %vm3573, %v3486
        %3714 = vst.msk [vmem:[%s3572 + $0xc4] sm:$0x2] %vm3573, %v3488
        %3715 = vst.msk [vmem:[%s3572 + $0xe4] sm:$0x2] %vm3573, %v3490
        %3716 = vst.msk [vmem:[%s3572 + $0x104] sm:$0x2] %vm3573, %v3492
        %3717 = vst.msk [vmem:[%s3572 + $0x124] sm:$0x2] %vm3573, %v3494
        %3718 = vst.msk [vmem:[%s3572 + $0x144] sm:$0x2] %vm3573, %v3496
        %3719 = vst.msk [vmem:[%s3572 + $0x164] sm:$0x2] %vm3573, %v3498
        %3720 = vst.msk [vmem:[%s3572 + $0x184] sm:$0x2] %vm3573, %v3500
        %3721 = vst.msk [vmem:[%s3572 + $0x1a4] sm:$0x2] %vm3573, %v3502
        %3722 = vst.msk [vmem:[%s3572 + $0x1c4] sm:$0x2] %vm3573, %v3504
        %3723 = vst.msk [vmem:[%s3572 + $0x1e4] sm:$0x2] %vm3573, %v3506
        %3724 = vst.msk [vmem:[%s3555 + $0x3] sm:$0x4] %vm3590, %v3476
        %3725 = vst.msk [vmem:[%s3555 + $0x23] sm:$0x4] %vm3590, %v3478
        %3726 = vst.msk [vmem:[%s3555 + $0x43] sm:$0x4] %vm3590, %v3480
        %3727 = vst.msk [vmem:[%s3555 + $0x63] sm:$0x4] %vm3590, %v3482
        %3728 = vst.msk [vmem:[%s3555 + $0x83] sm:$0x4] %vm3590, %v3484
        %3729 = vst.msk [vmem:[%s3555 + $0xa3] sm:$0x4] %vm3590, %v3486
        %3730 = vst.msk [vmem:[%s3555 + $0xc3] sm:$0x4] %vm3590, %v3488
        %3731 = vst.msk [vmem:[%s3555 + $0xe3] sm:$0x4] %vm3590, %v3490
        %3732 = vst.msk [vmem:[%s3555 + $0x103] sm:$0x4] %vm3590, %v3492
        %3733 = vst.msk [vmem:[%s3555 + $0x123] sm:$0x4] %vm3590, %v3494
        %3734 = vst.msk [vmem:[%s3555 + $0x143] sm:$0x4] %vm3590, %v3496
        %3735 = vst.msk [vmem:[%s3555 + $0x163] sm:$0x4] %vm3590, %v3498
        %3736 = vst.msk [vmem:[%s3555 + $0x183] sm:$0x4] %vm3590, %v3500
        %3737 = vst.msk [vmem:[%s3555 + $0x1a3] sm:$0x4] %vm3590, %v3502
        %3738 = vst.msk [vmem:[%s3555 + $0x1c3] sm:$0x4] %vm3590, %v3504
        %3739 = vst.msk [vmem:[%s3555 + $0x1e3] sm:$0x4] %vm3590, %v3506
        %3740 = vst.msk [vmem:[%s3572 + $0x3] sm:$0x8] %vm3607, %v3476
        %3741 = vst.msk [vmem:[%s3572 + $0x23] sm:$0x8] %vm3607, %v3478
        %3742 = vst.msk [vmem:[%s3572 + $0x43] sm:$0x8] %vm3607, %v3480
        %3743 = vst.msk [vmem:[%s3572 + $0x63] sm:$0x8] %vm3607, %v3482
        %3744 = vst.msk [vmem:[%s3572 + $0x83] sm:$0x8] %vm3607, %v3484
        %3745 = vst.msk [vmem:[%s3572 + $0xa3] sm:$0x8] %vm3607, %v3486
        %3746 = vst.msk [vmem:[%s3572 + $0xc3] sm:$0x8] %vm3607, %v3488
        %3747 = vst.msk [vmem:[%s3572 + $0xe3] sm:$0x8] %vm3607, %v3490
        %3748 = vst.msk [vmem:[%s3572 + $0x103] sm:$0x8] %vm3607, %v3492
        %3749 = vst.msk [vmem:[%s3572 + $0x123] sm:$0x8] %vm3607, %v3494
        %3750 = vst.msk [vmem:[%s3572 + $0x143] sm:$0x8] %vm3607, %v3496
        %3751 = vst.msk [vmem:[%s3572 + $0x163] sm:$0x8] %vm3607, %v3498
        %3752 = vst.msk [vmem:[%s3572 + $0x183] sm:$0x8] %vm3607, %v3500
        %3753 = vst.msk [vmem:[%s3572 + $0x1a3] sm:$0x8] %vm3607, %v3502
        %3754 = vst.msk [vmem:[%s3572 + $0x1c3] sm:$0x8] %vm3607, %v3504
        %3755 = vst.msk [vmem:[%s3572 + $0x1e3] sm:$0x8] %vm3607, %v3506
        %3756 = vst.msk [vmem:[%s3555 + $0x2] sm:$0x10] %vm3624, %v3476
        %3757 = vst.msk [vmem:[%s3555 + $0x22] sm:$0x10] %vm3624, %v3478
        %3758 = vst.msk [vmem:[%s3555 + $0x42] sm:$0x10] %vm3624, %v3480
        %3759 = vst.msk [vmem:[%s3555 + $0x62] sm:$0x10] %vm3624, %v3482
        %3760 = vst.msk [vmem:[%s3555 + $0x82] sm:$0x10] %vm3624, %v3484
        %3761 = vst.msk [vmem:[%s3555 + $0xa2] sm:$0x10] %vm3624, %v3486
        %3762 = vst.msk [vmem:[%s3555 + $0xc2] sm:$0x10] %vm3624, %v3488
        %3763 = vst.msk [vmem:[%s3555 + $0xe2] sm:$0x10] %vm3624, %v3490
        %3764 = vst.msk [vmem:[%s3555 + $0x102] sm:$0x10] %vm3624, %v3492
        %3765 = vst.msk [vmem:[%s3555 + $0x122] sm:$0x10] %vm3624, %v3494
        %3766 = vst.msk [vmem:[%s3555 + $0x142] sm:$0x10] %vm3624, %v3496
        %3767 = vst.msk [vmem:[%s3555 + $0x162] sm:$0x10] %vm3624, %v3498
        %3768 = vst.msk [vmem:[%s3555 + $0x182] sm:$0x10] %vm3624, %v3500
        %3769 = vst.msk [vmem:[%s3555 + $0x1a2] sm:$0x10] %vm3624, %v3502
        %3770 = vst.msk [vmem:[%s3555 + $0x1c2] sm:$0x10] %vm3624, %v3504
        %3771 = vst.msk [vmem:[%s3555 + $0x1e2] sm:$0x10] %vm3624, %v3506
        %3772 = vst.msk [vmem:[%s3572 + $0x2] sm:$0x20] %vm3641, %v3476
        %3773 = vst.msk [vmem:[%s3572 + $0x22] sm:$0x20] %vm3641, %v3478
        %3774 = vst.msk [vmem:[%s3572 + $0x42] sm:$0x20] %vm3641, %v3480
        %3775 = vst.msk [vmem:[%s3572 + $0x62] sm:$0x20] %vm3641, %v3482
        %3776 = vst.msk [vmem:[%s3572 + $0x82] sm:$0x20] %vm3641, %v3484
        %3777 = vst.msk [vmem:[%s3572 + $0xa2] sm:$0x20] %vm3641, %v3486
        %3778 = vst.msk [vmem:[%s3572 + $0xc2] sm:$0x20] %vm3641, %v3488
        %3779 = vst.msk [vmem:[%s3572 + $0xe2] sm:$0x20] %vm3641, %v3490
        %3780 = vst.msk [vmem:[%s3572 + $0x102] sm:$0x20] %vm3641, %v3492
        %3781 = vst.msk [vmem:[%s3572 + $0x122] sm:$0x20] %vm3641, %v3494
        %3782 = vst.msk [vmem:[%s3572 + $0x142] sm:$0x20] %vm3641, %v3496
        %3783 = vst.msk [vmem:[%s3572 + $0x162] sm:$0x20] %vm3641, %v3498
        %3784 = vst.msk [vmem:[%s3572 + $0x182] sm:$0x20] %vm3641, %v3500
        %3785 = vst.msk [vmem:[%s3572 + $0x1a2] sm:$0x20] %vm3641, %v3502
        %3786 = vst.msk [vmem:[%s3572 + $0x1c2] sm:$0x20] %vm3641, %v3504
        %3787 = vst.msk [vmem:[%s3572 + $0x1e2] sm:$0x20] %vm3641, %v3506
        %3788 = vst.msk [vmem:[%s3555 + $0x1] sm:$0x40] %vm3658, %v3476
        %3789 = vst.msk [vmem:[%s3555 + $0x21] sm:$0x40] %vm3658, %v3478
        %3790 = vst.msk [vmem:[%s3555 + $0x41] sm:$0x40] %vm3658, %v3480
        %3791 = vst.msk [vmem:[%s3555 + $0x61] sm:$0x40] %vm3658, %v3482
        %3792 = vst.msk [vmem:[%s3555 + $0x81] sm:$0x40] %vm3658, %v3484
        %3793 = vst.msk [vmem:[%s3555 + $0xa1] sm:$0x40] %vm3658, %v3486
        %3794 = vst.msk [vmem:[%s3555 + $0xc1] sm:$0x40] %vm3658, %v3488
        %3795 = vst.msk [vmem:[%s3555 + $0xe1] sm:$0x40] %vm3658, %v3490
        %3796 = vst.msk [vmem:[%s3555 + $0x101] sm:$0x40] %vm3658, %v3492
        %3797 = vst.msk [vmem:[%s3555 + $0x121] sm:$0x40] %vm3658, %v3494
        %3798 = vst.msk [vmem:[%s3555 + $0x141] sm:$0x40] %vm3658, %v3496
        %3799 = vst.msk [vmem:[%s3555 + $0x161] sm:$0x40] %vm3658, %v3498
        %3800 = vst.msk [vmem:[%s3555 + $0x181] sm:$0x40] %vm3658, %v3500
        %3801 = vst.msk [vmem:[%s3555 + $0x1a1] sm:$0x40] %vm3658, %v3502
        %3802 = vst.msk [vmem:[%s3555 + $0x1c1] sm:$0x40] %vm3658, %v3504
        %3803 = vst.msk [vmem:[%s3555 + $0x1e1] sm:$0x40] %vm3658, %v3506
        %3804 = vst.msk [vmem:[%s3572 + $0x1] sm:$0x80] %vm3675, %v3476
        %3805 = vst.msk [vmem:[%s3572 + $0x21] sm:$0x80] %vm3675, %v3478
        %3806 = vst.msk [vmem:[%s3572 + $0x41] sm:$0x80] %vm3675, %v3480
        %3807 = vst.msk [vmem:[%s3572 + $0x61] sm:$0x80] %vm3675, %v3482
        %3808 = vst.msk [vmem:[%s3572 + $0x81] sm:$0x80] %vm3675, %v3484
        %3809 = vst.msk [vmem:[%s3572 + $0xa1] sm:$0x80] %vm3675, %v3486
        %3810 = vst.msk [vmem:[%s3572 + $0xc1] sm:$0x80] %vm3675, %v3488
        %3811 = vst.msk [vmem:[%s3572 + $0xe1] sm:$0x80] %vm3675, %v3490
        %3812 = vst.msk [vmem:[%s3572 + $0x101] sm:$0x80] %vm3675, %v3492
        %3813 = vst.msk [vmem:[%s3572 + $0x121] sm:$0x80] %vm3675, %v3494
        %3814 = vst.msk [vmem:[%s3572 + $0x141] sm:$0x80] %vm3675, %v3496
        %3815 = vst.msk [vmem:[%s3572 + $0x161] sm:$0x80] %vm3675, %v3498
        %3816 = vst.msk [vmem:[%s3572 + $0x181] sm:$0x80] %vm3675, %v3500
        %3817 = vst.msk [vmem:[%s3572 + $0x1a1] sm:$0x80] %vm3675, %v3502
        %3818 = vst.msk [vmem:[%s3572 + $0x1c1] sm:$0x80] %vm3675, %v3504
        %3819 = vst.msk [vmem:[%s3572 + $0x1e1] sm:$0x80] %vm3675, %v3506
        %v3820 = vld [vmem:[#allocation3] sm:$0xff]
        %v3821 = vld [vmem:[#allocation3 + $0x8] sm:$0x1]
        %v3822 = vld [vmem:[#allocation3 + $0x10] sm:$0xff]
        %v3823 = vld [vmem:[#allocation3 + $0x18] sm:$0x1]
        %v3824 = vld [vmem:[#allocation3 + $0x20] sm:$0xff]
        %v3825 = vld [vmem:[#allocation3 + $0x28] sm:$0x1]
        %v3826 = vld [vmem:[#allocation3 + $0x30] sm:$0xff]
        %v3827 = vld [vmem:[#allocation3 + $0x38] sm:$0x1]
        %v3828 = vld [vmem:[#allocation3 + $0x40] sm:$0xff]
        %v3829 = vld [vmem:[#allocation3 + $0x48] sm:$0x1]
        %v3830 = vld [vmem:[#allocation3 + $0x50] sm:$0xff]
        %v3831 = vld [vmem:[#allocation3 + $0x58] sm:$0x1]
        %v3832 = vld [vmem:[#allocation3 + $0x60] sm:$0xff]
        %v3833 = vld [vmem:[#allocation3 + $0x68] sm:$0x1]
        %v3834 = vld [vmem:[#allocation3 + $0x70] sm:$0xff]
        %v3835 = vld [vmem:[#allocation3 + $0x78] sm:$0x1]
        %v3836 = vld [vmem:[#allocation3 + $0x80] sm:$0xff]
        %v3837 = vld [vmem:[#allocation3 + $0x88] sm:$0x1]
        %v3838 = vld [vmem:[#allocation3 + $0x90] sm:$0xff]
        %v3839 = vld [vmem:[#allocation3 + $0x98] sm:$0x1]
        %v3840 = vld [vmem:[#allocation3 + $0xa0] sm:$0xff]
        %v3841 = vld [vmem:[#allocation3 + $0xa8] sm:$0x1]
        %v3842 = vld [vmem:[#allocation3 + $0xb0] sm:$0xff]
        %v3843 = vld [vmem:[#allocation3 + $0xb8] sm:$0x1]
        %v3844 = vld [vmem:[#allocation3 + $0xc0] sm:$0xff]
        %v3845 = vld [vmem:[#allocation3 + $0xc8] sm:$0x1]
        %v3846 = vld [vmem:[#allocation3 + $0xd0] sm:$0xff]
        %v3847 = vld [vmem:[#allocation3 + $0xd8] sm:$0x1]
        %v3848 = vld [vmem:[#allocation3 + $0xe0] sm:$0xff]
        %v3849 = vld [vmem:[#allocation3 + $0xe8] sm:$0x1]
        %v3850 = vld [vmem:[#allocation3 + $0xf0] sm:$0xff]
        %v3851 = vld [vmem:[#allocation3 + $0xf8] sm:$0x1]
        %v3852 = vld [vmem:[#allocation3 + $0x100] sm:$0xff]
        %v3853 = vld [vmem:[#allocation3 + $0x108] sm:$0x1]
        %v3854 = vld [vmem:[#allocation3 + $0x110] sm:$0xff]
        %v3855 = vld [vmem:[#allocation3 + $0x118] sm:$0x1]
        %v3856 = vld [vmem:[#allocation3 + $0x120] sm:$0xff]
        %v3857 = vld [vmem:[#allocation3 + $0x128] sm:$0x1]
        %v3858 = vld [vmem:[#allocation3 + $0x130] sm:$0xff]
        %v3859 = vld [vmem:[#allocation3 + $0x138] sm:$0x1]
        %v3860 = vld [vmem:[#allocation3 + $0x140] sm:$0xff]
        %v3861 = vld [vmem:[#allocation3 + $0x148] sm:$0x1]
        %v3862 = vld [vmem:[#allocation3 + $0x150] sm:$0xff]
        %v3863 = vld [vmem:[#allocation3 + $0x158] sm:$0x1]
        %v3864 = vld [vmem:[#allocation3 + $0x160] sm:$0xff]
        %v3865 = vld [vmem:[#allocation3 + $0x168] sm:$0x1]
        %v3866 = vld [vmem:[#allocation3 + $0x170] sm:$0xff]
        %v3867 = vld [vmem:[#allocation3 + $0x178] sm:$0x1]
        %v3868 = vld [vmem:[#allocation3 + $0x180] sm:$0xff]
        %v3869 = vld [vmem:[#allocation3 + $0x188] sm:$0x1]
        %v3870 = vld [vmem:[#allocation3 + $0x190] sm:$0xff]
        %v3871 = vld [vmem:[#allocation3 + $0x198] sm:$0x1]
        %v3872 = vld [vmem:[#allocation3 + $0x1a0] sm:$0xff]
        %v3873 = vld [vmem:[#allocation3 + $0x1a8] sm:$0x1]
        %v3874 = vld [vmem:[#allocation3 + $0x1b0] sm:$0xff]
        %v3875 = vld [vmem:[#allocation3 + $0x1b8] sm:$0x1]
        %v3876 = vld [vmem:[#allocation3 + $0x1c0] sm:$0xff]
        %v3877 = vld [vmem:[#allocation3 + $0x1c8] sm:$0x1]
        %v3878 = vld [vmem:[#allocation3 + $0x1d0] sm:$0xff]
        %v3879 = vld [vmem:[#allocation3 + $0x1d8] sm:$0x1]
        %v3880 = vld [vmem:[#allocation3 + $0x1e0] sm:$0xff]
        %v3881 = vld [vmem:[#allocation3 + $0x1e8] sm:$0x1]
        %v3882 = vld [vmem:[#allocation3 + $0x1f0] sm:$0xff]
        %v3883 = vld [vmem:[#allocation3 + $0x1f8] sm:$0x1]
        %v3884 = vld [vmem:[#allocation3 + $0x200] sm:$0xff]
        %v3885 = vld [vmem:[#allocation3 + $0x208] sm:$0x1]
        %v3886 = vld [vmem:[#allocation3 + $0x210] sm:$0xff]
        %v3887 = vld [vmem:[#allocation3 + $0x218] sm:$0x1]
        %v3888 = vld [vmem:[#allocation3 + $0x220] sm:$0xff]
        %v3889 = vld [vmem:[#allocation3 + $0x228] sm:$0x1]
        %v3890 = vld [vmem:[#allocation3 + $0x230] sm:$0xff]
        %v3891 = vld [vmem:[#allocation3 + $0x238] sm:$0x1]
        %3892 = vst.msk [vmem:[#allocation8] sm:$0xff] %vm3507, %v3820
        %3893 = vst.msk [vmem:[#allocation8 + $0x8] sm:$0xff] %vm3507, %v3828
        %3894 = vst.msk [vmem:[#allocation8 + $0x10] sm:$0xff] %vm3507, %v3836
        %3895 = vst.msk [vmem:[#allocation8 + $0x18] sm:$0xff] %vm3507, %v3844
        %3896 = vst.msk [vmem:[#allocation8 + $0x20] sm:$0xff] %vm3507, %v3852
        %3897 = vst.msk [vmem:[#allocation8 + $0x28] sm:$0xff] %vm3507, %v3860
        %3898 = vst.msk [vmem:[#allocation8 + $0x30] sm:$0xff] %vm3507, %v3868
        %3899 = vst.msk [vmem:[#allocation8 + $0x38] sm:$0xff] %vm3507, %v3876
        %3908 = vrot.lane.b32.xlu0 %v3822, 8
        %v3909 = vpop.permute.xlu0 %3908
        %3910 = vrot.lane.b32.xlu0 %v3830, 8
        %v3911 = vpop.permute.xlu0 %3910
        %3912 = vrot.lane.b32.xlu0 %v3838, 8
        %v3913 = vpop.permute.xlu0 %3912
        %3914 = vrot.lane.b32.xlu0 %v3846, 8
        %v3915 = vpop.permute.xlu0 %3914
        %3916 = vrot.lane.b32.xlu0 %v3854, 8
        %v3917 = vpop.permute.xlu0 %3916
        %3918 = vrot.lane.b32.xlu0 %v3862, 8
        %v3919 = vpop.permute.xlu0 %3918
        %3920 = vrot.lane.b32.xlu0 %v3870, 8
        %v3921 = vpop.permute.xlu0 %3920
        %3922 = vrot.lane.b32.xlu0 %v3878, 8
        %v3923 = vpop.permute.xlu0 %3922
        %vm3932 = vcmask 130112
        %3933 = vst.msk [vmem:[#allocation8] sm:$0xff] %vm3932, %v3909
        %3934 = vst.msk [vmem:[#allocation8 + $0x8] sm:$0xff] %vm3932, %v3911
        %3935 = vst.msk [vmem:[#allocation8 + $0x10] sm:$0xff] %vm3932, %v3913
        %3936 = vst.msk [vmem:[#allocation8 + $0x18] sm:$0xff] %vm3932, %v3915
        %3937 = vst.msk [vmem:[#allocation8 + $0x20] sm:$0xff] %vm3932, %v3917
        %3938 = vst.msk [vmem:[#allocation8 + $0x28] sm:$0xff] %vm3932, %v3919
        %3939 = vst.msk [vmem:[#allocation8 + $0x30] sm:$0xff] %vm3932, %v3921
        %3940 = vst.msk [vmem:[#allocation8 + $0x38] sm:$0xff] %vm3932, %v3923
        %3957 = vrot.lane.b32.xlu0 %v3820, 16
        %v3958 = vpop.permute.xlu0 %3957
        %3959 = vrot.lane.b32.xlu0 %v3821, 16
        %v3960 = vpop.permute.xlu0 %3959
        %3961 = vrot.lane.b32.xlu0 %v3828, 16
        %v3962 = vpop.permute.xlu0 %3961
        %3963 = vrot.lane.b32.xlu0 %v3829, 16
        %v3964 = vpop.permute.xlu0 %3963
        %3965 = vrot.lane.b32.xlu0 %v3836, 16
        %v3966 = vpop.permute.xlu0 %3965
        %3967 = vrot.lane.b32.xlu0 %v3837, 16
        %v3968 = vpop.permute.xlu0 %3967
        %3969 = vrot.lane.b32.xlu0 %v3844, 16
        %v3970 = vpop.permute.xlu0 %3969
        %3971 = vrot.lane.b32.xlu0 %v3845, 16
        %v3972 = vpop.permute.xlu0 %3971
        %3973 = vrot.lane.b32.xlu0 %v3852, 16
        %v3974 = vpop.permute.xlu0 %3973
        %3975 = vrot.lane.b32.xlu0 %v3853, 16
        %v3976 = vpop.permute.xlu0 %3975
        %3977 = vrot.lane.b32.xlu0 %v3860, 16
        %v3978 = vpop.permute.xlu0 %3977
        %3979 = vrot.lane.b32.xlu0 %v3861, 16
        %v3980 = vpop.permute.xlu0 %3979
        %3981 = vrot.lane.b32.xlu0 %v3868, 16
        %v3982 = vpop.permute.xlu0 %3981
        %3983 = vrot.lane.b32.xlu0 %v3869, 16
        %v3984 = vpop.permute.xlu0 %3983
        %3985 = vrot.lane.b32.xlu0 %v3876, 16
        %v3986 = vpop.permute.xlu0 %3985
        %3987 = vrot.lane.b32.xlu0 %v3877, 16
        %v3988 = vpop.permute.xlu0 %3987
        %vm4005 = vcmask 195713
        %4006 = vst.msk [vmem:[#allocation8 - $0x1] sm:$0xfe] %vm4005, %v3958
        %vm4007 = vcmask 188544
        %4008 = vst.msk [vmem:[#allocation8 + $0x7] sm:$0x1] %vm4007, %v3960
        %4009 = vst.msk [vmem:[#allocation8 + $0x7] sm:$0xfe] %vm4005, %v3962
        %4010 = vst.msk [vmem:[#allocation8 + $0xf] sm:$0x1] %vm4007, %v3964
        %4011 = vst.msk [vmem:[#allocation8 + $0xf] sm:$0xfe] %vm4005, %v3966
        %4012 = vst.msk [vmem:[#allocation8 + $0x17] sm:$0x1] %vm4007, %v3968
        %4013 = vst.msk [vmem:[#allocation8 + $0x17] sm:$0xfe] %vm4005, %v3970
        %4014 = vst.msk [vmem:[#allocation8 + $0x1f] sm:$0x1] %vm4007, %v3972
        %4015 = vst.msk [vmem:[#allocation8 + $0x1f] sm:$0xfe] %vm4005, %v3974
        %4016 = vst.msk [vmem:[#allocation8 + $0x27] sm:$0x1] %vm4007, %v3976
        %4017 = vst.msk [vmem:[#allocation8 + $0x27] sm:$0xfe] %vm4005, %v3978
        %4018 = vst.msk [vmem:[#allocation8 + $0x2f] sm:$0x1] %vm4007, %v3980
        %4019 = vst.msk [vmem:[#allocation8 + $0x2f] sm:$0xfe] %vm4005, %v3982
        %4020 = vst.msk [vmem:[#allocation8 + $0x37] sm:$0x1] %vm4007, %v3984
        %4021 = vst.msk [vmem:[#allocation8 + $0x37] sm:$0xfe] %vm4005, %v3986
        %4022 = vst.msk [vmem:[#allocation8 + $0x3f] sm:$0x1] %vm4007, %v3988
        %4031 = vrot.lane.b32.xlu0 %v3822, 24
        %v4032 = vpop.permute.xlu0 %4031
        %4033 = vrot.lane.b32.xlu0 %v3823, 24
        %v4034 = vpop.permute.xlu0 %4033
        %4035 = vrot.lane.b32.xlu0 %v3830, 24
        %v4036 = vpop.permute.xlu0 %4035
        %4037 = vrot.lane.b32.xlu0 %v3831, 24
        %v4038 = vpop.permute.xlu0 %4037
        %4039 = vrot.lane.b32.xlu0 %v3838, 24
        %v4040 = vpop.permute.xlu0 %4039
        %4041 = vrot.lane.b32.xlu0 %v3839, 24
        %v4042 = vpop.permute.xlu0 %4041
        %4043 = vrot.lane.b32.xlu0 %v3846, 24
        %v4044 = vpop.permute.xlu0 %4043
        %4045 = vrot.lane.b32.xlu0 %v3847, 24
        %v4046 = vpop.permute.xlu0 %4045
        %4047 = vrot.lane.b32.xlu0 %v3854, 24
        %v4048 = vpop.permute.xlu0 %4047
        %4049 = vrot.lane.b32.xlu0 %v3855, 24
        %v4050 = vpop.permute.xlu0 %4049
        %4051 = vrot.lane.b32.xlu0 %v3862, 24
        %v4052 = vpop.permute.xlu0 %4051
        %4053 = vrot.lane.b32.xlu0 %v3863, 24
        %v4054 = vpop.permute.xlu0 %4053
        %4055 = vrot.lane.b32.xlu0 %v3870, 24
        %v4056 = vpop.permute.xlu0 %4055
        %4057 = vrot.lane.b32.xlu0 %v3871, 24
        %v4058 = vpop.permute.xlu0 %4057
        %4059 = vrot.lane.b32.xlu0 %v3878, 24
        %v4060 = vpop.permute.xlu0 %4059
        %4061 = vrot.lane.b32.xlu0 %v3879, 24
        %v4062 = vpop.permute.xlu0 %4061
        %vm4079 = vcmask 261313
        %4080 = vst.msk [vmem:[#allocation8 - $0x1] sm:$0xfe] %vm4079, %v4032
        %vm4081 = vcmask 254144
        %4082 = vst.msk [vmem:[#allocation8 + $0x7] sm:$0x1] %vm4081, %v4034
        %4083 = vst.msk [vmem:[#allocation8 + $0x7] sm:$0xfe] %vm4079, %v4036
        %4084 = vst.msk [vmem:[#allocation8 + $0xf] sm:$0x1] %vm4081, %v4038
        %4085 = vst.msk [vmem:[#allocation8 + $0xf] sm:$0xfe] %vm4079, %v4040
        %4086 = vst.msk [vmem:[#allocation8 + $0x17] sm:$0x1] %vm4081, %v4042
        %4087 = vst.msk [vmem:[#allocation8 + $0x17] sm:$0xfe] %vm4079, %v4044
        %4088 = vst.msk [vmem:[#allocation8 + $0x1f] sm:$0x1] %vm4081, %v4046
        %4089 = vst.msk [vmem:[#allocation8 + $0x1f] sm:$0xfe] %vm4079, %v4048
        %4090 = vst.msk [vmem:[#allocation8 + $0x27] sm:$0x1] %vm4081, %v4050
        %4091 = vst.msk [vmem:[#allocation8 + $0x27] sm:$0xfe] %vm4079, %v4052
        %4092 = vst.msk [vmem:[#allocation8 + $0x2f] sm:$0x1] %vm4081, %v4054
        %4093 = vst.msk [vmem:[#allocation8 + $0x2f] sm:$0xfe] %vm4079, %v4056
        %4094 = vst.msk [vmem:[#allocation8 + $0x37] sm:$0x1] %vm4081, %v4058
        %4095 = vst.msk [vmem:[#allocation8 + $0x37] sm:$0xfe] %vm4079, %v4060
        %4096 = vst.msk [vmem:[#allocation8 + $0x3f] sm:$0x1] %vm4081, %v4062
        %4105 = vrot.lane.b32.xlu0 %v3824, 32
        %v4106 = vpop.permute.xlu0 %4105
        %4107 = vrot.lane.b32.xlu0 %v3832, 32
        %v4108 = vpop.permute.xlu0 %4107
        %4109 = vrot.lane.b32.xlu0 %v3840, 32
        %v4110 = vpop.permute.xlu0 %4109
        %4111 = vrot.lane.b32.xlu0 %v3848, 32
        %v4112 = vpop.permute.xlu0 %4111
        %4113 = vrot.lane.b32.xlu0 %v3856, 32
        %v4114 = vpop.permute.xlu0 %4113
        %4115 = vrot.lane.b32.xlu0 %v3864, 32
        %v4116 = vpop.permute.xlu0 %4115
        %4117 = vrot.lane.b32.xlu0 %v3872, 32
        %v4118 = vpop.permute.xlu0 %4117
        %4119 = vrot.lane.b32.xlu0 %v3880, 32
        %v4120 = vpop.permute.xlu0 %4119
        %vm4129 = vcmask 326912
        %4130 = vst.msk [vmem:[#allocation8] sm:$0xff] %vm4129, %v4106
        %4131 = vst.msk [vmem:[#allocation8 + $0x8] sm:$0xff] %vm4129, %v4108
        %4132 = vst.msk [vmem:[#allocation8 + $0x10] sm:$0xff] %vm4129, %v4110
        %4133 = vst.msk [vmem:[#allocation8 + $0x18] sm:$0xff] %vm4129, %v4112
        %4134 = vst.msk [vmem:[#allocation8 + $0x20] sm:$0xff] %vm4129, %v4114
        %4135 = vst.msk [vmem:[#allocation8 + $0x28] sm:$0xff] %vm4129, %v4116
        %4136 = vst.msk [vmem:[#allocation8 + $0x30] sm:$0xff] %vm4129, %v4118
        %4137 = vst.msk [vmem:[#allocation8 + $0x38] sm:$0xff] %vm4129, %v4120
        %4146 = vrot.lane.b32.xlu0 %v3826, 40
        %v4147 = vpop.permute.xlu0 %4146
        %4148 = vrot.lane.b32.xlu0 %v3834, 40
        %v4149 = vpop.permute.xlu0 %4148
        %4150 = vrot.lane.b32.xlu0 %v3842, 40
        %v4151 = vpop.permute.xlu0 %4150
        %4152 = vrot.lane.b32.xlu0 %v3850, 40
        %v4153 = vpop.permute.xlu0 %4152
        %4154 = vrot.lane.b32.xlu0 %v3858, 40
        %v4155 = vpop.permute.xlu0 %4154
        %4156 = vrot.lane.b32.xlu0 %v3866, 40
        %v4157 = vpop.permute.xlu0 %4156
        %4158 = vrot.lane.b32.xlu0 %v3874, 40
        %v4159 = vpop.permute.xlu0 %4158
        %4160 = vrot.lane.b32.xlu0 %v3882, 40
        %v4161 = vpop.permute.xlu0 %4160
        %vm4170 = vcmask 392512
        %4171 = vst.msk [vmem:[#allocation8] sm:$0xff] %vm4170, %v4147
        %4172 = vst.msk [vmem:[#allocation8 + $0x8] sm:$0xff] %vm4170, %v4149
        %4173 = vst.msk [vmem:[#allocation8 + $0x10] sm:$0xff] %vm4170, %v4151
        %4174 = vst.msk [vmem:[#allocation8 + $0x18] sm:$0xff] %vm4170, %v4153
        %4175 = vst.msk [vmem:[#allocation8 + $0x20] sm:$0xff] %vm4170, %v4155
        %4176 = vst.msk [vmem:[#allocation8 + $0x28] sm:$0xff] %vm4170, %v4157
        %4177 = vst.msk [vmem:[#allocation8 + $0x30] sm:$0xff] %vm4170, %v4159
        %4178 = vst.msk [vmem:[#allocation8 + $0x38] sm:$0xff] %vm4170, %v4161
        %4187 = vrot.lane.b32.xlu0 %v3824, 48
        %v4188 = vpop.permute.xlu0 %4187
        %4189 = vrot.lane.b32.xlu0 %v3825, 48
        %v4190 = vpop.permute.xlu0 %4189
        %4191 = vrot.lane.b32.xlu0 %v3832, 48
        %v4192 = vpop.permute.xlu0 %4191
        %4193 = vrot.lane.b32.xlu0 %v3833, 48
        %v4194 = vpop.permute.xlu0 %4193
        %4195 = vrot.lane.b32.xlu0 %v3840, 48
        %v4196 = vpop.permute.xlu0 %4195
        %4197 = vrot.lane.b32.xlu0 %v3841, 48
        %v4198 = vpop.permute.xlu0 %4197
        %4199 = vrot.lane.b32.xlu0 %v3848, 48
        %v4200 = vpop.permute.xlu0 %4199
        %4201 = vrot.lane.b32.xlu0 %v3849, 48
        %v4202 = vpop.permute.xlu0 %4201
        %4203 = vrot.lane.b32.xlu0 %v3856, 48
        %v4204 = vpop.permute.xlu0 %4203
        %4205 = vrot.lane.b32.xlu0 %v3857, 48
        %v4206 = vpop.permute.xlu0 %4205
        %4207 = vrot.lane.b32.xlu0 %v3864, 48
        %v4208 = vpop.permute.xlu0 %4207
        %4209 = vrot.lane.b32.xlu0 %v3865, 48
        %v4210 = vpop.permute.xlu0 %4209
        %4211 = vrot.lane.b32.xlu0 %v3872, 48
        %v4212 = vpop.permute.xlu0 %4211
        %4213 = vrot.lane.b32.xlu0 %v3873, 48
        %v4214 = vpop.permute.xlu0 %4213
        %4215 = vrot.lane.b32.xlu0 %v3880, 48
        %v4216 = vpop.permute.xlu0 %4215
        %4217 = vrot.lane.b32.xlu0 %v3881, 48
        %v4218 = vpop.permute.xlu0 %4217
        %vm4235 = vcmask 458113
        %4236 = vst.msk [vmem:[#allocation8 - $0x1] sm:$0xfe] %vm4235, %v4188
        %vm4237 = vcmask 450944
        %4238 = vst.msk [vmem:[#allocation8 + $0x7] sm:$0x1] %vm4237, %v4190
        %4239 = vst.msk [vmem:[#allocation8 + $0x7] sm:$0xfe] %vm4235, %v4192
        %4240 = vst.msk [vmem:[#allocation8 + $0xf] sm:$0x1] %vm4237, %v4194
        %4241 = vst.msk [vmem:[#allocation8 + $0xf] sm:$0xfe] %vm4235, %v4196
        %4242 = vst.msk [vmem:[#allocation8 + $0x17] sm:$0x1] %vm4237, %v4198
        %4243 = vst.msk [vmem:[#allocation8 + $0x17] sm:$0xfe] %vm4235, %v4200
        %4244 = vst.msk [vmem:[#allocation8 + $0x1f] sm:$0x1] %vm4237, %v4202
        %4245 = vst.msk [vmem:[#allocation8 + $0x1f] sm:$0xfe] %vm4235, %v4204
        %4246 = vst.msk [vmem:[#allocation8 + $0x27] sm:$0x1] %vm4237, %v4206
        %4247 = vst.msk [vmem:[#allocation8 + $0x27] sm:$0xfe] %vm4235, %v4208
        %4248 = vst.msk [vmem:[#allocation8 + $0x2f] sm:$0x1] %vm4237, %v4210
        %4249 = vst.msk [vmem:[#allocation8 + $0x2f] sm:$0xfe] %vm4235, %v4212
        %4250 = vst.msk [vmem:[#allocation8 + $0x37] sm:$0x1] %vm4237, %v4214
        %4251 = vst.msk [vmem:[#allocation8 + $0x37] sm:$0xfe] %vm4235, %v4216
        %4252 = vst.msk [vmem:[#allocation8 + $0x3f] sm:$0x1] %vm4237, %v4218
        %4261 = vrot.lane.b32.xlu0 %v3826, 56
        %v4262 = vpop.permute.xlu0 %4261
        %4263 = vrot.lane.b32.xlu0 %v3827, 56
        %v4264 = vpop.permute.xlu0 %4263
        %4265 = vrot.lane.b32.xlu0 %v3834, 56
        %v4266 = vpop.permute.xlu0 %4265
        %4267 = vrot.lane.b32.xlu0 %v3835, 56
        %v4268 = vpop.permute.xlu0 %4267
        %4269 = vrot.lane.b32.xlu0 %v3842, 56
        %v4270 = vpop.permute.xlu0 %4269
        %4271 = vrot.lane.b32.xlu0 %v3843, 56
        %v4272 = vpop.permute.xlu0 %4271
        %4273 = vrot.lane.b32.xlu0 %v3850, 56
        %v4274 = vpop.permute.xlu0 %4273
        %4275 = vrot.lane.b32.xlu0 %v3851, 56
        %v4276 = vpop.permute.xlu0 %4275
        %4277 = vrot.lane.b32.xlu0 %v3858, 56
        %v4278 = vpop.permute.xlu0 %4277
        %4279 = vrot.lane.b32.xlu0 %v3859, 56
        %v4280 = vpop.permute.xlu0 %4279
        %4281 = vrot.lane.b32.xlu0 %v3866, 56
        %v4282 = vpop.permute.xlu0 %4281
        %4283 = vrot.lane.b32.xlu0 %v3867, 56
        %v4284 = vpop.permute.xlu0 %4283
        %4285 = vrot.lane.b32.xlu0 %v3874, 56
        %v4286 = vpop.permute.xlu0 %4285
        %4287 = vrot.lane.b32.xlu0 %v3875, 56
        %v4288 = vpop.permute.xlu0 %4287
        %4289 = vrot.lane.b32.xlu0 %v3882, 56
        %v4290 = vpop.permute.xlu0 %4289
        %4291 = vrot.lane.b32.xlu0 %v3883, 56
        %v4292 = vpop.permute.xlu0 %4291
        %vm4309 = vcmask 523713
        %4310 = vst.msk [vmem:[#allocation8 - $0x1] sm:$0xfe] %vm4309, %v4262
        %vm4311 = vcmask 516544
        %4312 = vst.msk [vmem:[#allocation8 + $0x7] sm:$0x1] %vm4311, %v4264
        %4313 = vst.msk [vmem:[#allocation8 + $0x7] sm:$0xfe] %vm4309, %v4266
        %4314 = vst.msk [vmem:[#allocation8 + $0xf] sm:$0x1] %vm4311, %v4268
        %4315 = vst.msk [vmem:[#allocation8 + $0xf] sm:$0xfe] %vm4309, %v4270
        %4316 = vst.msk [vmem:[#allocation8 + $0x17] sm:$0x1] %vm4311, %v4272
        %4317 = vst.msk [vmem:[#allocation8 + $0x17] sm:$0xfe] %vm4309, %v4274
        %4318 = vst.msk [vmem:[#allocation8 + $0x1f] sm:$0x1] %vm4311, %v4276
        %4319 = vst.msk [vmem:[#allocation8 + $0x1f] sm:$0xfe] %vm4309, %v4278
        %4320 = vst.msk [vmem:[#allocation8 + $0x27] sm:$0x1] %vm4311, %v4280
        %4321 = vst.msk [vmem:[#allocation8 + $0x27] sm:$0xfe] %vm4309, %v4282
        %4322 = vst.msk [vmem:[#allocation8 + $0x2f] sm:$0x1] %vm4311, %v4284
        %4323 = vst.msk [vmem:[#allocation8 + $0x2f] sm:$0xfe] %vm4309, %v4286
        %4324 = vst.msk [vmem:[#allocation8 + $0x37] sm:$0x1] %vm4311, %v4288
        %4325 = vst.msk [vmem:[#allocation8 + $0x37] sm:$0xfe] %vm4309, %v4290
        %4326 = vst.msk [vmem:[#allocation8 + $0x3f] sm:$0x1] %vm4311, %v4292
        %4328 = vrot.lane.b32.xlu0 %v3828, 64
        %v4329 = vpop.permute.xlu0 %4328
        %4330 = vrot.lane.b32.xlu0 %v3836, 64
        %v4331 = vpop.permute.xlu0 %4330
        %4332 = vrot.lane.b32.xlu0 %v3844, 64
        %v4333 = vpop.permute.xlu0 %4332
        %4334 = vrot.lane.b32.xlu0 %v3852, 64
        %v4335 = vpop.permute.xlu0 %4334
        %4336 = vrot.lane.b32.xlu0 %v3860, 64
        %v4337 = vpop.permute.xlu0 %4336
        %4338 = vrot.lane.b32.xlu0 %v3868, 64
        %v4339 = vpop.permute.xlu0 %4338
        %4340 = vrot.lane.b32.xlu0 %v3876, 64
        %v4341 = vpop.permute.xlu0 %4340
        %4342 = vrot.lane.b32.xlu0 %v3884, 64
        %v4343 = vpop.permute.xlu0 %4342
        %vm4352 = vcmask 589312
        %4353 = vst.msk [vmem:[#allocation8] sm:$0xff] %vm4352, %v4329
        %4354 = vst.msk [vmem:[#allocation8 + $0x8] sm:$0xff] %vm4352, %v4331
        %4355 = vst.msk [vmem:[#allocation8 + $0x10] sm:$0xff] %vm4352, %v4333
        %4356 = vst.msk [vmem:[#allocation8 + $0x18] sm:$0xff] %vm4352, %v4335
        %4357 = vst.msk [vmem:[#allocation8 + $0x20] sm:$0xff] %vm4352, %v4337
        %4358 = vst.msk [vmem:[#allocation8 + $0x28] sm:$0xff] %vm4352, %v4339
        %4359 = vst.msk [vmem:[#allocation8 + $0x30] sm:$0xff] %vm4352, %v4341
        %4360 = vst.msk [vmem:[#allocation8 + $0x38] sm:$0xff] %vm4352, %v4343
        %4362 = vrot.lane.b32.xlu0 %v3830, 72
        %v4363 = vpop.permute.xlu0 %4362
        %4364 = vrot.lane.b32.xlu0 %v3838, 72
        %v4365 = vpop.permute.xlu0 %4364
        %4366 = vrot.lane.b32.xlu0 %v3846, 72
        %v4367 = vpop.permute.xlu0 %4366
        %4368 = vrot.lane.b32.xlu0 %v3854, 72
        %v4369 = vpop.permute.xlu0 %4368
        %4370 = vrot.lane.b32.xlu0 %v3862, 72
        %v4371 = vpop.permute.xlu0 %4370
        %4372 = vrot.lane.b32.xlu0 %v3870, 72
        %v4373 = vpop.permute.xlu0 %4372
        %4374 = vrot.lane.b32.xlu0 %v3878, 72
        %v4375 = vpop.permute.xlu0 %4374
        %4376 = vrot.lane.b32.xlu0 %v3886, 72
        %v4377 = vpop.permute.xlu0 %4376
        %vm4386 = vcmask 654912
        %4387 = vst.msk [vmem:[#allocation8] sm:$0xff] %vm4386, %v4363
        %4388 = vst.msk [vmem:[#allocation8 + $0x8] sm:$0xff] %vm4386, %v4365
        %4389 = vst.msk [vmem:[#allocation8 + $0x10] sm:$0xff] %vm4386, %v4367
        %4390 = vst.msk [vmem:[#allocation8 + $0x18] sm:$0xff] %vm4386, %v4369
        %4391 = vst.msk [vmem:[#allocation8 + $0x20] sm:$0xff] %vm4386, %v4371
        %4392 = vst.msk [vmem:[#allocation8 + $0x28] sm:$0xff] %vm4386, %v4373
        %4393 = vst.msk [vmem:[#allocation8 + $0x30] sm:$0xff] %vm4386, %v4375
        %4394 = vst.msk [vmem:[#allocation8 + $0x38] sm:$0xff] %vm4386, %v4377
        %4396 = vrot.lane.b32.xlu0 %v3828, 80
        %v4397 = vpop.permute.xlu0 %4396
        %4398 = vrot.lane.b32.xlu0 %v3829, 80
        %v4399 = vpop.permute.xlu0 %4398
        %4400 = vrot.lane.b32.xlu0 %v3836, 80
        %v4401 = vpop.permute.xlu0 %4400
        %4402 = vrot.lane.b32.xlu0 %v3837, 80
        %v4403 = vpop.permute.xlu0 %4402
        %4404 = vrot.lane.b32.xlu0 %v3844, 80
        %v4405 = vpop.permute.xlu0 %4404
        %4406 = vrot.lane.b32.xlu0 %v3845, 80
        %v4407 = vpop.permute.xlu0 %4406
        %4408 = vrot.lane.b32.xlu0 %v3852, 80
        %v4409 = vpop.permute.xlu0 %4408
        %4410 = vrot.lane.b32.xlu0 %v3853, 80
        %v4411 = vpop.permute.xlu0 %4410
        %4412 = vrot.lane.b32.xlu0 %v3860, 80
        %v4413 = vpop.permute.xlu0 %4412
        %4414 = vrot.lane.b32.xlu0 %v3861, 80
        %v4415 = vpop.permute.xlu0 %4414
        %4416 = vrot.lane.b32.xlu0 %v3868, 80
        %v4417 = vpop.permute.xlu0 %4416
        %4418 = vrot.lane.b32.xlu0 %v3869, 80
        %v4419 = vpop.permute.xlu0 %4418
        %4420 = vrot.lane.b32.xlu0 %v3876, 80
        %v4421 = vpop.permute.xlu0 %4420
        %4422 = vrot.lane.b32.xlu0 %v3877, 80
        %v4423 = vpop.permute.xlu0 %4422
        %4424 = vrot.lane.b32.xlu0 %v3884, 80
        %v4425 = vpop.permute.xlu0 %4424
        %4426 = vrot.lane.b32.xlu0 %v3885, 80
        %v4427 = vpop.permute.xlu0 %4426
        %vm4444 = vcmask 720513
        %4445 = vst.msk [vmem:[#allocation8 - $0x1] sm:$0xfe] %vm4444, %v4397
        %vm4446 = vcmask 713344
        %4447 = vst.msk [vmem:[#allocation8 + $0x7] sm:$0x1] %vm4446, %v4399
        %4448 = vst.msk [vmem:[#allocation8 + $0x7] sm:$0xfe] %vm4444, %v4401
        %4449 = vst.msk [vmem:[#allocation8 + $0xf] sm:$0x1] %vm4446, %v4403
        %4450 = vst.msk [vmem:[#allocation8 + $0xf] sm:$0xfe] %vm4444, %v4405
        %4451 = vst.msk [vmem:[#allocation8 + $0x17] sm:$0x1] %vm4446, %v4407
        %4452 = vst.msk [vmem:[#allocation8 + $0x17] sm:$0xfe] %vm4444, %v4409
        %4453 = vst.msk [vmem:[#allocation8 + $0x1f] sm:$0x1] %vm4446, %v4411
        %4454 = vst.msk [vmem:[#allocation8 + $0x1f] sm:$0xfe] %vm4444, %v4413
        %4455 = vst.msk [vmem:[#allocation8 + $0x27] sm:$0x1] %vm4446, %v4415
        %4456 = vst.msk [vmem:[#allocation8 + $0x27] sm:$0xfe] %vm4444, %v4417
        %4457 = vst.msk [vmem:[#allocation8 + $0x2f] sm:$0x1] %vm4446, %v4419
        %4458 = vst.msk [vmem:[#allocation8 + $0x2f] sm:$0xfe] %vm4444, %v4421
        %4459 = vst.msk [vmem:[#allocation8 + $0x37] sm:$0x1] %vm4446, %v4423
        %4460 = vst.msk [vmem:[#allocation8 + $0x37] sm:$0xfe] %vm4444, %v4425
        %4461 = vst.msk [vmem:[#allocation8 + $0x3f] sm:$0x1] %vm4446, %v4427
        %4463 = vrot.lane.b32.xlu0 %v3830, 88
        %v4464 = vpop.permute.xlu0 %4463
        %4465 = vrot.lane.b32.xlu0 %v3831, 88
        %v4466 = vpop.permute.xlu0 %4465
        %4467 = vrot.lane.b32.xlu0 %v3838, 88
        %v4468 = vpop.permute.xlu0 %4467
        %4469 = vrot.lane.b32.xlu0 %v3839, 88
        %v4470 = vpop.permute.xlu0 %4469
        %4471 = vrot.lane.b32.xlu0 %v3846, 88
        %v4472 = vpop.permute.xlu0 %4471
        %4473 = vrot.lane.b32.xlu0 %v3847, 88
        %v4474 = vpop.permute.xlu0 %4473
        %4475 = vrot.lane.b32.xlu0 %v3854, 88
        %v4476 = vpop.permute.xlu0 %4475
        %4477 = vrot.lane.b32.xlu0 %v3855, 88
        %v4478 = vpop.permute.xlu0 %4477
        %4479 = vrot.lane.b32.xlu0 %v3862, 88
        %v4480 = vpop.permute.xlu0 %4479
        %4481 = vrot.lane.b32.xlu0 %v3863, 88
        %v4482 = vpop.permute.xlu0 %4481
        %4483 = vrot.lane.b32.xlu0 %v3870, 88
        %v4484 = vpop.permute.xlu0 %4483
        %4485 = vrot.lane.b32.xlu0 %v3871, 88
        %v4486 = vpop.permute.xlu0 %4485
        %4487 = vrot.lane.b32.xlu0 %v3878, 88
        %v4488 = vpop.permute.xlu0 %4487
        %4489 = vrot.lane.b32.xlu0 %v3879, 88
        %v4490 = vpop.permute.xlu0 %4489
        %4491 = vrot.lane.b32.xlu0 %v3886, 88
        %v4492 = vpop.permute.xlu0 %4491
        %4493 = vrot.lane.b32.xlu0 %v3887, 88
        %v4494 = vpop.permute.xlu0 %4493
        %vm4511 = vcmask 786113
        %4512 = vst.msk [vmem:[#allocation8 - $0x1] sm:$0xfe] %vm4511, %v4464
        %vm4513 = vcmask 778944
        %4514 = vst.msk [vmem:[#allocation8 + $0x7] sm:$0x1] %vm4513, %v4466
        %4515 = vst.msk [vmem:[#allocation8 + $0x7] sm:$0xfe] %vm4511, %v4468
        %4516 = vst.msk [vmem:[#allocation8 + $0xf] sm:$0x1] %vm4513, %v4470
        %4517 = vst.msk [vmem:[#allocation8 + $0xf] sm:$0xfe] %vm4511, %v4472
        %4518 = vst.msk [vmem:[#allocation8 + $0x17] sm:$0x1] %vm4513, %v4474
        %4519 = vst.msk [vmem:[#allocation8 + $0x17] sm:$0xfe] %vm4511, %v4476
        %4520 = vst.msk [vmem:[#allocation8 + $0x1f] sm:$0x1] %vm4513, %v4478
        %4521 = vst.msk [vmem:[#allocation8 + $0x1f] sm:$0xfe] %vm4511, %v4480
        %4522 = vst.msk [vmem:[#allocation8 + $0x27] sm:$0x1] %vm4513, %v4482
        %4523 = vst.msk [vmem:[#allocation8 + $0x27] sm:$0xfe] %vm4511, %v4484
        %4524 = vst.msk [vmem:[#allocation8 + $0x2f] sm:$0x1] %vm4513, %v4486
        %4525 = vst.msk [vmem:[#allocation8 + $0x2f] sm:$0xfe] %vm4511, %v4488
        %4526 = vst.msk [vmem:[#allocation8 + $0x37] sm:$0x1] %vm4513, %v4490
        %4527 = vst.msk [vmem:[#allocation8 + $0x37] sm:$0xfe] %vm4511, %v4492
        %4528 = vst.msk [vmem:[#allocation8 + $0x3f] sm:$0x1] %vm4513, %v4494
        %4530 = vrot.lane.b32.xlu0 %v3832, 96
        %v4531 = vpop.permute.xlu0 %4530
        %4532 = vrot.lane.b32.xlu0 %v3840, 96
        %v4533 = vpop.permute.xlu0 %4532
        %4534 = vrot.lane.b32.xlu0 %v3848, 96
        %v4535 = vpop.permute.xlu0 %4534
        %4536 = vrot.lane.b32.xlu0 %v3856, 96
        %v4537 = vpop.permute.xlu0 %4536
        %4538 = vrot.lane.b32.xlu0 %v3864, 96
        %v4539 = vpop.permute.xlu0 %4538
        %4540 = vrot.lane.b32.xlu0 %v3872, 96
        %v4541 = vpop.permute.xlu0 %4540
        %4542 = vrot.lane.b32.xlu0 %v3880, 96
        %v4543 = vpop.permute.xlu0 %4542
        %4544 = vrot.lane.b32.xlu0 %v3888, 96
        %v4545 = vpop.permute.xlu0 %4544
        %vm4554 = vcmask 851712
        %4555 = vst.msk [vmem:[#allocation8] sm:$0xff] %vm4554, %v4531
        %4556 = vst.msk [vmem:[#allocation8 + $0x8] sm:$0xff] %vm4554, %v4533
        %4557 = vst.msk [vmem:[#allocation8 + $0x10] sm:$0xff] %vm4554, %v4535
        %4558 = vst.msk [vmem:[#allocation8 + $0x18] sm:$0xff] %vm4554, %v4537
        %4559 = vst.msk [vmem:[#allocation8 + $0x20] sm:$0xff] %vm4554, %v4539
        %4560 = vst.msk [vmem:[#allocation8 + $0x28] sm:$0xff] %vm4554, %v4541
        %4561 = vst.msk [vmem:[#allocation8 + $0x30] sm:$0xff] %vm4554, %v4543
        %4562 = vst.msk [vmem:[#allocation8 + $0x38] sm:$0xff] %vm4554, %v4545
        %4564 = vrot.lane.b32.xlu0 %v3834, 104
        %v4565 = vpop.permute.xlu0 %4564
        %4566 = vrot.lane.b32.xlu0 %v3842, 104
        %v4567 = vpop.permute.xlu0 %4566
        %4568 = vrot.lane.b32.xlu0 %v3850, 104
        %v4569 = vpop.permute.xlu0 %4568
        %4570 = vrot.lane.b32.xlu0 %v3858, 104
        %v4571 = vpop.permute.xlu0 %4570
        %4572 = vrot.lane.b32.xlu0 %v3866, 104
        %v4573 = vpop.permute.xlu0 %4572
        %4574 = vrot.lane.b32.xlu0 %v3874, 104
        %v4575 = vpop.permute.xlu0 %4574
        %4576 = vrot.lane.b32.xlu0 %v3882, 104
        %v4577 = vpop.permute.xlu0 %4576
        %4578 = vrot.lane.b32.xlu0 %v3890, 104
        %v4579 = vpop.permute.xlu0 %4578
        %vm4588 = vcmask 917312
        %4589 = vst.msk [vmem:[#allocation8] sm:$0xff] %vm4588, %v4565
        %4590 = vst.msk [vmem:[#allocation8 + $0x8] sm:$0xff] %vm4588, %v4567
        %4591 = vst.msk [vmem:[#allocation8 + $0x10] sm:$0xff] %vm4588, %v4569
        %4592 = vst.msk [vmem:[#allocation8 + $0x18] sm:$0xff] %vm4588, %v4571
        %4593 = vst.msk [vmem:[#allocation8 + $0x20] sm:$0xff] %vm4588, %v4573
        %4594 = vst.msk [vmem:[#allocation8 + $0x28] sm:$0xff] %vm4588, %v4575
        %4595 = vst.msk [vmem:[#allocation8 + $0x30] sm:$0xff] %vm4588, %v4577
        %4596 = vst.msk [vmem:[#allocation8 + $0x38] sm:$0xff] %vm4588, %v4579
        %4598 = vrot.lane.b32.xlu0 %v3832, 112
        %v4599 = vpop.permute.xlu0 %4598
        %4600 = vrot.lane.b32.xlu0 %v3833, 112
        %v4601 = vpop.permute.xlu0 %4600
        %4602 = vrot.lane.b32.xlu0 %v3840, 112
        %v4603 = vpop.permute.xlu0 %4602
        %4604 = vrot.lane.b32.xlu0 %v3841, 112
        %v4605 = vpop.permute.xlu0 %4604
        %4606 = vrot.lane.b32.xlu0 %v3848, 112
        %v4607 = vpop.permute.xlu0 %4606
        %4608 = vrot.lane.b32.xlu0 %v3849, 112
        %v4609 = vpop.permute.xlu0 %4608
        %4610 = vrot.lane.b32.xlu0 %v3856, 112
        %v4611 = vpop.permute.xlu0 %4610
        %4612 = vrot.lane.b32.xlu0 %v3857, 112
        %v4613 = vpop.permute.xlu0 %4612
        %4614 = vrot.lane.b32.xlu0 %v3864, 112
        %v4615 = vpop.permute.xlu0 %4614
        %4616 = vrot.lane.b32.xlu0 %v3865, 112
        %v4617 = vpop.permute.xlu0 %4616
        %4618 = vrot.lane.b32.xlu0 %v3872, 112
        %v4619 = vpop.permute.xlu0 %4618
        %4620 = vrot.lane.b32.xlu0 %v3873, 112
        %v4621 = vpop.permute.xlu0 %4620
        %4622 = vrot.lane.b32.xlu0 %v3880, 112
        %v4623 = vpop.permute.xlu0 %4622
        %4624 = vrot.lane.b32.xlu0 %v3881, 112
        %v4625 = vpop.permute.xlu0 %4624
        %4626 = vrot.lane.b32.xlu0 %v3888, 112
        %v4627 = vpop.permute.xlu0 %4626
        %4628 = vrot.lane.b32.xlu0 %v3889, 112
        %v4629 = vpop.permute.xlu0 %4628
        %vm4646 = vcmask 982913
        %4647 = vst.msk [vmem:[#allocation8 - $0x1] sm:$0xfe] %vm4646, %v4599
        %vm4648 = vcmask 975744
        %4649 = vst.msk [vmem:[#allocation8 + $0x7] sm:$0x1] %vm4648, %v4601
        %4650 = vst.msk [vmem:[#allocation8 + $0x7] sm:$0xfe] %vm4646, %v4603
        %4651 = vst.msk [vmem:[#allocation8 + $0xf] sm:$0x1] %vm4648, %v4605
        %4652 = vst.msk [vmem:[#allocation8 + $0xf] sm:$0xfe] %vm4646, %v4607
        %4653 = vst.msk [vmem:[#allocation8 + $0x17] sm:$0x1] %vm4648, %v4609
        %4654 = vst.msk [vmem:[#allocation8 + $0x17] sm:$0xfe] %vm4646, %v4611
        %4655 = vst.msk [vmem:[#allocation8 + $0x1f] sm:$0x1] %vm4648, %v4613
        %4656 = vst.msk [vmem:[#allocation8 + $0x1f] sm:$0xfe] %vm4646, %v4615
        %4657 = vst.msk [vmem:[#allocation8 + $0x27] sm:$0x1] %vm4648, %v4617
        %4658 = vst.msk [vmem:[#allocation8 + $0x27] sm:$0xfe] %vm4646, %v4619
        %4659 = vst.msk [vmem:[#allocation8 + $0x2f] sm:$0x1] %vm4648, %v4621
        %4660 = vst.msk [vmem:[#allocation8 + $0x2f] sm:$0xfe] %vm4646, %v4623
        %4661 = vst.msk [vmem:[#allocation8 + $0x37] sm:$0x1] %vm4648, %v4625
        %4662 = vst.msk [vmem:[#allocation8 + $0x37] sm:$0xfe] %vm4646, %v4627
        %4663 = vst.msk [vmem:[#allocation8 + $0x3f] sm:$0x1] %vm4648, %v4629
        %4665 = vrot.lane.b32.xlu0 %v3834, 120
        %v4666 = vpop.permute.xlu0 %4665
        %4667 = vrot.lane.b32.xlu0 %v3835, 120
        %v4668 = vpop.permute.xlu0 %4667
        %4669 = vrot.lane.b32.xlu0 %v3842, 120
        %v4670 = vpop.permute.xlu0 %4669
        %4671 = vrot.lane.b32.xlu0 %v3843, 120
        %v4672 = vpop.permute.xlu0 %4671
        %4673 = vrot.lane.b32.xlu0 %v3850, 120
        %v4674 = vpop.permute.xlu0 %4673
        %4675 = vrot.lane.b32.xlu0 %v3851, 120
        %v4676 = vpop.permute.xlu0 %4675
        %4677 = vrot.lane.b32.xlu0 %v3858, 120
        %v4678 = vpop.permute.xlu0 %4677
        %4679 = vrot.lane.b32.xlu0 %v3859, 120
        %v4680 = vpop.permute.xlu0 %4679
        %4681 = vrot.lane.b32.xlu0 %v3866, 120
        %v4682 = vpop.permute.xlu0 %4681
        %4683 = vrot.lane.b32.xlu0 %v3867, 120
        %v4684 = vpop.permute.xlu0 %4683
        %4685 = vrot.lane.b32.xlu0 %v3874, 120
        %v4686 = vpop.permute.xlu0 %4685
        %4687 = vrot.lane.b32.xlu0 %v3875, 120
        %v4688 = vpop.permute.xlu0 %4687
        %4689 = vrot.lane.b32.xlu0 %v3882, 120
        %v4690 = vpop.permute.xlu0 %4689
        %4691 = vrot.lane.b32.xlu0 %v3883, 120
        %v4692 = vpop.permute.xlu0 %4691
        %4693 = vrot.lane.b32.xlu0 %v3890, 120
        %v4694 = vpop.permute.xlu0 %4693
        %4695 = vrot.lane.b32.xlu0 %v3891, 120
        %v4696 = vpop.permute.xlu0 %4695
        %vm4713 = vcmask 1048513
        %4714 = vst.msk [vmem:[#allocation8 - $0x1] sm:$0xfe] %vm4713, %v4666
        %vm4715 = vcmask 1041344
        %4716 = vst.msk [vmem:[#allocation8 + $0x7] sm:$0x1] %vm4715, %v4668
        %4717 = vst.msk [vmem:[#allocation8 + $0x7] sm:$0xfe] %vm4713, %v4670
        %4718 = vst.msk [vmem:[#allocation8 + $0xf] sm:$0x1] %vm4715, %v4672
        %4719 = vst.msk [vmem:[#allocation8 + $0xf] sm:$0xfe] %vm4713, %v4674
        %4720 = vst.msk [vmem:[#allocation8 + $0x17] sm:$0x1] %vm4715, %v4676
        %4721 = vst.msk [vmem:[#allocation8 + $0x17] sm:$0xfe] %vm4713, %v4678
        %4722 = vst.msk [vmem:[#allocation8 + $0x1f] sm:$0x1] %vm4715, %v4680
        %4723 = vst.msk [vmem:[#allocation8 + $0x1f] sm:$0xfe] %vm4713, %v4682
        %4724 = vst.msk [vmem:[#allocation8 + $0x27] sm:$0x1] %vm4715, %v4684
        %4725 = vst.msk [vmem:[#allocation8 + $0x27] sm:$0xfe] %vm4713, %v4686
        %4726 = vst.msk [vmem:[#allocation8 + $0x2f] sm:$0x1] %vm4715, %v4688
        %4727 = vst.msk [vmem:[#allocation8 + $0x2f] sm:$0xfe] %vm4713, %v4690
        %4728 = vst.msk [vmem:[#allocation8 + $0x37] sm:$0x1] %vm4715, %v4692
        %4729 = vst.msk [vmem:[#allocation8 + $0x37] sm:$0xfe] %vm4713, %v4694
        %4730 = vst.msk [vmem:[#allocation8 + $0x3f] sm:$0x1] %vm4715, %v4696
        %v4731 = vld [vmem:[#allocation8] sm:$0xff]
        %v4732 = vld [vmem:[#allocation8 + $0x8] sm:$0xff]
        %v4733 = vld [vmem:[#allocation8 + $0x10] sm:$0xff]
        %v4734 = vld [vmem:[#allocation8 + $0x18] sm:$0xff]
        %v4735 = vld [vmem:[#allocation8 + $0x20] sm:$0xff]
        %v4736 = vld [vmem:[#allocation8 + $0x28] sm:$0xff]
        %v4737 = vld [vmem:[#allocation8 + $0x30] sm:$0xff]
        %v4738 = vld [vmem:[#allocation8 + $0x38] sm:$0xff]
        %v4739 = vld [vmem:[%s6] sm:$0xff]
        %v4740 = vld [vmem:[%s6 + $0x8] sm:$0xff]
        %v4741 = vld [vmem:[%s6 + $0x10] sm:$0xff]
        %v4742 = vld [vmem:[%s6 + $0x18] sm:$0xff]
        %v4743 = vld [vmem:[%s6 + $0x20] sm:$0xff]
        %v4744 = vld [vmem:[%s6 + $0x28] sm:$0xff]
        %v4745 = vld [vmem:[%s6 + $0x30] sm:$0xff]
        %v4746 = vld [vmem:[%s6 + $0x38] sm:$0xff]
        %v4747 = vld [vmem:[%s6 + $0x40] sm:$0xff]
        %v4748 = vld [vmem:[%s6 + $0x48] sm:$0xff]
        %v4749 = vld [vmem:[%s6 + $0x50] sm:$0xff]
        %v4750 = vld [vmem:[%s6 + $0x58] sm:$0xff]
        %v4751 = vld [vmem:[%s6 + $0x60] sm:$0xff]
        %v4752 = vld [vmem:[%s6 + $0x68] sm:$0xff]
        %v4753 = vld [vmem:[%s6 + $0x70] sm:$0xff]
        %v4754 = vld [vmem:[%s6 + $0x78] sm:$0xff]
        %v4755 = vld [vmem:[%s7] sm:$0x1]
        %v4757 = vlaneseq
        %v4758 = vshrl.u32 %v4757, 7
        %v4759 = vsub.s32 0, %v4758
        %v4760 = vrot.slane %v4755, %v4759
        %4762 = vmatprep.subr.mxu0 0.0
        %4763 = vmatpush1.msra.mxu0 %v4754
        %4764 = vmatprep.subr.mxu0 0.0
        %4765 = vmatpush1.msra.mxu0 %v4753
        %4766 = vmatprep.subr.mxu0 0.0
        %4767 = vmatpush1.msra.mxu0 %v4752
        %4768 = vmatprep.subr.mxu0 0.0
        %4769 = vmatpush1.msra.mxu0 %v4751
        %4770 = vmatprep.subr.mxu0 0.0
        %4771 = vmatpush1.msra.mxu0 %v4750
        %4772 = vmatprep.subr.mxu0 0.0
        %4773 = vmatpush1.msra.mxu0 %v4749
        %4774 = vmatprep.subr.mxu0 0.0
        %4775 = vmatpush1.msra.mxu0 %v4748
        %4776 = vmatprep.subr.mxu0 0.0
        %4777 = vmatpush1.msra.mxu0 %v4747
        %4778 = vmatprep.subr.mxu0 0.0
        %4779 = vmatpush1.msra.mxu0 %v4746
        %4780 = vmatprep.subr.mxu0 0.0
        %4781 = vmatpush1.msra.mxu0 %v4745
        %4782 = vmatprep.subr.mxu0 0.0
        %4783 = vmatpush1.msra.mxu0 %v4744
        %4784 = vmatprep.subr.mxu0 0.0
        %4785 = vmatpush1.msra.mxu0 %v4743
        %4786 = vmatprep.subr.mxu0 0.0
        %4787 = vmatpush1.msra.mxu0 %v4742
        %4788 = vmatprep.subr.mxu0 0.0
        %4789 = vmatpush1.msra.mxu0 %v4741
        %4790 = vmatprep.subr.mxu0 0.0
        %4791 = vmatpush1.msra.mxu0 %v4740
        %4792 = vmatprep.subr.mxu0 0.0
        %4793 = vmatpush1.msra.mxu0 %v4739
        %4794 = vmatprep.subr.mxu0 0.0
        %4795 = vmatpush2.msra.mxu0 0.0
        %4796 = vmatprep.subr.mxu0 0.0
        %4797 = vmatpush2.msra.mxu0 0.0
        %4798 = vmatprep.subr.mxu0 0.0
        %4799 = vmatpush2.msra.mxu0 0.0
        %4800 = vmatprep.subr.mxu0 0.0
        %4801 = vmatpush2.msra.mxu0 0.0
        %4802 = vmatprep.subr.mxu0 0.0
        %4803 = vmatpush2.msra.mxu0 0.0
        %4804 = vmatprep.subr.mxu0 0.0
        %4805 = vmatpush2.msra.mxu0 0.0
        %4806 = vmatprep.subr.mxu0 0.0
        %4807 = vmatpush2.msra.mxu0 0.0
        %4808 = vmatprep.subr.mxu0 0.0
        %4809 = vmatpush2.msra.mxu0 0.0
        %4810 = vmatprep.subr.mxu0 0.0
        %4811 = vmatpush2.msra.mxu0 0.0
        %4812 = vmatprep.subr.mxu0 0.0
        %4813 = vmatpush2.msra.mxu0 0.0
        %4814 = vmatprep.subr.mxu0 0.0
        %4815 = vmatpush2.msra.mxu0 0.0
        %4816 = vmatprep.subr.mxu0 0.0
        %4817 = vmatpush2.msra.mxu0 0.0
        %4818 = vmatprep.subr.mxu0 0.0
        %4819 = vmatpush2.msra.mxu0 0.0
        %4820 = vmatprep.subr.mxu0 0.0
        %4821 = vmatpush2.msra.mxu0 0.0
        %4822 = vmatprep.subr.mxu0 0.0
        %4823 = vmatpush2.msra.mxu0 0.0
        %4824 = vmatprep.subr.mxu0 0.0
        %4825 = vmatpush2.msra.mxu0 0.0
        %4826 = vmatprep.mubr.f32.mxu0 0.0
        %4827 = vmatmul.mubr.f32.gmra.mxu0 %v4731
        %v4828 = vpop.f32.mrf.mxu0
        %v4829 = vadd.f32 %v4760, %v4828
        %v4830 = vpop.f32.mrf.mxu0
        %4831 = vmatprep.mubr.f32.mxu0 0.0
        %4832 = vmatmul.mubr.f32.gmra.mxu0 %v4732
        %v4833 = vpop.f32.mrf.mxu0
        %v4834 = vadd.f32 %v4760, %v4833
        %v4835 = vpop.f32.mrf.mxu0
        %4836 = vmatprep.mubr.f32.mxu0 0.0
        %4837 = vmatmul.mubr.f32.gmra.mxu0 %v4733
        %v4838 = vpop.f32.mrf.mxu0
        %v4839 = vadd.f32 %v4760, %v4838
        %v4840 = vpop.f32.mrf.mxu0
        %4841 = vmatprep.mubr.f32.mxu0 0.0
        %4842 = vmatmul.mubr.f32.gmra.mxu0 %v4734
        %v4843 = vpop.f32.mrf.mxu0
        %v4844 = vadd.f32 %v4760, %v4843
        %v4845 = vpop.f32.mrf.mxu0
        %4846 = vmatprep.mubr.f32.mxu0 0.0
        %4847 = vmatmul.mubr.f32.gmra.mxu0 %v4735
        %v4848 = vpop.f32.mrf.mxu0
        %v4849 = vadd.f32 %v4760, %v4848
        %v4850 = vpop.f32.mrf.mxu0
        %4851 = vmatprep.mubr.f32.mxu0 0.0
        %4852 = vmatmul.mubr.f32.gmra.mxu0 %v4736
        %v4853 = vpop.f32.mrf.mxu0
        %v4854 = vadd.f32 %v4760, %v4853
        %v4855 = vpop.f32.mrf.mxu0
        %4856 = vmatprep.mubr.f32.mxu0 0.0
        %4857 = vmatmul.mubr.f32.gmra.mxu0 %v4737
        %v4858 = vpop.f32.mrf.mxu0
        %v4859 = vadd.f32 %v4760, %v4858
        %v4860 = vpop.f32.mrf.mxu0
        %4861 = vmatprep.mubr.f32.mxu0 0.0
        %4862 = vmatmul.mubr.f32.gmra.mxu0 %v4738
        %v4863 = vpop.f32.mrf.mxu0
        %v4864 = vadd.f32 %v4760, %v4863
        %v4865 = vpop.f32.mrf.mxu0
        %4866 = vdwg.mxu0
        %vm4867 = vcmp.gt.f32.partialorder %v4829, 0.0
        %vm4868 = vcmp.gt.f32.partialorder %v4834, 0.0
        %vm4869 = vcmp.gt.f32.partialorder %v4839, 0.0
        %vm4870 = vcmp.gt.f32.partialorder %v4844, 0.0
        %vm4871 = vcmp.gt.f32.partialorder %v4849, 0.0
        %vm4872 = vcmp.gt.f32.partialorder %v4854, 0.0
        %vm4873 = vcmp.gt.f32.partialorder %v4859, 0.0
        %vm4874 = vcmp.gt.f32.partialorder %v4864, 0.0
        %v4875 = vmul.f32 %v4829, 0.2
        %v4876 = vmul.f32 %v4834, 0.2
        %v4877 = vmul.f32 %v4839, 0.2
        %v4878 = vmul.f32 %v4844, 0.2
        %v4879 = vmul.f32 %v4849, 0.2
        %v4880 = vmul.f32 %v4854, 0.2
        %v4881 = vmul.f32 %v4859, 0.2
        %v4882 = vmul.f32 %v4864, 0.2
        %v4883 = vsel %vm4867, %v4829, %v4875
        %v4884 = vsel %vm4868, %v4834, %v4876
        %v4885 = vsel %vm4869, %v4839, %v4877
        %v4886 = vsel %vm4870, %v4844, %v4878
        %v4887 = vsel %vm4871, %v4849, %v4879
        %v4888 = vsel %vm4872, %v4854, %v4880
        %v4889 = vsel %vm4873, %v4859, %v4881
        %v4890 = vsel %vm4874, %v4864, %v4882
        %vm4891 = vcmask 126976
        %4892 = vst.msk [vmem:[#allocation4] sm:$0x1f] %vm4891, 0.0
        %4893 = vst.msk [vmem:[#allocation4 + $0x8] sm:$0x1f] %vm4891, 0.0
        %s4894 = scalar_lea.vmem [#allocation4], 144
        %4895 = vst.msk [vmem:[%s4894] sm:$0x1f] %vm4891, 0.0
        %4896 = vst.msk [vmem:[%s4894 + $0x8] sm:$0x1f] %vm4891, 0.0
        %vm4897 = vcmask 122880
        %4898 = vst.msk [vmem:[#allocation4] sm:$0x1] %vm4897, 0.0
        %4899 = vst.msk [vmem:[#allocation4 + $0x10] sm:$0x1] %vm4897, 0.0
        %4900 = vst.msk [vmem:[#allocation4 + $0x20] sm:$0x1] %vm4897, 0.0
        %4901 = vst.msk [vmem:[#allocation4 + $0x30] sm:$0x1] %vm4897, 0.0
        %4902 = vst.msk [vmem:[#allocation4 + $0x40] sm:$0x1] %vm4897, 0.0
        %4903 = vst.msk [vmem:[#allocation4 + $0x50] sm:$0x1] %vm4897, 0.0
        %4904 = vst.msk [vmem:[#allocation4 + $0x60] sm:$0x1] %vm4897, 0.0
        %4905 = vst.msk [vmem:[#allocation4 + $0x70] sm:$0x1] %vm4897, 0.0
        %4906 = vst.msk [vmem:[#allocation4 + $0x80] sm:$0x1] %vm4897, 0.0
        %4907 = vst.msk [vmem:[#allocation4 + $0x90] sm:$0x1] %vm4897, 0.0
        %s4908 = scalar_lea.vmem [#allocation4], 8
        %4909 = vst.msk [vmem:[%s4908 + $0x4] sm:$0x1] %vm4897, 0.0
        %4910 = vst.msk [vmem:[%s4908 + $0x14] sm:$0x1] %vm4897, 0.0
        %4911 = vst.msk [vmem:[%s4908 + $0x24] sm:$0x1] %vm4897, 0.0
        %4912 = vst.msk [vmem:[%s4908 + $0x34] sm:$0x1] %vm4897, 0.0
        %4913 = vst.msk [vmem:[%s4908 + $0x44] sm:$0x1] %vm4897, 0.0
        %4914 = vst.msk [vmem:[%s4908 + $0x54] sm:$0x1] %vm4897, 0.0
        %4915 = vst.msk [vmem:[%s4908 + $0x64] sm:$0x1] %vm4897, 0.0
        %4916 = vst.msk [vmem:[%s4908 + $0x74] sm:$0x1] %vm4897, 0.0
        %4917 = vst.msk [vmem:[%s4908 + $0x84] sm:$0x1] %vm4897, 0.0
        %4918 = vst.msk [vmem:[%s4908 + $0x94] sm:$0x1] %vm4897, 0.0
        %s4919 = scalar_lea.vmem [#allocation4], 24
        %4920 = vst.msk [vmem:[%s4919] sm:$0x1] %vm4897, %v4883
        %4921 = vst.msk [vmem:[%s4919 + $0x10] sm:$0x1] %vm4897, %v4884
        %4922 = vst.msk [vmem:[%s4919 + $0x20] sm:$0x1] %vm4897, %v4885
        %4923 = vst.msk [vmem:[%s4919 + $0x30] sm:$0x1] %vm4897, %v4886
        %4924 = vst.msk [vmem:[%s4919 + $0x40] sm:$0x1] %vm4897, %v4887
        %4925 = vst.msk [vmem:[%s4919 + $0x50] sm:$0x1] %vm4897, %v4888
        %4926 = vst.msk [vmem:[%s4919 + $0x60] sm:$0x1] %vm4897, %v4889
        %4927 = vst.msk [vmem:[%s4919 + $0x70] sm:$0x1] %vm4897, %v4890
        %s4928 = scalar_lea.vmem [#allocation4], 16
        %vm4929 = vcmask 123905
        %4930 = vst.msk [vmem:[%s4928] sm:$0x2] %vm4929, %v4883
        %4931 = vst.msk [vmem:[%s4928 + $0x10] sm:$0x2] %vm4929, %v4884
        %4932 = vst.msk [vmem:[%s4928 + $0x20] sm:$0x2] %vm4929, %v4885
        %4933 = vst.msk [vmem:[%s4928 + $0x30] sm:$0x2] %vm4929, %v4886
        %4934 = vst.msk [vmem:[%s4928 + $0x40] sm:$0x2] %vm4929, %v4887
        %4935 = vst.msk [vmem:[%s4928 + $0x50] sm:$0x2] %vm4929, %v4888
        %4936 = vst.msk [vmem:[%s4928 + $0x60] sm:$0x2] %vm4929, %v4889
        %4937 = vst.msk [vmem:[%s4928 + $0x70] sm:$0x2] %vm4929, %v4890
        %vm4938 = vcmask 124930
        %4939 = vst.msk [vmem:[%s4919 - $0x1] sm:$0x4] %vm4938, %v4883
        %4940 = vst.msk [vmem:[%s4919 + $0xf] sm:$0x4] %vm4938, %v4884
        %4941 = vst.msk [vmem:[%s4919 + $0x1f] sm:$0x4] %vm4938, %v4885
        %4942 = vst.msk [vmem:[%s4919 + $0x2f] sm:$0x4] %vm4938, %v4886
        %4943 = vst.msk [vmem:[%s4919 + $0x3f] sm:$0x4] %vm4938, %v4887
        %4944 = vst.msk [vmem:[%s4919 + $0x4f] sm:$0x4] %vm4938, %v4888
        %4945 = vst.msk [vmem:[%s4919 + $0x5f] sm:$0x4] %vm4938, %v4889
        %4946 = vst.msk [vmem:[%s4919 + $0x6f] sm:$0x4] %vm4938, %v4890
        %vm4947 = vcmask 125955
        %4948 = vst.msk [vmem:[%s4928 - $0x1] sm:$0x8] %vm4947, %v4883
        %4949 = vst.msk [vmem:[%s4928 + $0xf] sm:$0x8] %vm4947, %v4884
        %4950 = vst.msk [vmem:[%s4928 + $0x1f] sm:$0x8] %vm4947, %v4885
        %4951 = vst.msk [vmem:[%s4928 + $0x2f] sm:$0x8] %vm4947, %v4886
        %4952 = vst.msk [vmem:[%s4928 + $0x3f] sm:$0x8] %vm4947, %v4887
        %4953 = vst.msk [vmem:[%s4928 + $0x4f] sm:$0x8] %vm4947, %v4888
        %4954 = vst.msk [vmem:[%s4928 + $0x5f] sm:$0x8] %vm4947, %v4889
        %4955 = vst.msk [vmem:[%s4928 + $0x6f] sm:$0x8] %vm4947, %v4890
        %vm4956 = vcmask 126980
        %4957 = vst.msk [vmem:[%s4919 - $0x2] sm:$0x10] %vm4956, %v4883
        %4958 = vst.msk [vmem:[%s4919 + $0xe] sm:$0x10] %vm4956, %v4884
        %4959 = vst.msk [vmem:[%s4919 + $0x1e] sm:$0x10] %vm4956, %v4885
        %4960 = vst.msk [vmem:[%s4919 + $0x2e] sm:$0x10] %vm4956, %v4886
        %4961 = vst.msk [vmem:[%s4919 + $0x3e] sm:$0x10] %vm4956, %v4887
        %4962 = vst.msk [vmem:[%s4919 + $0x4e] sm:$0x10] %vm4956, %v4888
        %4963 = vst.msk [vmem:[%s4919 + $0x5e] sm:$0x10] %vm4956, %v4889
        %4964 = vst.msk [vmem:[%s4919 + $0x6e] sm:$0x10] %vm4956, %v4890
        %vm4965 = vcmask 128005
        %4966 = vst.msk [vmem:[%s4928 - $0x2] sm:$0x20] %vm4965, %v4883
        %4967 = vst.msk [vmem:[%s4928 + $0xe] sm:$0x20] %vm4965, %v4884
        %4968 = vst.msk [vmem:[%s4928 + $0x1e] sm:$0x20] %vm4965, %v4885
        %4969 = vst.msk [vmem:[%s4928 + $0x2e] sm:$0x20] %vm4965, %v4886
        %4970 = vst.msk [vmem:[%s4928 + $0x3e] sm:$0x20] %vm4965, %v4887
        %4971 = vst.msk [vmem:[%s4928 + $0x4e] sm:$0x20] %vm4965, %v4888
        %4972 = vst.msk [vmem:[%s4928 + $0x5e] sm:$0x20] %vm4965, %v4889
        %4973 = vst.msk [vmem:[%s4928 + $0x6e] sm:$0x20] %vm4965, %v4890
        %vm4974 = vcmask 129030
        %4975 = vst.msk [vmem:[%s4919 - $0x3] sm:$0x40] %vm4974, %v4883
        %4976 = vst.msk [vmem:[%s4919 + $0xd] sm:$0x40] %vm4974, %v4884
        %4977 = vst.msk [vmem:[%s4919 + $0x1d] sm:$0x40] %vm4974, %v4885
        %4978 = vst.msk [vmem:[%s4919 + $0x2d] sm:$0x40] %vm4974, %v4886
        %4979 = vst.msk [vmem:[%s4919 + $0x3d] sm:$0x40] %vm4974, %v4887
        %4980 = vst.msk [vmem:[%s4919 + $0x4d] sm:$0x40] %vm4974, %v4888
        %4981 = vst.msk [vmem:[%s4919 + $0x5d] sm:$0x40] %vm4974, %v4889
        %4982 = vst.msk [vmem:[%s4919 + $0x6d] sm:$0x40] %vm4974, %v4890
        %vm4983 = vcmask 130055
        %4984 = vst.msk [vmem:[%s4928 - $0x3] sm:$0x80] %vm4983, %v4883
        %4985 = vst.msk [vmem:[%s4928 + $0xd] sm:$0x80] %vm4983, %v4884
        %4986 = vst.msk [vmem:[%s4928 + $0x1d] sm:$0x80] %vm4983, %v4885
        %4987 = vst.msk [vmem:[%s4928 + $0x2d] sm:$0x80] %vm4983, %v4886
        %4988 = vst.msk [vmem:[%s4928 + $0x3d] sm:$0x80] %vm4983, %v4887
        %4989 = vst.msk [vmem:[%s4928 + $0x4d] sm:$0x80] %vm4983, %v4888
        %4990 = vst.msk [vmem:[%s4928 + $0x5d] sm:$0x80] %vm4983, %v4889
        %4991 = vst.msk [vmem:[%s4928 + $0x6d] sm:$0x80] %vm4983, %v4890
        %v4992 = vld [vmem:[#allocation4] sm:$0x1f]
        %v4993 = vld [vmem:[#allocation4 + $0x8] sm:$0x1f]
        %v4994 = vld [vmem:[#allocation4 + $0x10] sm:$0x1f]
        %v4995 = vld [vmem:[#allocation4 + $0x18] sm:$0x1f]
        %v4996 = vld [vmem:[#allocation4 + $0x20] sm:$0x1f]
        %v4997 = vld [vmem:[#allocation4 + $0x28] sm:$0x1f]
        %v4998 = vld [vmem:[#allocation4 + $0x30] sm:$0x1f]
        %v4999 = vld [vmem:[#allocation4 + $0x38] sm:$0x1f]
        %v5000 = vld [vmem:[#allocation4 + $0x40] sm:$0x1f]
        %v5001 = vld [vmem:[#allocation4 + $0x48] sm:$0x1f]
        %v5002 = vld [vmem:[#allocation4 + $0x50] sm:$0x1f]
        %v5003 = vld [vmem:[#allocation4 + $0x58] sm:$0x1f]
        %v5004 = vld [vmem:[#allocation4 + $0x60] sm:$0x1f]
        %v5005 = vld [vmem:[#allocation4 + $0x68] sm:$0x1f]
        %v5006 = vld [vmem:[#allocation4 + $0x70] sm:$0x1f]
        %v5007 = vld [vmem:[#allocation4 + $0x78] sm:$0x1f]
        %v5008 = vld [vmem:[#allocation4 + $0x80] sm:$0x1f]
        %v5009 = vld [vmem:[#allocation4 + $0x88] sm:$0x1f]
        %v5010 = vld [vmem:[#allocation4 + $0x90] sm:$0x1f]
        %v5011 = vld [vmem:[#allocation4 + $0x98] sm:$0x1f]
        %vm5012 = vcmask 125952
        %5013 = vst.msk [vmem:[#allocation9] sm:$0xf] %vm5012, %v4992
        %5014 = vst.msk [vmem:[#allocation9 + $0x8] sm:$0xf] %vm5012, %v4996
        %5015 = vst.msk [vmem:[#allocation9 + $0x10] sm:$0xf] %vm5012, %v5000
        %5016 = vst.msk [vmem:[#allocation9 + $0x18] sm:$0xf] %vm5012, %v5004
        %5021 = vrot.lane.b32.xlu0 %v4993, 16
        %v5022 = vpop.permute.xlu0 %5021
        %5023 = vrot.lane.b32.xlu0 %v4997, 16
        %v5024 = vpop.permute.xlu0 %5023
        %5025 = vrot.lane.b32.xlu0 %v5001, 16
        %v5026 = vpop.permute.xlu0 %5025
        %5027 = vrot.lane.b32.xlu0 %v5005, 16
        %v5028 = vpop.permute.xlu0 %5027
        %vm5033 = vcmask 257152
        %5034 = vst.msk [vmem:[#allocation9] sm:$0xf] %vm5033, %v5022
        %5035 = vst.msk [vmem:[#allocation9 + $0x8] sm:$0xf] %vm5033, %v5024
        %5036 = vst.msk [vmem:[#allocation9 + $0x10] sm:$0xf] %vm5033, %v5026
        %5037 = vst.msk [vmem:[#allocation9 + $0x18] sm:$0xf] %vm5033, %v5028
        %v5042 = vcombine.high %v4992, %v4992
        %v5043 = vcombine.high %v4996, %v4996
        %v5044 = vcombine.high %v5000, %v5000
        %v5045 = vcombine.high %v5004, %v5004
        %vm5046 = vcmask 1042432
        %vm5047 = vcmask 1046532
        %vm5048 = vmor %vm5046, %vm5047
        %v5049 = vrot.slane %v4992, 5
        %v5050 = vrot.slane %v5049, 4
        %v5051 = vrot.slane %v5042, 5
        %v5052 = vsel %vm5048, %v5050, %v5051
        %v5053 = vrot.slane %v4996, 5
        %v5054 = vrot.slane %v5053, 4
        %v5055 = vrot.slane %v5043, 5
        %v5056 = vsel %vm5048, %v5054, %v5055
        %v5057 = vrot.slane %v5000, 5
        %v5058 = vrot.slane %v5057, 4
        %v5059 = vrot.slane %v5044, 5
        %v5060 = vsel %vm5048, %v5058, %v5059
        %v5061 = vrot.slane %v5004, 5
        %v5062 = vrot.slane %v5061, 4
        %v5063 = vrot.slane %v5045, 5
        %v5064 = vsel %vm5048, %v5062, %v5063
        %5065 = vrot.lane.b32.xlu0 %v5052, 32
        %v5066 = vpop.permute.xlu0 %5065
        %5067 = vrot.lane.b32.xlu0 %v5056, 32
        %v5068 = vpop.permute.xlu0 %5067
        %5069 = vrot.lane.b32.xlu0 %v5060, 32
        %v5070 = vpop.permute.xlu0 %5069
        %5071 = vrot.lane.b32.xlu0 %v5064, 32
        %v5072 = vpop.permute.xlu0 %5071
        %vm5077 = vcmask 388352
        %5078 = vst.msk [vmem:[#allocation9] sm:$0xf] %vm5077, %v5066
        %5079 = vst.msk [vmem:[#allocation9 + $0x8] sm:$0xf] %vm5077, %v5068
        %5080 = vst.msk [vmem:[#allocation9 + $0x10] sm:$0xf] %vm5077, %v5070
        %5081 = vst.msk [vmem:[#allocation9 + $0x18] sm:$0xf] %vm5077, %v5072
        %v5082 = vcombine.high %v4993, %v4993
        %v5083 = vcombine.high %v4997, %v4997
        %v5084 = vcombine.high %v5001, %v5001
        %v5085 = vcombine.high %v5005, %v5005
        %v5086 = vrot.slane %v4993, 5
        %v5087 = vrot.slane %v5086, 4
        %v5088 = vrot.slane %v5082, 5
        %v5089 = vsel %vm5048, %v5087, %v5088
        %v5090 = vrot.slane %v4997, 5
        %v5091 = vrot.slane %v5090, 4
        %v5092 = vrot.slane %v5083, 5
        %v5093 = vsel %vm5048, %v5091, %v5092
        %v5094 = vrot.slane %v5001, 5
        %v5095 = vrot.slane %v5094, 4
        %v5096 = vrot.slane %v5084, 5
        %v5097 = vsel %vm5048, %v5095, %v5096
        %v5098 = vrot.slane %v5005, 5
        %v5099 = vrot.slane %v5098, 4
        %v5100 = vrot.slane %v5085, 5
        %v5101 = vsel %vm5048, %v5099, %v5100
        %5102 = vrot.lane.b32.xlu0 %v5089, 48
        %v5103 = vpop.permute.xlu0 %5102
        %5104 = vrot.lane.b32.xlu0 %v5093, 48
        %v5105 = vpop.permute.xlu0 %5104
        %5106 = vrot.lane.b32.xlu0 %v5097, 48
        %v5107 = vpop.permute.xlu0 %5106
        %5108 = vrot.lane.b32.xlu0 %v5101, 48
        %v5109 = vpop.permute.xlu0 %5108
        %vm5114 = vcmask 519552
        %5115 = vst.msk [vmem:[#allocation9] sm:$0xf] %vm5114, %v5103
        %5116 = vst.msk [vmem:[#allocation9 + $0x8] sm:$0xf] %vm5114, %v5105
        %5117 = vst.msk [vmem:[#allocation9 + $0x10] sm:$0xf] %vm5114, %v5107
        %5118 = vst.msk [vmem:[#allocation9 + $0x18] sm:$0xf] %vm5114, %v5109
        %5123 = vrot.lane.b32.xlu0 %v4994, 64
        %v5124 = vpop.permute.xlu0 %5123
        %5125 = vrot.lane.b32.xlu0 %v4998, 64
        %v5126 = vpop.permute.xlu0 %5125
        %5127 = vrot.lane.b32.xlu0 %v5002, 64
        %v5128 = vpop.permute.xlu0 %5127
        %5129 = vrot.lane.b32.xlu0 %v5006, 64
        %v5130 = vpop.permute.xlu0 %5129
        %vm5135 = vcmask 650752
        %5136 = vst.msk [vmem:[#allocation9] sm:$0xf] %vm5135, %v5124
        %5137 = vst.msk [vmem:[#allocation9 + $0x8] sm:$0xf] %vm5135, %v5126
        %5138 = vst.msk [vmem:[#allocation9 + $0x10] sm:$0xf] %vm5135, %v5128
        %5139 = vst.msk [vmem:[#allocation9 + $0x18] sm:$0xf] %vm5135, %v5130
        %5144 = vrot.lane.b32.xlu0 %v4995, 80
        %v5145 = vpop.permute.xlu0 %5144
        %5146 = vrot.lane.b32.xlu0 %v4999, 80
        %v5147 = vpop.permute.xlu0 %5146
        %5148 = vrot.lane.b32.xlu0 %v5003, 80
        %v5149 = vpop.permute.xlu0 %5148
        %5150 = vrot.lane.b32.xlu0 %v5007, 80
        %v5151 = vpop.permute.xlu0 %5150
        %vm5156 = vcmask 781952
        %5157 = vst.msk [vmem:[#allocation9] sm:$0xf] %vm5156, %v5145
        %5158 = vst.msk [vmem:[#allocation9 + $0x8] sm:$0xf] %vm5156, %v5147
        %5159 = vst.msk [vmem:[#allocation9 + $0x10] sm:$0xf] %vm5156, %v5149
        %5160 = vst.msk [vmem:[#allocation9 + $0x18] sm:$0xf] %vm5156, %v5151
        %v5161 = vcombine.high %v4994, %v4994
        %v5162 = vcombine.high %v4998, %v4998
        %v5163 = vcombine.high %v5002, %v5002
        %v5164 = vcombine.high %v5006, %v5006
        %v5165 = vrot.slane %v4994, 5
        %v5166 = vrot.slane %v5165, 4
        %v5167 = vrot.slane %v5161, 5
        %v5168 = vsel %vm5048, %v5166, %v5167
        %v5169 = vrot.slane %v4998, 5
        %v5170 = vrot.slane %v5169, 4
        %v5171 = vrot.slane %v5162, 5
        %v5172 = vsel %vm5048, %v5170, %v5171
        %v5173 = vrot.slane %v5002, 5
        %v5174 = vrot.slane %v5173, 4
        %v5175 = vrot.slane %v5163, 5
        %v5176 = vsel %vm5048, %v5174, %v5175
        %v5177 = vrot.slane %v5006, 5
        %v5178 = vrot.slane %v5177, 4
        %v5179 = vrot.slane %v5164, 5
        %v5180 = vsel %vm5048, %v5178, %v5179
        %5181 = vrot.lane.b32.xlu0 %v5168, 96
        %v5182 = vpop.permute.xlu0 %5181
        %5183 = vrot.lane.b32.xlu0 %v5172, 96
        %v5184 = vpop.permute.xlu0 %5183
        %5185 = vrot.lane.b32.xlu0 %v5176, 96
        %v5186 = vpop.permute.xlu0 %5185
        %5187 = vrot.lane.b32.xlu0 %v5180, 96
        %v5188 = vpop.permute.xlu0 %5187
        %vm5193 = vcmask 913152
        %5194 = vst.msk [vmem:[#allocation9] sm:$0xf] %vm5193, %v5182
        %5195 = vst.msk [vmem:[#allocation9 + $0x8] sm:$0xf] %vm5193, %v5184
        %5196 = vst.msk [vmem:[#allocation9 + $0x10] sm:$0xf] %vm5193, %v5186
        %5197 = vst.msk [vmem:[#allocation9 + $0x18] sm:$0xf] %vm5193, %v5188
        %v5198 = vcombine.high %v4995, %v4995
        %v5199 = vcombine.high %v4999, %v4999
        %v5200 = vcombine.high %v5003, %v5003
        %v5201 = vcombine.high %v5007, %v5007
        %v5202 = vrot.slane %v4995, 5
        %v5203 = vrot.slane %v5202, 4
        %v5204 = vrot.slane %v5198, 5
        %v5205 = vsel %vm5048, %v5203, %v5204
        %v5206 = vrot.slane %v4999, 5
        %v5207 = vrot.slane %v5206, 4
        %v5208 = vrot.slane %v5199, 5
        %v5209 = vsel %vm5048, %v5207, %v5208
        %v5210 = vrot.slane %v5003, 5
        %v5211 = vrot.slane %v5210, 4
        %v5212 = vrot.slane %v5200, 5
        %v5213 = vsel %vm5048, %v5211, %v5212
        %v5214 = vrot.slane %v5007, 5
        %v5215 = vrot.slane %v5214, 4
        %v5216 = vrot.slane %v5201, 5
        %v5217 = vsel %vm5048, %v5215, %v5216
        %5218 = vrot.lane.b32.xlu0 %v5205, 112
        %v5219 = vpop.permute.xlu0 %5218
        %5220 = vrot.lane.b32.xlu0 %v5209, 112
        %v5221 = vpop.permute.xlu0 %5220
        %5222 = vrot.lane.b32.xlu0 %v5213, 112
        %v5223 = vpop.permute.xlu0 %5222
        %5224 = vrot.lane.b32.xlu0 %v5217, 112
        %v5225 = vpop.permute.xlu0 %5224
        %vm5230 = vcmask 1044352
        %5231 = vst.msk [vmem:[#allocation9] sm:$0xf] %vm5230, %v5219
        %5232 = vst.msk [vmem:[#allocation9 + $0x8] sm:$0xf] %vm5230, %v5221
        %5233 = vst.msk [vmem:[#allocation9 + $0x10] sm:$0xf] %vm5230, %v5223
        %5234 = vst.msk [vmem:[#allocation9 + $0x18] sm:$0xf] %vm5230, %v5225
        %5235 = vst.msk [vmem:[#allocation9 + $0x4] sm:$0xf] %vm5012, %v4996
        %5236 = vst.msk [vmem:[#allocation9 + $0xc] sm:$0xf] %vm5012, %v5000
        %5237 = vst.msk [vmem:[#allocation9 + $0x14] sm:$0xf] %vm5012, %v5004
        %5238 = vst.msk [vmem:[#allocation9 + $0x1c] sm:$0xf] %vm5012, %v5008
        %5240 = vrot.lane.b32.xlu0 %v5009, 16
        %v5241 = vpop.permute.xlu0 %5240
        %5243 = vst.msk [vmem:[#allocation9 + $0x4] sm:$0xf] %vm5033, %v5024
        %5244 = vst.msk [vmem:[#allocation9 + $0xc] sm:$0xf] %vm5033, %v5026
        %5245 = vst.msk [vmem:[#allocation9 + $0x14] sm:$0xf] %vm5033, %v5028
        %5246 = vst.msk [vmem:[#allocation9 + $0x1c] sm:$0xf] %vm5033, %v5241
        %v5248 = vcombine.high %v5008, %v5008
        %v5249 = vrot.slane %v5008, 5
        %v5250 = vrot.slane %v5249, 4
        %v5251 = vrot.slane %v5248, 5
        %v5252 = vsel %vm5048, %v5250, %v5251
        %5253 = vrot.lane.b32.xlu0 %v5252, 32
        %v5254 = vpop.permute.xlu0 %5253
        %5256 = vst.msk [vmem:[#allocation9 + $0x4] sm:$0xf] %vm5077, %v5068
        %5257 = vst.msk [vmem:[#allocation9 + $0xc] sm:$0xf] %vm5077, %v5070
        %5258 = vst.msk [vmem:[#allocation9 + $0x14] sm:$0xf] %vm5077, %v5072
        %5259 = vst.msk [vmem:[#allocation9 + $0x1c] sm:$0xf] %vm5077, %v5254
        %v5260 = vcombine.high %v5009, %v5009
        %v5261 = vrot.slane %v5009, 5
        %v5262 = vrot.slane %v5261, 4
        %v5263 = vrot.slane %v5260, 5
        %v5264 = vsel %vm5048, %v5262, %v5263
        %5265 = vrot.lane.b32.xlu0 %v5264, 48
        %v5266 = vpop.permute.xlu0 %5265
        %5268 = vst.msk [vmem:[#allocation9 + $0x4] sm:$0xf] %vm5114, %v5105
        %5269 = vst.msk [vmem:[#allocation9 + $0xc] sm:$0xf] %vm5114, %v5107
        %5270 = vst.msk [vmem:[#allocation9 + $0x14] sm:$0xf] %vm5114, %v5109
        %5271 = vst.msk [vmem:[#allocation9 + $0x1c] sm:$0xf] %vm5114, %v5266
        %5273 = vrot.lane.b32.xlu0 %v5010, 64
        %v5274 = vpop.permute.xlu0 %5273
        %5276 = vst.msk [vmem:[#allocation9 + $0x4] sm:$0xf] %vm5135, %v5126
        %5277 = vst.msk [vmem:[#allocation9 + $0xc] sm:$0xf] %vm5135, %v5128
        %5278 = vst.msk [vmem:[#allocation9 + $0x14] sm:$0xf] %vm5135, %v5130
        %5279 = vst.msk [vmem:[#allocation9 + $0x1c] sm:$0xf] %vm5135, %v5274
        %5281 = vrot.lane.b32.xlu0 %v5011, 80
        %v5282 = vpop.permute.xlu0 %5281
        %5284 = vst.msk [vmem:[#allocation9 + $0x4] sm:$0xf] %vm5156, %v5147
        %5285 = vst.msk [vmem:[#allocation9 + $0xc] sm:$0xf] %vm5156, %v5149
        %5286 = vst.msk [vmem:[#allocation9 + $0x14] sm:$0xf] %vm5156, %v5151
        %5287 = vst.msk [vmem:[#allocation9 + $0x1c] sm:$0xf] %vm5156, %v5282
        %v5288 = vcombine.high %v5010, %v5010
        %v5289 = vrot.slane %v5010, 5
        %v5290 = vrot.slane %v5289, 4
        %v5291 = vrot.slane %v5288, 5
        %v5292 = vsel %vm5048, %v5290, %v5291
        %5293 = vrot.lane.b32.xlu0 %v5292, 96
        %v5294 = vpop.permute.xlu0 %5293
        %5296 = vst.msk [vmem:[#allocation9 + $0x4] sm:$0xf] %vm5193, %v5184
        %5297 = vst.msk [vmem:[#allocation9 + $0xc] sm:$0xf] %vm5193, %v5186
        %5298 = vst.msk [vmem:[#allocation9 + $0x14] sm:$0xf] %vm5193, %v5188
        %5299 = vst.msk [vmem:[#allocation9 + $0x1c] sm:$0xf] %vm5193, %v5294
        %v5300 = vcombine.high %v5011, %v5011
        %v5301 = vrot.slane %v5011, 5
        %v5302 = vrot.slane %v5301, 4
        %v5303 = vrot.slane %v5300, 5
        %v5304 = vsel %vm5048, %v5302, %v5303
        %5305 = vrot.lane.b32.xlu0 %v5304, 112
        %v5306 = vpop.permute.xlu0 %5305
        %5308 = vst.msk [vmem:[#allocation9 + $0x4] sm:$0xf] %vm5230, %v5221
        %5309 = vst.msk [vmem:[#allocation9 + $0xc] sm:$0xf] %vm5230, %v5223
        %5310 = vst.msk [vmem:[#allocation9 + $0x14] sm:$0xf] %vm5230, %v5225
        %5311 = vst.msk [vmem:[#allocation9 + $0x1c] sm:$0xf] %vm5230, %v5306
        %v5312 = vld [vmem:[#allocation9] sm:$0xff]
        %v5313 = vld [vmem:[#allocation9 + $0x8] sm:$0xff]
        %v5314 = vld [vmem:[#allocation9 + $0x10] sm:$0xff]
        %v5315 = vld [vmem:[#allocation9 + $0x18] sm:$0xff]
        %v5316 = vld [vmem:[%s8] sm:$0xff]
        %v5317 = vld [vmem:[%s8 + $0x8] sm:$0xff]
        %v5318 = vld [vmem:[%s8 + $0x10] sm:$0xff]
        %v5319 = vld [vmem:[%s8 + $0x18] sm:$0xff]
        %v5320 = vld [vmem:[%s8 + $0x20] sm:$0xff]
        %v5321 = vld [vmem:[%s8 + $0x28] sm:$0xff]
        %v5322 = vld [vmem:[%s8 + $0x30] sm:$0xff]
        %v5323 = vld [vmem:[%s8 + $0x38] sm:$0xff]
        %v5324 = vld [vmem:[%s8 + $0x40] sm:$0xff]
        %v5325 = vld [vmem:[%s8 + $0x48] sm:$0xff]
        %v5326 = vld [vmem:[%s8 + $0x50] sm:$0xff]
        %v5327 = vld [vmem:[%s8 + $0x58] sm:$0xff]
        %v5328 = vld [vmem:[%s8 + $0x60] sm:$0xff]
        %v5329 = vld [vmem:[%s8 + $0x68] sm:$0xff]
        %v5330 = vld [vmem:[%s8 + $0x70] sm:$0xff]
        %v5331 = vld [vmem:[%s8 + $0x78] sm:$0xff]
        %v5332 = vld [vmem:[%s8 + $0x80] sm:$0xff]
        %v5333 = vld [vmem:[%s8 + $0x88] sm:$0xff]
        %v5334 = vld [vmem:[%s8 + $0x90] sm:$0xff]
        %v5335 = vld [vmem:[%s8 + $0x98] sm:$0xff]
        %v5336 = vld [vmem:[%s8 + $0xa0] sm:$0xff]
        %v5337 = vld [vmem:[%s8 + $0xa8] sm:$0xff]
        %v5338 = vld [vmem:[%s8 + $0xb0] sm:$0xff]
        %v5339 = vld [vmem:[%s8 + $0xb8] sm:$0xff]
        %v5340 = vld [vmem:[%s8 + $0xc0] sm:$0xff]
        %v5341 = vld [vmem:[%s8 + $0xc8] sm:$0xff]
        %v5342 = vld [vmem:[%s8 + $0xd0] sm:$0xff]
        %v5343 = vld [vmem:[%s8 + $0xd8] sm:$0xff]
        %v5344 = vld [vmem:[%s8 + $0xe0] sm:$0xff]
        %v5345 = vld [vmem:[%s8 + $0xe8] sm:$0xff]
        %v5346 = vld [vmem:[%s8 + $0xf0] sm:$0xff]
        %v5347 = vld [vmem:[%s8 + $0xf8] sm:$0xff]
        %v5348 = vld [vmem:[%s9] sm:$0x1]
        %v5350 = vlaneseq
        %v5351 = vshrl.u32 %v5350, 7
        %v5352 = vsub.s32 0, %v5351
        %v5353 = vrot.slane %v5312, %v5352
        %v5354 = vlaneseq
        %v5355 = vshrl.u32 %v5354, 7
        %v5356 = vsub.s32 4, %v5355
        %v5357 = vrot.slane %v5312, %v5356
        %5360 = vmatprep.subr.mxu0 0.0
        %5361 = vmatpush1.msra.mxu0 %v5331
        %5362 = vmatprep.subr.mxu0 0.0
        %5363 = vmatpush1.msra.mxu0 %v5330
        %5364 = vmatprep.subr.mxu0 0.0
        %5365 = vmatpush1.msra.mxu0 %v5329
        %5366 = vmatprep.subr.mxu0 0.0
        %5367 = vmatpush1.msra.mxu0 %v5328
        %5368 = vmatprep.subr.mxu0 0.0
        %5369 = vmatpush1.msra.mxu0 %v5327
        %5370 = vmatprep.subr.mxu0 0.0
        %5371 = vmatpush1.msra.mxu0 %v5326
        %5372 = vmatprep.subr.mxu0 0.0
        %5373 = vmatpush1.msra.mxu0 %v5325
        %5374 = vmatprep.subr.mxu0 0.0
        %5375 = vmatpush1.msra.mxu0 %v5324
        %5376 = vmatprep.subr.mxu0 0.0
        %5377 = vmatpush1.msra.mxu0 %v5323
        %5378 = vmatprep.subr.mxu0 0.0
        %5379 = vmatpush1.msra.mxu0 %v5322
        %5380 = vmatprep.subr.mxu0 0.0
        %5381 = vmatpush1.msra.mxu0 %v5321
        %5382 = vmatprep.subr.mxu0 0.0
        %5383 = vmatpush1.msra.mxu0 %v5320
        %5384 = vmatprep.subr.mxu0 0.0
        %5385 = vmatpush1.msra.mxu0 %v5319
        %5386 = vmatprep.subr.mxu0 0.0
        %5387 = vmatpush1.msra.mxu0 %v5318
        %5388 = vmatprep.subr.mxu0 0.0
        %5389 = vmatpush1.msra.mxu0 %v5317
        %5390 = vmatprep.subr.mxu0 0.0
        %5391 = vmatpush1.msra.mxu0 %v5316
        %5392 = vmatprep.subr.mxu0 0.0
        %5393 = vmatpush2.msra.mxu0 %v5347
        %5394 = vmatprep.subr.mxu0 0.0
        %5395 = vmatpush2.msra.mxu0 %v5346
        %5396 = vmatprep.subr.mxu0 0.0
        %5397 = vmatpush2.msra.mxu0 %v5345
        %5398 = vmatprep.subr.mxu0 0.0
        %5399 = vmatpush2.msra.mxu0 %v5344
        %5400 = vmatprep.subr.mxu0 0.0
        %5401 = vmatpush2.msra.mxu0 %v5343
        %5402 = vmatprep.subr.mxu0 0.0
        %5403 = vmatpush2.msra.mxu0 %v5342
        %5404 = vmatprep.subr.mxu0 0.0
        %5405 = vmatpush2.msra.mxu0 %v5341
        %5406 = vmatprep.subr.mxu0 0.0
        %5407 = vmatpush2.msra.mxu0 %v5340
        %5408 = vmatprep.subr.mxu0 0.0
        %5409 = vmatpush2.msra.mxu0 %v5339
        %5410 = vmatprep.subr.mxu0 0.0
        %5411 = vmatpush2.msra.mxu0 %v5338
        %5412 = vmatprep.subr.mxu0 0.0
        %5413 = vmatpush2.msra.mxu0 %v5337
        %5414 = vmatprep.subr.mxu0 0.0
        %5415 = vmatpush2.msra.mxu0 %v5336
        %5416 = vmatprep.subr.mxu0 0.0
        %5417 = vmatpush2.msra.mxu0 %v5335
        %5418 = vmatprep.subr.mxu0 0.0
        %5419 = vmatpush2.msra.mxu0 %v5334
        %5420 = vmatprep.subr.mxu0 0.0
        %5421 = vmatpush2.msra.mxu0 %v5333
        %5422 = vmatprep.subr.mxu0 0.0
        %5423 = vmatpush2.msra.mxu0 %v5332
        %5424 = vmatprep.mubr.f32.mxu0 %v5357
        %5425 = vmatmul.mubr.f32.gmra.mxu0 %v5353
        %v5426 = vpop.f32.mrf.mxu0
        %v5427 = vadd.f32 %v5348, %v5426
        %v5428 = vpop.f32.mrf.mxu0
        %5429 = vdwg.mxu0
        %vm5430 = vcmp.gt.f32.partialorder %v5427, 0.0
        %v5431 = vmul.f32 %v5427, 0.2
        %v5432 = vsel %vm5430, %v5427, %v5431
        %v5433 = vlaneseq
        %vm5434 = vcmp.ge.s32.totalorder %v5433, 0
        %vm5435 = vcmp.lt.s32.totalorder %v5433, 32
        %vm5436 = vmand %vm5434, %vm5435
        %5437 = vst.msk [vmem:[#allocation5] sm:$0x1] %vm5436, %v5432
        %v5438 = vlaneseq
        %v5439 = vshrl.u32 %v5438, 7
        %v5440 = vsub.s32 1, %v5439
        %v5441 = vrot.slane %v5312, %v5440
        %v5442 = vlaneseq
        %v5443 = vshrl.u32 %v5442, 7
        %v5444 = vsub.s32 5, %v5443
        %v5445 = vrot.slane %v5312, %v5444
        %5448 = vmatprep.subr.mxu0 0.0
        %5449 = vmatpush1.msra.mxu0 %v5331
        %5450 = vmatprep.subr.mxu0 0.0
        %5451 = vmatpush1.msra.mxu0 %v5330
        %5452 = vmatprep.subr.mxu0 0.0
        %5453 = vmatpush1.msra.mxu0 %v5329
        %5454 = vmatprep.subr.mxu0 0.0
        %5455 = vmatpush1.msra.mxu0 %v5328
        %5456 = vmatprep.subr.mxu0 0.0
        %5457 = vmatpush1.msra.mxu0 %v5327
        %5458 = vmatprep.subr.mxu0 0.0
        %5459 = vmatpush1.msra.mxu0 %v5326
        %5460 = vmatprep.subr.mxu0 0.0
        %5461 = vmatpush1.msra.mxu0 %v5325
        %5462 = vmatprep.subr.mxu0 0.0
        %5463 = vmatpush1.msra.mxu0 %v5324
        %5464 = vmatprep.subr.mxu0 0.0
        %5465 = vmatpush1.msra.mxu0 %v5323
        %5466 = vmatprep.subr.mxu0 0.0
        %5467 = vmatpush1.msra.mxu0 %v5322
        %5468 = vmatprep.subr.mxu0 0.0
        %5469 = vmatpush1.msra.mxu0 %v5321
        %5470 = vmatprep.subr.mxu0 0.0
        %5471 = vmatpush1.msra.mxu0 %v5320
        %5472 = vmatprep.subr.mxu0 0.0
        %5473 = vmatpush1.msra.mxu0 %v5319
        %5474 = vmatprep.subr.mxu0 0.0
        %5475 = vmatpush1.msra.mxu0 %v5318
        %5476 = vmatprep.subr.mxu0 0.0
        %5477 = vmatpush1.msra.mxu0 %v5317
        %5478 = vmatprep.subr.mxu0 0.0
        %5479 = vmatpush1.msra.mxu0 %v5316
        %5480 = vmatprep.subr.mxu0 0.0
        %5481 = vmatpush2.msra.mxu0 %v5347
        %5482 = vmatprep.subr.mxu0 0.0
        %5483 = vmatpush2.msra.mxu0 %v5346
        %5484 = vmatprep.subr.mxu0 0.0
        %5485 = vmatpush2.msra.mxu0 %v5345
        %5486 = vmatprep.subr.mxu0 0.0
        %5487 = vmatpush2.msra.mxu0 %v5344
        %5488 = vmatprep.subr.mxu0 0.0
        %5489 = vmatpush2.msra.mxu0 %v5343
        %5490 = vmatprep.subr.mxu0 0.0
        %5491 = vmatpush2.msra.mxu0 %v5342
        %5492 = vmatprep.subr.mxu0 0.0
        %5493 = vmatpush2.msra.mxu0 %v5341
        %5494 = vmatprep.subr.mxu0 0.0
        %5495 = vmatpush2.msra.mxu0 %v5340
        %5496 = vmatprep.subr.mxu0 0.0
        %5497 = vmatpush2.msra.mxu0 %v5339
        %5498 = vmatprep.subr.mxu0 0.0
        %5499 = vmatpush2.msra.mxu0 %v5338
        %5500 = vmatprep.subr.mxu0 0.0
        %5501 = vmatpush2.msra.mxu0 %v5337
        %5502 = vmatprep.subr.mxu0 0.0
        %5503 = vmatpush2.msra.mxu0 %v5336
        %5504 = vmatprep.subr.mxu0 0.0
        %5505 = vmatpush2.msra.mxu0 %v5335
        %5506 = vmatprep.subr.mxu0 0.0
        %5507 = vmatpush2.msra.mxu0 %v5334
        %5508 = vmatprep.subr.mxu0 0.0
        %5509 = vmatpush2.msra.mxu0 %v5333
        %5510 = vmatprep.subr.mxu0 0.0
        %5511 = vmatpush2.msra.mxu0 %v5332
        %5512 = vmatprep.mubr.f32.mxu0 %v5445
        %5513 = vmatmul.mubr.f32.gmra.mxu0 %v5441
        %v5514 = vpop.f32.mrf.mxu0
        %v5515 = vadd.f32 %v5348, %v5514
        %v5516 = vpop.f32.mrf.mxu0
        %5517 = vdwg.mxu0
        %vm5518 = vcmp.gt.f32.partialorder %v5515, 0.0
        %v5519 = vmul.f32 %v5515, 0.2
        %v5520 = vsel %vm5518, %v5515, %v5519
        %v5523 = vunpack.c.l.s4 1966171168
        %v5524 = vunpack.c.0.s8 %v5523
        %v5525 = vlaneseq
        %v5526 = vshrl.u32 %v5525, 7
        %v5527 = vsub.s32 %v5524, %v5526
        %v5528 = vrot.slane %v5520, %v5527
        %v5530 = vunpack.c.l.s4 1966171168
        %v5531 = vunpack.c.0.s8 %v5530
        %v5532 = vlaneseq
        %v5533 = vshrl.u32 %v5532, 7
        %v5534 = vsub.s32 %v5531, %v5533
        %v5535 = vrot.slane %v5528, %v5534
        %5536 = vrot.lane.b32.xlu0 %v5535, 32
        %v5537 = vpop.permute.xlu0 %5536
        %vm5539 = vcmp.ge.s32.totalorder %v5433, 32
        %vm5540 = vcmp.lt.s32.totalorder %v5433, 64
        %vm5541 = vmand %vm5539, %vm5540
        %5542 = vst.msk [vmem:[#allocation5] sm:$0x1] %vm5541, %v5537
        %v5543 = vlaneseq
        %v5544 = vshrl.u32 %v5543, 7
        %v5545 = vsub.s32 2, %v5544
        %v5546 = vrot.slane %v5312, %v5545
        %v5547 = vlaneseq
        %v5548 = vshrl.u32 %v5547, 7
        %v5549 = vsub.s32 6, %v5548
        %v5550 = vrot.slane %v5312, %v5549
        %5553 = vmatprep.subr.mxu0 0.0
        %5554 = vmatpush1.msra.mxu0 %v5331
        %5555 = vmatprep.subr.mxu0 0.0
        %5556 = vmatpush1.msra.mxu0 %v5330
        %5557 = vmatprep.subr.mxu0 0.0
        %5558 = vmatpush1.msra.mxu0 %v5329
        %5559 = vmatprep.subr.mxu0 0.0
        %5560 = vmatpush1.msra.mxu0 %v5328
        %5561 = vmatprep.subr.mxu0 0.0
        %5562 = vmatpush1.msra.mxu0 %v5327
        %5563 = vmatprep.subr.mxu0 0.0
        %5564 = vmatpush1.msra.mxu0 %v5326
        %5565 = vmatprep.subr.mxu0 0.0
        %5566 = vmatpush1.msra.mxu0 %v5325
        %5567 = vmatprep.subr.mxu0 0.0
        %5568 = vmatpush1.msra.mxu0 %v5324
        %5569 = vmatprep.subr.mxu0 0.0
        %5570 = vmatpush1.msra.mxu0 %v5323
        %5571 = vmatprep.subr.mxu0 0.0
        %5572 = vmatpush1.msra.mxu0 %v5322
        %5573 = vmatprep.subr.mxu0 0.0
        %5574 = vmatpush1.msra.mxu0 %v5321
        %5575 = vmatprep.subr.mxu0 0.0
        %5576 = vmatpush1.msra.mxu0 %v5320
        %5577 = vmatprep.subr.mxu0 0.0
        %5578 = vmatpush1.msra.mxu0 %v5319
        %5579 = vmatprep.subr.mxu0 0.0
        %5580 = vmatpush1.msra.mxu0 %v5318
        %5581 = vmatprep.subr.mxu0 0.0
        %5582 = vmatpush1.msra.mxu0 %v5317
        %5583 = vmatprep.subr.mxu0 0.0
        %5584 = vmatpush1.msra.mxu0 %v5316
        %5585 = vmatprep.subr.mxu0 0.0
        %5586 = vmatpush2.msra.mxu0 %v5347
        %5587 = vmatprep.subr.mxu0 0.0
        %5588 = vmatpush2.msra.mxu0 %v5346
        %5589 = vmatprep.subr.mxu0 0.0
        %5590 = vmatpush2.msra.mxu0 %v5345
        %5591 = vmatprep.subr.mxu0 0.0
        %5592 = vmatpush2.msra.mxu0 %v5344
        %5593 = vmatprep.subr.mxu0 0.0
        %5594 = vmatpush2.msra.mxu0 %v5343
        %5595 = vmatprep.subr.mxu0 0.0
        %5596 = vmatpush2.msra.mxu0 %v5342
        %5597 = vmatprep.subr.mxu0 0.0
        %5598 = vmatpush2.msra.mxu0 %v5341
        %5599 = vmatprep.subr.mxu0 0.0
        %5600 = vmatpush2.msra.mxu0 %v5340
        %5601 = vmatprep.subr.mxu0 0.0
        %5602 = vmatpush2.msra.mxu0 %v5339
        %5603 = vmatprep.subr.mxu0 0.0
        %5604 = vmatpush2.msra.mxu0 %v5338
        %5605 = vmatprep.subr.mxu0 0.0
        %5606 = vmatpush2.msra.mxu0 %v5337
        %5607 = vmatprep.subr.mxu0 0.0
        %5608 = vmatpush2.msra.mxu0 %v5336
        %5609 = vmatprep.subr.mxu0 0.0
        %5610 = vmatpush2.msra.mxu0 %v5335
        %5611 = vmatprep.subr.mxu0 0.0
        %5612 = vmatpush2.msra.mxu0 %v5334
        %5613 = vmatprep.subr.mxu0 0.0
        %5614 = vmatpush2.msra.mxu0 %v5333
        %5615 = vmatprep.subr.mxu0 0.0
        %5616 = vmatpush2.msra.mxu0 %v5332
        %5617 = vmatprep.mubr.f32.mxu0 %v5550
        %5618 = vmatmul.mubr.f32.gmra.mxu0 %v5546
        %v5619 = vpop.f32.mrf.mxu0
        %v5620 = vadd.f32 %v5348, %v5619
        %v5621 = vpop.f32.mrf.mxu0
        %5622 = vdwg.mxu0
        %vm5623 = vcmp.gt.f32.partialorder %v5620, 0.0
        %v5624 = vmul.f32 %v5620, 0.2
        %v5625 = vsel %vm5623, %v5620, %v5624
        %v5628 = vunpack.c.l.s4 1966171168
        %v5629 = vunpack.c.0.s8 %v5628
        %v5630 = vlaneseq
        %v5631 = vshrl.u32 %v5630, 7
        %v5632 = vsub.s32 %v5629, %v5631
        %v5633 = vrot.slane %v5625, %v5632
        %v5635 = vunpack.c.l.s4 1966171168
        %v5636 = vunpack.c.0.s8 %v5635
        %v5637 = vlaneseq
        %v5638 = vshrl.u32 %v5637, 7
        %v5639 = vsub.s32 %v5636, %v5638
        %v5640 = vrot.slane %v5633, %v5639
        %5641 = vrot.lane.b32.xlu0 %v5640, 64
        %v5642 = vpop.permute.xlu0 %5641
        %vm5644 = vcmp.ge.s32.totalorder %v5433, 64
        %vm5645 = vcmp.lt.s32.totalorder %v5433, 96
        %vm5646 = vmand %vm5644, %vm5645
        %5647 = vst.msk [vmem:[#allocation5] sm:$0x1] %vm5646, %v5642
        %v5648 = vlaneseq
        %v5649 = vshrl.u32 %v5648, 7
        %v5650 = vsub.s32 3, %v5649
        %v5651 = vrot.slane %v5312, %v5650
        %v5652 = vlaneseq
        %v5653 = vshrl.u32 %v5652, 7
        %v5654 = vsub.s32 7, %v5653
        %v5655 = vrot.slane %v5312, %v5654
        %5658 = vmatprep.subr.mxu0 0.0
        %5659 = vmatpush1.msra.mxu0 %v5331
        %5660 = vmatprep.subr.mxu0 0.0
        %5661 = vmatpush1.msra.mxu0 %v5330
        %5662 = vmatprep.subr.mxu0 0.0
        %5663 = vmatpush1.msra.mxu0 %v5329
        %5664 = vmatprep.subr.mxu0 0.0
        %5665 = vmatpush1.msra.mxu0 %v5328
        %5666 = vmatprep.subr.mxu0 0.0
        %5667 = vmatpush1.msra.mxu0 %v5327
        %5668 = vmatprep.subr.mxu0 0.0
        %5669 = vmatpush1.msra.mxu0 %v5326
        %5670 = vmatprep.subr.mxu0 0.0
        %5671 = vmatpush1.msra.mxu0 %v5325
        %5672 = vmatprep.subr.mxu0 0.0
        %5673 = vmatpush1.msra.mxu0 %v5324
        %5674 = vmatprep.subr.mxu0 0.0
        %5675 = vmatpush1.msra.mxu0 %v5323
        %5676 = vmatprep.subr.mxu0 0.0
        %5677 = vmatpush1.msra.mxu0 %v5322
        %5678 = vmatprep.subr.mxu0 0.0
        %5679 = vmatpush1.msra.mxu0 %v5321
        %5680 = vmatprep.subr.mxu0 0.0
        %5681 = vmatpush1.msra.mxu0 %v5320
        %5682 = vmatprep.subr.mxu0 0.0
        %5683 = vmatpush1.msra.mxu0 %v5319
        %5684 = vmatprep.subr.mxu0 0.0
        %5685 = vmatpush1.msra.mxu0 %v5318
        %5686 = vmatprep.subr.mxu0 0.0
        %5687 = vmatpush1.msra.mxu0 %v5317
        %5688 = vmatprep.subr.mxu0 0.0
        %5689 = vmatpush1.msra.mxu0 %v5316
        %5690 = vmatprep.subr.mxu0 0.0
        %5691 = vmatpush2.msra.mxu0 %v5347
        %5692 = vmatprep.subr.mxu0 0.0
        %5693 = vmatpush2.msra.mxu0 %v5346
        %5694 = vmatprep.subr.mxu0 0.0
        %5695 = vmatpush2.msra.mxu0 %v5345
        %5696 = vmatprep.subr.mxu0 0.0
        %5697 = vmatpush2.msra.mxu0 %v5344
        %5698 = vmatprep.subr.mxu0 0.0
        %5699 = vmatpush2.msra.mxu0 %v5343
        %5700 = vmatprep.subr.mxu0 0.0
        %5701 = vmatpush2.msra.mxu0 %v5342
        %5702 = vmatprep.subr.mxu0 0.0
        %5703 = vmatpush2.msra.mxu0 %v5341
        %5704 = vmatprep.subr.mxu0 0.0
        %5705 = vmatpush2.msra.mxu0 %v5340
        %5706 = vmatprep.subr.mxu0 0.0
        %5707 = vmatpush2.msra.mxu0 %v5339
        %5708 = vmatprep.subr.mxu0 0.0
        %5709 = vmatpush2.msra.mxu0 %v5338
        %5710 = vmatprep.subr.mxu0 0.0
        %5711 = vmatpush2.msra.mxu0 %v5337
        %5712 = vmatprep.subr.mxu0 0.0
        %5713 = vmatpush2.msra.mxu0 %v5336
        %5714 = vmatprep.subr.mxu0 0.0
        %5715 = vmatpush2.msra.mxu0 %v5335
        %5716 = vmatprep.subr.mxu0 0.0
        %5717 = vmatpush2.msra.mxu0 %v5334
        %5718 = vmatprep.subr.mxu0 0.0
        %5719 = vmatpush2.msra.mxu0 %v5333
        %5720 = vmatprep.subr.mxu0 0.0
        %5721 = vmatpush2.msra.mxu0 %v5332
        %5722 = vmatprep.mubr.f32.mxu0 %v5655
        %5723 = vmatmul.mubr.f32.gmra.mxu0 %v5651
        %v5724 = vpop.f32.mrf.mxu0
        %v5725 = vadd.f32 %v5348, %v5724
        %v5726 = vpop.f32.mrf.mxu0
        %5727 = vdwg.mxu0
        %vm5728 = vcmp.gt.f32.partialorder %v5725, 0.0
        %v5729 = vmul.f32 %v5725, 0.2
        %v5730 = vsel %vm5728, %v5725, %v5729
        %v5733 = vunpack.c.l.s4 1966171168
        %v5734 = vunpack.c.0.s8 %v5733
        %v5735 = vlaneseq
        %v5736 = vshrl.u32 %v5735, 7
        %v5737 = vsub.s32 %v5734, %v5736
        %v5738 = vrot.slane %v5730, %v5737
        %v5740 = vunpack.c.l.s4 1966171168
        %v5741 = vunpack.c.0.s8 %v5740
        %v5742 = vlaneseq
        %v5743 = vshrl.u32 %v5742, 7
        %v5744 = vsub.s32 %v5741, %v5743
        %v5745 = vrot.slane %v5738, %v5744
        %5746 = vrot.lane.b32.xlu0 %v5745, 96
        %v5747 = vpop.permute.xlu0 %5746
        %vm5749 = vcmp.ge.s32.totalorder %v5433, 96
        %vm5750 = vcmp.lt.s32.totalorder %v5433, 128
        %vm5751 = vmand %vm5749, %vm5750
        %5752 = vst.msk [vmem:[#allocation5] sm:$0x1] %vm5751, %v5747
        %v5754 = vlaneseq
        %v5755 = vshrl.u32 %v5754, 7
        %v5756 = vsub.s32 0, %v5755
        %v5757 = vrot.slane %v5313, %v5756
        %v5758 = vlaneseq
        %v5759 = vshrl.u32 %v5758, 7
        %v5760 = vsub.s32 4, %v5759
        %v5761 = vrot.slane %v5313, %v5760
        %5764 = vmatprep.subr.mxu0 0.0
        %5765 = vmatpush1.msra.mxu0 %v5331
        %5766 = vmatprep.subr.mxu0 0.0
        %5767 = vmatpush1.msra.mxu0 %v5330
        %5768 = vmatprep.subr.mxu0 0.0
        %5769 = vmatpush1.msra.mxu0 %v5329
        %5770 = vmatprep.subr.mxu0 0.0
        %5771 = vmatpush1.msra.mxu0 %v5328
        %5772 = vmatprep.subr.mxu0 0.0
        %5773 = vmatpush1.msra.mxu0 %v5327
        %5774 = vmatprep.subr.mxu0 0.0
        %5775 = vmatpush1.msra.mxu0 %v5326
        %5776 = vmatprep.subr.mxu0 0.0
        %5777 = vmatpush1.msra.mxu0 %v5325
        %5778 = vmatprep.subr.mxu0 0.0
        %5779 = vmatpush1.msra.mxu0 %v5324
        %5780 = vmatprep.subr.mxu0 0.0
        %5781 = vmatpush1.msra.mxu0 %v5323
        %5782 = vmatprep.subr.mxu0 0.0
        %5783 = vmatpush1.msra.mxu0 %v5322
        %5784 = vmatprep.subr.mxu0 0.0
        %5785 = vmatpush1.msra.mxu0 %v5321
        %5786 = vmatprep.subr.mxu0 0.0
        %5787 = vmatpush1.msra.mxu0 %v5320
        %5788 = vmatprep.subr.mxu0 0.0
        %5789 = vmatpush1.msra.mxu0 %v5319
        %5790 = vmatprep.subr.mxu0 0.0
        %5791 = vmatpush1.msra.mxu0 %v5318
        %5792 = vmatprep.subr.mxu0 0.0
        %5793 = vmatpush1.msra.mxu0 %v5317
        %5794 = vmatprep.subr.mxu0 0.0
        %5795 = vmatpush1.msra.mxu0 %v5316
        %5796 = vmatprep.subr.mxu0 0.0
        %5797 = vmatpush2.msra.mxu0 %v5347
        %5798 = vmatprep.subr.mxu0 0.0
        %5799 = vmatpush2.msra.mxu0 %v5346
        %5800 = vmatprep.subr.mxu0 0.0
        %5801 = vmatpush2.msra.mxu0 %v5345
        %5802 = vmatprep.subr.mxu0 0.0
        %5803 = vmatpush2.msra.mxu0 %v5344
        %5804 = vmatprep.subr.mxu0 0.0
        %5805 = vmatpush2.msra.mxu0 %v5343
        %5806 = vmatprep.subr.mxu0 0.0
        %5807 = vmatpush2.msra.mxu0 %v5342
        %5808 = vmatprep.subr.mxu0 0.0
        %5809 = vmatpush2.msra.mxu0 %v5341
        %5810 = vmatprep.subr.mxu0 0.0
        %5811 = vmatpush2.msra.mxu0 %v5340
        %5812 = vmatprep.subr.mxu0 0.0
        %5813 = vmatpush2.msra.mxu0 %v5339
        %5814 = vmatprep.subr.mxu0 0.0
        %5815 = vmatpush2.msra.mxu0 %v5338
        %5816 = vmatprep.subr.mxu0 0.0
        %5817 = vmatpush2.msra.mxu0 %v5337
        %5818 = vmatprep.subr.mxu0 0.0
        %5819 = vmatpush2.msra.mxu0 %v5336
        %5820 = vmatprep.subr.mxu0 0.0
        %5821 = vmatpush2.msra.mxu0 %v5335
        %5822 = vmatprep.subr.mxu0 0.0
        %5823 = vmatpush2.msra.mxu0 %v5334
        %5824 = vmatprep.subr.mxu0 0.0
        %5825 = vmatpush2.msra.mxu0 %v5333
        %5826 = vmatprep.subr.mxu0 0.0
        %5827 = vmatpush2.msra.mxu0 %v5332
        %5828 = vmatprep.mubr.f32.mxu0 %v5761
        %5829 = vmatmul.mubr.f32.gmra.mxu0 %v5757
        %v5830 = vpop.f32.mrf.mxu0
        %v5831 = vadd.f32 %v5348, %v5830
        %v5832 = vpop.f32.mrf.mxu0
        %5833 = vdwg.mxu0
        %vm5834 = vcmp.gt.f32.partialorder %v5831, 0.0
        %v5835 = vmul.f32 %v5831, 0.2
        %v5836 = vsel %vm5834, %v5831, %v5835
        %5837 = vst.msk [vmem:[#allocation5 + $0x1] sm:$0x1] %vm5436, %v5836
        %v5838 = vlaneseq
        %v5839 = vshrl.u32 %v5838, 7
        %v5840 = vsub.s32 1, %v5839
        %v5841 = vrot.slane %v5313, %v5840
        %v5842 = vlaneseq
        %v5843 = vshrl.u32 %v5842, 7
        %v5844 = vsub.s32 5, %v5843
        %v5845 = vrot.slane %v5313, %v5844
        %5848 = vmatprep.subr.mxu0 0.0
        %5849 = vmatpush1.msra.mxu0 %v5331
        %5850 = vmatprep.subr.mxu0 0.0
        %5851 = vmatpush1.msra.mxu0 %v5330
        %5852 = vmatprep.subr.mxu0 0.0
        %5853 = vmatpush1.msra.mxu0 %v5329
        %5854 = vmatprep.subr.mxu0 0.0
        %5855 = vmatpush1.msra.mxu0 %v5328
        %5856 = vmatprep.subr.mxu0 0.0
        %5857 = vmatpush1.msra.mxu0 %v5327
        %5858 = vmatprep.subr.mxu0 0.0
        %5859 = vmatpush1.msra.mxu0 %v5326
        %5860 = vmatprep.subr.mxu0 0.0
        %5861 = vmatpush1.msra.mxu0 %v5325
        %5862 = vmatprep.subr.mxu0 0.0
        %5863 = vmatpush1.msra.mxu0 %v5324
        %5864 = vmatprep.subr.mxu0 0.0
        %5865 = vmatpush1.msra.mxu0 %v5323
        %5866 = vmatprep.subr.mxu0 0.0
        %5867 = vmatpush1.msra.mxu0 %v5322
        %5868 = vmatprep.subr.mxu0 0.0
        %5869 = vmatpush1.msra.mxu0 %v5321
        %5870 = vmatprep.subr.mxu0 0.0
        %5871 = vmatpush1.msra.mxu0 %v5320
        %5872 = vmatprep.subr.mxu0 0.0
        %5873 = vmatpush1.msra.mxu0 %v5319
        %5874 = vmatprep.subr.mxu0 0.0
        %5875 = vmatpush1.msra.mxu0 %v5318
        %5876 = vmatprep.subr.mxu0 0.0
        %5877 = vmatpush1.msra.mxu0 %v5317
        %5878 = vmatprep.subr.mxu0 0.0
        %5879 = vmatpush1.msra.mxu0 %v5316
        %5880 = vmatprep.subr.mxu0 0.0
        %5881 = vmatpush2.msra.mxu0 %v5347
        %5882 = vmatprep.subr.mxu0 0.0
        %5883 = vmatpush2.msra.mxu0 %v5346
        %5884 = vmatprep.subr.mxu0 0.0
        %5885 = vmatpush2.msra.mxu0 %v5345
        %5886 = vmatprep.subr.mxu0 0.0
        %5887 = vmatpush2.msra.mxu0 %v5344
        %5888 = vmatprep.subr.mxu0 0.0
        %5889 = vmatpush2.msra.mxu0 %v5343
        %5890 = vmatprep.subr.mxu0 0.0
        %5891 = vmatpush2.msra.mxu0 %v5342
        %5892 = vmatprep.subr.mxu0 0.0
        %5893 = vmatpush2.msra.mxu0 %v5341
        %5894 = vmatprep.subr.mxu0 0.0
        %5895 = vmatpush2.msra.mxu0 %v5340
        %5896 = vmatprep.subr.mxu0 0.0
        %5897 = vmatpush2.msra.mxu0 %v5339
        %5898 = vmatprep.subr.mxu0 0.0
        %5899 = vmatpush2.msra.mxu0 %v5338
        %5900 = vmatprep.subr.mxu0 0.0
        %5901 = vmatpush2.msra.mxu0 %v5337
        %5902 = vmatprep.subr.mxu0 0.0
        %5903 = vmatpush2.msra.mxu0 %v5336
        %5904 = vmatprep.subr.mxu0 0.0
        %5905 = vmatpush2.msra.mxu0 %v5335
        %5906 = vmatprep.subr.mxu0 0.0
        %5907 = vmatpush2.msra.mxu0 %v5334
        %5908 = vmatprep.subr.mxu0 0.0
        %5909 = vmatpush2.msra.mxu0 %v5333
        %5910 = vmatprep.subr.mxu0 0.0
        %5911 = vmatpush2.msra.mxu0 %v5332
        %5912 = vmatprep.mubr.f32.mxu0 %v5845
        %5913 = vmatmul.mubr.f32.gmra.mxu0 %v5841
        %v5914 = vpop.f32.mrf.mxu0
        %v5915 = vadd.f32 %v5348, %v5914
        %v5916 = vpop.f32.mrf.mxu0
        %5917 = vdwg.mxu0
        %vm5918 = vcmp.gt.f32.partialorder %v5915, 0.0
        %v5919 = vmul.f32 %v5915, 0.2
        %v5920 = vsel %vm5918, %v5915, %v5919
        %v5923 = vunpack.c.l.s4 1966171168
        %v5924 = vunpack.c.0.s8 %v5923
        %v5925 = vlaneseq
        %v5926 = vshrl.u32 %v5925, 7
        %v5927 = vsub.s32 %v5924, %v5926
        %v5928 = vrot.slane %v5920, %v5927
        %v5930 = vunpack.c.l.s4 1966171168
        %v5931 = vunpack.c.0.s8 %v5930
        %v5932 = vlaneseq
        %v5933 = vshrl.u32 %v5932, 7
        %v5934 = vsub.s32 %v5931, %v5933
        %v5935 = vrot.slane %v5928, %v5934
        %5936 = vrot.lane.b32.xlu0 %v5935, 32
        %v5937 = vpop.permute.xlu0 %5936
        %5939 = vst.msk [vmem:[#allocation5 + $0x1] sm:$0x1] %vm5541, %v5937
        %v5940 = vlaneseq
        %v5941 = vshrl.u32 %v5940, 7
        %v5942 = vsub.s32 2, %v5941
        %v5943 = vrot.slane %v5313, %v5942
        %v5944 = vlaneseq
        %v5945 = vshrl.u32 %v5944, 7
        %v5946 = vsub.s32 6, %v5945
        %v5947 = vrot.slane %v5313, %v5946
        %5950 = vmatprep.subr.mxu0 0.0
        %5951 = vmatpush1.msra.mxu0 %v5331
        %5952 = vmatprep.subr.mxu0 0.0
        %5953 = vmatpush1.msra.mxu0 %v5330
        %5954 = vmatprep.subr.mxu0 0.0
        %5955 = vmatpush1.msra.mxu0 %v5329
        %5956 = vmatprep.subr.mxu0 0.0
        %5957 = vmatpush1.msra.mxu0 %v5328
        %5958 = vmatprep.subr.mxu0 0.0
        %5959 = vmatpush1.msra.mxu0 %v5327
        %5960 = vmatprep.subr.mxu0 0.0
        %5961 = vmatpush1.msra.mxu0 %v5326
        %5962 = vmatprep.subr.mxu0 0.0
        %5963 = vmatpush1.msra.mxu0 %v5325
        %5964 = vmatprep.subr.mxu0 0.0
        %5965 = vmatpush1.msra.mxu0 %v5324
        %5966 = vmatprep.subr.mxu0 0.0
        %5967 = vmatpush1.msra.mxu0 %v5323
        %5968 = vmatprep.subr.mxu0 0.0
        %5969 = vmatpush1.msra.mxu0 %v5322
        %5970 = vmatprep.subr.mxu0 0.0
        %5971 = vmatpush1.msra.mxu0 %v5321
        %5972 = vmatprep.subr.mxu0 0.0
        %5973 = vmatpush1.msra.mxu0 %v5320
        %5974 = vmatprep.subr.mxu0 0.0
        %5975 = vmatpush1.msra.mxu0 %v5319
        %5976 = vmatprep.subr.mxu0 0.0
        %5977 = vmatpush1.msra.mxu0 %v5318
        %5978 = vmatprep.subr.mxu0 0.0
        %5979 = vmatpush1.msra.mxu0 %v5317
        %5980 = vmatprep.subr.mxu0 0.0
        %5981 = vmatpush1.msra.mxu0 %v5316
        %5982 = vmatprep.subr.mxu0 0.0
        %5983 = vmatpush2.msra.mxu0 %v5347
        %5984 = vmatprep.subr.mxu0 0.0
        %5985 = vmatpush2.msra.mxu0 %v5346
        %5986 = vmatprep.subr.mxu0 0.0
        %5987 = vmatpush2.msra.mxu0 %v5345
        %5988 = vmatprep.subr.mxu0 0.0
        %5989 = vmatpush2.msra.mxu0 %v5344
        %5990 = vmatprep.subr.mxu0 0.0
        %5991 = vmatpush2.msra.mxu0 %v5343
        %5992 = vmatprep.subr.mxu0 0.0
        %5993 = vmatpush2.msra.mxu0 %v5342
        %5994 = vmatprep.subr.mxu0 0.0
        %5995 = vmatpush2.msra.mxu0 %v5341
        %5996 = vmatprep.subr.mxu0 0.0
        %5997 = vmatpush2.msra.mxu0 %v5340
        %5998 = vmatprep.subr.mxu0 0.0
        %5999 = vmatpush2.msra.mxu0 %v5339
        %6000 = vmatprep.subr.mxu0 0.0
        %6001 = vmatpush2.msra.mxu0 %v5338
        %6002 = vmatprep.subr.mxu0 0.0
        %6003 = vmatpush2.msra.mxu0 %v5337
        %6004 = vmatprep.subr.mxu0 0.0
        %6005 = vmatpush2.msra.mxu0 %v5336
        %6006 = vmatprep.subr.mxu0 0.0
        %6007 = vmatpush2.msra.mxu0 %v5335
        %6008 = vmatprep.subr.mxu0 0.0
        %6009 = vmatpush2.msra.mxu0 %v5334
        %6010 = vmatprep.subr.mxu0 0.0
        %6011 = vmatpush2.msra.mxu0 %v5333
        %6012 = vmatprep.subr.mxu0 0.0
        %6013 = vmatpush2.msra.mxu0 %v5332
        %6014 = vmatprep.mubr.f32.mxu0 %v5947
        %6015 = vmatmul.mubr.f32.gmra.mxu0 %v5943
        %v6016 = vpop.f32.mrf.mxu0
        %v6017 = vadd.f32 %v5348, %v6016
        %v6018 = vpop.f32.mrf.mxu0
        %6019 = vdwg.mxu0
        %vm6020 = vcmp.gt.f32.partialorder %v6017, 0.0
        %v6021 = vmul.f32 %v6017, 0.2
        %v6022 = vsel %vm6020, %v6017, %v6021
        %v6025 = vunpack.c.l.s4 1966171168
        %v6026 = vunpack.c.0.s8 %v6025
        %v6027 = vlaneseq
        %v6028 = vshrl.u32 %v6027, 7
        %v6029 = vsub.s32 %v6026, %v6028
        %v6030 = vrot.slane %v6022, %v6029
        %v6032 = vunpack.c.l.s4 1966171168
        %v6033 = vunpack.c.0.s8 %v6032
        %v6034 = vlaneseq
        %v6035 = vshrl.u32 %v6034, 7
        %v6036 = vsub.s32 %v6033, %v6035
        %v6037 = vrot.slane %v6030, %v6036
        %6038 = vrot.lane.b32.xlu0 %v6037, 64
        %v6039 = vpop.permute.xlu0 %6038
        %6041 = vst.msk [vmem:[#allocation5 + $0x1] sm:$0x1] %vm5646, %v6039
        %v6042 = vlaneseq
        %v6043 = vshrl.u32 %v6042, 7
        %v6044 = vsub.s32 3, %v6043
        %v6045 = vrot.slane %v5313, %v6044
        %v6046 = vlaneseq
        %v6047 = vshrl.u32 %v6046, 7
        %v6048 = vsub.s32 7, %v6047
        %v6049 = vrot.slane %v5313, %v6048
        %6052 = vmatprep.subr.mxu0 0.0
        %6053 = vmatpush1.msra.mxu0 %v5331
        %6054 = vmatprep.subr.mxu0 0.0
        %6055 = vmatpush1.msra.mxu0 %v5330
        %6056 = vmatprep.subr.mxu0 0.0
        %6057 = vmatpush1.msra.mxu0 %v5329
        %6058 = vmatprep.subr.mxu0 0.0
        %6059 = vmatpush1.msra.mxu0 %v5328
        %6060 = vmatprep.subr.mxu0 0.0
        %6061 = vmatpush1.msra.mxu0 %v5327
        %6062 = vmatprep.subr.mxu0 0.0
        %6063 = vmatpush1.msra.mxu0 %v5326
        %6064 = vmatprep.subr.mxu0 0.0
        %6065 = vmatpush1.msra.mxu0 %v5325
        %6066 = vmatprep.subr.mxu0 0.0
        %6067 = vmatpush1.msra.mxu0 %v5324
        %6068 = vmatprep.subr.mxu0 0.0
        %6069 = vmatpush1.msra.mxu0 %v5323
        %6070 = vmatprep.subr.mxu0 0.0
        %6071 = vmatpush1.msra.mxu0 %v5322
        %6072 = vmatprep.subr.mxu0 0.0
        %6073 = vmatpush1.msra.mxu0 %v5321
        %6074 = vmatprep.subr.mxu0 0.0
        %6075 = vmatpush1.msra.mxu0 %v5320
        %6076 = vmatprep.subr.mxu0 0.0
        %6077 = vmatpush1.msra.mxu0 %v5319
        %6078 = vmatprep.subr.mxu0 0.0
        %6079 = vmatpush1.msra.mxu0 %v5318
        %6080 = vmatprep.subr.mxu0 0.0
        %6081 = vmatpush1.msra.mxu0 %v5317
        %6082 = vmatprep.subr.mxu0 0.0
        %6083 = vmatpush1.msra.mxu0 %v5316
        %6084 = vmatprep.subr.mxu0 0.0
        %6085 = vmatpush2.msra.mxu0 %v5347
        %6086 = vmatprep.subr.mxu0 0.0
        %6087 = vmatpush2.msra.mxu0 %v5346
        %6088 = vmatprep.subr.mxu0 0.0
        %6089 = vmatpush2.msra.mxu0 %v5345
        %6090 = vmatprep.subr.mxu0 0.0
        %6091 = vmatpush2.msra.mxu0 %v5344
        %6092 = vmatprep.subr.mxu0 0.0
        %6093 = vmatpush2.msra.mxu0 %v5343
        %6094 = vmatprep.subr.mxu0 0.0
        %6095 = vmatpush2.msra.mxu0 %v5342
        %6096 = vmatprep.subr.mxu0 0.0
        %6097 = vmatpush2.msra.mxu0 %v5341
        %6098 = vmatprep.subr.mxu0 0.0
        %6099 = vmatpush2.msra.mxu0 %v5340
        %6100 = vmatprep.subr.mxu0 0.0
        %6101 = vmatpush2.msra.mxu0 %v5339
        %6102 = vmatprep.subr.mxu0 0.0
        %6103 = vmatpush2.msra.mxu0 %v5338
        %6104 = vmatprep.subr.mxu0 0.0
        %6105 = vmatpush2.msra.mxu0 %v5337
        %6106 = vmatprep.subr.mxu0 0.0
        %6107 = vmatpush2.msra.mxu0 %v5336
        %6108 = vmatprep.subr.mxu0 0.0
        %6109 = vmatpush2.msra.mxu0 %v5335
        %6110 = vmatprep.subr.mxu0 0.0
        %6111 = vmatpush2.msra.mxu0 %v5334
        %6112 = vmatprep.subr.mxu0 0.0
        %6113 = vmatpush2.msra.mxu0 %v5333
        %6114 = vmatprep.subr.mxu0 0.0
        %6115 = vmatpush2.msra.mxu0 %v5332
        %6116 = vmatprep.mubr.f32.mxu0 %v6049
        %6117 = vmatmul.mubr.f32.gmra.mxu0 %v6045
        %v6118 = vpop.f32.mrf.mxu0
        %v6119 = vadd.f32 %v5348, %v6118
        %v6120 = vpop.f32.mrf.mxu0
        %6121 = vdwg.mxu0
        %vm6122 = vcmp.gt.f32.partialorder %v6119, 0.0
        %v6123 = vmul.f32 %v6119, 0.2
        %v6124 = vsel %vm6122, %v6119, %v6123
        %v6127 = vunpack.c.l.s4 1966171168
        %v6128 = vunpack.c.0.s8 %v6127
        %v6129 = vlaneseq
        %v6130 = vshrl.u32 %v6129, 7
        %v6131 = vsub.s32 %v6128, %v6130
        %v6132 = vrot.slane %v6124, %v6131
        %v6134 = vunpack.c.l.s4 1966171168
        %v6135 = vunpack.c.0.s8 %v6134
        %v6136 = vlaneseq
        %v6137 = vshrl.u32 %v6136, 7
        %v6138 = vsub.s32 %v6135, %v6137
        %v6139 = vrot.slane %v6132, %v6138
        %6140 = vrot.lane.b32.xlu0 %v6139, 96
        %v6141 = vpop.permute.xlu0 %6140
        %6143 = vst.msk [vmem:[#allocation5 + $0x1] sm:$0x1] %vm5751, %v6141
        %v6145 = vlaneseq
        %v6146 = vshrl.u32 %v6145, 7
        %v6147 = vsub.s32 0, %v6146
        %v6148 = vrot.slane %v5314, %v6147
        %v6149 = vlaneseq
        %v6150 = vshrl.u32 %v6149, 7
        %v6151 = vsub.s32 4, %v6150
        %v6152 = vrot.slane %v5314, %v6151
        %6155 = vmatprep.subr.mxu0 0.0
        %6156 = vmatpush1.msra.mxu0 %v5331
        %6157 = vmatprep.subr.mxu0 0.0
        %6158 = vmatpush1.msra.mxu0 %v5330
        %6159 = vmatprep.subr.mxu0 0.0
        %6160 = vmatpush1.msra.mxu0 %v5329
        %6161 = vmatprep.subr.mxu0 0.0
        %6162 = vmatpush1.msra.mxu0 %v5328
        %6163 = vmatprep.subr.mxu0 0.0
        %6164 = vmatpush1.msra.mxu0 %v5327
        %6165 = vmatprep.subr.mxu0 0.0
        %6166 = vmatpush1.msra.mxu0 %v5326
        %6167 = vmatprep.subr.mxu0 0.0
        %6168 = vmatpush1.msra.mxu0 %v5325
        %6169 = vmatprep.subr.mxu0 0.0
        %6170 = vmatpush1.msra.mxu0 %v5324
        %6171 = vmatprep.subr.mxu0 0.0
        %6172 = vmatpush1.msra.mxu0 %v5323
        %6173 = vmatprep.subr.mxu0 0.0
        %6174 = vmatpush1.msra.mxu0 %v5322
        %6175 = vmatprep.subr.mxu0 0.0
        %6176 = vmatpush1.msra.mxu0 %v5321
        %6177 = vmatprep.subr.mxu0 0.0
        %6178 = vmatpush1.msra.mxu0 %v5320
        %6179 = vmatprep.subr.mxu0 0.0
        %6180 = vmatpush1.msra.mxu0 %v5319
        %6181 = vmatprep.subr.mxu0 0.0
        %6182 = vmatpush1.msra.mxu0 %v5318
        %6183 = vmatprep.subr.mxu0 0.0
        %6184 = vmatpush1.msra.mxu0 %v5317
        %6185 = vmatprep.subr.mxu0 0.0
        %6186 = vmatpush1.msra.mxu0 %v5316
        %6187 = vmatprep.subr.mxu0 0.0
        %6188 = vmatpush2.msra.mxu0 %v5347
        %6189 = vmatprep.subr.mxu0 0.0
        %6190 = vmatpush2.msra.mxu0 %v5346
        %6191 = vmatprep.subr.mxu0 0.0
        %6192 = vmatpush2.msra.mxu0 %v5345
        %6193 = vmatprep.subr.mxu0 0.0
        %6194 = vmatpush2.msra.mxu0 %v5344
        %6195 = vmatprep.subr.mxu0 0.0
        %6196 = vmatpush2.msra.mxu0 %v5343
        %6197 = vmatprep.subr.mxu0 0.0
        %6198 = vmatpush2.msra.mxu0 %v5342
        %6199 = vmatprep.subr.mxu0 0.0
        %6200 = vmatpush2.msra.mxu0 %v5341
        %6201 = vmatprep.subr.mxu0 0.0
        %6202 = vmatpush2.msra.mxu0 %v5340
        %6203 = vmatprep.subr.mxu0 0.0
        %6204 = vmatpush2.msra.mxu0 %v5339
        %6205 = vmatprep.subr.mxu0 0.0
        %6206 = vmatpush2.msra.mxu0 %v5338
        %6207 = vmatprep.subr.mxu0 0.0
        %6208 = vmatpush2.msra.mxu0 %v5337
        %6209 = vmatprep.subr.mxu0 0.0
        %6210 = vmatpush2.msra.mxu0 %v5336
        %6211 = vmatprep.subr.mxu0 0.0
        %6212 = vmatpush2.msra.mxu0 %v5335
        %6213 = vmatprep.subr.mxu0 0.0
        %6214 = vmatpush2.msra.mxu0 %v5334
        %6215 = vmatprep.subr.mxu0 0.0
        %6216 = vmatpush2.msra.mxu0 %v5333
        %6217 = vmatprep.subr.mxu0 0.0
        %6218 = vmatpush2.msra.mxu0 %v5332
        %6219 = vmatprep.mubr.f32.mxu0 %v6152
        %6220 = vmatmul.mubr.f32.gmra.mxu0 %v6148
        %v6221 = vpop.f32.mrf.mxu0
        %v6222 = vadd.f32 %v5348, %v6221
        %v6223 = vpop.f32.mrf.mxu0
        %6224 = vdwg.mxu0
        %vm6225 = vcmp.gt.f32.partialorder %v6222, 0.0
        %v6226 = vmul.f32 %v6222, 0.2
        %v6227 = vsel %vm6225, %v6222, %v6226
        %6228 = vst.msk [vmem:[#allocation5 + $0x2] sm:$0x1] %vm5436, %v6227
        %v6229 = vlaneseq
        %v6230 = vshrl.u32 %v6229, 7
        %v6231 = vsub.s32 1, %v6230
        %v6232 = vrot.slane %v5314, %v6231
        %v6233 = vlaneseq
        %v6234 = vshrl.u32 %v6233, 7
        %v6235 = vsub.s32 5, %v6234
        %v6236 = vrot.slane %v5314, %v6235
        %6239 = vmatprep.subr.mxu0 0.0
        %6240 = vmatpush1.msra.mxu0 %v5331
        %6241 = vmatprep.subr.mxu0 0.0
        %6242 = vmatpush1.msra.mxu0 %v5330
        %6243 = vmatprep.subr.mxu0 0.0
        %6244 = vmatpush1.msra.mxu0 %v5329
        %6245 = vmatprep.subr.mxu0 0.0
        %6246 = vmatpush1.msra.mxu0 %v5328
        %6247 = vmatprep.subr.mxu0 0.0
        %6248 = vmatpush1.msra.mxu0 %v5327
        %6249 = vmatprep.subr.mxu0 0.0
        %6250 = vmatpush1.msra.mxu0 %v5326
        %6251 = vmatprep.subr.mxu0 0.0
        %6252 = vmatpush1.msra.mxu0 %v5325
        %6253 = vmatprep.subr.mxu0 0.0
        %6254 = vmatpush1.msra.mxu0 %v5324
        %6255 = vmatprep.subr.mxu0 0.0
        %6256 = vmatpush1.msra.mxu0 %v5323
        %6257 = vmatprep.subr.mxu0 0.0
        %6258 = vmatpush1.msra.mxu0 %v5322
        %6259 = vmatprep.subr.mxu0 0.0
        %6260 = vmatpush1.msra.mxu0 %v5321
        %6261 = vmatprep.subr.mxu0 0.0
        %6262 = vmatpush1.msra.mxu0 %v5320
        %6263 = vmatprep.subr.mxu0 0.0
        %6264 = vmatpush1.msra.mxu0 %v5319
        %6265 = vmatprep.subr.mxu0 0.0
        %6266 = vmatpush1.msra.mxu0 %v5318
        %6267 = vmatprep.subr.mxu0 0.0
        %6268 = vmatpush1.msra.mxu0 %v5317
        %6269 = vmatprep.subr.mxu0 0.0
        %6270 = vmatpush1.msra.mxu0 %v5316
        %6271 = vmatprep.subr.mxu0 0.0
        %6272 = vmatpush2.msra.mxu0 %v5347
        %6273 = vmatprep.subr.mxu0 0.0
        %6274 = vmatpush2.msra.mxu0 %v5346
        %6275 = vmatprep.subr.mxu0 0.0
        %6276 = vmatpush2.msra.mxu0 %v5345
        %6277 = vmatprep.subr.mxu0 0.0
        %6278 = vmatpush2.msra.mxu0 %v5344
        %6279 = vmatprep.subr.mxu0 0.0
        %6280 = vmatpush2.msra.mxu0 %v5343
        %6281 = vmatprep.subr.mxu0 0.0
        %6282 = vmatpush2.msra.mxu0 %v5342
        %6283 = vmatprep.subr.mxu0 0.0
        %6284 = vmatpush2.msra.mxu0 %v5341
        %6285 = vmatprep.subr.mxu0 0.0
        %6286 = vmatpush2.msra.mxu0 %v5340
        %6287 = vmatprep.subr.mxu0 0.0
        %6288 = vmatpush2.msra.mxu0 %v5339
        %6289 = vmatprep.subr.mxu0 0.0
        %6290 = vmatpush2.msra.mxu0 %v5338
        %6291 = vmatprep.subr.mxu0 0.0
        %6292 = vmatpush2.msra.mxu0 %v5337
        %6293 = vmatprep.subr.mxu0 0.0
        %6294 = vmatpush2.msra.mxu0 %v5336
        %6295 = vmatprep.subr.mxu0 0.0
        %6296 = vmatpush2.msra.mxu0 %v5335
        %6297 = vmatprep.subr.mxu0 0.0
        %6298 = vmatpush2.msra.mxu0 %v5334
        %6299 = vmatprep.subr.mxu0 0.0
        %6300 = vmatpush2.msra.mxu0 %v5333
        %6301 = vmatprep.subr.mxu0 0.0
        %6302 = vmatpush2.msra.mxu0 %v5332
        %6303 = vmatprep.mubr.f32.mxu0 %v6236
        %6304 = vmatmul.mubr.f32.gmra.mxu0 %v6232
        %v6305 = vpop.f32.mrf.mxu0
        %v6306 = vadd.f32 %v5348, %v6305
        %v6307 = vpop.f32.mrf.mxu0
        %6308 = vdwg.mxu0
        %vm6309 = vcmp.gt.f32.partialorder %v6306, 0.0
        %v6310 = vmul.f32 %v6306, 0.2
        %v6311 = vsel %vm6309, %v6306, %v6310
        %v6314 = vunpack.c.l.s4 1966171168
        %v6315 = vunpack.c.0.s8 %v6314
        %v6316 = vlaneseq
        %v6317 = vshrl.u32 %v6316, 7
        %v6318 = vsub.s32 %v6315, %v6317
        %v6319 = vrot.slane %v6311, %v6318
        %v6321 = vunpack.c.l.s4 1966171168
        %v6322 = vunpack.c.0.s8 %v6321
        %v6323 = vlaneseq
        %v6324 = vshrl.u32 %v6323, 7
        %v6325 = vsub.s32 %v6322, %v6324
        %v6326 = vrot.slane %v6319, %v6325
        %6327 = vrot.lane.b32.xlu0 %v6326, 32
        %v6328 = vpop.permute.xlu0 %6327
        %6330 = vst.msk [vmem:[#allocation5 + $0x2] sm:$0x1] %vm5541, %v6328
        %v6331 = vlaneseq
        %v6332 = vshrl.u32 %v6331, 7
        %v6333 = vsub.s32 2, %v6332
        %v6334 = vrot.slane %v5314, %v6333
        %v6335 = vlaneseq
        %v6336 = vshrl.u32 %v6335, 7
        %v6337 = vsub.s32 6, %v6336
        %v6338 = vrot.slane %v5314, %v6337
        %6341 = vmatprep.subr.mxu0 0.0
        %6342 = vmatpush1.msra.mxu0 %v5331
        %6343 = vmatprep.subr.mxu0 0.0
        %6344 = vmatpush1.msra.mxu0 %v5330
        %6345 = vmatprep.subr.mxu0 0.0
        %6346 = vmatpush1.msra.mxu0 %v5329
        %6347 = vmatprep.subr.mxu0 0.0
        %6348 = vmatpush1.msra.mxu0 %v5328
        %6349 = vmatprep.subr.mxu0 0.0
        %6350 = vmatpush1.msra.mxu0 %v5327
        %6351 = vmatprep.subr.mxu0 0.0
        %6352 = vmatpush1.msra.mxu0 %v5326
        %6353 = vmatprep.subr.mxu0 0.0
        %6354 = vmatpush1.msra.mxu0 %v5325
        %6355 = vmatprep.subr.mxu0 0.0
        %6356 = vmatpush1.msra.mxu0 %v5324
        %6357 = vmatprep.subr.mxu0 0.0
        %6358 = vmatpush1.msra.mxu0 %v5323
        %6359 = vmatprep.subr.mxu0 0.0
        %6360 = vmatpush1.msra.mxu0 %v5322
        %6361 = vmatprep.subr.mxu0 0.0
        %6362 = vmatpush1.msra.mxu0 %v5321
        %6363 = vmatprep.subr.mxu0 0.0
        %6364 = vmatpush1.msra.mxu0 %v5320
        %6365 = vmatprep.subr.mxu0 0.0
        %6366 = vmatpush1.msra.mxu0 %v5319
        %6367 = vmatprep.subr.mxu0 0.0
        %6368 = vmatpush1.msra.mxu0 %v5318
        %6369 = vmatprep.subr.mxu0 0.0
        %6370 = vmatpush1.msra.mxu0 %v5317
        %6371 = vmatprep.subr.mxu0 0.0
        %6372 = vmatpush1.msra.mxu0 %v5316
        %6373 = vmatprep.subr.mxu0 0.0
        %6374 = vmatpush2.msra.mxu0 %v5347
        %6375 = vmatprep.subr.mxu0 0.0
        %6376 = vmatpush2.msra.mxu0 %v5346
        %6377 = vmatprep.subr.mxu0 0.0
        %6378 = vmatpush2.msra.mxu0 %v5345
        %6379 = vmatprep.subr.mxu0 0.0
        %6380 = vmatpush2.msra.mxu0 %v5344
        %6381 = vmatprep.subr.mxu0 0.0
        %6382 = vmatpush2.msra.mxu0 %v5343
        %6383 = vmatprep.subr.mxu0 0.0
        %6384 = vmatpush2.msra.mxu0 %v5342
        %6385 = vmatprep.subr.mxu0 0.0
        %6386 = vmatpush2.msra.mxu0 %v5341
        %6387 = vmatprep.subr.mxu0 0.0
        %6388 = vmatpush2.msra.mxu0 %v5340
        %6389 = vmatprep.subr.mxu0 0.0
        %6390 = vmatpush2.msra.mxu0 %v5339
        %6391 = vmatprep.subr.mxu0 0.0
        %6392 = vmatpush2.msra.mxu0 %v5338
        %6393 = vmatprep.subr.mxu0 0.0
        %6394 = vmatpush2.msra.mxu0 %v5337
        %6395 = vmatprep.subr.mxu0 0.0
        %6396 = vmatpush2.msra.mxu0 %v5336
        %6397 = vmatprep.subr.mxu0 0.0
        %6398 = vmatpush2.msra.mxu0 %v5335
        %6399 = vmatprep.subr.mxu0 0.0
        %6400 = vmatpush2.msra.mxu0 %v5334
        %6401 = vmatprep.subr.mxu0 0.0
        %6402 = vmatpush2.msra.mxu0 %v5333
        %6403 = vmatprep.subr.mxu0 0.0
        %6404 = vmatpush2.msra.mxu0 %v5332
        %6405 = vmatprep.mubr.f32.mxu0 %v6338
        %6406 = vmatmul.mubr.f32.gmra.mxu0 %v6334
        %v6407 = vpop.f32.mrf.mxu0
        %v6408 = vadd.f32 %v5348, %v6407
        %v6409 = vpop.f32.mrf.mxu0
        %6410 = vdwg.mxu0
        %vm6411 = vcmp.gt.f32.partialorder %v6408, 0.0
        %v6412 = vmul.f32 %v6408, 0.2
        %v6413 = vsel %vm6411, %v6408, %v6412
        %v6416 = vunpack.c.l.s4 1966171168
        %v6417 = vunpack.c.0.s8 %v6416
        %v6418 = vlaneseq
        %v6419 = vshrl.u32 %v6418, 7
        %v6420 = vsub.s32 %v6417, %v6419
        %v6421 = vrot.slane %v6413, %v6420
        %v6423 = vunpack.c.l.s4 1966171168
        %v6424 = vunpack.c.0.s8 %v6423
        %v6425 = vlaneseq
        %v6426 = vshrl.u32 %v6425, 7
        %v6427 = vsub.s32 %v6424, %v6426
        %v6428 = vrot.slane %v6421, %v6427
        %6429 = vrot.lane.b32.xlu0 %v6428, 64
        %v6430 = vpop.permute.xlu0 %6429
        %6432 = vst.msk [vmem:[#allocation5 + $0x2] sm:$0x1] %vm5646, %v6430
        %v6433 = vlaneseq
        %v6434 = vshrl.u32 %v6433, 7
        %v6435 = vsub.s32 3, %v6434
        %v6436 = vrot.slane %v5314, %v6435
        %v6437 = vlaneseq
        %v6438 = vshrl.u32 %v6437, 7
        %v6439 = vsub.s32 7, %v6438
        %v6440 = vrot.slane %v5314, %v6439
        %6443 = vmatprep.subr.mxu0 0.0
        %6444 = vmatpush1.msra.mxu0 %v5331
        %6445 = vmatprep.subr.mxu0 0.0
        %6446 = vmatpush1.msra.mxu0 %v5330
        %6447 = vmatprep.subr.mxu0 0.0
        %6448 = vmatpush1.msra.mxu0 %v5329
        %6449 = vmatprep.subr.mxu0 0.0
        %6450 = vmatpush1.msra.mxu0 %v5328
        %6451 = vmatprep.subr.mxu0 0.0
        %6452 = vmatpush1.msra.mxu0 %v5327
        %6453 = vmatprep.subr.mxu0 0.0
        %6454 = vmatpush1.msra.mxu0 %v5326
        %6455 = vmatprep.subr.mxu0 0.0
        %6456 = vmatpush1.msra.mxu0 %v5325
        %6457 = vmatprep.subr.mxu0 0.0
        %6458 = vmatpush1.msra.mxu0 %v5324
        %6459 = vmatprep.subr.mxu0 0.0
        %6460 = vmatpush1.msra.mxu0 %v5323
        %6461 = vmatprep.subr.mxu0 0.0
        %6462 = vmatpush1.msra.mxu0 %v5322
        %6463 = vmatprep.subr.mxu0 0.0
        %6464 = vmatpush1.msra.mxu0 %v5321
        %6465 = vmatprep.subr.mxu0 0.0
        %6466 = vmatpush1.msra.mxu0 %v5320
        %6467 = vmatprep.subr.mxu0 0.0
        %6468 = vmatpush1.msra.mxu0 %v5319
        %6469 = vmatprep.subr.mxu0 0.0
        %6470 = vmatpush1.msra.mxu0 %v5318
        %6471 = vmatprep.subr.mxu0 0.0
        %6472 = vmatpush1.msra.mxu0 %v5317
        %6473 = vmatprep.subr.mxu0 0.0
        %6474 = vmatpush1.msra.mxu0 %v5316
        %6475 = vmatprep.subr.mxu0 0.0
        %6476 = vmatpush2.msra.mxu0 %v5347
        %6477 = vmatprep.subr.mxu0 0.0
        %6478 = vmatpush2.msra.mxu0 %v5346
        %6479 = vmatprep.subr.mxu0 0.0
        %6480 = vmatpush2.msra.mxu0 %v5345
        %6481 = vmatprep.subr.mxu0 0.0
        %6482 = vmatpush2.msra.mxu0 %v5344
        %6483 = vmatprep.subr.mxu0 0.0
        %6484 = vmatpush2.msra.mxu0 %v5343
        %6485 = vmatprep.subr.mxu0 0.0
        %6486 = vmatpush2.msra.mxu0 %v5342
        %6487 = vmatprep.subr.mxu0 0.0
        %6488 = vmatpush2.msra.mxu0 %v5341
        %6489 = vmatprep.subr.mxu0 0.0
        %6490 = vmatpush2.msra.mxu0 %v5340
        %6491 = vmatprep.subr.mxu0 0.0
        %6492 = vmatpush2.msra.mxu0 %v5339
        %6493 = vmatprep.subr.mxu0 0.0
        %6494 = vmatpush2.msra.mxu0 %v5338
        %6495 = vmatprep.subr.mxu0 0.0
        %6496 = vmatpush2.msra.mxu0 %v5337
        %6497 = vmatprep.subr.mxu0 0.0
        %6498 = vmatpush2.msra.mxu0 %v5336
        %6499 = vmatprep.subr.mxu0 0.0
        %6500 = vmatpush2.msra.mxu0 %v5335
        %6501 = vmatprep.subr.mxu0 0.0
        %6502 = vmatpush2.msra.mxu0 %v5334
        %6503 = vmatprep.subr.mxu0 0.0
        %6504 = vmatpush2.msra.mxu0 %v5333
        %6505 = vmatprep.subr.mxu0 0.0
        %6506 = vmatpush2.msra.mxu0 %v5332
        %6507 = vmatprep.mubr.f32.mxu0 %v6440
        %6508 = vmatmul.mubr.f32.gmra.mxu0 %v6436
        %v6509 = vpop.f32.mrf.mxu0
        %v6510 = vadd.f32 %v5348, %v6509
        %v6511 = vpop.f32.mrf.mxu0
        %6512 = vdwg.mxu0
        %vm6513 = vcmp.gt.f32.partialorder %v6510, 0.0
        %v6514 = vmul.f32 %v6510, 0.2
        %v6515 = vsel %vm6513, %v6510, %v6514
        %v6518 = vunpack.c.l.s4 1966171168
        %v6519 = vunpack.c.0.s8 %v6518
        %v6520 = vlaneseq
        %v6521 = vshrl.u32 %v6520, 7
        %v6522 = vsub.s32 %v6519, %v6521
        %v6523 = vrot.slane %v6515, %v6522
        %v6525 = vunpack.c.l.s4 1966171168
        %v6526 = vunpack.c.0.s8 %v6525
        %v6527 = vlaneseq
        %v6528 = vshrl.u32 %v6527, 7
        %v6529 = vsub.s32 %v6526, %v6528
        %v6530 = vrot.slane %v6523, %v6529
        %6531 = vrot.lane.b32.xlu0 %v6530, 96
        %v6532 = vpop.permute.xlu0 %6531
        %6534 = vst.msk [vmem:[#allocation5 + $0x2] sm:$0x1] %vm5751, %v6532
        %v6536 = vlaneseq
        %v6537 = vshrl.u32 %v6536, 7
        %v6538 = vsub.s32 0, %v6537
        %v6539 = vrot.slane %v5315, %v6538
        %v6540 = vlaneseq
        %v6541 = vshrl.u32 %v6540, 7
        %v6542 = vsub.s32 4, %v6541
        %v6543 = vrot.slane %v5315, %v6542
        %6546 = vmatprep.subr.mxu0 0.0
        %6547 = vmatpush1.msra.mxu0 %v5331
        %6548 = vmatprep.subr.mxu0 0.0
        %6549 = vmatpush1.msra.mxu0 %v5330
        %6550 = vmatprep.subr.mxu0 0.0
        %6551 = vmatpush1.msra.mxu0 %v5329
        %6552 = vmatprep.subr.mxu0 0.0
        %6553 = vmatpush1.msra.mxu0 %v5328
        %6554 = vmatprep.subr.mxu0 0.0
        %6555 = vmatpush1.msra.mxu0 %v5327
        %6556 = vmatprep.subr.mxu0 0.0
        %6557 = vmatpush1.msra.mxu0 %v5326
        %6558 = vmatprep.subr.mxu0 0.0
        %6559 = vmatpush1.msra.mxu0 %v5325
        %6560 = vmatprep.subr.mxu0 0.0
        %6561 = vmatpush1.msra.mxu0 %v5324
        %6562 = vmatprep.subr.mxu0 0.0
        %6563 = vmatpush1.msra.mxu0 %v5323
        %6564 = vmatprep.subr.mxu0 0.0
        %6565 = vmatpush1.msra.mxu0 %v5322
        %6566 = vmatprep.subr.mxu0 0.0
        %6567 = vmatpush1.msra.mxu0 %v5321
        %6568 = vmatprep.subr.mxu0 0.0
        %6569 = vmatpush1.msra.mxu0 %v5320
        %6570 = vmatprep.subr.mxu0 0.0
        %6571 = vmatpush1.msra.mxu0 %v5319
        %6572 = vmatprep.subr.mxu0 0.0
        %6573 = vmatpush1.msra.mxu0 %v5318
        %6574 = vmatprep.subr.mxu0 0.0
        %6575 = vmatpush1.msra.mxu0 %v5317
        %6576 = vmatprep.subr.mxu0 0.0
        %6577 = vmatpush1.msra.mxu0 %v5316
        %6578 = vmatprep.subr.mxu0 0.0
        %6579 = vmatpush2.msra.mxu0 %v5347
        %6580 = vmatprep.subr.mxu0 0.0
        %6581 = vmatpush2.msra.mxu0 %v5346
        %6582 = vmatprep.subr.mxu0 0.0
        %6583 = vmatpush2.msra.mxu0 %v5345
        %6584 = vmatprep.subr.mxu0 0.0
        %6585 = vmatpush2.msra.mxu0 %v5344
        %6586 = vmatprep.subr.mxu0 0.0
        %6587 = vmatpush2.msra.mxu0 %v5343
        %6588 = vmatprep.subr.mxu0 0.0
        %6589 = vmatpush2.msra.mxu0 %v5342
        %6590 = vmatprep.subr.mxu0 0.0
        %6591 = vmatpush2.msra.mxu0 %v5341
        %6592 = vmatprep.subr.mxu0 0.0
        %6593 = vmatpush2.msra.mxu0 %v5340
        %6594 = vmatprep.subr.mxu0 0.0
        %6595 = vmatpush2.msra.mxu0 %v5339
        %6596 = vmatprep.subr.mxu0 0.0
        %6597 = vmatpush2.msra.mxu0 %v5338
        %6598 = vmatprep.subr.mxu0 0.0
        %6599 = vmatpush2.msra.mxu0 %v5337
        %6600 = vmatprep.subr.mxu0 0.0
        %6601 = vmatpush2.msra.mxu0 %v5336
        %6602 = vmatprep.subr.mxu0 0.0
        %6603 = vmatpush2.msra.mxu0 %v5335
        %6604 = vmatprep.subr.mxu0 0.0
        %6605 = vmatpush2.msra.mxu0 %v5334
        %6606 = vmatprep.subr.mxu0 0.0
        %6607 = vmatpush2.msra.mxu0 %v5333
        %6608 = vmatprep.subr.mxu0 0.0
        %6609 = vmatpush2.msra.mxu0 %v5332
        %6610 = vmatprep.mubr.f32.mxu0 %v6543
        %6611 = vmatmul.mubr.f32.gmra.mxu0 %v6539
        %v6612 = vpop.f32.mrf.mxu0
        %v6613 = vadd.f32 %v5348, %v6612
        %v6614 = vpop.f32.mrf.mxu0
        %6615 = vdwg.mxu0
        %vm6616 = vcmp.gt.f32.partialorder %v6613, 0.0
        %v6617 = vmul.f32 %v6613, 0.2
        %v6618 = vsel %vm6616, %v6613, %v6617
        %6619 = vst.msk [vmem:[#allocation5 + $0x3] sm:$0x1] %vm5436, %v6618
        %v6620 = vlaneseq
        %v6621 = vshrl.u32 %v6620, 7
        %v6622 = vsub.s32 1, %v6621
        %v6623 = vrot.slane %v5315, %v6622
        %v6624 = vlaneseq
        %v6625 = vshrl.u32 %v6624, 7
        %v6626 = vsub.s32 5, %v6625
        %v6627 = vrot.slane %v5315, %v6626
        %6630 = vmatprep.subr.mxu0 0.0
        %6631 = vmatpush1.msra.mxu0 %v5331
        %6632 = vmatprep.subr.mxu0 0.0
        %6633 = vmatpush1.msra.mxu0 %v5330
        %6634 = vmatprep.subr.mxu0 0.0
        %6635 = vmatpush1.msra.mxu0 %v5329
        %6636 = vmatprep.subr.mxu0 0.0
        %6637 = vmatpush1.msra.mxu0 %v5328
        %6638 = vmatprep.subr.mxu0 0.0
        %6639 = vmatpush1.msra.mxu0 %v5327
        %6640 = vmatprep.subr.mxu0 0.0
        %6641 = vmatpush1.msra.mxu0 %v5326
        %6642 = vmatprep.subr.mxu0 0.0
        %6643 = vmatpush1.msra.mxu0 %v5325
        %6644 = vmatprep.subr.mxu0 0.0
        %6645 = vmatpush1.msra.mxu0 %v5324
        %6646 = vmatprep.subr.mxu0 0.0
        %6647 = vmatpush1.msra.mxu0 %v5323
        %6648 = vmatprep.subr.mxu0 0.0
        %6649 = vmatpush1.msra.mxu0 %v5322
        %6650 = vmatprep.subr.mxu0 0.0
        %6651 = vmatpush1.msra.mxu0 %v5321
        %6652 = vmatprep.subr.mxu0 0.0
        %6653 = vmatpush1.msra.mxu0 %v5320
        %6654 = vmatprep.subr.mxu0 0.0
        %6655 = vmatpush1.msra.mxu0 %v5319
        %6656 = vmatprep.subr.mxu0 0.0
        %6657 = vmatpush1.msra.mxu0 %v5318
        %6658 = vmatprep.subr.mxu0 0.0
        %6659 = vmatpush1.msra.mxu0 %v5317
        %6660 = vmatprep.subr.mxu0 0.0
        %6661 = vmatpush1.msra.mxu0 %v5316
        %6662 = vmatprep.subr.mxu0 0.0
        %6663 = vmatpush2.msra.mxu0 %v5347
        %6664 = vmatprep.subr.mxu0 0.0
        %6665 = vmatpush2.msra.mxu0 %v5346
        %6666 = vmatprep.subr.mxu0 0.0
        %6667 = vmatpush2.msra.mxu0 %v5345
        %6668 = vmatprep.subr.mxu0 0.0
        %6669 = vmatpush2.msra.mxu0 %v5344
        %6670 = vmatprep.subr.mxu0 0.0
        %6671 = vmatpush2.msra.mxu0 %v5343
        %6672 = vmatprep.subr.mxu0 0.0
        %6673 = vmatpush2.msra.mxu0 %v5342
        %6674 = vmatprep.subr.mxu0 0.0
        %6675 = vmatpush2.msra.mxu0 %v5341
        %6676 = vmatprep.subr.mxu0 0.0
        %6677 = vmatpush2.msra.mxu0 %v5340
        %6678 = vmatprep.subr.mxu0 0.0
        %6679 = vmatpush2.msra.mxu0 %v5339
        %6680 = vmatprep.subr.mxu0 0.0
        %6681 = vmatpush2.msra.mxu0 %v5338
        %6682 = vmatprep.subr.mxu0 0.0
        %6683 = vmatpush2.msra.mxu0 %v5337
        %6684 = vmatprep.subr.mxu0 0.0
        %6685 = vmatpush2.msra.mxu0 %v5336
        %6686 = vmatprep.subr.mxu0 0.0
        %6687 = vmatpush2.msra.mxu0 %v5335
        %6688 = vmatprep.subr.mxu0 0.0
        %6689 = vmatpush2.msra.mxu0 %v5334
        %6690 = vmatprep.subr.mxu0 0.0
        %6691 = vmatpush2.msra.mxu0 %v5333
        %6692 = vmatprep.subr.mxu0 0.0
        %6693 = vmatpush2.msra.mxu0 %v5332
        %6694 = vmatprep.mubr.f32.mxu0 %v6627
        %6695 = vmatmul.mubr.f32.gmra.mxu0 %v6623
        %v6696 = vpop.f32.mrf.mxu0
        %v6697 = vadd.f32 %v5348, %v6696
        %v6698 = vpop.f32.mrf.mxu0
        %6699 = vdwg.mxu0
        %vm6700 = vcmp.gt.f32.partialorder %v6697, 0.0
        %v6701 = vmul.f32 %v6697, 0.2
        %v6702 = vsel %vm6700, %v6697, %v6701
        %v6705 = vunpack.c.l.s4 1966171168
        %v6706 = vunpack.c.0.s8 %v6705
        %v6707 = vlaneseq
        %v6708 = vshrl.u32 %v6707, 7
        %v6709 = vsub.s32 %v6706, %v6708
        %v6710 = vrot.slane %v6702, %v6709
        %v6712 = vunpack.c.l.s4 1966171168
        %v6713 = vunpack.c.0.s8 %v6712
        %v6714 = vlaneseq
        %v6715 = vshrl.u32 %v6714, 7
        %v6716 = vsub.s32 %v6713, %v6715
        %v6717 = vrot.slane %v6710, %v6716
        %6718 = vrot.lane.b32.xlu0 %v6717, 32
        %v6719 = vpop.permute.xlu0 %6718
        %6721 = vst.msk [vmem:[#allocation5 + $0x3] sm:$0x1] %vm5541, %v6719
        %v6722 = vlaneseq
        %v6723 = vshrl.u32 %v6722, 7
        %v6724 = vsub.s32 2, %v6723
        %v6725 = vrot.slane %v5315, %v6724
        %v6726 = vlaneseq
        %v6727 = vshrl.u32 %v6726, 7
        %v6728 = vsub.s32 6, %v6727
        %v6729 = vrot.slane %v5315, %v6728
        %6732 = vmatprep.subr.mxu0 0.0
        %6733 = vmatpush1.msra.mxu0 %v5331
        %6734 = vmatprep.subr.mxu0 0.0
        %6735 = vmatpush1.msra.mxu0 %v5330
        %6736 = vmatprep.subr.mxu0 0.0
        %6737 = vmatpush1.msra.mxu0 %v5329
        %6738 = vmatprep.subr.mxu0 0.0
        %6739 = vmatpush1.msra.mxu0 %v5328
        %6740 = vmatprep.subr.mxu0 0.0
        %6741 = vmatpush1.msra.mxu0 %v5327
        %6742 = vmatprep.subr.mxu0 0.0
        %6743 = vmatpush1.msra.mxu0 %v5326
        %6744 = vmatprep.subr.mxu0 0.0
        %6745 = vmatpush1.msra.mxu0 %v5325
        %6746 = vmatprep.subr.mxu0 0.0
        %6747 = vmatpush1.msra.mxu0 %v5324
        %6748 = vmatprep.subr.mxu0 0.0
        %6749 = vmatpush1.msra.mxu0 %v5323
        %6750 = vmatprep.subr.mxu0 0.0
        %6751 = vmatpush1.msra.mxu0 %v5322
        %6752 = vmatprep.subr.mxu0 0.0
        %6753 = vmatpush1.msra.mxu0 %v5321
        %6754 = vmatprep.subr.mxu0 0.0
        %6755 = vmatpush1.msra.mxu0 %v5320
        %6756 = vmatprep.subr.mxu0 0.0
        %6757 = vmatpush1.msra.mxu0 %v5319
        %6758 = vmatprep.subr.mxu0 0.0
        %6759 = vmatpush1.msra.mxu0 %v5318
        %6760 = vmatprep.subr.mxu0 0.0
        %6761 = vmatpush1.msra.mxu0 %v5317
        %6762 = vmatprep.subr.mxu0 0.0
        %6763 = vmatpush1.msra.mxu0 %v5316
        %6764 = vmatprep.subr.mxu0 0.0
        %6765 = vmatpush2.msra.mxu0 %v5347
        %6766 = vmatprep.subr.mxu0 0.0
        %6767 = vmatpush2.msra.mxu0 %v5346
        %6768 = vmatprep.subr.mxu0 0.0
        %6769 = vmatpush2.msra.mxu0 %v5345
        %6770 = vmatprep.subr.mxu0 0.0
        %6771 = vmatpush2.msra.mxu0 %v5344
        %6772 = vmatprep.subr.mxu0 0.0
        %6773 = vmatpush2.msra.mxu0 %v5343
        %6774 = vmatprep.subr.mxu0 0.0
        %6775 = vmatpush2.msra.mxu0 %v5342
        %6776 = vmatprep.subr.mxu0 0.0
        %6777 = vmatpush2.msra.mxu0 %v5341
        %6778 = vmatprep.subr.mxu0 0.0
        %6779 = vmatpush2.msra.mxu0 %v5340
        %6780 = vmatprep.subr.mxu0 0.0
        %6781 = vmatpush2.msra.mxu0 %v5339
        %6782 = vmatprep.subr.mxu0 0.0
        %6783 = vmatpush2.msra.mxu0 %v5338
        %6784 = vmatprep.subr.mxu0 0.0
        %6785 = vmatpush2.msra.mxu0 %v5337
        %6786 = vmatprep.subr.mxu0 0.0
        %6787 = vmatpush2.msra.mxu0 %v5336
        %6788 = vmatprep.subr.mxu0 0.0
        %6789 = vmatpush2.msra.mxu0 %v5335
        %6790 = vmatprep.subr.mxu0 0.0
        %6791 = vmatpush2.msra.mxu0 %v5334
        %6792 = vmatprep.subr.mxu0 0.0
        %6793 = vmatpush2.msra.mxu0 %v5333
        %6794 = vmatprep.subr.mxu0 0.0
        %6795 = vmatpush2.msra.mxu0 %v5332
        %6796 = vmatprep.mubr.f32.mxu0 %v6729
        %6797 = vmatmul.mubr.f32.gmra.mxu0 %v6725
        %v6798 = vpop.f32.mrf.mxu0
        %v6799 = vadd.f32 %v5348, %v6798
        %v6800 = vpop.f32.mrf.mxu0
        %6801 = vdwg.mxu0
        %vm6802 = vcmp.gt.f32.partialorder %v6799, 0.0
        %v6803 = vmul.f32 %v6799, 0.2
        %v6804 = vsel %vm6802, %v6799, %v6803
        %v6807 = vunpack.c.l.s4 1966171168
        %v6808 = vunpack.c.0.s8 %v6807
        %v6809 = vlaneseq
        %v6810 = vshrl.u32 %v6809, 7
        %v6811 = vsub.s32 %v6808, %v6810
        %v6812 = vrot.slane %v6804, %v6811
        %v6814 = vunpack.c.l.s4 1966171168
        %v6815 = vunpack.c.0.s8 %v6814
        %v6816 = vlaneseq
        %v6817 = vshrl.u32 %v6816, 7
        %v6818 = vsub.s32 %v6815, %v6817
        %v6819 = vrot.slane %v6812, %v6818
        %6820 = vrot.lane.b32.xlu0 %v6819, 64
        %v6821 = vpop.permute.xlu0 %6820
        %6823 = vst.msk [vmem:[#allocation5 + $0x3] sm:$0x1] %vm5646, %v6821
        %v6824 = vlaneseq
        %v6825 = vshrl.u32 %v6824, 7
        %v6826 = vsub.s32 3, %v6825
        %v6827 = vrot.slane %v5315, %v6826
        %v6828 = vlaneseq
        %v6829 = vshrl.u32 %v6828, 7
        %v6830 = vsub.s32 7, %v6829
        %v6831 = vrot.slane %v5315, %v6830
        %6834 = vmatprep.subr.mxu0 0.0
        %6835 = vmatpush1.msra.mxu0 %v5331
        %6836 = vmatprep.subr.mxu0 0.0
        %6837 = vmatpush1.msra.mxu0 %v5330
        %6838 = vmatprep.subr.mxu0 0.0
        %6839 = vmatpush1.msra.mxu0 %v5329
        %6840 = vmatprep.subr.mxu0 0.0
        %6841 = vmatpush1.msra.mxu0 %v5328
        %6842 = vmatprep.subr.mxu0 0.0
        %6843 = vmatpush1.msra.mxu0 %v5327
        %6844 = vmatprep.subr.mxu0 0.0
        %6845 = vmatpush1.msra.mxu0 %v5326
        %6846 = vmatprep.subr.mxu0 0.0
        %6847 = vmatpush1.msra.mxu0 %v5325
        %6848 = vmatprep.subr.mxu0 0.0
        %6849 = vmatpush1.msra.mxu0 %v5324
        %6850 = vmatprep.subr.mxu0 0.0
        %6851 = vmatpush1.msra.mxu0 %v5323
        %6852 = vmatprep.subr.mxu0 0.0
        %6853 = vmatpush1.msra.mxu0 %v5322
        %6854 = vmatprep.subr.mxu0 0.0
        %6855 = vmatpush1.msra.mxu0 %v5321
        %6856 = vmatprep.subr.mxu0 0.0
        %6857 = vmatpush1.msra.mxu0 %v5320
        %6858 = vmatprep.subr.mxu0 0.0
        %6859 = vmatpush1.msra.mxu0 %v5319
        %6860 = vmatprep.subr.mxu0 0.0
        %6861 = vmatpush1.msra.mxu0 %v5318
        %6862 = vmatprep.subr.mxu0 0.0
        %6863 = vmatpush1.msra.mxu0 %v5317
        %6864 = vmatprep.subr.mxu0 0.0
        %6865 = vmatpush1.msra.mxu0 %v5316
        %6866 = vmatprep.subr.mxu0 0.0
        %6867 = vmatpush2.msra.mxu0 %v5347
        %6868 = vmatprep.subr.mxu0 0.0
        %6869 = vmatpush2.msra.mxu0 %v5346
        %6870 = vmatprep.subr.mxu0 0.0
        %6871 = vmatpush2.msra.mxu0 %v5345
        %6872 = vmatprep.subr.mxu0 0.0
        %6873 = vmatpush2.msra.mxu0 %v5344
        %6874 = vmatprep.subr.mxu0 0.0
        %6875 = vmatpush2.msra.mxu0 %v5343
        %6876 = vmatprep.subr.mxu0 0.0
        %6877 = vmatpush2.msra.mxu0 %v5342
        %6878 = vmatprep.subr.mxu0 0.0
        %6879 = vmatpush2.msra.mxu0 %v5341
        %6880 = vmatprep.subr.mxu0 0.0
        %6881 = vmatpush2.msra.mxu0 %v5340
        %6882 = vmatprep.subr.mxu0 0.0
        %6883 = vmatpush2.msra.mxu0 %v5339
        %6884 = vmatprep.subr.mxu0 0.0
        %6885 = vmatpush2.msra.mxu0 %v5338
        %6886 = vmatprep.subr.mxu0 0.0
        %6887 = vmatpush2.msra.mxu0 %v5337
        %6888 = vmatprep.subr.mxu0 0.0
        %6889 = vmatpush2.msra.mxu0 %v5336
        %6890 = vmatprep.subr.mxu0 0.0
        %6891 = vmatpush2.msra.mxu0 %v5335
        %6892 = vmatprep.subr.mxu0 0.0
        %6893 = vmatpush2.msra.mxu0 %v5334
        %6894 = vmatprep.subr.mxu0 0.0
        %6895 = vmatpush2.msra.mxu0 %v5333
        %6896 = vmatprep.subr.mxu0 0.0
        %6897 = vmatpush2.msra.mxu0 %v5332
        %6898 = vmatprep.mubr.f32.mxu0 %v6831
        %6899 = vmatmul.mubr.f32.gmra.mxu0 %v6827
        %v6900 = vpop.f32.mrf.mxu0
        %v6901 = vadd.f32 %v5348, %v6900
        %v6902 = vpop.f32.mrf.mxu0
        %6903 = vdwg.mxu0
        %vm6904 = vcmp.gt.f32.partialorder %v6901, 0.0
        %v6905 = vmul.f32 %v6901, 0.2
        %v6906 = vsel %vm6904, %v6901, %v6905
        %v6909 = vunpack.c.l.s4 1966171168
        %v6910 = vunpack.c.0.s8 %v6909
        %v6911 = vlaneseq
        %v6912 = vshrl.u32 %v6911, 7
        %v6913 = vsub.s32 %v6910, %v6912
        %v6914 = vrot.slane %v6906, %v6913
        %v6916 = vunpack.c.l.s4 1966171168
        %v6917 = vunpack.c.0.s8 %v6916
        %v6918 = vlaneseq
        %v6919 = vshrl.u32 %v6918, 7
        %v6920 = vsub.s32 %v6917, %v6919
        %v6921 = vrot.slane %v6914, %v6920
        %6922 = vrot.lane.b32.xlu0 %v6921, 96
        %v6923 = vpop.permute.xlu0 %6922
        %6925 = vst.msk [vmem:[#allocation5 + $0x3] sm:$0x1] %vm5751, %v6923
        %v6926 = vld [vmem:[#allocation5] sm:$0xf]
        %v6927 = vld [vmem:[%s10] sm:$0xff]
        %v6928 = vld [vmem:[%s10 + $0x8] sm:$0xff]
        %v6929 = vld [vmem:[%s10 + $0x10] sm:$0xff]
        %v6930 = vld [vmem:[%s10 + $0x18] sm:$0xff]
        %v6931 = vld [vmem:[%s10 + $0x20] sm:$0xff]
        %v6932 = vld [vmem:[%s10 + $0x28] sm:$0xff]
        %v6933 = vld [vmem:[%s10 + $0x30] sm:$0xff]
        %v6934 = vld [vmem:[%s10 + $0x38] sm:$0xff]
        %v6935 = vld [vmem:[%s10 + $0x40] sm:$0xff]
        %v6936 = vld [vmem:[%s10 + $0x48] sm:$0xff]
        %v6937 = vld [vmem:[%s10 + $0x50] sm:$0xff]
        %v6938 = vld [vmem:[%s10 + $0x58] sm:$0xff]
        %v6939 = vld [vmem:[%s10 + $0x60] sm:$0xff]
        %v6940 = vld [vmem:[%s10 + $0x68] sm:$0xff]
        %v6941 = vld [vmem:[%s10 + $0x70] sm:$0xff]
        %v6942 = vld [vmem:[%s10 + $0x78] sm:$0xff]
        %v6943 = vld [vmem:[%s10 + $0x80] sm:$0xff]
        %v6944 = vld [vmem:[%s10 + $0x88] sm:$0xff]
        %v6945 = vld [vmem:[%s10 + $0x90] sm:$0xff]
        %v6946 = vld [vmem:[%s10 + $0x98] sm:$0xff]
        %v6947 = vld [vmem:[%s10 + $0xa0] sm:$0xff]
        %v6948 = vld [vmem:[%s10 + $0xa8] sm:$0xff]
        %v6949 = vld [vmem:[%s10 + $0xb0] sm:$0xff]
        %v6950 = vld [vmem:[%s10 + $0xb8] sm:$0xff]
        %v6951 = vld [vmem:[%s10 + $0xc0] sm:$0xff]
        %v6952 = vld [vmem:[%s10 + $0xc8] sm:$0xff]
        %v6953 = vld [vmem:[%s10 + $0xd0] sm:$0xff]
        %v6954 = vld [vmem:[%s10 + $0xd8] sm:$0xff]
        %v6955 = vld [vmem:[%s10 + $0xe0] sm:$0xff]
        %v6956 = vld [vmem:[%s10 + $0xe8] sm:$0xff]
        %v6957 = vld [vmem:[%s10 + $0xf0] sm:$0xff]
        %v6958 = vld [vmem:[%s10 + $0xf8] sm:$0xff]
        %v6959 = vld [vmem:[%s10 + $0x100] sm:$0xff]
        %v6960 = vld [vmem:[%s10 + $0x108] sm:$0xff]
        %v6961 = vld [vmem:[%s10 + $0x110] sm:$0xff]
        %v6962 = vld [vmem:[%s10 + $0x118] sm:$0xff]
        %v6963 = vld [vmem:[%s10 + $0x120] sm:$0xff]
        %v6964 = vld [vmem:[%s10 + $0x128] sm:$0xff]
        %v6965 = vld [vmem:[%s10 + $0x130] sm:$0xff]
        %v6966 = vld [vmem:[%s10 + $0x138] sm:$0xff]
        %v6967 = vld [vmem:[%s10 + $0x140] sm:$0xff]
        %v6968 = vld [vmem:[%s10 + $0x148] sm:$0xff]
        %v6969 = vld [vmem:[%s10 + $0x150] sm:$0xff]
        %v6970 = vld [vmem:[%s10 + $0x158] sm:$0xff]
        %v6971 = vld [vmem:[%s10 + $0x160] sm:$0xff]
        %v6972 = vld [vmem:[%s10 + $0x168] sm:$0xff]
        %v6973 = vld [vmem:[%s10 + $0x170] sm:$0xff]
        %v6974 = vld [vmem:[%s10 + $0x178] sm:$0xff]
        %v6975 = vld [vmem:[%s10 + $0x180] sm:$0xff]
        %v6976 = vld [vmem:[%s10 + $0x188] sm:$0xff]
        %v6977 = vld [vmem:[%s10 + $0x190] sm:$0xff]
        %v6978 = vld [vmem:[%s10 + $0x198] sm:$0xff]
        %v6979 = vld [vmem:[%s10 + $0x1a0] sm:$0xff]
        %v6980 = vld [vmem:[%s10 + $0x1a8] sm:$0xff]
        %v6981 = vld [vmem:[%s10 + $0x1b0] sm:$0xff]
        %v6982 = vld [vmem:[%s10 + $0x1b8] sm:$0xff]
        %v6983 = vld [vmem:[%s10 + $0x1c0] sm:$0xff]
        %v6984 = vld [vmem:[%s10 + $0x1c8] sm:$0xff]
        %v6985 = vld [vmem:[%s10 + $0x1d0] sm:$0xff]
        %v6986 = vld [vmem:[%s10 + $0x1d8] sm:$0xff]
        %v6987 = vld [vmem:[%s10 + $0x1e0] sm:$0xff]
        %v6988 = vld [vmem:[%s10 + $0x1e8] sm:$0xff]
        %v6989 = vld [vmem:[%s10 + $0x1f0] sm:$0xff]
        %v6990 = vld [vmem:[%s10 + $0x1f8] sm:$0xff]
        %v6991 = vld [vmem:[%s11] sm:$0x1]
        %v6993 = vlaneseq
        %v6994 = vshrl.u32 %v6993, 7
        %v6995 = vsub.s32 0, %v6994
        %v6996 = vrot.slane %v6926, %v6995
        %v6997 = vlaneseq
        %v6998 = vshrl.u32 %v6997, 7
        %v6999 = vsub.s32 1, %v6998
        %v7000 = vrot.slane %v6926, %v6999
        %v7001 = vlaneseq
        %v7002 = vshrl.u32 %v7001, 7
        %v7003 = vsub.s32 2, %v7002
        %v7004 = vrot.slane %v6926, %v7003
        %v7005 = vlaneseq
        %v7006 = vshrl.u32 %v7005, 7
        %v7007 = vsub.s32 3, %v7006
        %v7008 = vrot.slane %v6926, %v7007
        %7013 = vmatprep.subr.mxu0 0.0
        %7014 = vmatpush1.msra.mxu0 %v6942
        %7015 = vmatprep.subr.mxu0 0.0
        %7016 = vmatpush1.msra.mxu0 %v6941
        %7017 = vmatprep.subr.mxu0 0.0
        %7018 = vmatpush1.msra.mxu0 %v6940
        %7019 = vmatprep.subr.mxu0 0.0
        %7020 = vmatpush1.msra.mxu0 %v6939
        %7021 = vmatprep.subr.mxu0 0.0
        %7022 = vmatpush1.msra.mxu0 %v6938
        %7023 = vmatprep.subr.mxu0 0.0
        %7024 = vmatpush1.msra.mxu0 %v6937
        %7025 = vmatprep.subr.mxu0 0.0
        %7026 = vmatpush1.msra.mxu0 %v6936
        %7027 = vmatprep.subr.mxu0 0.0
        %7028 = vmatpush1.msra.mxu0 %v6935
        %7029 = vmatprep.subr.mxu0 0.0
        %7030 = vmatpush1.msra.mxu0 %v6934
        %7031 = vmatprep.subr.mxu0 0.0
        %7032 = vmatpush1.msra.mxu0 %v6933
        %7033 = vmatprep.subr.mxu0 0.0
        %7034 = vmatpush1.msra.mxu0 %v6932
        %7035 = vmatprep.subr.mxu0 0.0
        %7036 = vmatpush1.msra.mxu0 %v6931
        %7037 = vmatprep.subr.mxu0 0.0
        %7038 = vmatpush1.msra.mxu0 %v6930
        %7039 = vmatprep.subr.mxu0 0.0
        %7040 = vmatpush1.msra.mxu0 %v6929
        %7041 = vmatprep.subr.mxu0 0.0
        %7042 = vmatpush1.msra.mxu0 %v6928
        %7043 = vmatprep.subr.mxu0 0.0
        %7044 = vmatpush1.msra.mxu0 %v6927
        %7045 = vmatprep.subr.mxu0 0.0
        %7046 = vmatpush2.msra.mxu0 %v6958
        %7047 = vmatprep.subr.mxu0 0.0
        %7048 = vmatpush2.msra.mxu0 %v6957
        %7049 = vmatprep.subr.mxu0 0.0
        %7050 = vmatpush2.msra.mxu0 %v6956
        %7051 = vmatprep.subr.mxu0 0.0
        %7052 = vmatpush2.msra.mxu0 %v6955
        %7053 = vmatprep.subr.mxu0 0.0
        %7054 = vmatpush2.msra.mxu0 %v6954
        %7055 = vmatprep.subr.mxu0 0.0
        %7056 = vmatpush2.msra.mxu0 %v6953
        %7057 = vmatprep.subr.mxu0 0.0
        %7058 = vmatpush2.msra.mxu0 %v6952
        %7059 = vmatprep.subr.mxu0 0.0
        %7060 = vmatpush2.msra.mxu0 %v6951
        %7061 = vmatprep.subr.mxu0 0.0
        %7062 = vmatpush2.msra.mxu0 %v6950
        %7063 = vmatprep.subr.mxu0 0.0
        %7064 = vmatpush2.msra.mxu0 %v6949
        %7065 = vmatprep.subr.mxu0 0.0
        %7066 = vmatpush2.msra.mxu0 %v6948
        %7067 = vmatprep.subr.mxu0 0.0
        %7068 = vmatpush2.msra.mxu0 %v6947
        %7069 = vmatprep.subr.mxu0 0.0
        %7070 = vmatpush2.msra.mxu0 %v6946
        %7071 = vmatprep.subr.mxu0 0.0
        %7072 = vmatpush2.msra.mxu0 %v6945
        %7073 = vmatprep.subr.mxu0 0.0
        %7074 = vmatpush2.msra.mxu0 %v6944
        %7075 = vmatprep.subr.mxu0 0.0
        %7076 = vmatpush2.msra.mxu0 %v6943
        %7077 = vmatprep.mubr.f32.mxu0 %v7000
        %7078 = vmatmul.mubr.f32.gmra.mxu0 %v6996
        %v7079 = vpop.f32.mrf.mxu0
        %v7080 = vadd.f32 %v6991, %v7079
        %v7081 = vpop.f32.mrf.mxu0
        %7082 = vdwg.mxu0
        %7083 = vmatprep.subr.mxu0 0.0
        %7084 = vmatpush1.msra.mxu0 %v6974
        %7085 = vmatprep.subr.mxu0 0.0
        %7086 = vmatpush1.msra.mxu0 %v6973
        %7087 = vmatprep.subr.mxu0 0.0
        %7088 = vmatpush1.msra.mxu0 %v6972
        %7089 = vmatprep.subr.mxu0 0.0
        %7090 = vmatpush1.msra.mxu0 %v6971
        %7091 = vmatprep.subr.mxu0 0.0
        %7092 = vmatpush1.msra.mxu0 %v6970
        %7093 = vmatprep.subr.mxu0 0.0
        %7094 = vmatpush1.msra.mxu0 %v6969
        %7095 = vmatprep.subr.mxu0 0.0
        %7096 = vmatpush1.msra.mxu0 %v6968
        %7097 = vmatprep.subr.mxu0 0.0
        %7098 = vmatpush1.msra.mxu0 %v6967
        %7099 = vmatprep.subr.mxu0 0.0
        %7100 = vmatpush1.msra.mxu0 %v6966
        %7101 = vmatprep.subr.mxu0 0.0
        %7102 = vmatpush1.msra.mxu0 %v6965
        %7103 = vmatprep.subr.mxu0 0.0
        %7104 = vmatpush1.msra.mxu0 %v6964
        %7105 = vmatprep.subr.mxu0 0.0
        %7106 = vmatpush1.msra.mxu0 %v6963
        %7107 = vmatprep.subr.mxu0 0.0
        %7108 = vmatpush1.msra.mxu0 %v6962
        %7109 = vmatprep.subr.mxu0 0.0
        %7110 = vmatpush1.msra.mxu0 %v6961
        %7111 = vmatprep.subr.mxu0 0.0
        %7112 = vmatpush1.msra.mxu0 %v6960
        %7113 = vmatprep.subr.mxu0 0.0
        %7114 = vmatpush1.msra.mxu0 %v6959
        %7115 = vmatprep.subr.mxu0 0.0
        %7116 = vmatpush2.msra.mxu0 %v6990
        %7117 = vmatprep.subr.mxu0 0.0
        %7118 = vmatpush2.msra.mxu0 %v6989
        %7119 = vmatprep.subr.mxu0 0.0
        %7120 = vmatpush2.msra.mxu0 %v6988
        %7121 = vmatprep.subr.mxu0 0.0
        %7122 = vmatpush2.msra.mxu0 %v6987
        %7123 = vmatprep.subr.mxu0 0.0
        %7124 = vmatpush2.msra.mxu0 %v6986
        %7125 = vmatprep.subr.mxu0 0.0
        %7126 = vmatpush2.msra.mxu0 %v6985
        %7127 = vmatprep.subr.mxu0 0.0
        %7128 = vmatpush2.msra.mxu0 %v6984
        %7129 = vmatprep.subr.mxu0 0.0
        %7130 = vmatpush2.msra.mxu0 %v6983
        %7131 = vmatprep.subr.mxu0 0.0
        %7132 = vmatpush2.msra.mxu0 %v6982
        %7133 = vmatprep.subr.mxu0 0.0
        %7134 = vmatpush2.msra.mxu0 %v6981
        %7135 = vmatprep.subr.mxu0 0.0
        %7136 = vmatpush2.msra.mxu0 %v6980
        %7137 = vmatprep.subr.mxu0 0.0
        %7138 = vmatpush2.msra.mxu0 %v6979
        %7139 = vmatprep.subr.mxu0 0.0
        %7140 = vmatpush2.msra.mxu0 %v6978
        %7141 = vmatprep.subr.mxu0 0.0
        %7142 = vmatpush2.msra.mxu0 %v6977
        %7143 = vmatprep.subr.mxu0 0.0
        %7144 = vmatpush2.msra.mxu0 %v6976
        %7145 = vmatprep.subr.mxu0 0.0
        %7146 = vmatpush2.msra.mxu0 %v6975
        %7147 = vmatprep.mubr.f32.mxu0 %v7008
        %7148 = vmatmul.mubr.f32.gmra.mxu0 %v7004
        %v7149 = vpop.f32.mrf.mxu0
        %v7150 = vadd.f32 %v7080, %v7149
        %v7151 = vpop.f32.mrf.mxu0
        %7152 = vdwg.mxu0
        %vm7153 = vcmp.gt.f32.partialorder %v7150, 0.0
        %v7154 = vmul.f32 %v7150, 0.2
        %v7155 = vsel %vm7153, %v7150, %v7154
        %v7156 = vld [vmem:[%s478] sm:$0x1]
        %v7158 = vlaneseq
        %v7159 = vshrl.u32 %v7158, 7
        %v7160 = vsub.s32 0, %v7159
        %v7161 = vrot.slane %v7156, %v7160
        %7162 = vrot.lane.b32.xlu0 %v7161, 64
        %v7163 = vpop.permute.xlu0 %7162
        %vm7165 = vcmask 523264
        %v7166 = vsel %vm7165, %v7155, %v7163
        %v7167 = vld [vmem:[%s12] sm:$0xff]
        %v7168 = vld [vmem:[%s12 + $0x8] sm:$0xff]
        %v7169 = vld [vmem:[%s12 + $0x10] sm:$0xff]
        %v7170 = vld [vmem:[%s12 + $0x18] sm:$0xff]
        %v7171 = vld [vmem:[%s12 + $0x20] sm:$0xff]
        %v7172 = vld [vmem:[%s12 + $0x28] sm:$0xff]
        %v7173 = vld [vmem:[%s12 + $0x30] sm:$0xff]
        %v7174 = vld [vmem:[%s12 + $0x38] sm:$0xff]
        %v7175 = vld [vmem:[%s12 + $0x40] sm:$0x1f]
        %v7176 = vld [vmem:[%s13] sm:$0x1]
        %vm7177 = vcmask 564224
        %v7179 = vsel %vm7177, %v7166, 0
        %vm7181 = vcmask 1044480
        %v7183 = vsel %vm7181, %v7175, 0
        %7185 = vmatprep.subr.mxu0 0.0
        %7186 = vmatpush1.msra.mxu0 0.0
        %7187 = vmatprep.subr.mxu0 0.0
        %7188 = vmatpush1.msra.mxu0 0.0
        %7189 = vmatprep.subr.mxu0 0.0
        %7190 = vmatpush1.msra.mxu0 0.0
        %7191 = vmatprep.subr.mxu0 0.0
        %7192 = vmatpush1.msra.mxu0 0.0
        %7193 = vmatprep.subr.mxu0 0.0
        %7194 = vmatpush1.msra.mxu0 0.0
        %7195 = vmatprep.subr.mxu0 0.0
        %7196 = vmatpush1.msra.mxu0 0.0
        %7197 = vmatprep.subr.mxu0 0.0
        %7198 = vmatpush1.msra.mxu0 0.0
        %7199 = vmatprep.subr.mxu0 0.0
        %7200 = vmatpush1.msra.mxu0 %v7183
        %7201 = vmatprep.subr.mxu0 0.0
        %7202 = vmatpush1.msra.mxu0 %v7174
        %7203 = vmatprep.subr.mxu0 0.0
        %7204 = vmatpush1.msra.mxu0 %v7173
        %7205 = vmatprep.subr.mxu0 0.0
        %7206 = vmatpush1.msra.mxu0 %v7172
        %7207 = vmatprep.subr.mxu0 0.0
        %7208 = vmatpush1.msra.mxu0 %v7171
        %7209 = vmatprep.subr.mxu0 0.0
        %7210 = vmatpush1.msra.mxu0 %v7170
        %7211 = vmatprep.subr.mxu0 0.0
        %7212 = vmatpush1.msra.mxu0 %v7169
        %7213 = vmatprep.subr.mxu0 0.0
        %7214 = vmatpush1.msra.mxu0 %v7168
        %7215 = vmatprep.subr.mxu0 0.0
        %7216 = vmatpush1.msra.mxu0 %v7167
        %7217 = vmatprep.subr.mxu0 0.0
        %7218 = vmatpush2.msra.mxu0 0.0
        %7219 = vmatprep.subr.mxu0 0.0
        %7220 = vmatpush2.msra.mxu0 0.0
        %7221 = vmatprep.subr.mxu0 0.0
        %7222 = vmatpush2.msra.mxu0 0.0
        %7223 = vmatprep.subr.mxu0 0.0
        %7224 = vmatpush2.msra.mxu0 0.0
        %7225 = vmatprep.subr.mxu0 0.0
        %7226 = vmatpush2.msra.mxu0 0.0
        %7227 = vmatprep.subr.mxu0 0.0
        %7228 = vmatpush2.msra.mxu0 0.0
        %7229 = vmatprep.subr.mxu0 0.0
        %7230 = vmatpush2.msra.mxu0 0.0
        %7231 = vmatprep.subr.mxu0 0.0
        %7232 = vmatpush2.msra.mxu0 0.0
        %7233 = vmatprep.subr.mxu0 0.0
        %7234 = vmatpush2.msra.mxu0 0.0
        %7235 = vmatprep.subr.mxu0 0.0
        %7236 = vmatpush2.msra.mxu0 0.0
        %7237 = vmatprep.subr.mxu0 0.0
        %7238 = vmatpush2.msra.mxu0 0.0
        %7239 = vmatprep.subr.mxu0 0.0
        %7240 = vmatpush2.msra.mxu0 0.0
        %7241 = vmatprep.subr.mxu0 0.0
        %7242 = vmatpush2.msra.mxu0 0.0
        %7243 = vmatprep.subr.mxu0 0.0
        %7244 = vmatpush2.msra.mxu0 0.0
        %7245 = vmatprep.subr.mxu0 0.0
        %7246 = vmatpush2.msra.mxu0 0.0
        %7247 = vmatprep.subr.mxu0 0.0
        %7248 = vmatpush2.msra.mxu0 0.0
        %7249 = vmatprep.mubr.f32.mxu0 0.0
        %7250 = vmatmul.mubr.f32.gmra.mxu0 %v7179
        %v7251 = vpop.f32.mrf.mxu0
        %v7252 = vadd.f32 %v7176, %v7251
        %v7253 = vpop.f32.mrf.mxu0
        %7254 = vdwg.mxu0
        %7255 = vst.msk [vmem:[%s470] sm:$0x1] %vm3509, %v7252
        %s7256 = sand.u32 %s340, 1
        %s7257 = scalar_lea.sflag [#allocation11], %s7256
        %s7258 = sand.u32 %s340, 1
        %s7259 = scalar_lea.vmem [#allocation10], %s7258
        // Predicated region
        $region77: #{discriminator_forward.1} parent=75 // pred_check
          %p7260 = pneg %p350
        $region78: #{discriminator_forward.1} parent=75 // pred_check_branch
          %7262 = sbr.rel (%p7260) target = $region80
        $region79: #{discriminator_forward.1} parent=75 // pred_region
          %s7264 = ssub.s32 16, 16
          %7265 = vsyncadd %s7257, %s7264
          %s7266 = smul.addr %s28, 16
          %s7267 = scalar_lea.hbm %s14, %s7266
          %s7269 = sshll.u32 %s7259, 4
          %s7270 = int_to_ptr.vmem [resolvable:$true] %s7269
          %7272 = dma.vmem_to_hbm [thread:$0]  %s7270, 16, %s7267, %s7257
        $region80: #{discriminator_forward.1} parent=75 // pred_fallthru
          _
      $region76: #{discriminator_forward.1} parent=5 // pred_fallthru
        _
      %p7273 = scmp.le.s32.totalorder 2, %s23
      // Predicated region
      $region81: #{discriminator_forward.1} parent=5 // pred_check
        %p7274 = pneg %p7273
      $region82: #{discriminator_forward.1} parent=5 // pred_check_branch
        %7276 = sbr.rel (%p7274) target = $region84
      $region83: #{discriminator_forward.1} parent=5 // pred_region
        %s7277 = ssub.s32 %s23, 2
        // Predicated region
        $region85: #{discriminator_forward.1} parent=83 // pred_check
          %p7278 = pneg %p356
        $region86: #{discriminator_forward.1} parent=83 // pred_check_branch
          %7280 = sbr.rel (%p7278) target = $region88
        $region87: #{discriminator_forward.1} parent=83 // pred_region
          %s7281 = sand.u32 %s341, 1
          %s7282 = scalar_lea.sflag [#allocation11], %s7281
          %s7283 = sand.u32 %s341, 1
          %s7284 = scalar_lea.vmem [#allocation10], %s7283
          %7285 = dma.done %s7282, 16
        $region88: #{discriminator_forward.1} parent=83 // pred_fallthru
          _
      $region84: #{discriminator_forward.1} parent=5 // pred_fallthru
        _
    $region6: #{discriminator_forward.1} parent=1 // loop_footer
      %s27 = sadd.s32 1, %s23
    $region7: #{discriminator_forward.1} parent=1 // loop_footer_branch
      %22 = sbr.rel target = $region3
    $region8: #{discriminator_forward.1} parent=1 // loop_exit
      _
    %7286 = vsyncpa [#allocation11], 1
    %s7287 = scalar_lea.sflag [#allocation11], 1
    %7288 = vsyncpa %s7287, 1

</llo_original>
